<compile_context>
chip_gen: v7x
topology: tpu7x:2x2x1
jax: 0.10.0
libtpu: 0.0.40
codegen_flags: <defaults>
</compile_context>

<pallas_src>
import functools

import numpy as np
import jax
import jax.numpy as jnp
from jax.experimental import pallas as pl
from jax.experimental.pallas import tpu as pltpu


# ---------------------------------------------------------------------------
# Fused residual-unit Pallas kernel (one image per grid step)
# ---------------------------------------------------------------------------
def _make_unit_kernel(*, k, s, p, wg, mg, guard, c_out, num_layers, has_proj):
    """Builds the kernel body. All arguments are static Python ints/bools."""

    def kernel(*refs):
        n_slabs = s * s
        slab_refs = refs[:n_slabs]
        pos = n_slabs
        mask_ref = refs[pos]; pos += 1
        w_refs, b_refs = [], []
        for _ in range(num_layers):
            w_refs.append(refs[pos])
            b_refs.append(refs[pos + 1])
            pos += 2
        if has_proj:
            wsc_ref, bsc_ref = refs[pos], refs[pos + 1]
            pos += 2
        o_ref = refs[pos]
        y_scr = refs[pos + 1]

        mask = mask_ref[...]                       # (mg, 1) f32, 1 on the interior

        def conv_taps(read_tap, w_ref):
            acc = jnp.zeros((mg, c_out), jnp.float32)
            for dh in range(k):
                for dw in range(k):
                    xs = read_tap(dh, dw)          # (mg, c_in_l) f32
                    acc = acc + jnp.dot(xs.astype(jnp.bfloat16),
                                        w_ref[dh * k + dw],
                                        preferred_element_type=jnp.float32)
            return acc

        def tap_input(dh, dw):
            # stride-s conv: pick phase slab + constant flat offset
            ph = (dh % s) * s + (dw % s)
            delta = (dh // s - p) * wg + (dw // s - p)
            return slab_refs[ph][guard + delta: guard + delta + mg, :]

        def tap_scratch(dh, dw):
            # stride-1 conv over the VMEM-resident intermediate
            delta = (dh - p) * wg + (dw - p)
            return y_scr[guard + delta: guard + delta + mg, :]

        # --- layer 1: kxk conv (stride s), folded BN, ReLU ---
        h = jnp.maximum(conv_taps(tap_input, w_refs[0]) + b_refs[0][...], 0.0)

        # --- layers 2..L: kxk conv (stride 1), folded BN, ReLU (stay in VMEM) ---
        if num_layers > 1:
            y_scr[...] = jnp.zeros_like(y_scr)     # zero pad-ring + guard rows
        for l in range(1, num_layers):
            # mask once, at the only point where the intermediate is consumed
            y_scr[guard:guard + mg, :] = (h * mask).astype(y_scr.dtype)
            h = jnp.maximum(conv_taps(tap_scratch, w_refs[l]) + b_refs[l][...], 0.0)

        # --- shortcut: identity or 1x1 conv (stride s) + folded BN ---
        sc_ph = (p % s) * s + (p % s)
        d_sc = (p // s - p) * (wg + 1)
        idn = slab_refs[sc_ph][guard + d_sc: guard + d_sc + mg, :]
        if has_proj:
            sc = jnp.dot(idn.astype(jnp.bfloat16), wsc_ref[...],
                         preferred_element_type=jnp.float32) + bsc_ref[...]
        else:
            sc = idn                               # same channels, stride 1

        # single final mask zeroes the ring (the host drops it anyway)
        o_ref[...] = ((h + sc) * mask).astype(o_ref.dtype)

    return kernel


# ---------------------------------------------------------------------------
# Host-side glue: BN folding + flat padded layout construction
# ---------------------------------------------------------------------------
def _fold_bn(w, stats, eps=1e-5):
    """Fold BN(gamma,beta,mean,var) into conv weight (scale) + bias."""
    scale = stats["gamma"] / jnp.sqrt(stats["var"] + eps)
    w_folded = (w * scale).astype(jnp.bfloat16)          # scale over C_out (last dim)
    bias = (stats["beta"] - stats["mean"] * scale).reshape(1, -1).astype(jnp.float32)
    return w_folded, bias


def residual_unit_forward(x_nhwc, unit, *, ksize, stride):
    """One _ResidualUnit (eval mode) as a single fused Pallas kernel call."""
    N, H, W, c_in = x_nhwc.shape
    layers = unit["layers"]
    num_layers = len(layers)
    c_out = layers[0]["w"].shape[-1]
    has_proj = "shortcut" in unit

    k, s = ksize, stride
    # TODO(synk): only odd ksize and stride in {1, 2} are supported by the fused
    #             kernel (matches the default ResidualBlock configuration).
    assert k % 2 == 1 and s in (1, 2)
    assert has_proj or (c_in == c_out and s == 1)
    p = k // 2

    h_out = (H + 2 * p - k) // s + 1
    w_out = (W + 2 * p - k) // s + 1
    hg, wg = h_out + 2 * p, w_out + 2 * p          # padded output grid
    mg = hg * wg
    guard = ((p * wg + p + 31) // 32) * 32         # guard rows (aligned)
    slab_len = mg + 2 * guard

    # ---- conv1 input slabs (flat padded layout, phase-split when strided) ----
    xp = jnp.pad(x_nhwc, ((0, 0), (p, p), (p, p), (0, 0)))
    if s == 1:
        slabs4d = [xp]                             # (N, hg, wg, c_in)
    else:
        slabs4d = []
        for a in range(s):
            for b in range(s):
                sl = xp[:, a::s, b::s, :]
                slabs4d.append(jnp.pad(
                    sl, ((0, 0), (0, hg - sl.shape[1]),
                         (0, wg - sl.shape[2]), (0, 0))))
    slabs = [jnp.pad(sl.reshape(N, mg, c_in), ((0, 0), (guard, guard), (0, 0)))
             for sl in slabs4d]

    # ---- interior mask over the padded output grid ----
    hh, ww = np.arange(hg), np.arange(wg)
    m2 = (((hh >= p) & (hh < p + h_out))[:, None]
          & ((ww >= p) & (ww < p + w_out))[None, :])
    mask = jnp.asarray(m2.reshape(mg, 1), jnp.float32)

    # ---- fold BN into weights (bf16) / biases (f32) ----
    w_list, b_list = [], []
    for lyr in layers:
        wf, bf = _fold_bn(lyr["w"], lyr)
        w_list.append(wf.reshape(k * k, lyr["w"].shape[2], c_out))
        b_list.append(bf)
    if has_proj:
        wsc, bsc = _fold_bn(unit["shortcut"]["w"], unit["shortcut"])

    # ---- pallas_call ----
    kernel = _make_unit_kernel(k=k, s=s, p=p, wg=wg, mg=mg, guard=guard,
                               c_out=c_out, num_layers=num_layers,
                               has_proj=has_proj)

    const2 = lambda n: (0, 0)
    const3 = lambda n: (0, 0, 0)
    slab_spec = pl.BlockSpec((None, slab_len, c_in), lambda n: (n, 0, 0))

    in_specs = [slab_spec] * len(slabs) + [pl.BlockSpec((mg, 1), const2)]
    operands = list(slabs) + [mask]
    for wf, bf in zip(w_list, b_list):
        in_specs += [pl.BlockSpec(wf.shape, const3), pl.BlockSpec(bf.shape, const2)]
        operands += [wf, bf]
    if has_proj:
        in_specs += [pl.BlockSpec(wsc.shape, const2), pl.BlockSpec(bsc.shape, const2)]
        operands += [wsc, bsc]

    flops = 2 * N * mg * k * k * sum(int(w.shape[1]) * int(w.shape[2]) for w in w_list)
    if has_proj:
        flops += 2 * N * mg * c_in * c_out
    bytes_acc = int(sum(int(np.prod(a.shape)) * a.dtype.itemsize for a in operands)
                    + N * mg * c_out * 4)

    out = pl.pallas_call(
        kernel,
        out_shape=jax.ShapeDtypeStruct((N, mg, c_out), jnp.float32),
        grid_spec=pltpu.PrefetchScalarGridSpec(
            num_scalar_prefetch=0,
            grid=(N,),                                     # one image per step
            in_specs=in_specs,
            out_specs=pl.BlockSpec((None, mg, c_out), lambda n: (n, 0, 0)),
            scratch_shapes=[pltpu.VMEM((slab_len, c_out), jnp.float32)],
        ),
        compiler_params=pltpu.CompilerParams(
            dimension_semantics=("parallel",),
            vmem_limit_bytes=32 * 1024 * 1024,             # safe on v7x (64 MiB VMEM)
        ),
        cost_estimate=pl.CostEstimate(flops=flops, transcendentals=0,
                                      bytes_accessed=bytes_acc),
    )(*operands)

    # back to NHWC (drop the zero ring)
    out = out.reshape(N, hg, wg, c_out)[:, p:p + h_out, p:p + w_out, :]
    return out


def residual_block_forward(x_nchw, params, *, ksize, space_reduction_ratio=2):
    """ResidualBlock forward (eval mode). Input/Output are NCHW like PyTorch."""
    x = jnp.transpose(x_nchw, (0, 2, 3, 1))        # NHWC inside
    for i, unit in enumerate(params):
        stride = space_reduction_ratio if i == 0 else 1
        x = residual_unit_forward(x, unit, ksize=ksize, stride=stride)
    return jnp.transpose(x, (0, 3, 1, 2))          # back to NCHW


# ---------------------------------------------------------------------------
# Synthetic parameters (eval-mode BN running stats)
# ---------------------------------------------------------------------------
def init_residual_block_params(key, num_units, num_in_channels, ksize,
                               space_reduction_ratio, feature_expand_ratio,
                               num_layer_per_unit):
    params = []
    n_features = num_in_channels * feature_expand_ratio

    def bn_stats(key, c):
        k1, k2, k3, k4 = jax.random.split(key, 4)
        return {
            "gamma": 1.0 + 0.1 * jax.random.normal(k1, (c,), jnp.float32),
            "beta": 0.1 * jax.random.normal(k2, (c,), jnp.float32),
            "mean": 0.1 * jax.random.normal(k3, (c,), jnp.float32),
            "var": jnp.abs(1.0 + 0.1 * jax.random.normal(k4, (c,), jnp.float32)),
        }

    for u in range(num_units):
        cin = num_in_channels if u == 0 else n_features
        cout = n_features
        stride = space_reduction_ratio if u == 0 else 1
        layers = []
        for l in range(num_layer_per_unit):
            lc_in = cin if l == 0 else cout
            key, kw, kb = jax.random.split(key, 3)
            lyr = {"w": 0.1 * jax.random.normal(kw, (ksize, ksize, lc_in, cout),
                                                jnp.float32)}
            lyr.update(bn_stats(kb, cout))
            layers.append(lyr)
        unit = {"layers": layers}
        if cin != cout or stride != 1:
            key, kw, kb = jax.random.split(key, 3)
            sc = {"w": 0.1 * jax.random.normal(kw, (cin, cout), jnp.float32)}
            sc.update(bn_stats(kb, cout))
            unit["shortcut"] = sc
        params.append(unit)
    return params


# ---------------------------------------------------------------------------
# Pure-JAX reference (for correctness check)
# ---------------------------------------------------------------------------
def _reference_block(x_nchw, params, *, ksize, space_reduction_ratio=2):
    x = jnp.transpose(x_nchw, (0, 2, 3, 1))
    p = ksize // 2
    for i, unit in enumerate(params):
        stride = space_reduction_ratio if i == 0 else 1
        identity = x
        h = x
        for l, lyr in enumerate(unit["layers"]):
            st = stride if l == 0 else 1
            scale = lyr["gamma"] / jnp.sqrt(lyr["var"] + 1e-5)
            bias = lyr["beta"] - lyr["mean"] * scale
            h = jax.lax.conv_general_dilated(
                h, lyr["w"], window_strides=(st, st), padding=[(p, p), (p, p)],
                dimension_numbers=("NHWC", "HWIO", "NHWC"))
            h = jnp.maximum(h * scale + bias, 0.0)
        if "shortcut" in unit:
            sc = unit["shortcut"]
            sscale = sc["gamma"] / jnp.sqrt(sc["var"] + 1e-5)
            sbias = sc["beta"] - sc["mean"] * sscale
            idp = jax.lax.conv_general_dilated(
                identity, sc["w"].reshape(1, 1, *sc["w"].shape),
                window_strides=(stride, stride), padding=[(0, 0), (0, 0)],
                dimension_numbers=("NHWC", "HWIO", "NHWC"))
            identity = idp * sscale + sbias
        x = h + identity
    return jnp.transpose(x, (0, 3, 1, 2))


# ---------------------------------------------------------------------------
# Demo
# ---------------------------------------------------------------------------
if __name__ == "__main__":
    # ResidualBlock(num_units=2, num_in_channels=4, ksize=3,
    #               space_reduction_ratio=2, feature_expand_ratio=2,
    #               num_layer_per_unit=2, separable_convolution=False)
    # TODO(synk): separable_convolution=True (DepthwiseSeparableConv) is not
    #             implemented; only the standard-conv path is translated.
    num_units = 2
    num_in_channels = 4
    ksize = 3
    space_reduction_ratio = 2
    feature_expand_ratio = 2
    num_layer_per_unit = 2

    N, H, W = 2, 16, 16

    key = jax.random.PRNGKey(0)
    kx, kp = jax.random.split(key)
    x = jax.random.normal(kx, (N, num_in_channels, H, W), jnp.float32)   # NCHW
    params = init_residual_block_params(kp, num_units, num_in_channels, ksize,
                                        space_reduction_ratio,
                                        feature_expand_ratio,
                                        num_layer_per_unit)

    fwd = jax.jit(functools.partial(residual_block_forward, ksize=ksize,
                                    space_reduction_ratio=space_reduction_ratio))
    out = fwd(x, params)
    jax.block_until_ready(out)

    expected = (N, num_in_channels * feature_expand_ratio,
                H // space_reduction_ratio, W // space_reduction_ratio)
    assert out.shape == expected, out.shape
    assert bool(jnp.all(jnp.isfinite(out)))

    ref = _reference_block(x, params, ksize=ksize,
                           space_reduction_ratio=space_reduction_ratio)
    np.testing.assert_allclose(np.asarray(out), np.asarray(ref),
                               rtol=5e-2, atol=5e-2)   # bf16 MXU tolerance
    print("KERNEL_OK")
</pallas_src>

<mosaic_0001>
module attributes {stable_mosaic.version = 11 : i64} {
  func.func @kernel(%arg0: i32, %arg1: memref<1x164x4xf32, #tpu.memory_space<vmem>>, %arg2: memref<1x164x4xf32, #tpu.memory_space<vmem>>, %arg3: memref<1x164x4xf32, #tpu.memory_space<vmem>>, %arg4: memref<1x164x4xf32, #tpu.memory_space<vmem>>, %arg5: memref<100x1xf32, #tpu.memory_space<vmem>>, %arg6: memref<9x4x8xbf16, #tpu.memory_space<vmem>>, %arg7: memref<1x8xf32, #tpu.memory_space<vmem>>, %arg8: memref<9x8x8xbf16, #tpu.memory_space<vmem>>, %arg9: memref<1x8xf32, #tpu.memory_space<vmem>>, %arg10: memref<4x8xbf16, #tpu.memory_space<vmem>>, %arg11: memref<1x8xf32, #tpu.memory_space<vmem>>, %arg12: memref<1x100x8xf32, #tpu.memory_space<vmem>>, %arg13: memref<164x8xf32, #tpu.memory_space<vmem>>) attributes {dimension_semantics = [#tpu.dimension_semantics<parallel>], iteration_bounds = array<i64: 2>, scalar_prefetch = 0 : i64, scratch_operands = 1 : i64, tpu.core_type = #tpu.core_type<tc>, window_params = [{transform_indices = @transform_0, window_bounds = array<i64: 1, 164, 4>}, {transform_indices = @transform_1, window_bounds = array<i64: 1, 164, 4>}, {transform_indices = @transform_2, window_bounds = array<i64: 1, 164, 4>}, {transform_indices = @transform_3, window_bounds = array<i64: 1, 164, 4>}, {pipeline_mode = #tpu.pipeline_mode<synchronous>, transform_indices = @transform_4, window_bounds = array<i64: 100, 1>}, {pipeline_mode = #tpu.pipeline_mode<synchronous>, transform_indices = @transform_5, window_bounds = array<i64: 9, 4, 8>}, {pipeline_mode = #tpu.pipeline_mode<synchronous>, transform_indices = @transform_6, window_bounds = array<i64: 1, 8>}, {pipeline_mode = #tpu.pipeline_mode<synchronous>, transform_indices = @transform_7, window_bounds = array<i64: 9, 8, 8>}, {pipeline_mode = #tpu.pipeline_mode<synchronous>, transform_indices = @transform_8, window_bounds = array<i64: 1, 8>}, {pipeline_mode = #tpu.pipeline_mode<synchronous>, transform_indices = @transform_9, window_bounds = array<i64: 4, 8>}, {pipeline_mode = #tpu.pipeline_mode<synchronous>, transform_indices = @transform_10, window_bounds = array<i64: 1, 8>}, {transform_indices = @transform_11, window_bounds = array<i64: 1, 100, 8>}]} {
    %c0 = arith.constant 0 : index
    %c0_0 = arith.constant 0 : index
    %0 = vector.load %arg5[%c0, %c0_0] : memref<100x1xf32, #tpu.memory_space<vmem>>, vector<100x1xf32>
    %cst = arith.constant 0.000000e+00 : f32
    %1 = vector.broadcast %cst : f32 to vector<100x8xf32>
    %c0_1 = arith.constant 0 : index
    %c21 = arith.constant 21 : index
    %c0_2 = arith.constant 0 : index
    %2 = vector.load %arg1[%c0_1, %c21, %c0_2] : memref<1x164x4xf32, #tpu.memory_space<vmem>>, vector<1x100x4xf32>
    %3 = vector.shape_cast %2 : vector<1x100x4xf32> to vector<100x4xf32>
    %4 = arith.truncf %3 : vector<100x4xf32> to vector<100x4xbf16>
    %c0_3 = arith.constant 0 : index
    %c0_4 = arith.constant 0 : index
    %c0_5 = arith.constant 0 : index
    %5 = vector.load %arg6[%c0_3, %c0_4, %c0_5] : memref<9x4x8xbf16, #tpu.memory_space<vmem>>, vector<1x4x8xbf16>
    %6 = vector.shape_cast %5 : vector<1x4x8xbf16> to vector<4x8xbf16>
    %cst_6 = arith.constant dense<0.000000e+00> : vector<100x8xf32>
    %7 = tpu.matmul %4, %6, %cst_6 {dimension_numbers = #tpu.dot_dimension_numbers<[1], [0], [0], [1], [0, 0, 1, 1], [], []>} : vector<100x4xbf16>, vector<4x8xbf16>, vector<100x8xf32> -> vector<100x8xf32>
    %8 = arith.addf %1, %7 : vector<100x8xf32>
    %c0_7 = arith.constant 0 : index
    %c21_8 = arith.constant 21 : index
    %c0_9 = arith.constant 0 : index
    %9 = vector.load %arg2[%c0_7, %c21_8, %c0_9] : memref<1x164x4xf32, #tpu.memory_space<vmem>>, vector<1x100x4xf32>
    %10 = vector.shape_cast %9 : vector<1x100x4xf32> to vector<100x4xf32>
    %11 = arith.truncf %10 : vector<100x4xf32> to vector<100x4xbf16>
    %c1 = arith.constant 1 : index
    %c0_10 = arith.constant 0 : index
    %c0_11 = arith.constant 0 : index
    %12 = vector.load %arg6[%c1, %c0_10, %c0_11] : memref<9x4x8xbf16, #tpu.memory_space<vmem>>, vector<1x4x8xbf16>
    %13 = vector.shape_cast %12 : vector<1x4x8xbf16> to vector<4x8xbf16>
    %cst_12 = arith.constant dense<0.000000e+00> : vector<100x8xf32>
    %14 = tpu.matmul %11, %13, %cst_12 {dimension_numbers = #tpu.dot_dimension_numbers<[1], [0], [0], [1], [0, 0, 1, 1], [], []>} : vector<100x4xbf16>, vector<4x8xbf16>, vector<100x8xf32> -> vector<100x8xf32>
    %15 = arith.addf %8, %14 : vector<100x8xf32>
    %c0_13 = arith.constant 0 : index
    %c22 = arith.constant 22 : index
    %c0_14 = arith.constant 0 : index
    %16 = vector.load %arg1[%c0_13, %c22, %c0_14] : memref<1x164x4xf32, #tpu.memory_space<vmem>>, vector<1x100x4xf32>
    %17 = vector.shape_cast %16 : vector<1x100x4xf32> to vector<100x4xf32>
    %18 = arith.truncf %17 : vector<100x4xf32> to vector<100x4xbf16>
    %c2 = arith.constant 2 : index
    %c0_15 = arith.constant 0 : index
    %c0_16 = arith.constant 0 : index
    %19 = vector.load %arg6[%c2, %c0_15, %c0_16] : memref<9x4x8xbf16, #tpu.memory_space<vmem>>, vector<1x4x8xbf16>
    %20 = vector.shape_cast %19 : vector<1x4x8xbf16> to vector<4x8xbf16>
    %cst_17 = arith.constant dense<0.000000e+00> : vector<100x8xf32>
    %21 = tpu.matmul %18, %20, %cst_17 {dimension_numbers = #tpu.dot_dimension_numbers<[1], [0], [0], [1], [0, 0, 1, 1], [], []>} : vector<100x4xbf16>, vector<4x8xbf16>, vector<100x8xf32> -> vector<100x8xf32>
    %22 = arith.addf %15, %21 : vector<100x8xf32>
    %c0_18 = arith.constant 0 : index
    %c21_19 = arith.constant 21 : index
    %c0_20 = arith.constant 0 : index
    %23 = vector.load %arg3[%c0_18, %c21_19, %c0_20] : memref<1x164x4xf32, #tpu.memory_space<vmem>>, vector<1x100x4xf32>
    %24 = vector.shape_cast %23 : vector<1x100x4xf32> to vector<100x4xf32>
    %25 = arith.truncf %24 : vector<100x4xf32> to vector<100x4xbf16>
    %c3 = arith.constant 3 : index
    %c0_21 = arith.constant 0 : index
    %c0_22 = arith.constant 0 : index
    %26 = vector.load %arg6[%c3, %c0_21, %c0_22] : memref<9x4x8xbf16, #tpu.memory_space<vmem>>, vector<1x4x8xbf16>
    %27 = vector.shape_cast %26 : vector<1x4x8xbf16> to vector<4x8xbf16>
    %cst_23 = arith.constant dense<0.000000e+00> : vector<100x8xf32>
    %28 = tpu.matmul %25, %27, %cst_23 {dimension_numbers = #tpu.dot_dimension_numbers<[1], [0], [0], [1], [0, 0, 1, 1], [], []>} : vector<100x4xbf16>, vector<4x8xbf16>, vector<100x8xf32> -> vector<100x8xf32>
    %29 = arith.addf %22, %28 : vector<100x8xf32>
    %c0_24 = arith.constant 0 : index
    %c21_25 = arith.constant 21 : index
    %c0_26 = arith.constant 0 : index
    %30 = vector.load %arg4[%c0_24, %c21_25, %c0_26] : memref<1x164x4xf32, #tpu.memory_space<vmem>>, vector<1x100x4xf32>
    %31 = vector.shape_cast %30 : vector<1x100x4xf32> to vector<100x4xf32>
    %32 = arith.truncf %31 : vector<100x4xf32> to vector<100x4xbf16>
    %c4 = arith.constant 4 : index
    %c0_27 = arith.constant 0 : index
    %c0_28 = arith.constant 0 : index
    %33 = vector.load %arg6[%c4, %c0_27, %c0_28] : memref<9x4x8xbf16, #tpu.memory_space<vmem>>, vector<1x4x8xbf16>
    %34 = vector.shape_cast %33 : vector<1x4x8xbf16> to vector<4x8xbf16>
    %cst_29 = arith.constant dense<0.000000e+00> : vector<100x8xf32>
    %35 = tpu.matmul %32, %34, %cst_29 {dimension_numbers = #tpu.dot_dimension_numbers<[1], [0], [0], [1], [0, 0, 1, 1], [], []>} : vector<100x4xbf16>, vector<4x8xbf16>, vector<100x8xf32> -> vector<100x8xf32>
    %36 = arith.addf %29, %35 : vector<100x8xf32>
    %c0_30 = arith.constant 0 : index
    %c22_31 = arith.constant 22 : index
    %c0_32 = arith.constant 0 : index
    %37 = vector.load %arg3[%c0_30, %c22_31, %c0_32] : memref<1x164x4xf32, #tpu.memory_space<vmem>>, vector<1x100x4xf32>
    %38 = vector.shape_cast %37 : vector<1x100x4xf32> to vector<100x4xf32>
    %39 = arith.truncf %38 : vector<100x4xf32> to vector<100x4xbf16>
    %c5 = arith.constant 5 : index
    %c0_33 = arith.constant 0 : index
    %c0_34 = arith.constant 0 : index
    %40 = vector.load %arg6[%c5, %c0_33, %c0_34] : memref<9x4x8xbf16, #tpu.memory_space<vmem>>, vector<1x4x8xbf16>
    %41 = vector.shape_cast %40 : vector<1x4x8xbf16> to vector<4x8xbf16>
    %cst_35 = arith.constant dense<0.000000e+00> : vector<100x8xf32>
    %42 = tpu.matmul %39, %41, %cst_35 {dimension_numbers = #tpu.dot_dimension_numbers<[1], [0], [0], [1], [0, 0, 1, 1], [], []>} : vector<100x4xbf16>, vector<4x8xbf16>, vector<100x8xf32> -> vector<100x8xf32>
    %43 = arith.addf %36, %42 : vector<100x8xf32>
    %c0_36 = arith.constant 0 : index
    %c31 = arith.constant 31 : index
    %c0_37 = arith.constant 0 : index
    %44 = vector.load %arg1[%c0_36, %c31, %c0_37] : memref<1x164x4xf32, #tpu.memory_space<vmem>>, vector<1x100x4xf32>
    %45 = vector.shape_cast %44 : vector<1x100x4xf32> to vector<100x4xf32>
    %46 = arith.truncf %45 : vector<100x4xf32> to vector<100x4xbf16>
    %c6 = arith.constant 6 : index
    %c0_38 = arith.constant 0 : index
    %c0_39 = arith.constant 0 : index
    %47 = vector.load %arg6[%c6, %c0_38, %c0_39] : memref<9x4x8xbf16, #tpu.memory_space<vmem>>, vector<1x4x8xbf16>
    %48 = vector.shape_cast %47 : vector<1x4x8xbf16> to vector<4x8xbf16>
    %cst_40 = arith.constant dense<0.000000e+00> : vector<100x8xf32>
    %49 = tpu.matmul %46, %48, %cst_40 {dimension_numbers = #tpu.dot_dimension_numbers<[1], [0], [0], [1], [0, 0, 1, 1], [], []>} : vector<100x4xbf16>, vector<4x8xbf16>, vector<100x8xf32> -> vector<100x8xf32>
    %50 = arith.addf %43, %49 : vector<100x8xf32>
    %c0_41 = arith.constant 0 : index
    %c31_42 = arith.constant 31 : index
    %c0_43 = arith.constant 0 : index
    %51 = vector.load %arg2[%c0_41, %c31_42, %c0_43] : memref<1x164x4xf32, #tpu.memory_space<vmem>>, vector<1x100x4xf32>
    %52 = vector.shape_cast %51 : vector<1x100x4xf32> to vector<100x4xf32>
    %53 = arith.truncf %52 : vector<100x4xf32> to vector<100x4xbf16>
    %c7 = arith.constant 7 : index
    %c0_44 = arith.constant 0 : index
    %c0_45 = arith.constant 0 : index
    %54 = vector.load %arg6[%c7, %c0_44, %c0_45] : memref<9x4x8xbf16, #tpu.memory_space<vmem>>, vector<1x4x8xbf16>
    %55 = vector.shape_cast %54 : vector<1x4x8xbf16> to vector<4x8xbf16>
    %cst_46 = arith.constant dense<0.000000e+00> : vector<100x8xf32>
    %56 = tpu.matmul %53, %55, %cst_46 {dimension_numbers = #tpu.dot_dimension_numbers<[1], [0], [0], [1], [0, 0, 1, 1], [], []>} : vector<100x4xbf16>, vector<4x8xbf16>, vector<100x8xf32> -> vector<100x8xf32>
    %57 = arith.addf %50, %56 : vector<100x8xf32>
    %c0_47 = arith.constant 0 : index
    %c32 = arith.constant 32 : index
    %c0_48 = arith.constant 0 : index
    %58 = vector.load %arg1[%c0_47, %c32, %c0_48] : memref<1x164x4xf32, #tpu.memory_space<vmem>>, vector<1x100x4xf32>
    %59 = vector.shape_cast %58 : vector<1x100x4xf32> to vector<100x4xf32>
    %60 = arith.truncf %59 : vector<100x4xf32> to vector<100x4xbf16>
    %c8 = arith.constant 8 : index
    %c0_49 = arith.constant 0 : index
    %c0_50 = arith.constant 0 : index
    %61 = vector.load %arg6[%c8, %c0_49, %c0_50] : memref<9x4x8xbf16, #tpu.memory_space<vmem>>, vector<1x4x8xbf16>
    %62 = vector.shape_cast %61 : vector<1x4x8xbf16> to vector<4x8xbf16>
    %cst_51 = arith.constant dense<0.000000e+00> : vector<100x8xf32>
    %63 = tpu.matmul %60, %62, %cst_51 {dimension_numbers = #tpu.dot_dimension_numbers<[1], [0], [0], [1], [0, 0, 1, 1], [], []>} : vector<100x4xbf16>, vector<4x8xbf16>, vector<100x8xf32> -> vector<100x8xf32>
    %64 = arith.addf %57, %63 : vector<100x8xf32>
    %c0_52 = arith.constant 0 : index
    %c0_53 = arith.constant 0 : index
    %65 = vector.load %arg7[%c0_52, %c0_53] : memref<1x8xf32, #tpu.memory_space<vmem>>, vector<1x8xf32>
    %66 = vector.broadcast %65 : vector<1x8xf32> to vector<100x8xf32>
    %67 = arith.addf %64, %66 : vector<100x8xf32>
    %cst_54 = arith.constant 0.000000e+00 : f32
    %68 = vector.broadcast %cst_54 : f32 to vector<100x8xf32>
    %69 = arith.maximumf %67, %68 : vector<100x8xf32>
    %cst_55 = arith.constant 0.000000e+00 : f32
    %70 = vector.broadcast %cst_55 : f32 to vector<164x8xf32>
    %c0_56 = arith.constant 0 : index
    %c0_57 = arith.constant 0 : index
    %71 = vector.load %arg13[%c0_56, %c0_57] : memref<164x8xf32, #tpu.memory_space<vmem>>, vector<164x8xf32>
    tpu.vector_store %arg13[%c0_56, %c0_57], %70 {strides = array<i32>} : memref<164x8xf32, #tpu.memory_space<vmem>>, vector<164x8xf32>,
    %72 = vector.broadcast %0 : vector<100x1xf32> to vector<100x8xf32>
    %73 = arith.mulf %69, %72 : vector<100x8xf32>
    %c32_58 = arith.constant 32 : index
    %c0_59 = arith.constant 0 : index
    %74 = vector.load %arg13[%c32_58, %c0_59] : memref<164x8xf32, #tpu.memory_space<vmem>>, vector<100x8xf32>
    tpu.vector_store %arg13[%c32_58, %c0_59], %73 {strides = array<i32>} : memref<164x8xf32, #tpu.memory_space<vmem>>, vector<100x8xf32>,
    %cst_60 = arith.constant 0.000000e+00 : f32
    %75 = vector.broadcast %cst_60 : f32 to vector<100x8xf32>
    %c21_61 = arith.constant 21 : index
    %c0_62 = arith.constant 0 : index
    %76 = vector.load %arg13[%c21_61, %c0_62] : memref<164x8xf32, #tpu.memory_space<vmem>>, vector<100x8xf32>
    %77 = arith.truncf %76 : vector<100x8xf32> to vector<100x8xbf16>
    %c0_63 = arith.constant 0 : index
    %c0_64 = arith.constant 0 : index
    %c0_65 = arith.constant 0 : index
    %78 = vector.load %arg8[%c0_63, %c0_64, %c0_65] : memref<9x8x8xbf16, #tpu.memory_space<vmem>>, vector<1x8x8xbf16>
    %79 = vector.shape_cast %78 : vector<1x8x8xbf16> to vector<8x8xbf16>
    %cst_66 = arith.constant dense<0.000000e+00> : vector<100x8xf32>
    %80 = tpu.matmul %77, %79, %cst_66 {dimension_numbers = #tpu.dot_dimension_numbers<[1], [0], [0], [1], [0, 0, 1, 1], [], []>} : vector<100x8xbf16>, vector<8x8xbf16>, vector<100x8xf32> -> vector<100x8xf32>
    %81 = arith.addf %75, %80 : vector<100x8xf32>
    %c22_67 = arith.constant 22 : index
    %c0_68 = arith.constant 0 : index
    %82 = vector.load %arg13[%c22_67, %c0_68] : memref<164x8xf32, #tpu.memory_space<vmem>>, vector<100x8xf32>
    %83 = arith.truncf %82 : vector<100x8xf32> to vector<100x8xbf16>
    %c1_69 = arith.constant 1 : index
    %c0_70 = arith.constant 0 : index
    %c0_71 = arith.constant 0 : index
    %84 = vector.load %arg8[%c1_69, %c0_70, %c0_71] : memref<9x8x8xbf16, #tpu.memory_space<vmem>>, vector<1x8x8xbf16>
    %85 = vector.shape_cast %84 : vector<1x8x8xbf16> to vector<8x8xbf16>
    %cst_72 = arith.constant dense<0.000000e+00> : vector<100x8xf32>
    %86 = tpu.matmul %83, %85, %cst_72 {dimension_numbers = #tpu.dot_dimension_numbers<[1], [0], [0], [1], [0, 0, 1, 1], [], []>} : vector<100x8xbf16>, vector<8x8xbf16>, vector<100x8xf32> -> vector<100x8xf32>
    %87 = arith.addf %81, %86 : vector<100x8xf32>
    %c23 = arith.constant 23 : index
    %c0_73 = arith.constant 0 : index
    %88 = vector.load %arg13[%c23, %c0_73] : memref<164x8xf32, #tpu.memory_space<vmem>>, vector<100x8xf32>
    %89 = arith.truncf %88 : vector<100x8xf32> to vector<100x8xbf16>
    %c2_74 = arith.constant 2 : index
    %c0_75 = arith.constant 0 : index
    %c0_76 = arith.constant 0 : index
    %90 = vector.load %arg8[%c2_74, %c0_75, %c0_76] : memref<9x8x8xbf16, #tpu.memory_space<vmem>>, vector<1x8x8xbf16>
    %91 = vector.shape_cast %90 : vector<1x8x8xbf16> to vector<8x8xbf16>
    %cst_77 = arith.constant dense<0.000000e+00> : vector<100x8xf32>
    %92 = tpu.matmul %89, %91, %cst_77 {dimension_numbers = #tpu.dot_dimension_numbers<[1], [0], [0], [1], [0, 0, 1, 1], [], []>} : vector<100x8xbf16>, vector<8x8xbf16>, vector<100x8xf32> -> vector<100x8xf32>
    %93 = arith.addf %87, %92 : vector<100x8xf32>
    %c31_78 = arith.constant 31 : index
    %c0_79 = arith.constant 0 : index
    %94 = vector.load %arg13[%c31_78, %c0_79] : memref<164x8xf32, #tpu.memory_space<vmem>>, vector<100x8xf32>
    %95 = arith.truncf %94 : vector<100x8xf32> to vector<100x8xbf16>
    %c3_80 = arith.constant 3 : index
    %c0_81 = arith.constant 0 : index
    %c0_82 = arith.constant 0 : index
    %96 = vector.load %arg8[%c3_80, %c0_81, %c0_82] : memref<9x8x8xbf16, #tpu.memory_space<vmem>>, vector<1x8x8xbf16>
    %97 = vector.shape_cast %96 : vector<1x8x8xbf16> to vector<8x8xbf16>
    %cst_83 = arith.constant dense<0.000000e+00> : vector<100x8xf32>
    %98 = tpu.matmul %95, %97, %cst_83 {dimension_numbers = #tpu.dot_dimension_numbers<[1], [0], [0], [1], [0, 0, 1, 1], [], []>} : vector<100x8xbf16>, vector<8x8xbf16>, vector<100x8xf32> -> vector<100x8xf32>
    %99 = arith.addf %93, %98 : vector<100x8xf32>
    %c32_84 = arith.constant 32 : index
    %c0_85 = arith.constant 0 : index
    %100 = vector.load %arg13[%c32_84, %c0_85] : memref<164x8xf32, #tpu.memory_space<vmem>>, vector<100x8xf32>
    %101 = arith.truncf %100 : vector<100x8xf32> to vector<100x8xbf16>
    %c4_86 = arith.constant 4 : index
    %c0_87 = arith.constant 0 : index
    %c0_88 = arith.constant 0 : index
    %102 = vector.load %arg8[%c4_86, %c0_87, %c0_88] : memref<9x8x8xbf16, #tpu.memory_space<vmem>>, vector<1x8x8xbf16>
    %103 = vector.shape_cast %102 : vector<1x8x8xbf16> to vector<8x8xbf16>
    %cst_89 = arith.constant dense<0.000000e+00> : vector<100x8xf32>
    %104 = tpu.matmul %101, %103, %cst_89 {dimension_numbers = #tpu.dot_dimension_numbers<[1], [0], [0], [1], [0, 0, 1, 1], [], []>} : vector<100x8xbf16>, vector<8x8xbf16>, vector<100x8xf32> -> vector<100x8xf32>
    %105 = arith.addf %99, %104 : vector<100x8xf32>
    %c33 = arith.constant 33 : index
    %c0_90 = arith.constant 0 : index
    %106 = vector.load %arg13[%c33, %c0_90] : memref<164x8xf32, #tpu.memory_space<vmem>>, vector<100x8xf32>
    %107 = arith.truncf %106 : vector<100x8xf32> to vector<100x8xbf16>
    %c5_91 = arith.constant 5 : index
    %c0_92 = arith.constant 0 : index
    %c0_93 = arith.constant 0 : index
    %108 = vector.load %arg8[%c5_91, %c0_92, %c0_93] : memref<9x8x8xbf16, #tpu.memory_space<vmem>>, vector<1x8x8xbf16>
    %109 = vector.shape_cast %108 : vector<1x8x8xbf16> to vector<8x8xbf16>
    %cst_94 = arith.constant dense<0.000000e+00> : vector<100x8xf32>
    %110 = tpu.matmul %107, %109, %cst_94 {dimension_numbers = #tpu.dot_dimension_numbers<[1], [0], [0], [1], [0, 0, 1, 1], [], []>} : vector<100x8xbf16>, vector<8x8xbf16>, vector<100x8xf32> -> vector<100x8xf32>
    %111 = arith.addf %105, %110 : vector<100x8xf32>
    %c41 = arith.constant 41 : index
    %c0_95 = arith.constant 0 : index
    %112 = vector.load %arg13[%c41, %c0_95] : memref<164x8xf32, #tpu.memory_space<vmem>>, vector<100x8xf32>
    %113 = arith.truncf %112 : vector<100x8xf32> to vector<100x8xbf16>
    %c6_96 = arith.constant 6 : index
    %c0_97 = arith.constant 0 : index
    %c0_98 = arith.constant 0 : index
    %114 = vector.load %arg8[%c6_96, %c0_97, %c0_98] : memref<9x8x8xbf16, #tpu.memory_space<vmem>>, vector<1x8x8xbf16>
    %115 = vector.shape_cast %114 : vector<1x8x8xbf16> to vector<8x8xbf16>
    %cst_99 = arith.constant dense<0.000000e+00> : vector<100x8xf32>
    %116 = tpu.matmul %113, %115, %cst_99 {dimension_numbers = #tpu.dot_dimension_numbers<[1], [0], [0], [1], [0, 0, 1, 1], [], []>} : vector<100x8xbf16>, vector<8x8xbf16>, vector<100x8xf32> -> vector<100x8xf32>
    %117 = arith.addf %111, %116 : vector<100x8xf32>
    %c42 = arith.constant 42 : index
    %c0_100 = arith.constant 0 : index
    %118 = vector.load %arg13[%c42, %c0_100] : memref<164x8xf32, #tpu.memory_space<vmem>>, vector<100x8xf32>
    %119 = arith.truncf %118 : vector<100x8xf32> to vector<100x8xbf16>
    %c7_101 = arith.constant 7 : index
    %c0_102 = arith.constant 0 : index
    %c0_103 = arith.constant 0 : index
    %120 = vector.load %arg8[%c7_101, %c0_102, %c0_103] : memref<9x8x8xbf16, #tpu.memory_space<vmem>>, vector<1x8x8xbf16>
    %121 = vector.shape_cast %120 : vector<1x8x8xbf16> to vector<8x8xbf16>
    %cst_104 = arith.constant dense<0.000000e+00> : vector<100x8xf32>
    %122 = tpu.matmul %119, %121, %cst_104 {dimension_numbers = #tpu.dot_dimension_numbers<[1], [0], [0], [1], [0, 0, 1, 1], [], []>} : vector<100x8xbf16>, vector<8x8xbf16>, vector<100x8xf32> -> vector<100x8xf32>
    %123 = arith.addf %117, %122 : vector<100x8xf32>
    %c43 = arith.constant 43 : index
    %c0_105 = arith.constant 0 : index
    %124 = vector.load %arg13[%c43, %c0_105] : memref<164x8xf32, #tpu.memory_space<vmem>>, vector<100x8xf32>
    %125 = arith.truncf %124 : vector<100x8xf32> to vector<100x8xbf16>
    %c8_106 = arith.constant 8 : index
    %c0_107 = arith.constant 0 : index
    %c0_108 = arith.constant 0 : index
    %126 = vector.load %arg8[%c8_106, %c0_107, %c0_108] : memref<9x8x8xbf16, #tpu.memory_space<vmem>>, vector<1x8x8xbf16>
    %127 = vector.shape_cast %126 : vector<1x8x8xbf16> to vector<8x8xbf16>
    %cst_109 = arith.constant dense<0.000000e+00> : vector<100x8xf32>
    %128 = tpu.matmul %125, %127, %cst_109 {dimension_numbers = #tpu.dot_dimension_numbers<[1], [0], [0], [1], [0, 0, 1, 1], [], []>} : vector<100x8xbf16>, vector<8x8xbf16>, vector<100x8xf32> -> vector<100x8xf32>
    %129 = arith.addf %123, %128 : vector<100x8xf32>
    %c0_110 = arith.constant 0 : index
    %c0_111 = arith.constant 0 : index
    %130 = vector.load %arg9[%c0_110, %c0_111] : memref<1x8xf32, #tpu.memory_space<vmem>>, vector<1x8xf32>
    %131 = vector.broadcast %130 : vector<1x8xf32> to vector<100x8xf32>
    %132 = arith.addf %129, %131 : vector<100x8xf32>
    %cst_112 = arith.constant 0.000000e+00 : f32
    %133 = vector.broadcast %cst_112 : f32 to vector<100x8xf32>
    %134 = arith.maximumf %132, %133 : vector<100x8xf32>
    %c0_113 = arith.constant 0 : index
    %c21_114 = arith.constant 21 : index
    %c0_115 = arith.constant 0 : index
    %135 = vector.load %arg4[%c0_113, %c21_114, %c0_115] : memref<1x164x4xf32, #tpu.memory_space<vmem>>, vector<1x100x4xf32>
    %136 = vector.shape_cast %135 : vector<1x100x4xf32> to vector<100x4xf32>
    %137 = arith.truncf %136 : vector<100x4xf32> to vector<100x4xbf16>
    %c0_116 = arith.constant 0 : index
    %c0_117 = arith.constant 0 : index
    %138 = vector.load %arg10[%c0_116, %c0_117] : memref<4x8xbf16, #tpu.memory_space<vmem>>, vector<4x8xbf16>
    %cst_118 = arith.constant dense<0.000000e+00> : vector<100x8xf32>
    %139 = tpu.matmul %137, %138, %cst_118 {dimension_numbers = #tpu.dot_dimension_numbers<[1], [0], [0], [1], [0, 0, 1, 1], [], []>} : vector<100x4xbf16>, vector<4x8xbf16>, vector<100x8xf32> -> vector<100x8xf32>
    %c0_119 = arith.constant 0 : index
    %c0_120 = arith.constant 0 : index
    %140 = vector.load %arg11[%c0_119, %c0_120] : memref<1x8xf32, #tpu.memory_space<vmem>>, vector<1x8xf32>
    %141 = vector.broadcast %140 : vector<1x8xf32> to vector<100x8xf32>
    %142 = arith.addf %139, %141 : vector<100x8xf32>
    %143 = arith.addf %134, %142 : vector<100x8xf32>
    %144 = vector.broadcast %0 : vector<100x1xf32> to vector<100x8xf32>
    %145 = arith.mulf %143, %144 : vector<100x8xf32>
    %c0_121 = arith.constant 0 : index
    %c0_122 = arith.constant 0 : index
    %c0_123 = arith.constant 0 : index
    %146 = vector.load %arg12[%c0_121, %c0_122, %c0_123] : memref<1x100x8xf32, #tpu.memory_space<vmem>>, vector<1x100x8xf32>
    %147 = vector.shape_cast %146 : vector<1x100x8xf32> to vector<100x8xf32>
    %148 = vector.shape_cast %145 : vector<100x8xf32> to vector<1x100x8xf32>
    tpu.vector_store %arg12[%c0_121, %c0_122, %c0_123], %148 {strides = array<i32>} : memref<1x100x8xf32, #tpu.memory_space<vmem>>, vector<1x100x8xf32>,
    return
  }
  func.func @transform_0(%arg0: i32) -> (i32, i32, i32) {
    %c0_i32 = arith.constant 0 : i32
    %c0_i32_0 = arith.constant 0 : i32
    %c0_i32_1 = arith.constant 0 : i32
    return %arg0, %c0_i32, %c0_i32_0 : i32, i32, i32
  }
  func.func @transform_1(%arg0: i32) -> (i32, i32, i32) {
    %c0_i32 = arith.constant 0 : i32
    %c0_i32_0 = arith.constant 0 : i32
    %c0_i32_1 = arith.constant 0 : i32
    return %arg0, %c0_i32, %c0_i32_0 : i32, i32, i32
  }
  func.func @transform_2(%arg0: i32) -> (i32, i32, i32) {
    %c0_i32 = arith.constant 0 : i32
    %c0_i32_0 = arith.constant 0 : i32
    %c0_i32_1 = arith.constant 0 : i32
    return %arg0, %c0_i32, %c0_i32_0 : i32, i32, i32
  }
  func.func @transform_3(%arg0: i32) -> (i32, i32, i32) {
    %c0_i32 = arith.constant 0 : i32
    %c0_i32_0 = arith.constant 0 : i32
    %c0_i32_1 = arith.constant 0 : i32
    return %arg0, %c0_i32, %c0_i32_0 : i32, i32, i32
  }
  func.func @transform_4(%arg0: i32) -> (i32, i32) {
    %c0_i32 = arith.constant 0 : i32
    %c0_i32_0 = arith.constant 0 : i32
    %c0_i32_1 = arith.constant 0 : i32
    return %c0_i32, %c0_i32_0 : i32, i32
  }
  func.func @transform_5(%arg0: i32) -> (i32, i32, i32) {
    %c0_i32 = arith.constant 0 : i32
    %c0_i32_0 = arith.constant 0 : i32
    %c0_i32_1 = arith.constant 0 : i32
    %c0_i32_2 = arith.constant 0 : i32
    return %c0_i32, %c0_i32_0, %c0_i32_1 : i32, i32, i32
  }
  func.func @transform_6(%arg0: i32) -> (i32, i32) {
    %c0_i32 = arith.constant 0 : i32
    %c0_i32_0 = arith.constant 0 : i32
    %c0_i32_1 = arith.constant 0 : i32
    return %c0_i32, %c0_i32_0 : i32, i32
  }
  func.func @transform_7(%arg0: i32) -> (i32, i32, i32) {
    %c0_i32 = arith.constant 0 : i32
    %c0_i32_0 = arith.constant 0 : i32
    %c0_i32_1 = arith.constant 0 : i32
    %c0_i32_2 = arith.constant 0 : i32
    return %c0_i32, %c0_i32_0, %c0_i32_1 : i32, i32, i32
  }
  func.func @transform_8(%arg0: i32) -> (i32, i32) {
    %c0_i32 = arith.constant 0 : i32
    %c0_i32_0 = arith.constant 0 : i32
    %c0_i32_1 = arith.constant 0 : i32
    return %c0_i32, %c0_i32_0 : i32, i32
  }
  func.func @transform_9(%arg0: i32) -> (i32, i32) {
    %c0_i32 = arith.constant 0 : i32
    %c0_i32_0 = arith.constant 0 : i32
    %c0_i32_1 = arith.constant 0 : i32
    return %c0_i32, %c0_i32_0 : i32, i32
  }
  func.func @transform_10(%arg0: i32) -> (i32, i32) {
    %c0_i32 = arith.constant 0 : i32
    %c0_i32_0 = arith.constant 0 : i32
    %c0_i32_1 = arith.constant 0 : i32
    return %c0_i32, %c0_i32_0 : i32, i32
  }
  func.func @transform_11(%arg0: i32) -> (i32, i32, i32) {
    %c0_i32 = arith.constant 0 : i32
    %c0_i32_0 = arith.constant 0 : i32
    %c0_i32_1 = arith.constant 0 : i32
    return %arg0, %c0_i32, %c0_i32_0 : i32, i32, i32
  }
}

module attributes {stable_mosaic.version = 11 : i64} {
  func.func @kernel(%arg0: i32, %arg1: memref<1x164x8xf32, #tpu.memory_space<vmem>>, %arg2: memref<100x1xf32, #tpu.memory_space<vmem>>, %arg3: memref<9x8x8xbf16, #tpu.memory_space<vmem>>, %arg4: memref<1x8xf32, #tpu.memory_space<vmem>>, %arg5: memref<9x8x8xbf16, #tpu.memory_space<vmem>>, %arg6: memref<1x8xf32, #tpu.memory_space<vmem>>, %arg7: memref<1x100x8xf32, #tpu.memory_space<vmem>>, %arg8: memref<164x8xf32, #tpu.memory_space<vmem>>) attributes {dimension_semantics = [#tpu.dimension_semantics<parallel>], iteration_bounds = array<i64: 2>, scalar_prefetch = 0 : i64, scratch_operands = 1 : i64, tpu.core_type = #tpu.core_type<tc>, window_params = [{transform_indices = @transform_0, window_bounds = array<i64: 1, 164, 8>}, {pipeline_mode = #tpu.pipeline_mode<synchronous>, transform_indices = @transform_1, window_bounds = array<i64: 100, 1>}, {pipeline_mode = #tpu.pipeline_mode<synchronous>, transform_indices = @transform_2, window_bounds = array<i64: 9, 8, 8>}, {pipeline_mode = #tpu.pipeline_mode<synchronous>, transform_indices = @transform_3, window_bounds = array<i64: 1, 8>}, {pipeline_mode = #tpu.pipeline_mode<synchronous>, transform_indices = @transform_4, window_bounds = array<i64: 9, 8, 8>}, {pipeline_mode = #tpu.pipeline_mode<synchronous>, transform_indices = @transform_5, window_bounds = array<i64: 1, 8>}, {transform_indices = @transform_6, window_bounds = array<i64: 1, 100, 8>}]} {
    %c0 = arith.constant 0 : index
    %c0_0 = arith.constant 0 : index
    %0 = vector.load %arg2[%c0, %c0_0] : memref<100x1xf32, #tpu.memory_space<vmem>>, vector<100x1xf32>
    %cst = arith.constant 0.000000e+00 : f32
    %1 = vector.broadcast %cst : f32 to vector<100x8xf32>
    %c0_1 = arith.constant 0 : index
    %c21 = arith.constant 21 : index
    %c0_2 = arith.constant 0 : index
    %2 = vector.load %arg1[%c0_1, %c21, %c0_2] : memref<1x164x8xf32, #tpu.memory_space<vmem>>, vector<1x100x8xf32>
    %3 = vector.shape_cast %2 : vector<1x100x8xf32> to vector<100x8xf32>
    %4 = arith.truncf %3 : vector<100x8xf32> to vector<100x8xbf16>
    %c0_3 = arith.constant 0 : index
    %c0_4 = arith.constant 0 : index
    %c0_5 = arith.constant 0 : index
    %5 = vector.load %arg3[%c0_3, %c0_4, %c0_5] : memref<9x8x8xbf16, #tpu.memory_space<vmem>>, vector<1x8x8xbf16>
    %6 = vector.shape_cast %5 : vector<1x8x8xbf16> to vector<8x8xbf16>
    %cst_6 = arith.constant dense<0.000000e+00> : vector<100x8xf32>
    %7 = tpu.matmul %4, %6, %cst_6 {dimension_numbers = #tpu.dot_dimension_numbers<[1], [0], [0], [1], [0, 0, 1, 1], [], []>} : vector<100x8xbf16>, vector<8x8xbf16>, vector<100x8xf32> -> vector<100x8xf32>
    %8 = arith.addf %1, %7 : vector<100x8xf32>
    %c0_7 = arith.constant 0 : index
    %c22 = arith.constant 22 : index
    %c0_8 = arith.constant 0 : index
    %9 = vector.load %arg1[%c0_7, %c22, %c0_8] : memref<1x164x8xf32, #tpu.memory_space<vmem>>, vector<1x100x8xf32>
    %10 = vector.shape_cast %9 : vector<1x100x8xf32> to vector<100x8xf32>
    %11 = arith.truncf %10 : vector<100x8xf32> to vector<100x8xbf16>
    %c1 = arith.constant 1 : index
    %c0_9 = arith.constant 0 : index
    %c0_10 = arith.constant 0 : index
    %12 = vector.load %arg3[%c1, %c0_9, %c0_10] : memref<9x8x8xbf16, #tpu.memory_space<vmem>>, vector<1x8x8xbf16>
    %13 = vector.shape_cast %12 : vector<1x8x8xbf16> to vector<8x8xbf16>
    %cst_11 = arith.constant dense<0.000000e+00> : vector<100x8xf32>
    %14 = tpu.matmul %11, %13, %cst_11 {dimension_numbers = #tpu.dot_dimension_numbers<[1], [0], [0], [1], [0, 0, 1, 1], [], []>} : vector<100x8xbf16>, vector<8x8xbf16>, vector<100x8xf32> -> vector<100x8xf32>
    %15 = arith.addf %8, %14 : vector<100x8xf32>
    %c0_12 = arith.constant 0 : index
    %c23 = arith.constant 23 : index
    %c0_13 = arith.constant 0 : index
    %16 = vector.load %arg1[%c0_12, %c23, %c0_13] : memref<1x164x8xf32, #tpu.memory_space<vmem>>, vector<1x100x8xf32>
    %17 = vector.shape_cast %16 : vector<1x100x8xf32> to vector<100x8xf32>
    %18 = arith.truncf %17 : vector<100x8xf32> to vector<100x8xbf16>
    %c2 = arith.constant 2 : index
    %c0_14 = arith.constant 0 : index
    %c0_15 = arith.constant 0 : index
    %19 = vector.load %arg3[%c2, %c0_14, %c0_15] : memref<9x8x8xbf16, #tpu.memory_space<vmem>>, vector<1x8x8xbf16>
    %20 = vector.shape_cast %19 : vector<1x8x8xbf16> to vector<8x8xbf16>
    %cst_16 = arith.constant dense<0.000000e+00> : vector<100x8xf32>
    %21 = tpu.matmul %18, %20, %cst_16 {dimension_numbers = #tpu.dot_dimension_numbers<[1], [0], [0], [1], [0, 0, 1, 1], [], []>} : vector<100x8xbf16>, vector<8x8xbf16>, vector<100x8xf32> -> vector<100x8xf32>
    %22 = arith.addf %15, %21 : vector<100x8xf32>
    %c0_17 = arith.constant 0 : index
    %c31 = arith.constant 31 : index
    %c0_18 = arith.constant 0 : index
    %23 = vector.load %arg1[%c0_17, %c31, %c0_18] : memref<1x164x8xf32, #tpu.memory_space<vmem>>, vector<1x100x8xf32>
    %24 = vector.shape_cast %23 : vector<1x100x8xf32> to vector<100x8xf32>
    %25 = arith.truncf %24 : vector<100x8xf32> to vector<100x8xbf16>
    %c3 = arith.constant 3 : index
    %c0_19 = arith.constant 0 : index
    %c0_20 = arith.constant 0 : index
    %26 = vector.load %arg3[%c3, %c0_19, %c0_20] : memref<9x8x8xbf16, #tpu.memory_space<vmem>>, vector<1x8x8xbf16>
    %27 = vector.shape_cast %26 : vector<1x8x8xbf16> to vector<8x8xbf16>
    %cst_21 = arith.constant dense<0.000000e+00> : vector<100x8xf32>
    %28 = tpu.matmul %25, %27, %cst_21 {dimension_numbers = #tpu.dot_dimension_numbers<[1], [0], [0], [1], [0, 0, 1, 1], [], []>} : vector<100x8xbf16>, vector<8x8xbf16>, vector<100x8xf32> -> vector<100x8xf32>
    %29 = arith.addf %22, %28 : vector<100x8xf32>
    %c0_22 = arith.constant 0 : index
    %c32 = arith.constant 32 : index
    %c0_23 = arith.constant 0 : index
    %30 = vector.load %arg1[%c0_22, %c32, %c0_23] : memref<1x164x8xf32, #tpu.memory_space<vmem>>, vector<1x100x8xf32>
    %31 = vector.shape_cast %30 : vector<1x100x8xf32> to vector<100x8xf32>
    %32 = arith.truncf %31 : vector<100x8xf32> to vector<100x8xbf16>
    %c4 = arith.constant 4 : index
    %c0_24 = arith.constant 0 : index
    %c0_25 = arith.constant 0 : index
    %33 = vector.load %arg3[%c4, %c0_24, %c0_25] : memref<9x8x8xbf16, #tpu.memory_space<vmem>>, vector<1x8x8xbf16>
    %34 = vector.shape_cast %33 : vector<1x8x8xbf16> to vector<8x8xbf16>
    %cst_26 = arith.constant dense<0.000000e+00> : vector<100x8xf32>
    %35 = tpu.matmul %32, %34, %cst_26 {dimension_numbers = #tpu.dot_dimension_numbers<[1], [0], [0], [1], [0, 0, 1, 1], [], []>} : vector<100x8xbf16>, vector<8x8xbf16>, vector<100x8xf32> -> vector<100x8xf32>
    %36 = arith.addf %29, %35 : vector<100x8xf32>
    %c0_27 = arith.constant 0 : index
    %c33 = arith.constant 33 : index
    %c0_28 = arith.constant 0 : index
    %37 = vector.load %arg1[%c0_27, %c33, %c0_28] : memref<1x164x8xf32, #tpu.memory_space<vmem>>, vector<1x100x8xf32>
    %38 = vector.shape_cast %37 : vector<1x100x8xf32> to vector<100x8xf32>
    %39 = arith.truncf %38 : vector<100x8xf32> to vector<100x8xbf16>
    %c5 = arith.constant 5 : index
    %c0_29 = arith.constant 0 : index
    %c0_30 = arith.constant 0 : index
    %40 = vector.load %arg3[%c5, %c0_29, %c0_30] : memref<9x8x8xbf16, #tpu.memory_space<vmem>>, vector<1x8x8xbf16>
    %41 = vector.shape_cast %40 : vector<1x8x8xbf16> to vector<8x8xbf16>
    %cst_31 = arith.constant dense<0.000000e+00> : vector<100x8xf32>
    %42 = tpu.matmul %39, %41, %cst_31 {dimension_numbers = #tpu.dot_dimension_numbers<[1], [0], [0], [1], [0, 0, 1, 1], [], []>} : vector<100x8xbf16>, vector<8x8xbf16>, vector<100x8xf32> -> vector<100x8xf32>
    %43 = arith.addf %36, %42 : vector<100x8xf32>
    %c0_32 = arith.constant 0 : index
    %c41 = arith.constant 41 : index
    %c0_33 = arith.constant 0 : index
    %44 = vector.load %arg1[%c0_32, %c41, %c0_33] : memref<1x164x8xf32, #tpu.memory_space<vmem>>, vector<1x100x8xf32>
    %45 = vector.shape_cast %44 : vector<1x100x8xf32> to vector<100x8xf32>
    %46 = arith.truncf %45 : vector<100x8xf32> to vector<100x8xbf16>
    %c6 = arith.constant 6 : index
    %c0_34 = arith.constant 0 : index
    %c0_35 = arith.constant 0 : index
    %47 = vector.load %arg3[%c6, %c0_34, %c0_35] : memref<9x8x8xbf16, #tpu.memory_space<vmem>>, vector<1x8x8xbf16>
    %48 = vector.shape_cast %47 : vector<1x8x8xbf16> to vector<8x8xbf16>
    %cst_36 = arith.constant dense<0.000000e+00> : vector<100x8xf32>
    %49 = tpu.matmul %46, %48, %cst_36 {dimension_numbers = #tpu.dot_dimension_numbers<[1], [0], [0], [1], [0, 0, 1, 1], [], []>} : vector<100x8xbf16>, vector<8x8xbf16>, vector<100x8xf32> -> vector<100x8xf32>
    %50 = arith.addf %43, %49 : vector<100x8xf32>
    %c0_37 = arith.constant 0 : index
    %c42 = arith.constant 42 : index
    %c0_38 = arith.constant 0 : index
    %51 = vector.load %arg1[%c0_37, %c42, %c0_38] : memref<1x164x8xf32, #tpu.memory_space<vmem>>, vector<1x100x8xf32>
    %52 = vector.shape_cast %51 : vector<1x100x8xf32> to vector<100x8xf32>
    %53 = arith.truncf %52 : vector<100x8xf32> to vector<100x8xbf16>
    %c7 = arith.constant 7 : index
    %c0_39 = arith.constant 0 : index
    %c0_40 = arith.constant 0 : index
    %54 = vector.load %arg3[%c7, %c0_39, %c0_40] : memref<9x8x8xbf16, #tpu.memory_space<vmem>>, vector<1x8x8xbf16>
    %55 = vector.shape_cast %54 : vector<1x8x8xbf16> to vector<8x8xbf16>
    %cst_41 = arith.constant dense<0.000000e+00> : vector<100x8xf32>
    %56 = tpu.matmul %53, %55, %cst_41 {dimension_numbers = #tpu.dot_dimension_numbers<[1], [0], [0], [1], [0, 0, 1, 1], [], []>} : vector<100x8xbf16>, vector<8x8xbf16>, vector<100x8xf32> -> vector<100x8xf32>
    %57 = arith.addf %50, %56 : vector<100x8xf32>
    %c0_42 = arith.constant 0 : index
    %c43 = arith.constant 43 : index
    %c0_43 = arith.constant 0 : index
    %58 = vector.load %arg1[%c0_42, %c43, %c0_43] : memref<1x164x8xf32, #tpu.memory_space<vmem>>, vector<1x100x8xf32>
    %59 = vector.shape_cast %58 : vector<1x100x8xf32> to vector<100x8xf32>
    %60 = arith.truncf %59 : vector<100x8xf32> to vector<100x8xbf16>
    %c8 = arith.constant 8 : index
    %c0_44 = arith.constant 0 : index
    %c0_45 = arith.constant 0 : index
    %61 = vector.load %arg3[%c8, %c0_44, %c0_45] : memref<9x8x8xbf16, #tpu.memory_space<vmem>>, vector<1x8x8xbf16>
    %62 = vector.shape_cast %61 : vector<1x8x8xbf16> to vector<8x8xbf16>
    %cst_46 = arith.constant dense<0.000000e+00> : vector<100x8xf32>
    %63 = tpu.matmul %60, %62, %cst_46 {dimension_numbers = #tpu.dot_dimension_numbers<[1], [0], [0], [1], [0, 0, 1, 1], [], []>} : vector<100x8xbf16>, vector<8x8xbf16>, vector<100x8xf32> -> vector<100x8xf32>
    %64 = arith.addf %57, %63 : vector<100x8xf32>
    %c0_47 = arith.constant 0 : index
    %c0_48 = arith.constant 0 : index
    %65 = vector.load %arg4[%c0_47, %c0_48] : memref<1x8xf32, #tpu.memory_space<vmem>>, vector<1x8xf32>
    %66 = vector.broadcast %65 : vector<1x8xf32> to vector<100x8xf32>
    %67 = arith.addf %64, %66 : vector<100x8xf32>
    %cst_49 = arith.constant 0.000000e+00 : f32
    %68 = vector.broadcast %cst_49 : f32 to vector<100x8xf32>
    %69 = arith.maximumf %67, %68 : vector<100x8xf32>
    %cst_50 = arith.constant 0.000000e+00 : f32
    %70 = vector.broadcast %cst_50 : f32 to vector<164x8xf32>
    %c0_51 = arith.constant 0 : index
    %c0_52 = arith.constant 0 : index
    %71 = vector.load %arg8[%c0_51, %c0_52] : memref<164x8xf32, #tpu.memory_space<vmem>>, vector<164x8xf32>
    tpu.vector_store %arg8[%c0_51, %c0_52], %70 {strides = array<i32>} : memref<164x8xf32, #tpu.memory_space<vmem>>, vector<164x8xf32>,
    %72 = vector.broadcast %0 : vector<100x1xf32> to vector<100x8xf32>
    %73 = arith.mulf %69, %72 : vector<100x8xf32>
    %c32_53 = arith.constant 32 : index
    %c0_54 = arith.constant 0 : index
    %74 = vector.load %arg8[%c32_53, %c0_54] : memref<164x8xf32, #tpu.memory_space<vmem>>, vector<100x8xf32>
    tpu.vector_store %arg8[%c32_53, %c0_54], %73 {strides = array<i32>} : memref<164x8xf32, #tpu.memory_space<vmem>>, vector<100x8xf32>,
    %cst_55 = arith.constant 0.000000e+00 : f32
    %75 = vector.broadcast %cst_55 : f32 to vector<100x8xf32>
    %c21_56 = arith.constant 21 : index
    %c0_57 = arith.constant 0 : index
    %76 = vector.load %arg8[%c21_56, %c0_57] : memref<164x8xf32, #tpu.memory_space<vmem>>, vector<100x8xf32>
    %77 = arith.truncf %76 : vector<100x8xf32> to vector<100x8xbf16>
    %c0_58 = arith.constant 0 : index
    %c0_59 = arith.constant 0 : index
    %c0_60 = arith.constant 0 : index
    %78 = vector.load %arg5[%c0_58, %c0_59, %c0_60] : memref<9x8x8xbf16, #tpu.memory_space<vmem>>, vector<1x8x8xbf16>
    %79 = vector.shape_cast %78 : vector<1x8x8xbf16> to vector<8x8xbf16>
    %cst_61 = arith.constant dense<0.000000e+00> : vector<100x8xf32>
    %80 = tpu.matmul %77, %79, %cst_61 {dimension_numbers = #tpu.dot_dimension_numbers<[1], [0], [0], [1], [0, 0, 1, 1], [], []>} : vector<100x8xbf16>, vector<8x8xbf16>, vector<100x8xf32> -> vector<100x8xf32>
    %81 = arith.addf %75, %80 : vector<100x8xf32>
    %c22_62 = arith.constant 22 : index
    %c0_63 = arith.constant 0 : index
    %82 = vector.load %arg8[%c22_62, %c0_63] : memref<164x8xf32, #tpu.memory_space<vmem>>, vector<100x8xf32>
    %83 = arith.truncf %82 : vector<100x8xf32> to vector<100x8xbf16>
    %c1_64 = arith.constant 1 : index
    %c0_65 = arith.constant 0 : index
    %c0_66 = arith.constant 0 : index
    %84 = vector.load %arg5[%c1_64, %c0_65, %c0_66] : memref<9x8x8xbf16, #tpu.memory_space<vmem>>, vector<1x8x8xbf16>
    %85 = vector.shape_cast %84 : vector<1x8x8xbf16> to vector<8x8xbf16>
    %cst_67 = arith.constant dense<0.000000e+00> : vector<100x8xf32>
    %86 = tpu.matmul %83, %85, %cst_67 {dimension_numbers = #tpu.dot_dimension_numbers<[1], [0], [0], [1], [0, 0, 1, 1], [], []>} : vector<100x8xbf16>, vector<8x8xbf16>, vector<100x8xf32> -> vector<100x8xf32>
    %87 = arith.addf %81, %86 : vector<100x8xf32>
    %c23_68 = arith.constant 23 : index
    %c0_69 = arith.constant 0 : index
    %88 = vector.load %arg8[%c23_68, %c0_69] : memref<164x8xf32, #tpu.memory_space<vmem>>, vector<100x8xf32>
    %89 = arith.truncf %88 : vector<100x8xf32> to vector<100x8xbf16>
    %c2_70 = arith.constant 2 : index
    %c0_71 = arith.constant 0 : index
    %c0_72 = arith.constant 0 : index
    %90 = vector.load %arg5[%c2_70, %c0_71, %c0_72] : memref<9x8x8xbf16, #tpu.memory_space<vmem>>, vector<1x8x8xbf16>
    %91 = vector.shape_cast %90 : vector<1x8x8xbf16> to vector<8x8xbf16>
    %cst_73 = arith.constant dense<0.000000e+00> : vector<100x8xf32>
    %92 = tpu.matmul %89, %91, %cst_73 {dimension_numbers = #tpu.dot_dimension_numbers<[1], [0], [0], [1], [0, 0, 1, 1], [], []>} : vector<100x8xbf16>, vector<8x8xbf16>, vector<100x8xf32> -> vector<100x8xf32>
    %93 = arith.addf %87, %92 : vector<100x8xf32>
    %c31_74 = arith.constant 31 : index
    %c0_75 = arith.constant 0 : index
    %94 = vector.load %arg8[%c31_74, %c0_75] : memref<164x8xf32, #tpu.memory_space<vmem>>, vector<100x8xf32>
    %95 = arith.truncf %94 : vector<100x8xf32> to vector<100x8xbf16>
    %c3_76 = arith.constant 3 : index
    %c0_77 = arith.constant 0 : index
    %c0_78 = arith.constant 0 : index
    %96 = vector.load %arg5[%c3_76, %c0_77, %c0_78] : memref<9x8x8xbf16, #tpu.memory_space<vmem>>, vector<1x8x8xbf16>
    %97 = vector.shape_cast %96 : vector<1x8x8xbf16> to vector<8x8xbf16>
    %cst_79 = arith.constant dense<0.000000e+00> : vector<100x8xf32>
    %98 = tpu.matmul %95, %97, %cst_79 {dimension_numbers = #tpu.dot_dimension_numbers<[1], [0], [0], [1], [0, 0, 1, 1], [], []>} : vector<100x8xbf16>, vector<8x8xbf16>, vector<100x8xf32> -> vector<100x8xf32>
    %99 = arith.addf %93, %98 : vector<100x8xf32>
    %c32_80 = arith.constant 32 : index
    %c0_81 = arith.constant 0 : index
    %100 = vector.load %arg8[%c32_80, %c0_81] : memref<164x8xf32, #tpu.memory_space<vmem>>, vector<100x8xf32>
    %101 = arith.truncf %100 : vector<100x8xf32> to vector<100x8xbf16>
    %c4_82 = arith.constant 4 : index
    %c0_83 = arith.constant 0 : index
    %c0_84 = arith.constant 0 : index
    %102 = vector.load %arg5[%c4_82, %c0_83, %c0_84] : memref<9x8x8xbf16, #tpu.memory_space<vmem>>, vector<1x8x8xbf16>
    %103 = vector.shape_cast %102 : vector<1x8x8xbf16> to vector<8x8xbf16>
    %cst_85 = arith.constant dense<0.000000e+00> : vector<100x8xf32>
    %104 = tpu.matmul %101, %103, %cst_85 {dimension_numbers = #tpu.dot_dimension_numbers<[1], [0], [0], [1], [0, 0, 1, 1], [], []>} : vector<100x8xbf16>, vector<8x8xbf16>, vector<100x8xf32> -> vector<100x8xf32>
    %105 = arith.addf %99, %104 : vector<100x8xf32>
    %c33_86 = arith.constant 33 : index
    %c0_87 = arith.constant 0 : index
    %106 = vector.load %arg8[%c33_86, %c0_87] : memref<164x8xf32, #tpu.memory_space<vmem>>, vector<100x8xf32>
    %107 = arith.truncf %106 : vector<100x8xf32> to vector<100x8xbf16>
    %c5_88 = arith.constant 5 : index
    %c0_89 = arith.constant 0 : index
    %c0_90 = arith.constant 0 : index
    %108 = vector.load %arg5[%c5_88, %c0_89, %c0_90] : memref<9x8x8xbf16, #tpu.memory_space<vmem>>, vector<1x8x8xbf16>
    %109 = vector.shape_cast %108 : vector<1x8x8xbf16> to vector<8x8xbf16>
    %cst_91 = arith.constant dense<0.000000e+00> : vector<100x8xf32>
    %110 = tpu.matmul %107, %109, %cst_91 {dimension_numbers = #tpu.dot_dimension_numbers<[1], [0], [0], [1], [0, 0, 1, 1], [], []>} : vector<100x8xbf16>, vector<8x8xbf16>, vector<100x8xf32> -> vector<100x8xf32>
    %111 = arith.addf %105, %110 : vector<100x8xf32>
    %c41_92 = arith.constant 41 : index
    %c0_93 = arith.constant 0 : index
    %112 = vector.load %arg8[%c41_92, %c0_93] : memref<164x8xf32, #tpu.memory_space<vmem>>, vector<100x8xf32>
    %113 = arith.truncf %112 : vector<100x8xf32> to vector<100x8xbf16>
    %c6_94 = arith.constant 6 : index
    %c0_95 = arith.constant 0 : index
    %c0_96 = arith.constant 0 : index
    %114 = vector.load %arg5[%c6_94, %c0_95, %c0_96] : memref<9x8x8xbf16, #tpu.memory_space<vmem>>, vector<1x8x8xbf16>
    %115 = vector.shape_cast %114 : vector<1x8x8xbf16> to vector<8x8xbf16>
    %cst_97 = arith.constant dense<0.000000e+00> : vector<100x8xf32>
    %116 = tpu.matmul %113, %115, %cst_97 {dimension_numbers = #tpu.dot_dimension_numbers<[1], [0], [0], [1], [0, 0, 1, 1], [], []>} : vector<100x8xbf16>, vector<8x8xbf16>, vector<100x8xf32> -> vector<100x8xf32>
    %117 = arith.addf %111, %116 : vector<100x8xf32>
    %c42_98 = arith.constant 42 : index
    %c0_99 = arith.constant 0 : index
    %118 = vector.load %arg8[%c42_98, %c0_99] : memref<164x8xf32, #tpu.memory_space<vmem>>, vector<100x8xf32>
    %119 = arith.truncf %118 : vector<100x8xf32> to vector<100x8xbf16>
    %c7_100 = arith.constant 7 : index
    %c0_101 = arith.constant 0 : index
    %c0_102 = arith.constant 0 : index
    %120 = vector.load %arg5[%c7_100, %c0_101, %c0_102] : memref<9x8x8xbf16, #tpu.memory_space<vmem>>, vector<1x8x8xbf16>
    %121 = vector.shape_cast %120 : vector<1x8x8xbf16> to vector<8x8xbf16>
    %cst_103 = arith.constant dense<0.000000e+00> : vector<100x8xf32>
    %122 = tpu.matmul %119, %121, %cst_103 {dimension_numbers = #tpu.dot_dimension_numbers<[1], [0], [0], [1], [0, 0, 1, 1], [], []>} : vector<100x8xbf16>, vector<8x8xbf16>, vector<100x8xf32> -> vector<100x8xf32>
    %123 = arith.addf %117, %122 : vector<100x8xf32>
    %c43_104 = arith.constant 43 : index
    %c0_105 = arith.constant 0 : index
    %124 = vector.load %arg8[%c43_104, %c0_105] : memref<164x8xf32, #tpu.memory_space<vmem>>, vector<100x8xf32>
    %125 = arith.truncf %124 : vector<100x8xf32> to vector<100x8xbf16>
    %c8_106 = arith.constant 8 : index
    %c0_107 = arith.constant 0 : index
    %c0_108 = arith.constant 0 : index
    %126 = vector.load %arg5[%c8_106, %c0_107, %c0_108] : memref<9x8x8xbf16, #tpu.memory_space<vmem>>, vector<1x8x8xbf16>
    %127 = vector.shape_cast %126 : vector<1x8x8xbf16> to vector<8x8xbf16>
    %cst_109 = arith.constant dense<0.000000e+00> : vector<100x8xf32>
    %128 = tpu.matmul %125, %127, %cst_109 {dimension_numbers = #tpu.dot_dimension_numbers<[1], [0], [0], [1], [0, 0, 1, 1], [], []>} : vector<100x8xbf16>, vector<8x8xbf16>, vector<100x8xf32> -> vector<100x8xf32>
    %129 = arith.addf %123, %128 : vector<100x8xf32>
    %c0_110 = arith.constant 0 : index
    %c0_111 = arith.constant 0 : index
    %130 = vector.load %arg6[%c0_110, %c0_111] : memref<1x8xf32, #tpu.memory_space<vmem>>, vector<1x8xf32>
    %131 = vector.broadcast %130 : vector<1x8xf32> to vector<100x8xf32>
    %132 = arith.addf %129, %131 : vector<100x8xf32>
    %cst_112 = arith.constant 0.000000e+00 : f32
    %133 = vector.broadcast %cst_112 : f32 to vector<100x8xf32>
    %134 = arith.maximumf %132, %133 : vector<100x8xf32>
    %c0_113 = arith.constant 0 : index
    %c32_114 = arith.constant 32 : index
    %c0_115 = arith.constant 0 : index
    %135 = vector.load %arg1[%c0_113, %c32_114, %c0_115] : memref<1x164x8xf32, #tpu.memory_space<vmem>>, vector<1x100x8xf32>
    %136 = vector.shape_cast %135 : vector<1x100x8xf32> to vector<100x8xf32>
    %137 = arith.addf %134, %136 : vector<100x8xf32>
    %138 = vector.broadcast %0 : vector<100x1xf32> to vector<100x8xf32>
    %139 = arith.mulf %137, %138 : vector<100x8xf32>
    %c0_116 = arith.constant 0 : index
    %c0_117 = arith.constant 0 : index
    %c0_118 = arith.constant 0 : index
    %140 = vector.load %arg7[%c0_116, %c0_117, %c0_118] : memref<1x100x8xf32, #tpu.memory_space<vmem>>, vector<1x100x8xf32>
    %141 = vector.shape_cast %140 : vector<1x100x8xf32> to vector<100x8xf32>
    %142 = vector.shape_cast %139 : vector<100x8xf32> to vector<1x100x8xf32>
    tpu.vector_store %arg7[%c0_116, %c0_117, %c0_118], %142 {strides = array<i32>} : memref<1x100x8xf32, #tpu.memory_space<vmem>>, vector<1x100x8xf32>,
    return
  }
  func.func @transform_0(%arg0: i32) -> (i32, i32, i32) {
    %c0_i32 = arith.constant 0 : i32
    %c0_i32_0 = arith.constant 0 : i32
    %c0_i32_1 = arith.constant 0 : i32
    return %arg0, %c0_i32, %c0_i32_0 : i32, i32, i32
  }
  func.func @transform_1(%arg0: i32) -> (i32, i32) {
    %c0_i32 = arith.constant 0 : i32
    %c0_i32_0 = arith.constant 0 : i32
    %c0_i32_1 = arith.constant 0 : i32
    return %c0_i32, %c0_i32_0 : i32, i32
  }
  func.func @transform_2(%arg0: i32) -> (i32, i32, i32) {
    %c0_i32 = arith.constant 0 : i32
    %c0_i32_0 = arith.constant 0 : i32
    %c0_i32_1 = arith.constant 0 : i32
    %c0_i32_2 = arith.constant 0 : i32
    return %c0_i32, %c0_i32_0, %c0_i32_1 : i32, i32, i32
  }
  func.func @transform_3(%arg0: i32) -> (i32, i32) {
    %c0_i32 = arith.constant 0 : i32
    %c0_i32_0 = arith.constant 0 : i32
    %c0_i32_1 = arith.constant 0 : i32
    return %c0_i32, %c0_i32_0 : i32, i32
  }
  func.func @transform_4(%arg0: i32) -> (i32, i32, i32) {
    %c0_i32 = arith.constant 0 : i32
    %c0_i32_0 = arith.constant 0 : i32
    %c0_i32_1 = arith.constant 0 : i32
    %c0_i32_2 = arith.constant 0 : i32
    return %c0_i32, %c0_i32_0, %c0_i32_1 : i32, i32, i32
  }
  func.func @transform_5(%arg0: i32) -> (i32, i32) {
    %c0_i32 = arith.constant 0 : i32
    %c0_i32_0 = arith.constant 0 : i32
    %c0_i32_1 = arith.constant 0 : i32
    return %c0_i32, %c0_i32_0 : i32, i32
  }
  func.func @transform_6(%arg0: i32) -> (i32, i32, i32) {
    %c0_i32 = arith.constant 0 : i32
    %c0_i32_0 = arith.constant 0 : i32
    %c0_i32_1 = arith.constant 0 : i32
    return %arg0, %c0_i32, %c0_i32_0 : i32, i32, i32
  }
}

</mosaic_0001>

<llo_original>
// kernel: residual_block_forward.2
$region0: #{residual_block_forward.2}
  #allocation0 [shape = 'u32[]', space=smem, size = 0x4, offset = 0x4, fixed_abs, tag = 'smem constant byte address 0x4 - core index']
  #allocation1 [shape = 'u32[144,128]{1,0:T(1,128)}', space=vmem, size = 0x12000, scoped, tag = 'internal scratch']
  #allocation2 [shape = 'f32[164,8]{1,0:T(8,128)}', space=vmem, size = 0x15000, scoped, tag = 'scratch operand']
  %s0 = inlined_call_operand.vmem [shape: f32[2,164,4], index: 0, kind: input, shape index: {}]
  %s1 = inlined_call_operand.vmem [shape: f32[2,164,4], index: 1, kind: input, shape index: {}]
  %s2 = inlined_call_operand.vmem [shape: f32[2,164,4], index: 2, kind: input, shape index: {}]
  %s3 = inlined_call_operand.vmem [shape: f32[2,164,4], index: 3, kind: input, shape index: {}]
  %s4 = inlined_call_operand.vmem [shape: f32[100,1], index: 4, kind: input, shape index: {}]
  %s5 = inlined_call_operand.vmem [shape: bf16[9,4,8], index: 5, kind: input, shape index: {}]
  %s6 = inlined_call_operand.vmem [shape: f32[1,8], index: 6, kind: input, shape index: {}]
  %s7 = inlined_call_operand.vmem [shape: bf16[9,8,8], index: 7, kind: input, shape index: {}]
  %s8 = inlined_call_operand.vmem [shape: f32[1,8], index: 8, kind: input, shape index: {}]
  %s9 = inlined_call_operand.vmem [shape: bf16[4,8], index: 9, kind: input, shape index: {}]
  %s10 = inlined_call_operand.vmem [shape: f32[1,8], index: 10, kind: input, shape index: {}]
  %s11 = inlined_call_operand.vmem [shape: f32[2,100,8], index: 11, kind: output, shape index: {}]
  %s12 = sld [smem:[#allocation0]]
  $region77: #{residual_block_forward.2} parent=0
    _
  %s14 = ssub.s32 1, %s12
  %s15 = scalar_select 0, %s14, %s12
  loop: start=0, step=1, limit=4
  $region2: #{residual_block_forward.2} parent=0 // loop_pre_header
    _
  $region3: #{residual_block_forward.2} parent=0 // loop_header
    %s17 = sphi 0, %s21
    %p18 = scmp.ge.s32.totalorder %s17, 4
    %s27 = sphi 0, %s29
    %s30 = sphi 0, %s27
    %s31 = sphi 0, %s30
    %s47 = sphi 0, %s31
    %s53 = sphi 0, %s55
    %s56 = sphi 0, %s53
    %s57 = sphi 0, %s56
    %s73 = sphi 0, %s57
    %s79 = sphi 0, %s81
    %s82 = sphi 0, %s79
    %s83 = sphi 0, %s82
    %s99 = sphi 0, %s83
    %s105 = sphi 0, %s107
    %s108 = sphi 0, %s105
    %s109 = sphi 0, %s108
    %s125 = sphi 0, %s109
    %s129 = sphi 0, %s129
    %s131 = sphi 0, %s129
    %s132 = sphi 0, %s131
    %s146 = sphi 0, %s132
    %s150 = sphi 0, %s150
    %s152 = sphi 0, %s150
    %s153 = sphi 0, %s152
    %s167 = sphi 0, %s153
    %s171 = sphi 0, %s171
    %s173 = sphi 0, %s171
    %s174 = sphi 0, %s173
    %s188 = sphi 0, %s174
    %s192 = sphi 0, %s192
    %s194 = sphi 0, %s192
    %s195 = sphi 0, %s194
    %s209 = sphi 0, %s195
    %s213 = sphi 0, %s213
    %s215 = sphi 0, %s213
    %s216 = sphi 0, %s215
    %s230 = sphi 0, %s216
    %s234 = sphi 0, %s234
    %s236 = sphi 0, %s234
    %s237 = sphi 0, %s236
    %s251 = sphi 0, %s237
    %s255 = sphi 0, %s255
    %s257 = sphi 0, %s255
    %s258 = sphi 0, %s257
    %s272 = sphi 0, %s258
    %s278 = sphi 0, %s280
    %s281 = sphi 0, %s278
    %s282 = sphi 0, %s281
    %s298 = sphi 0, %s282
  $region4: #{residual_block_forward.2} parent=0 // loop_header_branch
    %20 = sbr.rel (%p18) target = $region8
  $region5: #{residual_block_forward.2} parent=0 // loop_body
    %s22 = ssub.s32 %s17, 1
    %s23 = ssub.s32 %s17, 2
    %s24 = sadd.s32 %s17, 1
    %s25 = ssub.s32 %s17, %s24
    %p26 = scmp.eq.s32.totalorder %s25, 0
    %s28 = sadd.s32 %s27, 1
    %s29 = scalar_select %p26, %s27, %s28
    %p32 = pneg %p26
    %p33 = scmp.eq.s32.totalorder %s17, 1
    %p34 = por %p32, %p33
    %p35 = scmp.ne.s32.totalorder %s27, %s30
    %p36 = scmp.eq.s32.totalorder %s17, 0
    %p37 = por %p35, %p36
    %p38 = scmp.ne.s32.totalorder %s27, %s30
    %p39 = scmp.eq.s32.totalorder %s22, 1
    %p40 = por %p38, %p39
    %p41 = scmp.ne.s32.totalorder %s30, %s31
    %p42 = scmp.eq.s32.totalorder %s22, 0
    %p43 = por %p41, %p42
    %p44 = scmp.ne.s32.totalorder %s30, %s31
    %p45 = scmp.eq.s32.totalorder %s23, 1
    %p46 = por %p44, %p45
    %p48 = scmp.ne.s32.totalorder %s31, %s47
    %p49 = scmp.eq.s32.totalorder %s23, 0
    %p50 = por %p48, %p49
    %s51 = ssub.s32 %s17, %s24
    %p52 = scmp.eq.s32.totalorder %s51, 0
    %s54 = sadd.s32 %s53, 1
    %s55 = scalar_select %p52, %s53, %s54
    %p58 = pneg %p52
    %p59 = scmp.eq.s32.totalorder %s17, 1
    %p60 = por %p58, %p59
    %p61 = scmp.ne.s32.totalorder %s53, %s56
    %p62 = scmp.eq.s32.totalorder %s17, 0
    %p63 = por %p61, %p62
    %p64 = scmp.ne.s32.totalorder %s53, %s56
    %p65 = scmp.eq.s32.totalorder %s22, 1
    %p66 = por %p64, %p65
    %p67 = scmp.ne.s32.totalorder %s56, %s57
    %p68 = scmp.eq.s32.totalorder %s22, 0
    %p69 = por %p67, %p68
    %p70 = scmp.ne.s32.totalorder %s56, %s57
    %p71 = scmp.eq.s32.totalorder %s23, 1
    %p72 = por %p70, %p71
    %p74 = scmp.ne.s32.totalorder %s57, %s73
    %p75 = scmp.eq.s32.totalorder %s23, 0
    %p76 = por %p74, %p75
    %s77 = ssub.s32 %s17, %s24
    %p78 = scmp.eq.s32.totalorder %s77, 0
    %s80 = sadd.s32 %s79, 1
    %s81 = scalar_select %p78, %s79, %s80
    %p84 = pneg %p78
    %p85 = scmp.eq.s32.totalorder %s17, 1
    %p86 = por %p84, %p85
    %p87 = scmp.ne.s32.totalorder %s79, %s82
    %p88 = scmp.eq.s32.totalorder %s17, 0
    %p89 = por %p87, %p88
    %p90 = scmp.ne.s32.totalorder %s79, %s82
    %p91 = scmp.eq.s32.totalorder %s22, 1
    %p92 = por %p90, %p91
    %p93 = scmp.ne.s32.totalorder %s82, %s83
    %p94 = scmp.eq.s32.totalorder %s22, 0
    %p95 = por %p93, %p94
    %p96 = scmp.ne.s32.totalorder %s82, %s83
    %p97 = scmp.eq.s32.totalorder %s23, 1
    %p98 = por %p96, %p97
    %p100 = scmp.ne.s32.totalorder %s83, %s99
    %p101 = scmp.eq.s32.totalorder %s23, 0
    %p102 = por %p100, %p101
    %s103 = ssub.s32 %s17, %s24
    %p104 = scmp.eq.s32.totalorder %s103, 0
    %s106 = sadd.s32 %s105, 1
    %s107 = scalar_select %p104, %s105, %s106
    %p110 = pneg %p104
    %p111 = scmp.eq.s32.totalorder %s17, 1
    %p112 = por %p110, %p111
    %p113 = scmp.ne.s32.totalorder %s105, %s108
    %p114 = scmp.eq.s32.totalorder %s17, 0
    %p115 = por %p113, %p114
    %p116 = scmp.ne.s32.totalorder %s105, %s108
    %p117 = scmp.eq.s32.totalorder %s22, 1
    %p118 = por %p116, %p117
    %p119 = scmp.ne.s32.totalorder %s108, %s109
    %p120 = scmp.eq.s32.totalorder %s22, 0
    %p121 = por %p119, %p120
    %p122 = scmp.ne.s32.totalorder %s108, %s109
    %p123 = scmp.eq.s32.totalorder %s23, 1
    %p124 = por %p122, %p123
    %p126 = scmp.ne.s32.totalorder %s109, %s125
    %p127 = scmp.eq.s32.totalorder %s23, 0
    %p128 = por %p126, %p127
    %s130 = sadd.s32 %s129, 1
    %p133 = scmp.eq.s32.totalorder %s17, 1
    %p134 = scmp.ne.s32.totalorder %s129, %s131
    %p135 = scmp.eq.s32.totalorder %s17, 0
    %p136 = por %p134, %p135
    %p137 = scmp.ne.s32.totalorder %s129, %s131
    %p138 = scmp.eq.s32.totalorder %s22, 1
    %p139 = por %p137, %p138
    %p140 = scmp.ne.s32.totalorder %s131, %s132
    %p141 = scmp.eq.s32.totalorder %s22, 0
    %p142 = por %p140, %p141
    %p143 = scmp.ne.s32.totalorder %s131, %s132
    %p144 = scmp.eq.s32.totalorder %s23, 1
    %p145 = por %p143, %p144
    %p147 = scmp.ne.s32.totalorder %s132, %s146
    %p148 = scmp.eq.s32.totalorder %s23, 0
    %p149 = por %p147, %p148
    %s151 = sadd.s32 %s150, 1
    %p154 = scmp.eq.s32.totalorder %s17, 1
    %p155 = scmp.ne.s32.totalorder %s150, %s152
    %p156 = scmp.eq.s32.totalorder %s17, 0
    %p157 = por %p155, %p156
    %p158 = scmp.ne.s32.totalorder %s150, %s152
    %p159 = scmp.eq.s32.totalorder %s22, 1
    %p160 = por %p158, %p159
    %p161 = scmp.ne.s32.totalorder %s152, %s153
    %p162 = scmp.eq.s32.totalorder %s22, 0
    %p163 = por %p161, %p162
    %p164 = scmp.ne.s32.totalorder %s152, %s153
    %p165 = scmp.eq.s32.totalorder %s23, 1
    %p166 = por %p164, %p165
    %p168 = scmp.ne.s32.totalorder %s153, %s167
    %p169 = scmp.eq.s32.totalorder %s23, 0
    %p170 = por %p168, %p169
    %s172 = sadd.s32 %s171, 1
    %p175 = scmp.eq.s32.totalorder %s17, 1
    %p176 = scmp.ne.s32.totalorder %s171, %s173
    %p177 = scmp.eq.s32.totalorder %s17, 0
    %p178 = por %p176, %p177
    %p179 = scmp.ne.s32.totalorder %s171, %s173
    %p180 = scmp.eq.s32.totalorder %s22, 1
    %p181 = por %p179, %p180
    %p182 = scmp.ne.s32.totalorder %s173, %s174
    %p183 = scmp.eq.s32.totalorder %s22, 0
    %p184 = por %p182, %p183
    %p185 = scmp.ne.s32.totalorder %s173, %s174
    %p186 = scmp.eq.s32.totalorder %s23, 1
    %p187 = por %p185, %p186
    %p189 = scmp.ne.s32.totalorder %s174, %s188
    %p190 = scmp.eq.s32.totalorder %s23, 0
    %p191 = por %p189, %p190
    %s193 = sadd.s32 %s192, 1
    %p196 = scmp.eq.s32.totalorder %s17, 1
    %p197 = scmp.ne.s32.totalorder %s192, %s194
    %p198 = scmp.eq.s32.totalorder %s17, 0
    %p199 = por %p197, %p198
    %p200 = scmp.ne.s32.totalorder %s192, %s194
    %p201 = scmp.eq.s32.totalorder %s22, 1
    %p202 = por %p200, %p201
    %p203 = scmp.ne.s32.totalorder %s194, %s195
    %p204 = scmp.eq.s32.totalorder %s22, 0
    %p205 = por %p203, %p204
    %p206 = scmp.ne.s32.totalorder %s194, %s195
    %p207 = scmp.eq.s32.totalorder %s23, 1
    %p208 = por %p206, %p207
    %p210 = scmp.ne.s32.totalorder %s195, %s209
    %p211 = scmp.eq.s32.totalorder %s23, 0
    %p212 = por %p210, %p211
    %s214 = sadd.s32 %s213, 1
    %p217 = scmp.eq.s32.totalorder %s17, 1
    %p218 = scmp.ne.s32.totalorder %s213, %s215
    %p219 = scmp.eq.s32.totalorder %s17, 0
    %p220 = por %p218, %p219
    %p221 = scmp.ne.s32.totalorder %s213, %s215
    %p222 = scmp.eq.s32.totalorder %s22, 1
    %p223 = por %p221, %p222
    %p224 = scmp.ne.s32.totalorder %s215, %s216
    %p225 = scmp.eq.s32.totalorder %s22, 0
    %p226 = por %p224, %p225
    %p227 = scmp.ne.s32.totalorder %s215, %s216
    %p228 = scmp.eq.s32.totalorder %s23, 1
    %p229 = por %p227, %p228
    %p231 = scmp.ne.s32.totalorder %s216, %s230
    %p232 = scmp.eq.s32.totalorder %s23, 0
    %p233 = por %p231, %p232
    %s235 = sadd.s32 %s234, 1
    %p238 = scmp.eq.s32.totalorder %s17, 1
    %p239 = scmp.ne.s32.totalorder %s234, %s236
    %p240 = scmp.eq.s32.totalorder %s17, 0
    %p241 = por %p239, %p240
    %p242 = scmp.ne.s32.totalorder %s234, %s236
    %p243 = scmp.eq.s32.totalorder %s22, 1
    %p244 = por %p242, %p243
    %p245 = scmp.ne.s32.totalorder %s236, %s237
    %p246 = scmp.eq.s32.totalorder %s22, 0
    %p247 = por %p245, %p246
    %p248 = scmp.ne.s32.totalorder %s236, %s237
    %p249 = scmp.eq.s32.totalorder %s23, 1
    %p250 = por %p248, %p249
    %p252 = scmp.ne.s32.totalorder %s237, %s251
    %p253 = scmp.eq.s32.totalorder %s23, 0
    %p254 = por %p252, %p253
    %s256 = sadd.s32 %s255, 1
    %p259 = scmp.eq.s32.totalorder %s17, 1
    %p260 = scmp.ne.s32.totalorder %s255, %s257
    %p261 = scmp.eq.s32.totalorder %s17, 0
    %p262 = por %p260, %p261
    %p263 = scmp.ne.s32.totalorder %s255, %s257
    %p264 = scmp.eq.s32.totalorder %s22, 1
    %p265 = por %p263, %p264
    %p266 = scmp.ne.s32.totalorder %s257, %s258
    %p267 = scmp.eq.s32.totalorder %s22, 0
    %p268 = por %p266, %p267
    %p269 = scmp.ne.s32.totalorder %s257, %s258
    %p270 = scmp.eq.s32.totalorder %s23, 1
    %p271 = por %p269, %p270
    %p273 = scmp.ne.s32.totalorder %s258, %s272
    %p274 = scmp.eq.s32.totalorder %s23, 0
    %p275 = por %p273, %p274
    %s276 = ssub.s32 %s17, %s24
    %p277 = scmp.eq.s32.totalorder %s276, 0
    %s279 = sadd.s32 %s278, 1
    %s280 = scalar_select %p277, %s278, %s279
    %p283 = pneg %p277
    %p284 = scmp.eq.s32.totalorder %s17, 1
    %p285 = por %p283, %p284
    %p286 = scmp.ne.s32.totalorder %s278, %s281
    %p287 = scmp.eq.s32.totalorder %s17, 0
    %p288 = por %p286, %p287
    %p289 = scmp.ne.s32.totalorder %s278, %s281
    %p290 = scmp.eq.s32.totalorder %s22, 1
    %p291 = por %p289, %p290
    %p292 = scmp.ne.s32.totalorder %s281, %s282
    %p293 = scmp.eq.s32.totalorder %s22, 0
    %p294 = por %p292, %p293
    %p295 = scmp.ne.s32.totalorder %s281, %s282
    %p296 = scmp.eq.s32.totalorder %s23, 1
    %p297 = por %p295, %p296
    %p299 = scmp.ne.s32.totalorder %s282, %s298
    %p300 = scmp.eq.s32.totalorder %s23, 0
    %p301 = por %p299, %p300
    %p302 = scmp.le.s32.totalorder 1, %s17
    %p303 = scmp.lt.s32.totalorder %s17, 3
    %p304 = pnand %p302, %p303
    %p305 = pneg %p304
    // Predicated region
    $region9: #{residual_block_forward.2} parent=5 // pred_check
      _
    $region10: #{residual_block_forward.2} parent=5 // pred_check_branch
      %307 = sbr.rel (%p304) target = $region12
    $region11: #{residual_block_forward.2} parent=5 // pred_region
      %s308 = ssub.s32 %s17, 1
      // Predicated region
      $region13: #{residual_block_forward.2} parent=11 // pred_check
        %p309 = pneg %p142
      $region14: #{residual_block_forward.2} parent=11 // pred_check_branch
        %311 = sbr.rel (%p309) target = $region16
      $region15: #{residual_block_forward.2} parent=11 // pred_region
        _
      $region16: #{residual_block_forward.2} parent=11 // pred_fallthru
        _
      // Predicated region
      $region17: #{residual_block_forward.2} parent=11 // pred_check
        %p312 = pneg %p163
      $region18: #{residual_block_forward.2} parent=11 // pred_check_branch
        %314 = sbr.rel (%p312) target = $region20
      $region19: #{residual_block_forward.2} parent=11 // pred_region
        _
      $region20: #{residual_block_forward.2} parent=11 // pred_fallthru
        _
      // Predicated region
      $region21: #{residual_block_forward.2} parent=11 // pred_check
        %p315 = pneg %p184
      $region22: #{residual_block_forward.2} parent=11 // pred_check_branch
        %317 = sbr.rel (%p315) target = $region24
      $region23: #{residual_block_forward.2} parent=11 // pred_region
        _
      $region24: #{residual_block_forward.2} parent=11 // pred_fallthru
        _
      // Predicated region
      $region25: #{residual_block_forward.2} parent=11 // pred_check
        %p318 = pneg %p205
      $region26: #{residual_block_forward.2} parent=11 // pred_check_branch
        %320 = sbr.rel (%p318) target = $region28
      $region27: #{residual_block_forward.2} parent=11 // pred_region
        _
      $region28: #{residual_block_forward.2} parent=11 // pred_fallthru
        _
      // Predicated region
      $region29: #{residual_block_forward.2} parent=11 // pred_check
        %p321 = pneg %p226
      $region30: #{residual_block_forward.2} parent=11 // pred_check_branch
        %323 = sbr.rel (%p321) target = $region32
      $region31: #{residual_block_forward.2} parent=11 // pred_region
        _
      $region32: #{residual_block_forward.2} parent=11 // pred_fallthru
        _
      // Predicated region
      $region33: #{residual_block_forward.2} parent=11 // pred_check
        %p324 = pneg %p247
      $region34: #{residual_block_forward.2} parent=11 // pred_check_branch
        %326 = sbr.rel (%p324) target = $region36
      $region35: #{residual_block_forward.2} parent=11 // pred_region
        _
      $region36: #{residual_block_forward.2} parent=11 // pred_fallthru
        _
      // Predicated region
      $region37: #{residual_block_forward.2} parent=11 // pred_check
        %p327 = pneg %p268
      $region38: #{residual_block_forward.2} parent=11 // pred_check_branch
        %329 = sbr.rel (%p327) target = $region40
      $region39: #{residual_block_forward.2} parent=11 // pred_region
        _
      $region40: #{residual_block_forward.2} parent=11 // pred_fallthru
        _
    $region12: #{residual_block_forward.2} parent=5 // pred_fallthru
      _
    %p330 = scmp.lt.s32.totalorder %s17, 2
    // Predicated region
    $region41: #{residual_block_forward.2} parent=5 // pred_check
      %p331 = pneg %p330
    $region42: #{residual_block_forward.2} parent=5 // pred_check_branch
      %333 = sbr.rel (%p331) target = $region44
    $region43: #{residual_block_forward.2} parent=5 // pred_region
      // Predicated region
      $region45: #{residual_block_forward.2} parent=43 // pred_check
        %p334 = pneg %p37
      $region46: #{residual_block_forward.2} parent=43 // pred_check_branch
        %336 = sbr.rel (%p334) target = $region48
      $region47: #{residual_block_forward.2} parent=43 // pred_region
        %p337 = scmp.lt.s32.totalorder %s17, 1
        %s338 = scalar_select %p337, %s17, 1
        %s339 = smul.addr %s338, 21
        %s340 = smul.addr %s339, 8
        %s341 = scalar_lea.vmem %s0, %s340
      $region48: #{residual_block_forward.2} parent=43 // pred_fallthru
        _
      // Predicated region
      $region49: #{residual_block_forward.2} parent=43 // pred_check
        %p342 = pneg %p63
      $region50: #{residual_block_forward.2} parent=43 // pred_check_branch
        %344 = sbr.rel (%p342) target = $region52
      $region51: #{residual_block_forward.2} parent=43 // pred_region
        %p345 = scmp.lt.s32.totalorder %s17, 1
        %s346 = scalar_select %p345, %s17, 1
        %s347 = smul.addr %s346, 21
        %s348 = smul.addr %s347, 8
        %s349 = scalar_lea.vmem %s1, %s348
      $region52: #{residual_block_forward.2} parent=43 // pred_fallthru
        _
      // Predicated region
      $region53: #{residual_block_forward.2} parent=43 // pred_check
        %p350 = pneg %p89
      $region54: #{residual_block_forward.2} parent=43 // pred_check_branch
        %352 = sbr.rel (%p350) target = $region56
      $region55: #{residual_block_forward.2} parent=43 // pred_region
        %p353 = scmp.lt.s32.totalorder %s17, 1
        %s354 = scalar_select %p353, %s17, 1
        %s355 = smul.addr %s354, 21
        %s356 = smul.addr %s355, 8
        %s357 = scalar_lea.vmem %s2, %s356
      $region56: #{residual_block_forward.2} parent=43 // pred_fallthru
        _
      // Predicated region
      $region57: #{residual_block_forward.2} parent=43 // pred_check
        %p358 = pneg %p115
      $region58: #{residual_block_forward.2} parent=43 // pred_check_branch
        %360 = sbr.rel (%p358) target = $region60
      $region59: #{residual_block_forward.2} parent=43 // pred_region
        %p361 = scmp.lt.s32.totalorder %s17, 1
        %s362 = scalar_select %p361, %s17, 1
        %s363 = smul.addr %s362, 21
        %s364 = smul.addr %s363, 8
        %s365 = scalar_lea.vmem %s3, %s364
      $region60: #{residual_block_forward.2} parent=43 // pred_fallthru
        _
    $region44: #{residual_block_forward.2} parent=5 // pred_fallthru
      _
    %p366 = scmp.le.s32.totalorder 1, %s17
    %p367 = scmp.lt.s32.totalorder %s17, 3
    %p368 = pnand %p366, %p367
    %p369 = pneg %p368
    // Predicated region
    $region61: #{residual_block_forward.2} parent=5 // pred_check
      _
    $region62: #{residual_block_forward.2} parent=5 // pred_check_branch
      %371 = sbr.rel (%p368) target = $region64
    $region63: #{residual_block_forward.2} parent=5 // pred_region
      %s372 = ssub.s32 %s17, 1
      %p373 = scmp.lt.s32.totalorder %s22, 1
      %s374 = scalar_select %p373, %s22, 1
      %s375 = smul.addr %s374, 21
      %s376 = smul.addr %s375, 8
      %s377 = scalar_lea.vmem %s0, %s376
      %p378 = pneg %p43
      %p379 = pneg %p40
      %p380 = scmp.lt.s32.totalorder %s22, 1
      %s381 = scalar_select %p380, %s22, 1
      %s382 = smul.addr %s381, 21
      %s383 = smul.addr %s382, 8
      %s384 = scalar_lea.vmem %s1, %s383
      %p385 = pneg %p69
      %p386 = pneg %p66
      %p387 = scmp.lt.s32.totalorder %s22, 1
      %s388 = scalar_select %p387, %s22, 1
      %s389 = smul.addr %s388, 21
      %s390 = smul.addr %s389, 8
      %s391 = scalar_lea.vmem %s2, %s390
      %p392 = pneg %p95
      %p393 = pneg %p92
      %p394 = scmp.lt.s32.totalorder %s22, 1
      %s395 = scalar_select %p394, %s22, 1
      %s396 = smul.addr %s395, 21
      %s397 = smul.addr %s396, 8
      %s398 = scalar_lea.vmem %s3, %s397
      %p399 = pneg %p121
      %p400 = pneg %p118
      %p401 = pneg %p142
      %p402 = pneg %p139
      %p403 = pneg %p163
      %p404 = pneg %p160
      %p405 = pneg %p184
      %p406 = pneg %p181
      %p407 = pneg %p205
      %p408 = pneg %p202
      %p409 = pneg %p226
      %p410 = pneg %p223
      %p411 = pneg %p247
      %p412 = pneg %p244
      %p413 = pneg %p268
      %p414 = pneg %p265
      %p415 = pneg %p294
      %p416 = pneg %p291
      %p417 = scmp.lt.s32.totalorder %s22, 1
      %s418 = scalar_select %p417, %s22, 1
      %s419 = smul.addr %s418, 13
      %s420 = smul.addr %s419, 8
      %s421 = scalar_lea.vmem %s11, %s420
      %p422 = scmp.lt.s32.totalorder %s22, 1
      %s423 = scalar_select %p422, %s22, 1
      %s424 = smul.addr %s423, 21
      %s425 = smul.addr %s424, 8
      %s426 = scalar_lea.vmem %s0, %s425
      %p427 = scmp.lt.s32.totalorder %s22, 1
      %s428 = scalar_select %p427, %s22, 1
      %s429 = smul.addr %s428, 21
      %s430 = smul.addr %s429, 8
      %s431 = scalar_lea.vmem %s1, %s430
      %p432 = scmp.lt.s32.totalorder %s22, 1
      %s433 = scalar_select %p432, %s22, 1
      %s434 = smul.addr %s433, 21
      %s435 = smul.addr %s434, 8
      %s436 = scalar_lea.vmem %s2, %s435
      %p437 = scmp.lt.s32.totalorder %s22, 1
      %s438 = scalar_select %p437, %s22, 1
      %s439 = smul.addr %s438, 21
      %s440 = smul.addr %s439, 8
      %s441 = scalar_lea.vmem %s3, %s440
      %p442 = scmp.lt.s32.totalorder %s22, 1
      %s443 = scalar_select %p442, %s22, 1
      %s444 = smul.addr %s443, 13
      %s445 = smul.addr %s444, 8
      %s446 = scalar_lea.vmem %s11, %s445
      %v448 = vld [vmem:[%s4] sm:$0xff]
      %v449 = vld [vmem:[%s4 + $0x8] sm:$0xff]
      %v450 = vld [vmem:[%s4 + $0x10] sm:$0xff]
      %v451 = vld [vmem:[%s4 + $0x18] sm:$0xff]
      %v452 = vld [vmem:[%s4 + $0x20] sm:$0xff]
      %v453 = vld [vmem:[%s4 + $0x28] sm:$0xff]
      %v454 = vld [vmem:[%s4 + $0x30] sm:$0xff]
      %v455 = vld [vmem:[%s4 + $0x38] sm:$0xff]
      %v456 = vld [vmem:[%s4 + $0x40] sm:$0xff]
      %v457 = vld [vmem:[%s4 + $0x48] sm:$0xff]
      %v458 = vld [vmem:[%s4 + $0x50] sm:$0xff]
      %v459 = vld [vmem:[%s4 + $0x58] sm:$0xff]
      %v460 = vld [vmem:[%s4 + $0x60] sm:$0xf]
      %v461 = vld [vmem:[%s426 + $0x15] sm:$0xff]
      %v462 = vld [vmem:[%s426 + $0x1d] sm:$0xff]
      %v463 = vld [vmem:[%s426 + $0x25] sm:$0xff]
      %v464 = vld [vmem:[%s426 + $0x2d] sm:$0xff]
      %v465 = vld [vmem:[%s426 + $0x35] sm:$0xff]
      %v466 = vld [vmem:[%s426 + $0x3d] sm:$0xff]
      %v467 = vld [vmem:[%s426 + $0x45] sm:$0xff]
      %v468 = vld [vmem:[%s426 + $0x4d] sm:$0xff]
      %v469 = vld [vmem:[%s426 + $0x55] sm:$0xff]
      %v470 = vld [vmem:[%s426 + $0x5d] sm:$0xff]
      %v471 = vld [vmem:[%s426 + $0x65] sm:$0xff]
      %v472 = vld [vmem:[%s426 + $0x6d] sm:$0xff]
      %v473 = vld [vmem:[%s426 + $0x75] sm:$0xf]
      %v474 = vpack.c.bf16 %v462, %v461
      %v475 = vpack.c.bf16 %v464, %v463
      %v476 = vpack.c.bf16 %v466, %v465
      %v477 = vpack.c.bf16 %v468, %v467
      %v478 = vpack.c.bf16 %v470, %v469
      %v479 = vpack.c.bf16 %v472, %v471
      %v480 = vpack.c.bf16 %v473, %v473
      %v481 = vld [vmem:[%s5] sm:$0x3]
      %v482 = vld [vmem:[%s431 + $0x15] sm:$0xff]
      %v483 = vld [vmem:[%s431 + $0x1d] sm:$0xff]
      %v484 = vld [vmem:[%s431 + $0x25] sm:$0xff]
      %v485 = vld [vmem:[%s431 + $0x2d] sm:$0xff]
      %v486 = vld [vmem:[%s431 + $0x35] sm:$0xff]
      %v487 = vld [vmem:[%s431 + $0x3d] sm:$0xff]
      %v488 = vld [vmem:[%s431 + $0x45] sm:$0xff]
      %v489 = vld [vmem:[%s431 + $0x4d] sm:$0xff]
      %v490 = vld [vmem:[%s431 + $0x55] sm:$0xff]
      %v491 = vld [vmem:[%s431 + $0x5d] sm:$0xff]
      %v492 = vld [vmem:[%s431 + $0x65] sm:$0xff]
      %v493 = vld [vmem:[%s431 + $0x6d] sm:$0xff]
      %v494 = vld [vmem:[%s431 + $0x75] sm:$0xf]
      %v495 = vpack.c.bf16 %v483, %v482
      %v496 = vpack.c.bf16 %v485, %v484
      %v497 = vpack.c.bf16 %v487, %v486
      %v498 = vpack.c.bf16 %v489, %v488
      %v499 = vpack.c.bf16 %v491, %v490
      %v500 = vpack.c.bf16 %v493, %v492
      %v501 = vpack.c.bf16 %v494, %v494
      %s502 = scalar_lea.vmem %s5, 2
      %v503 = vld [vmem:[%s502] sm:$0x3]
      %vm504 = vcmask 31744
      %v506 = vsel %vm504, %v495, 0
      %v509 = vsel %vm504, %v496, 0
      %v512 = vsel %vm504, %v497, 0
      %v515 = vsel %vm504, %v498, 0
      %v518 = vsel %vm504, %v499, 0
      %v521 = vsel %vm504, %v500, 0
      %v524 = vsel %vm504, %v501, 0
      %vm526 = vcmask 1041408
      %v528 = vsel %vm526, %v503, 0
      %530 = vmatprep.subr.bf16.mxu0 0
      %531 = vmatpush1.bf16.msra.mxu0 %v528
      %532 = vmatprep.subr.bf16.mxu0 0
      %533 = vmatpush1.bf16.msra.mxu0 0
      %534 = vmatprep.subr.bf16.mxu0 0
      %535 = vmatpush1.bf16.msra.mxu0 0
      %536 = vmatprep.subr.bf16.mxu0 0
      %537 = vmatpush1.bf16.msra.mxu0 0
      %538 = vmatprep.subr.bf16.mxu0 0
      %539 = vmatpush1.bf16.msra.mxu0 0
      %540 = vmatprep.subr.bf16.mxu0 0
      %541 = vmatpush1.bf16.msra.mxu0 0
      %542 = vmatprep.subr.bf16.mxu0 0
      %543 = vmatpush1.bf16.msra.mxu0 0
      %544 = vmatprep.subr.bf16.mxu0 0
      %545 = vmatpush1.bf16.msra.mxu0 0
      %546 = vmatprep.subr.bf16.mxu0 0
      %547 = vmatpush1.bf16.msra.mxu0 0
      %548 = vmatprep.subr.bf16.mxu0 0
      %549 = vmatpush1.bf16.msra.mxu0 0
      %550 = vmatprep.subr.bf16.mxu0 0
      %551 = vmatpush1.bf16.msra.mxu0 0
      %552 = vmatprep.subr.bf16.mxu0 0
      %553 = vmatpush1.bf16.msra.mxu0 0
      %554 = vmatprep.subr.bf16.mxu0 0
      %555 = vmatpush1.bf16.msra.mxu0 0
      %556 = vmatprep.subr.bf16.mxu0 0
      %557 = vmatpush1.bf16.msra.mxu0 0
      %558 = vmatprep.subr.bf16.mxu0 0
      %559 = vmatpush1.bf16.msra.mxu0 0
      %560 = vmatprep.subr.bf16.mxu0 0
      %561 = vmatpush1.bf16.msra.mxu0 0
      %562 = vmatprep.mubr.bf16.mxu0 0
      %563 = vmatmul.mubr.bf16.gmra.mrb[0].mxu0 %v506
      %v564 = vpop.f32.mrb[0].mxu0
      %v565 = vadd.f32 0.0, %v564
      %v566 = vpop.f32.mrb[0].mxu0
      %v567 = vpop.f32.mrb[0].mxu0
      %v568 = vadd.f32 0.0, %v567
      %v569 = vpop.f32.mrb[0].mxu0
      %570 = vmatprep.mubr.bf16.mxu0 0
      %571 = vmatmul.mubr.bf16.gmra.mrb[0].mxu0 %v509
      %v572 = vpop.f32.mrb[0].mxu0
      %v573 = vadd.f32 0.0, %v572
      %v574 = vpop.f32.mrb[0].mxu0
      %v575 = vpop.f32.mrb[0].mxu0
      %v576 = vadd.f32 0.0, %v575
      %v577 = vpop.f32.mrb[0].mxu0
      %578 = vmatprep.mubr.bf16.mxu0 0
      %579 = vmatmul.mubr.bf16.gmra.mrb[0].mxu0 %v512
      %v580 = vpop.f32.mrb[0].mxu0
      %v581 = vadd.f32 0.0, %v580
      %v582 = vpop.f32.mrb[0].mxu0
      %v583 = vpop.f32.mrb[0].mxu0
      %v584 = vadd.f32 0.0, %v583
      %v585 = vpop.f32.mrb[0].mxu0
      %586 = vmatprep.mubr.bf16.mxu0 0
      %587 = vmatmul.mubr.bf16.gmra.mrb[0].mxu0 %v515
      %v588 = vpop.f32.mrb[0].mxu0
      %v589 = vadd.f32 0.0, %v588
      %v590 = vpop.f32.mrb[0].mxu0
      %v591 = vpop.f32.mrb[0].mxu0
      %v592 = vadd.f32 0.0, %v591
      %v593 = vpop.f32.mrb[0].mxu0
      %594 = vmatprep.mubr.bf16.mxu0 0
      %595 = vmatmul.mubr.bf16.gmra.mrb[0].mxu0 %v518
      %v596 = vpop.f32.mrb[0].mxu0
      %v597 = vadd.f32 0.0, %v596
      %v598 = vpop.f32.mrb[0].mxu0
      %v599 = vpop.f32.mrb[0].mxu0
      %v600 = vadd.f32 0.0, %v599
      %v601 = vpop.f32.mrb[0].mxu0
      %602 = vmatprep.mubr.bf16.mxu0 0
      %603 = vmatmul.mubr.bf16.gmra.mrb[0].mxu0 %v521
      %v604 = vpop.f32.mrb[0].mxu0
      %v605 = vadd.f32 0.0, %v604
      %v606 = vpop.f32.mrb[0].mxu0
      %v607 = vpop.f32.mrb[0].mxu0
      %v608 = vadd.f32 0.0, %v607
      %v609 = vpop.f32.mrb[0].mxu0
      %610 = vmatprep.mubr.bf16.mxu0 0
      %611 = vmatmul.mubr.bf16.gmra.mrb[0].mxu0 %v524
      %v612 = vpop.f32.mrb[0].mxu0
      %v613 = vadd.f32 0.0, %v612
      %v614 = vpop.f32.mrb[0].mxu0
      %v615 = vpop.f32.mrb[0].mxu0
      %v616 = vpop.f32.mrb[0].mxu0
      %617 = vdwg.mxu0
      %v619 = vsel %vm504, %v474, 0
      %v622 = vsel %vm504, %v475, 0
      %v625 = vsel %vm504, %v476, 0
      %v628 = vsel %vm504, %v477, 0
      %v631 = vsel %vm504, %v478, 0
      %v634 = vsel %vm504, %v479, 0
      %v637 = vsel %vm504, %v480, 0
      %v640 = vsel %vm526, %v481, 0
      %642 = vmatprep.subr.bf16.mxu0 0
      %643 = vmatpush1.bf16.msra.mxu0 %v640
      %644 = vmatprep.subr.bf16.mxu0 0
      %645 = vmatpush1.bf16.msra.mxu0 0
      %646 = vmatprep.subr.bf16.mxu0 0
      %647 = vmatpush1.bf16.msra.mxu0 0
      %648 = vmatprep.subr.bf16.mxu0 0
      %649 = vmatpush1.bf16.msra.mxu0 0
      %650 = vmatprep.subr.bf16.mxu0 0
      %651 = vmatpush1.bf16.msra.mxu0 0
      %652 = vmatprep.subr.bf16.mxu0 0
      %653 = vmatpush1.bf16.msra.mxu0 0
      %654 = vmatprep.subr.bf16.mxu0 0
      %655 = vmatpush1.bf16.msra.mxu0 0
      %656 = vmatprep.subr.bf16.mxu0 0
      %657 = vmatpush1.bf16.msra.mxu0 0
      %658 = vmatprep.subr.bf16.mxu0 0
      %659 = vmatpush1.bf16.msra.mxu0 0
      %660 = vmatprep.subr.bf16.mxu0 0
      %661 = vmatpush1.bf16.msra.mxu0 0
      %662 = vmatprep.subr.bf16.mxu0 0
      %663 = vmatpush1.bf16.msra.mxu0 0
      %664 = vmatprep.subr.bf16.mxu0 0
      %665 = vmatpush1.bf16.msra.mxu0 0
      %666 = vmatprep.subr.bf16.mxu0 0
      %667 = vmatpush1.bf16.msra.mxu0 0
      %668 = vmatprep.subr.bf16.mxu0 0
      %669 = vmatpush1.bf16.msra.mxu0 0
      %670 = vmatprep.subr.bf16.mxu0 0
      %671 = vmatpush1.bf16.msra.mxu0 0
      %672 = vmatprep.subr.bf16.mxu0 0
      %673 = vmatpush1.bf16.msra.mxu0 0
      %674 = vmatprep.mubr.bf16.mxu0 0
      %675 = vmatmul.mubr.bf16.gmra.mrb[0].mxu0 %v619
      %v676 = vpop.f32.mrb[0].mxu0
      %v677 = vadd.f32 %v565, %v676
      %v678 = vpop.f32.mrb[0].mxu0
      %v679 = vpop.f32.mrb[0].mxu0
      %v680 = vadd.f32 %v568, %v679
      %v681 = vpop.f32.mrb[0].mxu0
      %682 = vmatprep.mubr.bf16.mxu0 0
      %683 = vmatmul.mubr.bf16.gmra.mrb[0].mxu0 %v622
      %v684 = vpop.f32.mrb[0].mxu0
      %v685 = vadd.f32 %v573, %v684
      %v686 = vpop.f32.mrb[0].mxu0
      %v687 = vpop.f32.mrb[0].mxu0
      %v688 = vadd.f32 %v576, %v687
      %v689 = vpop.f32.mrb[0].mxu0
      %690 = vmatprep.mubr.bf16.mxu0 0
      %691 = vmatmul.mubr.bf16.gmra.mrb[0].mxu0 %v625
      %v692 = vpop.f32.mrb[0].mxu0
      %v693 = vadd.f32 %v581, %v692
      %v694 = vpop.f32.mrb[0].mxu0
      %v695 = vpop.f32.mrb[0].mxu0
      %v696 = vadd.f32 %v584, %v695
      %v697 = vpop.f32.mrb[0].mxu0
      %698 = vmatprep.mubr.bf16.mxu0 0
      %699 = vmatmul.mubr.bf16.gmra.mrb[0].mxu0 %v628
      %v700 = vpop.f32.mrb[0].mxu0
      %v701 = vadd.f32 %v589, %v700
      %v702 = vpop.f32.mrb[0].mxu0
      %v703 = vpop.f32.mrb[0].mxu0
      %v704 = vadd.f32 %v592, %v703
      %v705 = vpop.f32.mrb[0].mxu0
      %706 = vmatprep.mubr.bf16.mxu0 0
      %707 = vmatmul.mubr.bf16.gmra.mrb[0].mxu0 %v631
      %v708 = vpop.f32.mrb[0].mxu0
      %v709 = vadd.f32 %v597, %v708
      %v710 = vpop.f32.mrb[0].mxu0
      %v711 = vpop.f32.mrb[0].mxu0
      %v712 = vadd.f32 %v600, %v711
      %v713 = vpop.f32.mrb[0].mxu0
      %714 = vmatprep.mubr.bf16.mxu0 0
      %715 = vmatmul.mubr.bf16.gmra.mrb[0].mxu0 %v634
      %v716 = vpop.f32.mrb[0].mxu0
      %v717 = vadd.f32 %v605, %v716
      %v718 = vpop.f32.mrb[0].mxu0
      %v719 = vpop.f32.mrb[0].mxu0
      %v720 = vadd.f32 %v608, %v719
      %v721 = vpop.f32.mrb[0].mxu0
      %722 = vmatprep.mubr.bf16.mxu0 0
      %723 = vmatmul.mubr.bf16.gmra.mrb[0].mxu0 %v637
      %v724 = vpop.f32.mrb[0].mxu0
      %v725 = vadd.f32 %v613, %v724
      %v726 = vpop.f32.mrb[0].mxu0
      %v727 = vpop.f32.mrb[0].mxu0
      %v728 = vpop.f32.mrb[0].mxu0
      %729 = vdwg.mxu0
      %v730 = vld [vmem:[%s426 + $0x16] sm:$0xff]
      %v731 = vld [vmem:[%s426 + $0x1e] sm:$0xff]
      %v732 = vld [vmem:[%s426 + $0x26] sm:$0xff]
      %v733 = vld [vmem:[%s426 + $0x2e] sm:$0xff]
      %v734 = vld [vmem:[%s426 + $0x36] sm:$0xff]
      %v735 = vld [vmem:[%s426 + $0x3e] sm:$0xff]
      %v736 = vld [vmem:[%s426 + $0x46] sm:$0xff]
      %v737 = vld [vmem:[%s426 + $0x4e] sm:$0xff]
      %v738 = vld [vmem:[%s426 + $0x56] sm:$0xff]
      %v739 = vld [vmem:[%s426 + $0x5e] sm:$0xff]
      %v740 = vld [vmem:[%s426 + $0x66] sm:$0xff]
      %v741 = vld [vmem:[%s426 + $0x6e] sm:$0xff]
      %v742 = vld [vmem:[%s426 + $0x76] sm:$0xf]
      %v743 = vpack.c.bf16 %v731, %v730
      %v744 = vpack.c.bf16 %v733, %v732
      %v745 = vpack.c.bf16 %v735, %v734
      %v746 = vpack.c.bf16 %v737, %v736
      %v747 = vpack.c.bf16 %v739, %v738
      %v748 = vpack.c.bf16 %v741, %v740
      %v749 = vpack.c.bf16 %v742, %v742
      %s750 = scalar_lea.vmem %s5, 4
      %v751 = vld [vmem:[%s750] sm:$0x3]
      %v753 = vsel %vm504, %v743, 0
      %v756 = vsel %vm504, %v744, 0
      %v759 = vsel %vm504, %v745, 0
      %v762 = vsel %vm504, %v746, 0
      %v765 = vsel %vm504, %v747, 0
      %v768 = vsel %vm504, %v748, 0
      %v771 = vsel %vm504, %v749, 0
      %v774 = vsel %vm526, %v751, 0
      %776 = vmatprep.subr.bf16.mxu0 0
      %777 = vmatpush1.bf16.msra.mxu0 %v774
      %778 = vmatprep.subr.bf16.mxu0 0
      %779 = vmatpush1.bf16.msra.mxu0 0
      %780 = vmatprep.subr.bf16.mxu0 0
      %781 = vmatpush1.bf16.msra.mxu0 0
      %782 = vmatprep.subr.bf16.mxu0 0
      %783 = vmatpush1.bf16.msra.mxu0 0
      %784 = vmatprep.subr.bf16.mxu0 0
      %785 = vmatpush1.bf16.msra.mxu0 0
      %786 = vmatprep.subr.bf16.mxu0 0
      %787 = vmatpush1.bf16.msra.mxu0 0
      %788 = vmatprep.subr.bf16.mxu0 0
      %789 = vmatpush1.bf16.msra.mxu0 0
      %790 = vmatprep.subr.bf16.mxu0 0
      %791 = vmatpush1.bf16.msra.mxu0 0
      %792 = vmatprep.subr.bf16.mxu0 0
      %793 = vmatpush1.bf16.msra.mxu0 0
      %794 = vmatprep.subr.bf16.mxu0 0
      %795 = vmatpush1.bf16.msra.mxu0 0
      %796 = vmatprep.subr.bf16.mxu0 0
      %797 = vmatpush1.bf16.msra.mxu0 0
      %798 = vmatprep.subr.bf16.mxu0 0
      %799 = vmatpush1.bf16.msra.mxu0 0
      %800 = vmatprep.subr.bf16.mxu0 0
      %801 = vmatpush1.bf16.msra.mxu0 0
      %802 = vmatprep.subr.bf16.mxu0 0
      %803 = vmatpush1.bf16.msra.mxu0 0
      %804 = vmatprep.subr.bf16.mxu0 0
      %805 = vmatpush1.bf16.msra.mxu0 0
      %806 = vmatprep.subr.bf16.mxu0 0
      %807 = vmatpush1.bf16.msra.mxu0 0
      %808 = vmatprep.mubr.bf16.mxu0 0
      %809 = vmatmul.mubr.bf16.gmra.mrb[0].mxu0 %v753
      %v810 = vpop.f32.mrb[0].mxu0
      %v811 = vadd.f32 0.0, %v810
      %v812 = vpop.f32.mrb[0].mxu0
      %v813 = vpop.f32.mrb[0].mxu0
      %v814 = vadd.f32 0.0, %v813
      %v815 = vpop.f32.mrb[0].mxu0
      %816 = vmatprep.mubr.bf16.mxu0 0
      %817 = vmatmul.mubr.bf16.gmra.mrb[0].mxu0 %v756
      %v818 = vpop.f32.mrb[0].mxu0
      %v819 = vadd.f32 0.0, %v818
      %v820 = vpop.f32.mrb[0].mxu0
      %v821 = vpop.f32.mrb[0].mxu0
      %v822 = vadd.f32 0.0, %v821
      %v823 = vpop.f32.mrb[0].mxu0
      %824 = vmatprep.mubr.bf16.mxu0 0
      %825 = vmatmul.mubr.bf16.gmra.mrb[0].mxu0 %v759
      %v826 = vpop.f32.mrb[0].mxu0
      %v827 = vadd.f32 0.0, %v826
      %v828 = vpop.f32.mrb[0].mxu0
      %v829 = vpop.f32.mrb[0].mxu0
      %v830 = vadd.f32 0.0, %v829
      %v831 = vpop.f32.mrb[0].mxu0
      %832 = vmatprep.mubr.bf16.mxu0 0
      %833 = vmatmul.mubr.bf16.gmra.mrb[0].mxu0 %v762
      %v834 = vpop.f32.mrb[0].mxu0
      %v835 = vadd.f32 0.0, %v834
      %v836 = vpop.f32.mrb[0].mxu0
      %v837 = vpop.f32.mrb[0].mxu0
      %v838 = vadd.f32 0.0, %v837
      %v839 = vpop.f32.mrb[0].mxu0
      %840 = vmatprep.mubr.bf16.mxu0 0
      %841 = vmatmul.mubr.bf16.gmra.mrb[0].mxu0 %v765
      %v842 = vpop.f32.mrb[0].mxu0
      %v843 = vadd.f32 0.0, %v842
      %v844 = vpop.f32.mrb[0].mxu0
      %v845 = vpop.f32.mrb[0].mxu0
      %v846 = vadd.f32 0.0, %v845
      %v847 = vpop.f32.mrb[0].mxu0
      %848 = vmatprep.mubr.bf16.mxu0 0
      %849 = vmatmul.mubr.bf16.gmra.mrb[0].mxu0 %v768
      %v850 = vpop.f32.mrb[0].mxu0
      %v851 = vadd.f32 0.0, %v850
      %v852 = vpop.f32.mrb[0].mxu0
      %v853 = vpop.f32.mrb[0].mxu0
      %v854 = vadd.f32 0.0, %v853
      %v855 = vpop.f32.mrb[0].mxu0
      %856 = vmatprep.mubr.bf16.mxu0 0
      %857 = vmatmul.mubr.bf16.gmra.mrb[0].mxu0 %v771
      %v858 = vpop.f32.mrb[0].mxu0
      %v859 = vadd.f32 0.0, %v858
      %v860 = vpop.f32.mrb[0].mxu0
      %v861 = vpop.f32.mrb[0].mxu0
      %v862 = vpop.f32.mrb[0].mxu0
      %863 = vdwg.mxu0
      %v864 = vadd.f32 %v677, %v811
      %v865 = vadd.f32 %v680, %v814
      %v866 = vadd.f32 %v685, %v819
      %v867 = vadd.f32 %v688, %v822
      %v868 = vadd.f32 %v693, %v827
      %v869 = vadd.f32 %v696, %v830
      %v870 = vadd.f32 %v701, %v835
      %v871 = vadd.f32 %v704, %v838
      %v872 = vadd.f32 %v709, %v843
      %v873 = vadd.f32 %v712, %v846
      %v874 = vadd.f32 %v717, %v851
      %v875 = vadd.f32 %v720, %v854
      %v876 = vadd.f32 %v725, %v859
      %v877 = vld [vmem:[%s436 + $0x15] sm:$0xff]
      %v878 = vld [vmem:[%s436 + $0x1d] sm:$0xff]
      %v879 = vld [vmem:[%s436 + $0x25] sm:$0xff]
      %v880 = vld [vmem:[%s436 + $0x2d] sm:$0xff]
      %v881 = vld [vmem:[%s436 + $0x35] sm:$0xff]
      %v882 = vld [vmem:[%s436 + $0x3d] sm:$0xff]
      %v883 = vld [vmem:[%s436 + $0x45] sm:$0xff]
      %v884 = vld [vmem:[%s436 + $0x4d] sm:$0xff]
      %v885 = vld [vmem:[%s436 + $0x55] sm:$0xff]
      %v886 = vld [vmem:[%s436 + $0x5d] sm:$0xff]
      %v887 = vld [vmem:[%s436 + $0x65] sm:$0xff]
      %v888 = vld [vmem:[%s436 + $0x6d] sm:$0xff]
      %v889 = vld [vmem:[%s436 + $0x75] sm:$0xf]
      %v890 = vpack.c.bf16 %v878, %v877
      %v891 = vpack.c.bf16 %v880, %v879
      %v892 = vpack.c.bf16 %v882, %v881
      %v893 = vpack.c.bf16 %v884, %v883
      %v894 = vpack.c.bf16 %v886, %v885
      %v895 = vpack.c.bf16 %v888, %v887
      %v896 = vpack.c.bf16 %v889, %v889
      %s897 = scalar_lea.vmem %s5, 6
      %v898 = vld [vmem:[%s897] sm:$0x3]
      %v900 = vsel %vm504, %v890, 0
      %v903 = vsel %vm504, %v891, 0
      %v906 = vsel %vm504, %v892, 0
      %v909 = vsel %vm504, %v893, 0
      %v912 = vsel %vm504, %v894, 0
      %v915 = vsel %vm504, %v895, 0
      %v918 = vsel %vm504, %v896, 0
      %v921 = vsel %vm526, %v898, 0
      %923 = vmatprep.subr.bf16.mxu0 0
      %924 = vmatpush1.bf16.msra.mxu0 %v921
      %925 = vmatprep.subr.bf16.mxu0 0
      %926 = vmatpush1.bf16.msra.mxu0 0
      %927 = vmatprep.subr.bf16.mxu0 0
      %928 = vmatpush1.bf16.msra.mxu0 0
      %929 = vmatprep.subr.bf16.mxu0 0
      %930 = vmatpush1.bf16.msra.mxu0 0
      %931 = vmatprep.subr.bf16.mxu0 0
      %932 = vmatpush1.bf16.msra.mxu0 0
      %933 = vmatprep.subr.bf16.mxu0 0
      %934 = vmatpush1.bf16.msra.mxu0 0
      %935 = vmatprep.subr.bf16.mxu0 0
      %936 = vmatpush1.bf16.msra.mxu0 0
      %937 = vmatprep.subr.bf16.mxu0 0
      %938 = vmatpush1.bf16.msra.mxu0 0
      %939 = vmatprep.subr.bf16.mxu0 0
      %940 = vmatpush1.bf16.msra.mxu0 0
      %941 = vmatprep.subr.bf16.mxu0 0
      %942 = vmatpush1.bf16.msra.mxu0 0
      %943 = vmatprep.subr.bf16.mxu0 0
      %944 = vmatpush1.bf16.msra.mxu0 0
      %945 = vmatprep.subr.bf16.mxu0 0
      %946 = vmatpush1.bf16.msra.mxu0 0
      %947 = vmatprep.subr.bf16.mxu0 0
      %948 = vmatpush1.bf16.msra.mxu0 0
      %949 = vmatprep.subr.bf16.mxu0 0
      %950 = vmatpush1.bf16.msra.mxu0 0
      %951 = vmatprep.subr.bf16.mxu0 0
      %952 = vmatpush1.bf16.msra.mxu0 0
      %953 = vmatprep.subr.bf16.mxu0 0
      %954 = vmatpush1.bf16.msra.mxu0 0
      %955 = vmatprep.mubr.bf16.mxu0 0
      %956 = vmatmul.mubr.bf16.gmra.mrb[0].mxu0 %v900
      %v957 = vpop.f32.mrb[0].mxu0
      %v958 = vadd.f32 0.0, %v957
      %v959 = vpop.f32.mrb[0].mxu0
      %v960 = vpop.f32.mrb[0].mxu0
      %v961 = vadd.f32 0.0, %v960
      %v962 = vpop.f32.mrb[0].mxu0
      %963 = vmatprep.mubr.bf16.mxu0 0
      %964 = vmatmul.mubr.bf16.gmra.mrb[0].mxu0 %v903
      %v965 = vpop.f32.mrb[0].mxu0
      %v966 = vadd.f32 0.0, %v965
      %v967 = vpop.f32.mrb[0].mxu0
      %v968 = vpop.f32.mrb[0].mxu0
      %v969 = vadd.f32 0.0, %v968
      %v970 = vpop.f32.mrb[0].mxu0
      %971 = vmatprep.mubr.bf16.mxu0 0
      %972 = vmatmul.mubr.bf16.gmra.mrb[0].mxu0 %v906
      %v973 = vpop.f32.mrb[0].mxu0
      %v974 = vadd.f32 0.0, %v973
      %v975 = vpop.f32.mrb[0].mxu0
      %v976 = vpop.f32.mrb[0].mxu0
      %v977 = vadd.f32 0.0, %v976
      %v978 = vpop.f32.mrb[0].mxu0
      %979 = vmatprep.mubr.bf16.mxu0 0
      %980 = vmatmul.mubr.bf16.gmra.mrb[0].mxu0 %v909
      %v981 = vpop.f32.mrb[0].mxu0
      %v982 = vadd.f32 0.0, %v981
      %v983 = vpop.f32.mrb[0].mxu0
      %v984 = vpop.f32.mrb[0].mxu0
      %v985 = vadd.f32 0.0, %v984
      %v986 = vpop.f32.mrb[0].mxu0
      %987 = vmatprep.mubr.bf16.mxu0 0
      %988 = vmatmul.mubr.bf16.gmra.mrb[0].mxu0 %v912
      %v989 = vpop.f32.mrb[0].mxu0
      %v990 = vadd.f32 0.0, %v989
      %v991 = vpop.f32.mrb[0].mxu0
      %v992 = vpop.f32.mrb[0].mxu0
      %v993 = vadd.f32 0.0, %v992
      %v994 = vpop.f32.mrb[0].mxu0
      %995 = vmatprep.mubr.bf16.mxu0 0
      %996 = vmatmul.mubr.bf16.gmra.mrb[0].mxu0 %v915
      %v997 = vpop.f32.mrb[0].mxu0
      %v998 = vadd.f32 0.0, %v997
      %v999 = vpop.f32.mrb[0].mxu0
      %v1000 = vpop.f32.mrb[0].mxu0
      %v1001 = vadd.f32 0.0, %v1000
      %v1002 = vpop.f32.mrb[0].mxu0
      %1003 = vmatprep.mubr.bf16.mxu0 0
      %1004 = vmatmul.mubr.bf16.gmra.mrb[0].mxu0 %v918
      %v1005 = vpop.f32.mrb[0].mxu0
      %v1006 = vadd.f32 0.0, %v1005
      %v1007 = vpop.f32.mrb[0].mxu0
      %v1008 = vpop.f32.mrb[0].mxu0
      %v1009 = vpop.f32.mrb[0].mxu0
      %1010 = vdwg.mxu0
      %v1011 = vadd.f32 %v864, %v958
      %v1012 = vadd.f32 %v865, %v961
      %v1013 = vadd.f32 %v866, %v966
      %v1014 = vadd.f32 %v867, %v969
      %v1015 = vadd.f32 %v868, %v974
      %v1016 = vadd.f32 %v869, %v977
      %v1017 = vadd.f32 %v870, %v982
      %v1018 = vadd.f32 %v871, %v985
      %v1019 = vadd.f32 %v872, %v990
      %v1020 = vadd.f32 %v873, %v993
      %v1021 = vadd.f32 %v874, %v998
      %v1022 = vadd.f32 %v875, %v1001
      %v1023 = vadd.f32 %v876, %v1006
      %v1024 = vld [vmem:[%s441 + $0x15] sm:$0xff]
      %v1025 = vld [vmem:[%s441 + $0x1d] sm:$0xff]
      %v1026 = vld [vmem:[%s441 + $0x25] sm:$0xff]
      %v1027 = vld [vmem:[%s441 + $0x2d] sm:$0xff]
      %v1028 = vld [vmem:[%s441 + $0x35] sm:$0xff]
      %v1029 = vld [vmem:[%s441 + $0x3d] sm:$0xff]
      %v1030 = vld [vmem:[%s441 + $0x45] sm:$0xff]
      %v1031 = vld [vmem:[%s441 + $0x4d] sm:$0xff]
      %v1032 = vld [vmem:[%s441 + $0x55] sm:$0xff]
      %v1033 = vld [vmem:[%s441 + $0x5d] sm:$0xff]
      %v1034 = vld [vmem:[%s441 + $0x65] sm:$0xff]
      %v1035 = vld [vmem:[%s441 + $0x6d] sm:$0xff]
      %v1036 = vld [vmem:[%s441 + $0x75] sm:$0xf]
      %v1037 = vpack.c.bf16 %v1025, %v1024
      %v1038 = vpack.c.bf16 %v1027, %v1026
      %v1039 = vpack.c.bf16 %v1029, %v1028
      %v1040 = vpack.c.bf16 %v1031, %v1030
      %v1041 = vpack.c.bf16 %v1033, %v1032
      %v1042 = vpack.c.bf16 %v1035, %v1034
      %v1043 = vpack.c.bf16 %v1036, %v1036
      %s1044 = scalar_lea.vmem %s5, 8
      %v1045 = vld [vmem:[%s1044] sm:$0x3]
      %v1047 = vsel %vm504, %v1037, 0
      %v1050 = vsel %vm504, %v1038, 0
      %v1053 = vsel %vm504, %v1039, 0
      %v1056 = vsel %vm504, %v1040, 0
      %v1059 = vsel %vm504, %v1041, 0
      %v1062 = vsel %vm504, %v1042, 0
      %v1065 = vsel %vm504, %v1043, 0
      %v1068 = vsel %vm526, %v1045, 0
      %1070 = vmatprep.subr.bf16.mxu0 0
      %1071 = vmatpush1.bf16.msra.mxu0 %v1068
      %1072 = vmatprep.subr.bf16.mxu0 0
      %1073 = vmatpush1.bf16.msra.mxu0 0
      %1074 = vmatprep.subr.bf16.mxu0 0
      %1075 = vmatpush1.bf16.msra.mxu0 0
      %1076 = vmatprep.subr.bf16.mxu0 0
      %1077 = vmatpush1.bf16.msra.mxu0 0
      %1078 = vmatprep.subr.bf16.mxu0 0
      %1079 = vmatpush1.bf16.msra.mxu0 0
      %1080 = vmatprep.subr.bf16.mxu0 0
      %1081 = vmatpush1.bf16.msra.mxu0 0
      %1082 = vmatprep.subr.bf16.mxu0 0
      %1083 = vmatpush1.bf16.msra.mxu0 0
      %1084 = vmatprep.subr.bf16.mxu0 0
      %1085 = vmatpush1.bf16.msra.mxu0 0
      %1086 = vmatprep.subr.bf16.mxu0 0
      %1087 = vmatpush1.bf16.msra.mxu0 0
      %1088 = vmatprep.subr.bf16.mxu0 0
      %1089 = vmatpush1.bf16.msra.mxu0 0
      %1090 = vmatprep.subr.bf16.mxu0 0
      %1091 = vmatpush1.bf16.msra.mxu0 0
      %1092 = vmatprep.subr.bf16.mxu0 0
      %1093 = vmatpush1.bf16.msra.mxu0 0
      %1094 = vmatprep.subr.bf16.mxu0 0
      %1095 = vmatpush1.bf16.msra.mxu0 0
      %1096 = vmatprep.subr.bf16.mxu0 0
      %1097 = vmatpush1.bf16.msra.mxu0 0
      %1098 = vmatprep.subr.bf16.mxu0 0
      %1099 = vmatpush1.bf16.msra.mxu0 0
      %1100 = vmatprep.subr.bf16.mxu0 0
      %1101 = vmatpush1.bf16.msra.mxu0 0
      %1102 = vmatprep.mubr.bf16.mxu0 0
      %1103 = vmatmul.mubr.bf16.gmra.mrb[0].mxu0 %v1047
      %v1104 = vpop.f32.mrb[0].mxu0
      %v1105 = vadd.f32 0.0, %v1104
      %v1106 = vpop.f32.mrb[0].mxu0
      %v1107 = vpop.f32.mrb[0].mxu0
      %v1108 = vadd.f32 0.0, %v1107
      %v1109 = vpop.f32.mrb[0].mxu0
      %1110 = vmatprep.mubr.bf16.mxu0 0
      %1111 = vmatmul.mubr.bf16.gmra.mrb[0].mxu0 %v1050
      %v1112 = vpop.f32.mrb[0].mxu0
      %v1113 = vadd.f32 0.0, %v1112
      %v1114 = vpop.f32.mrb[0].mxu0
      %v1115 = vpop.f32.mrb[0].mxu0
      %v1116 = vadd.f32 0.0, %v1115
      %v1117 = vpop.f32.mrb[0].mxu0
      %1118 = vmatprep.mubr.bf16.mxu0 0
      %1119 = vmatmul.mubr.bf16.gmra.mrb[0].mxu0 %v1053
      %v1120 = vpop.f32.mrb[0].mxu0
      %v1121 = vadd.f32 0.0, %v1120
      %v1122 = vpop.f32.mrb[0].mxu0
      %v1123 = vpop.f32.mrb[0].mxu0
      %v1124 = vadd.f32 0.0, %v1123
      %v1125 = vpop.f32.mrb[0].mxu0
      %1126 = vmatprep.mubr.bf16.mxu0 0
      %1127 = vmatmul.mubr.bf16.gmra.mrb[0].mxu0 %v1056
      %v1128 = vpop.f32.mrb[0].mxu0
      %v1129 = vadd.f32 0.0, %v1128
      %v1130 = vpop.f32.mrb[0].mxu0
      %v1131 = vpop.f32.mrb[0].mxu0
      %v1132 = vadd.f32 0.0, %v1131
      %v1133 = vpop.f32.mrb[0].mxu0
      %1134 = vmatprep.mubr.bf16.mxu0 0
      %1135 = vmatmul.mubr.bf16.gmra.mrb[0].mxu0 %v1059
      %v1136 = vpop.f32.mrb[0].mxu0
      %v1137 = vadd.f32 0.0, %v1136
      %v1138 = vpop.f32.mrb[0].mxu0
      %v1139 = vpop.f32.mrb[0].mxu0
      %v1140 = vadd.f32 0.0, %v1139
      %v1141 = vpop.f32.mrb[0].mxu0
      %1142 = vmatprep.mubr.bf16.mxu0 0
      %1143 = vmatmul.mubr.bf16.gmra.mrb[0].mxu0 %v1062
      %v1144 = vpop.f32.mrb[0].mxu0
      %v1145 = vadd.f32 0.0, %v1144
      %v1146 = vpop.f32.mrb[0].mxu0
      %v1147 = vpop.f32.mrb[0].mxu0
      %v1148 = vadd.f32 0.0, %v1147
      %v1149 = vpop.f32.mrb[0].mxu0
      %1150 = vmatprep.mubr.bf16.mxu0 0
      %1151 = vmatmul.mubr.bf16.gmra.mrb[0].mxu0 %v1065
      %v1152 = vpop.f32.mrb[0].mxu0
      %v1153 = vadd.f32 0.0, %v1152
      %v1154 = vpop.f32.mrb[0].mxu0
      %v1155 = vpop.f32.mrb[0].mxu0
      %v1156 = vpop.f32.mrb[0].mxu0
      %1157 = vdwg.mxu0
      %v1158 = vadd.f32 %v1011, %v1105
      %v1159 = vadd.f32 %v1012, %v1108
      %v1160 = vadd.f32 %v1013, %v1113
      %v1161 = vadd.f32 %v1014, %v1116
      %v1162 = vadd.f32 %v1015, %v1121
      %v1163 = vadd.f32 %v1016, %v1124
      %v1164 = vadd.f32 %v1017, %v1129
      %v1165 = vadd.f32 %v1018, %v1132
      %v1166 = vadd.f32 %v1019, %v1137
      %v1167 = vadd.f32 %v1020, %v1140
      %v1168 = vadd.f32 %v1021, %v1145
      %v1169 = vadd.f32 %v1022, %v1148
      %v1170 = vadd.f32 %v1023, %v1153
      %v1171 = vld [vmem:[%s436 + $0x16] sm:$0xff]
      %v1172 = vld [vmem:[%s436 + $0x1e] sm:$0xff]
      %v1173 = vld [vmem:[%s436 + $0x26] sm:$0xff]
      %v1174 = vld [vmem:[%s436 + $0x2e] sm:$0xff]
      %v1175 = vld [vmem:[%s436 + $0x36] sm:$0xff]
      %v1176 = vld [vmem:[%s436 + $0x3e] sm:$0xff]
      %v1177 = vld [vmem:[%s436 + $0x46] sm:$0xff]
      %v1178 = vld [vmem:[%s436 + $0x4e] sm:$0xff]
      %v1179 = vld [vmem:[%s436 + $0x56] sm:$0xff]
      %v1180 = vld [vmem:[%s436 + $0x5e] sm:$0xff]
      %v1181 = vld [vmem:[%s436 + $0x66] sm:$0xff]
      %v1182 = vld [vmem:[%s436 + $0x6e] sm:$0xff]
      %v1183 = vld [vmem:[%s436 + $0x76] sm:$0xf]
      %v1184 = vpack.c.bf16 %v1172, %v1171
      %v1185 = vpack.c.bf16 %v1174, %v1173
      %v1186 = vpack.c.bf16 %v1176, %v1175
      %v1187 = vpack.c.bf16 %v1178, %v1177
      %v1188 = vpack.c.bf16 %v1180, %v1179
      %v1189 = vpack.c.bf16 %v1182, %v1181
      %v1190 = vpack.c.bf16 %v1183, %v1183
      %s1191 = scalar_lea.vmem %s5, 10
      %v1192 = vld [vmem:[%s1191] sm:$0x3]
      %v1194 = vsel %vm504, %v1184, 0
      %v1197 = vsel %vm504, %v1185, 0
      %v1200 = vsel %vm504, %v1186, 0
      %v1203 = vsel %vm504, %v1187, 0
      %v1206 = vsel %vm504, %v1188, 0
      %v1209 = vsel %vm504, %v1189, 0
      %v1212 = vsel %vm504, %v1190, 0
      %v1215 = vsel %vm526, %v1192, 0
      %1217 = vmatprep.subr.bf16.mxu0 0
      %1218 = vmatpush1.bf16.msra.mxu0 %v1215
      %1219 = vmatprep.subr.bf16.mxu0 0
      %1220 = vmatpush1.bf16.msra.mxu0 0
      %1221 = vmatprep.subr.bf16.mxu0 0
      %1222 = vmatpush1.bf16.msra.mxu0 0
      %1223 = vmatprep.subr.bf16.mxu0 0
      %1224 = vmatpush1.bf16.msra.mxu0 0
      %1225 = vmatprep.subr.bf16.mxu0 0
      %1226 = vmatpush1.bf16.msra.mxu0 0
      %1227 = vmatprep.subr.bf16.mxu0 0
      %1228 = vmatpush1.bf16.msra.mxu0 0
      %1229 = vmatprep.subr.bf16.mxu0 0
      %1230 = vmatpush1.bf16.msra.mxu0 0
      %1231 = vmatprep.subr.bf16.mxu0 0
      %1232 = vmatpush1.bf16.msra.mxu0 0
      %1233 = vmatprep.subr.bf16.mxu0 0
      %1234 = vmatpush1.bf16.msra.mxu0 0
      %1235 = vmatprep.subr.bf16.mxu0 0
      %1236 = vmatpush1.bf16.msra.mxu0 0
      %1237 = vmatprep.subr.bf16.mxu0 0
      %1238 = vmatpush1.bf16.msra.mxu0 0
      %1239 = vmatprep.subr.bf16.mxu0 0
      %1240 = vmatpush1.bf16.msra.mxu0 0
      %1241 = vmatprep.subr.bf16.mxu0 0
      %1242 = vmatpush1.bf16.msra.mxu0 0
      %1243 = vmatprep.subr.bf16.mxu0 0
      %1244 = vmatpush1.bf16.msra.mxu0 0
      %1245 = vmatprep.subr.bf16.mxu0 0
      %1246 = vmatpush1.bf16.msra.mxu0 0
      %1247 = vmatprep.subr.bf16.mxu0 0
      %1248 = vmatpush1.bf16.msra.mxu0 0
      %1249 = vmatprep.mubr.bf16.mxu0 0
      %1250 = vmatmul.mubr.bf16.gmra.mrb[0].mxu0 %v1194
      %v1251 = vpop.f32.mrb[0].mxu0
      %v1252 = vadd.f32 0.0, %v1251
      %v1253 = vpop.f32.mrb[0].mxu0
      %v1254 = vpop.f32.mrb[0].mxu0
      %v1255 = vadd.f32 0.0, %v1254
      %v1256 = vpop.f32.mrb[0].mxu0
      %1257 = vmatprep.mubr.bf16.mxu0 0
      %1258 = vmatmul.mubr.bf16.gmra.mrb[0].mxu0 %v1197
      %v1259 = vpop.f32.mrb[0].mxu0
      %v1260 = vadd.f32 0.0, %v1259
      %v1261 = vpop.f32.mrb[0].mxu0
      %v1262 = vpop.f32.mrb[0].mxu0
      %v1263 = vadd.f32 0.0, %v1262
      %v1264 = vpop.f32.mrb[0].mxu0
      %1265 = vmatprep.mubr.bf16.mxu0 0
      %1266 = vmatmul.mubr.bf16.gmra.mrb[0].mxu0 %v1200
      %v1267 = vpop.f32.mrb[0].mxu0
      %v1268 = vadd.f32 0.0, %v1267
      %v1269 = vpop.f32.mrb[0].mxu0
      %v1270 = vpop.f32.mrb[0].mxu0
      %v1271 = vadd.f32 0.0, %v1270
      %v1272 = vpop.f32.mrb[0].mxu0
      %1273 = vmatprep.mubr.bf16.mxu0 0
      %1274 = vmatmul.mubr.bf16.gmra.mrb[0].mxu0 %v1203
      %v1275 = vpop.f32.mrb[0].mxu0
      %v1276 = vadd.f32 0.0, %v1275
      %v1277 = vpop.f32.mrb[0].mxu0
      %v1278 = vpop.f32.mrb[0].mxu0
      %v1279 = vadd.f32 0.0, %v1278
      %v1280 = vpop.f32.mrb[0].mxu0
      %1281 = vmatprep.mubr.bf16.mxu0 0
      %1282 = vmatmul.mubr.bf16.gmra.mrb[0].mxu0 %v1206
      %v1283 = vpop.f32.mrb[0].mxu0
      %v1284 = vadd.f32 0.0, %v1283
      %v1285 = vpop.f32.mrb[0].mxu0
      %v1286 = vpop.f32.mrb[0].mxu0
      %v1287 = vadd.f32 0.0, %v1286
      %v1288 = vpop.f32.mrb[0].mxu0
      %1289 = vmatprep.mubr.bf16.mxu0 0
      %1290 = vmatmul.mubr.bf16.gmra.mrb[0].mxu0 %v1209
      %v1291 = vpop.f32.mrb[0].mxu0
      %v1292 = vadd.f32 0.0, %v1291
      %v1293 = vpop.f32.mrb[0].mxu0
      %v1294 = vpop.f32.mrb[0].mxu0
      %v1295 = vadd.f32 0.0, %v1294
      %v1296 = vpop.f32.mrb[0].mxu0
      %1297 = vmatprep.mubr.bf16.mxu0 0
      %1298 = vmatmul.mubr.bf16.gmra.mrb[0].mxu0 %v1212
      %v1299 = vpop.f32.mrb[0].mxu0
      %v1300 = vadd.f32 0.0, %v1299
      %v1301 = vpop.f32.mrb[0].mxu0
      %v1302 = vpop.f32.mrb[0].mxu0
      %v1303 = vpop.f32.mrb[0].mxu0
      %1304 = vdwg.mxu0
      %v1305 = vadd.f32 %v1158, %v1252
      %v1306 = vadd.f32 %v1159, %v1255
      %v1307 = vadd.f32 %v1160, %v1260
      %v1308 = vadd.f32 %v1161, %v1263
      %v1309 = vadd.f32 %v1162, %v1268
      %v1310 = vadd.f32 %v1163, %v1271
      %v1311 = vadd.f32 %v1164, %v1276
      %v1312 = vadd.f32 %v1165, %v1279
      %v1313 = vadd.f32 %v1166, %v1284
      %v1314 = vadd.f32 %v1167, %v1287
      %v1315 = vadd.f32 %v1168, %v1292
      %v1316 = vadd.f32 %v1169, %v1295
      %v1317 = vadd.f32 %v1170, %v1300
      %v1318 = vld [vmem:[%s426 + $0x1f] sm:$0xff]
      %v1319 = vld [vmem:[%s426 + $0x27] sm:$0xff]
      %v1320 = vld [vmem:[%s426 + $0x2f] sm:$0xff]
      %v1321 = vld [vmem:[%s426 + $0x37] sm:$0xff]
      %v1322 = vld [vmem:[%s426 + $0x3f] sm:$0xff]
      %v1323 = vld [vmem:[%s426 + $0x47] sm:$0xff]
      %v1324 = vld [vmem:[%s426 + $0x4f] sm:$0xff]
      %v1325 = vld [vmem:[%s426 + $0x57] sm:$0xff]
      %v1326 = vld [vmem:[%s426 + $0x5f] sm:$0xff]
      %v1327 = vld [vmem:[%s426 + $0x67] sm:$0xff]
      %v1328 = vld [vmem:[%s426 + $0x6f] sm:$0xff]
      %v1329 = vld [vmem:[%s426 + $0x77] sm:$0xff]
      %v1330 = vld [vmem:[%s426 + $0x7f] sm:$0xf]
      %v1331 = vpack.c.bf16 %v1319, %v1318
      %v1332 = vpack.c.bf16 %v1321, %v1320
      %v1333 = vpack.c.bf16 %v1323, %v1322
      %v1334 = vpack.c.bf16 %v1325, %v1324
      %v1335 = vpack.c.bf16 %v1327, %v1326
      %v1336 = vpack.c.bf16 %v1329, %v1328
      %v1337 = vpack.c.bf16 %v1330, %v1330
      %s1338 = scalar_lea.vmem %s5, 12
      %v1339 = vld [vmem:[%s1338] sm:$0x3]
      %v1341 = vsel %vm504, %v1331, 0
      %v1344 = vsel %vm504, %v1332, 0
      %v1347 = vsel %vm504, %v1333, 0
      %v1350 = vsel %vm504, %v1334, 0
      %v1353 = vsel %vm504, %v1335, 0
      %v1356 = vsel %vm504, %v1336, 0
      %v1359 = vsel %vm504, %v1337, 0
      %v1362 = vsel %vm526, %v1339, 0
      %1364 = vmatprep.subr.bf16.mxu0 0
      %1365 = vmatpush1.bf16.msra.mxu0 %v1362
      %1366 = vmatprep.subr.bf16.mxu0 0
      %1367 = vmatpush1.bf16.msra.mxu0 0
      %1368 = vmatprep.subr.bf16.mxu0 0
      %1369 = vmatpush1.bf16.msra.mxu0 0
      %1370 = vmatprep.subr.bf16.mxu0 0
      %1371 = vmatpush1.bf16.msra.mxu0 0
      %1372 = vmatprep.subr.bf16.mxu0 0
      %1373 = vmatpush1.bf16.msra.mxu0 0
      %1374 = vmatprep.subr.bf16.mxu0 0
      %1375 = vmatpush1.bf16.msra.mxu0 0
      %1376 = vmatprep.subr.bf16.mxu0 0
      %1377 = vmatpush1.bf16.msra.mxu0 0
      %1378 = vmatprep.subr.bf16.mxu0 0
      %1379 = vmatpush1.bf16.msra.mxu0 0
      %1380 = vmatprep.subr.bf16.mxu0 0
      %1381 = vmatpush1.bf16.msra.mxu0 0
      %1382 = vmatprep.subr.bf16.mxu0 0
      %1383 = vmatpush1.bf16.msra.mxu0 0
      %1384 = vmatprep.subr.bf16.mxu0 0
      %1385 = vmatpush1.bf16.msra.mxu0 0
      %1386 = vmatprep.subr.bf16.mxu0 0
      %1387 = vmatpush1.bf16.msra.mxu0 0
      %1388 = vmatprep.subr.bf16.mxu0 0
      %1389 = vmatpush1.bf16.msra.mxu0 0
      %1390 = vmatprep.subr.bf16.mxu0 0
      %1391 = vmatpush1.bf16.msra.mxu0 0
      %1392 = vmatprep.subr.bf16.mxu0 0
      %1393 = vmatpush1.bf16.msra.mxu0 0
      %1394 = vmatprep.subr.bf16.mxu0 0
      %1395 = vmatpush1.bf16.msra.mxu0 0
      %1396 = vmatprep.mubr.bf16.mxu0 0
      %1397 = vmatmul.mubr.bf16.gmra.mrb[0].mxu0 %v1341
      %v1398 = vpop.f32.mrb[0].mxu0
      %v1399 = vadd.f32 0.0, %v1398
      %v1400 = vpop.f32.mrb[0].mxu0
      %v1401 = vpop.f32.mrb[0].mxu0
      %v1402 = vadd.f32 0.0, %v1401
      %v1403 = vpop.f32.mrb[0].mxu0
      %1404 = vmatprep.mubr.bf16.mxu0 0
      %1405 = vmatmul.mubr.bf16.gmra.mrb[0].mxu0 %v1344
      %v1406 = vpop.f32.mrb[0].mxu0
      %v1407 = vadd.f32 0.0, %v1406
      %v1408 = vpop.f32.mrb[0].mxu0
      %v1409 = vpop.f32.mrb[0].mxu0
      %v1410 = vadd.f32 0.0, %v1409
      %v1411 = vpop.f32.mrb[0].mxu0
      %1412 = vmatprep.mubr.bf16.mxu0 0
      %1413 = vmatmul.mubr.bf16.gmra.mrb[0].mxu0 %v1347
      %v1414 = vpop.f32.mrb[0].mxu0
      %v1415 = vadd.f32 0.0, %v1414
      %v1416 = vpop.f32.mrb[0].mxu0
      %v1417 = vpop.f32.mrb[0].mxu0
      %v1418 = vadd.f32 0.0, %v1417
      %v1419 = vpop.f32.mrb[0].mxu0
      %1420 = vmatprep.mubr.bf16.mxu0 0
      %1421 = vmatmul.mubr.bf16.gmra.mrb[0].mxu0 %v1350
      %v1422 = vpop.f32.mrb[0].mxu0
      %v1423 = vadd.f32 0.0, %v1422
      %v1424 = vpop.f32.mrb[0].mxu0
      %v1425 = vpop.f32.mrb[0].mxu0
      %v1426 = vadd.f32 0.0, %v1425
      %v1427 = vpop.f32.mrb[0].mxu0
      %1428 = vmatprep.mubr.bf16.mxu0 0
      %1429 = vmatmul.mubr.bf16.gmra.mrb[0].mxu0 %v1353
      %v1430 = vpop.f32.mrb[0].mxu0
      %v1431 = vadd.f32 0.0, %v1430
      %v1432 = vpop.f32.mrb[0].mxu0
      %v1433 = vpop.f32.mrb[0].mxu0
      %v1434 = vadd.f32 0.0, %v1433
      %v1435 = vpop.f32.mrb[0].mxu0
      %1436 = vmatprep.mubr.bf16.mxu0 0
      %1437 = vmatmul.mubr.bf16.gmra.mrb[0].mxu0 %v1356
      %v1438 = vpop.f32.mrb[0].mxu0
      %v1439 = vadd.f32 0.0, %v1438
      %v1440 = vpop.f32.mrb[0].mxu0
      %v1441 = vpop.f32.mrb[0].mxu0
      %v1442 = vadd.f32 0.0, %v1441
      %v1443 = vpop.f32.mrb[0].mxu0
      %1444 = vmatprep.mubr.bf16.mxu0 0
      %1445 = vmatmul.mubr.bf16.gmra.mrb[0].mxu0 %v1359
      %v1446 = vpop.f32.mrb[0].mxu0
      %v1447 = vadd.f32 0.0, %v1446
      %v1448 = vpop.f32.mrb[0].mxu0
      %v1449 = vpop.f32.mrb[0].mxu0
      %v1450 = vpop.f32.mrb[0].mxu0
      %1451 = vdwg.mxu0
      %v1452 = vadd.f32 %v1305, %v1399
      %v1453 = vadd.f32 %v1306, %v1402
      %v1454 = vadd.f32 %v1307, %v1407
      %v1455 = vadd.f32 %v1308, %v1410
      %v1456 = vadd.f32 %v1309, %v1415
      %v1457 = vadd.f32 %v1310, %v1418
      %v1458 = vadd.f32 %v1311, %v1423
      %v1459 = vadd.f32 %v1312, %v1426
      %v1460 = vadd.f32 %v1313, %v1431
      %v1461 = vadd.f32 %v1314, %v1434
      %v1462 = vadd.f32 %v1315, %v1439
      %v1463 = vadd.f32 %v1316, %v1442
      %v1464 = vadd.f32 %v1317, %v1447
      %v1465 = vld [vmem:[%s431 + $0x1f] sm:$0xff]
      %v1466 = vld [vmem:[%s431 + $0x27] sm:$0xff]
      %v1467 = vld [vmem:[%s431 + $0x2f] sm:$0xff]
      %v1468 = vld [vmem:[%s431 + $0x37] sm:$0xff]
      %v1469 = vld [vmem:[%s431 + $0x3f] sm:$0xff]
      %v1470 = vld [vmem:[%s431 + $0x47] sm:$0xff]
      %v1471 = vld [vmem:[%s431 + $0x4f] sm:$0xff]
      %v1472 = vld [vmem:[%s431 + $0x57] sm:$0xff]
      %v1473 = vld [vmem:[%s431 + $0x5f] sm:$0xff]
      %v1474 = vld [vmem:[%s431 + $0x67] sm:$0xff]
      %v1475 = vld [vmem:[%s431 + $0x6f] sm:$0xff]
      %v1476 = vld [vmem:[%s431 + $0x77] sm:$0xff]
      %v1477 = vld [vmem:[%s431 + $0x7f] sm:$0xf]
      %v1478 = vpack.c.bf16 %v1466, %v1465
      %v1479 = vpack.c.bf16 %v1468, %v1467
      %v1480 = vpack.c.bf16 %v1470, %v1469
      %v1481 = vpack.c.bf16 %v1472, %v1471
      %v1482 = vpack.c.bf16 %v1474, %v1473
      %v1483 = vpack.c.bf16 %v1476, %v1475
      %v1484 = vpack.c.bf16 %v1477, %v1477
      %s1485 = scalar_lea.vmem %s5, 14
      %v1486 = vld [vmem:[%s1485] sm:$0x3]
      %v1488 = vsel %vm504, %v1478, 0
      %v1491 = vsel %vm504, %v1479, 0
      %v1494 = vsel %vm504, %v1480, 0
      %v1497 = vsel %vm504, %v1481, 0
      %v1500 = vsel %vm504, %v1482, 0
      %v1503 = vsel %vm504, %v1483, 0
      %v1506 = vsel %vm504, %v1484, 0
      %v1509 = vsel %vm526, %v1486, 0
      %1511 = vmatprep.subr.bf16.mxu0 0
      %1512 = vmatpush1.bf16.msra.mxu0 %v1509
      %1513 = vmatprep.subr.bf16.mxu0 0
      %1514 = vmatpush1.bf16.msra.mxu0 0
      %1515 = vmatprep.subr.bf16.mxu0 0
      %1516 = vmatpush1.bf16.msra.mxu0 0
      %1517 = vmatprep.subr.bf16.mxu0 0
      %1518 = vmatpush1.bf16.msra.mxu0 0
      %1519 = vmatprep.subr.bf16.mxu0 0
      %1520 = vmatpush1.bf16.msra.mxu0 0
      %1521 = vmatprep.subr.bf16.mxu0 0
      %1522 = vmatpush1.bf16.msra.mxu0 0
      %1523 = vmatprep.subr.bf16.mxu0 0
      %1524 = vmatpush1.bf16.msra.mxu0 0
      %1525 = vmatprep.subr.bf16.mxu0 0
      %1526 = vmatpush1.bf16.msra.mxu0 0
      %1527 = vmatprep.subr.bf16.mxu0 0
      %1528 = vmatpush1.bf16.msra.mxu0 0
      %1529 = vmatprep.subr.bf16.mxu0 0
      %1530 = vmatpush1.bf16.msra.mxu0 0
      %1531 = vmatprep.subr.bf16.mxu0 0
      %1532 = vmatpush1.bf16.msra.mxu0 0
      %1533 = vmatprep.subr.bf16.mxu0 0
      %1534 = vmatpush1.bf16.msra.mxu0 0
      %1535 = vmatprep.subr.bf16.mxu0 0
      %1536 = vmatpush1.bf16.msra.mxu0 0
      %1537 = vmatprep.subr.bf16.mxu0 0
      %1538 = vmatpush1.bf16.msra.mxu0 0
      %1539 = vmatprep.subr.bf16.mxu0 0
      %1540 = vmatpush1.bf16.msra.mxu0 0
      %1541 = vmatprep.subr.bf16.mxu0 0
      %1542 = vmatpush1.bf16.msra.mxu0 0
      %1543 = vmatprep.mubr.bf16.mxu0 0
      %1544 = vmatmul.mubr.bf16.gmra.mrb[0].mxu0 %v1488
      %v1545 = vpop.f32.mrb[0].mxu0
      %v1546 = vadd.f32 0.0, %v1545
      %v1547 = vpop.f32.mrb[0].mxu0
      %v1548 = vpop.f32.mrb[0].mxu0
      %v1549 = vadd.f32 0.0, %v1548
      %v1550 = vpop.f32.mrb[0].mxu0
      %1551 = vmatprep.mubr.bf16.mxu0 0
      %1552 = vmatmul.mubr.bf16.gmra.mrb[0].mxu0 %v1491
      %v1553 = vpop.f32.mrb[0].mxu0
      %v1554 = vadd.f32 0.0, %v1553
      %v1555 = vpop.f32.mrb[0].mxu0
      %v1556 = vpop.f32.mrb[0].mxu0
      %v1557 = vadd.f32 0.0, %v1556
      %v1558 = vpop.f32.mrb[0].mxu0
      %1559 = vmatprep.mubr.bf16.mxu0 0
      %1560 = vmatmul.mubr.bf16.gmra.mrb[0].mxu0 %v1494
      %v1561 = vpop.f32.mrb[0].mxu0
      %v1562 = vadd.f32 0.0, %v1561
      %v1563 = vpop.f32.mrb[0].mxu0
      %v1564 = vpop.f32.mrb[0].mxu0
      %v1565 = vadd.f32 0.0, %v1564
      %v1566 = vpop.f32.mrb[0].mxu0
      %1567 = vmatprep.mubr.bf16.mxu0 0
      %1568 = vmatmul.mubr.bf16.gmra.mrb[0].mxu0 %v1497
      %v1569 = vpop.f32.mrb[0].mxu0
      %v1570 = vadd.f32 0.0, %v1569
      %v1571 = vpop.f32.mrb[0].mxu0
      %v1572 = vpop.f32.mrb[0].mxu0
      %v1573 = vadd.f32 0.0, %v1572
      %v1574 = vpop.f32.mrb[0].mxu0
      %1575 = vmatprep.mubr.bf16.mxu0 0
      %1576 = vmatmul.mubr.bf16.gmra.mrb[0].mxu0 %v1500
      %v1577 = vpop.f32.mrb[0].mxu0
      %v1578 = vadd.f32 0.0, %v1577
      %v1579 = vpop.f32.mrb[0].mxu0
      %v1580 = vpop.f32.mrb[0].mxu0
      %v1581 = vadd.f32 0.0, %v1580
      %v1582 = vpop.f32.mrb[0].mxu0
      %1583 = vmatprep.mubr.bf16.mxu0 0
      %1584 = vmatmul.mubr.bf16.gmra.mrb[0].mxu0 %v1503
      %v1585 = vpop.f32.mrb[0].mxu0
      %v1586 = vadd.f32 0.0, %v1585
      %v1587 = vpop.f32.mrb[0].mxu0
      %v1588 = vpop.f32.mrb[0].mxu0
      %v1589 = vadd.f32 0.0, %v1588
      %v1590 = vpop.f32.mrb[0].mxu0
      %1591 = vmatprep.mubr.bf16.mxu0 0
      %1592 = vmatmul.mubr.bf16.gmra.mrb[0].mxu0 %v1506
      %v1593 = vpop.f32.mrb[0].mxu0
      %v1594 = vadd.f32 0.0, %v1593
      %v1595 = vpop.f32.mrb[0].mxu0
      %v1596 = vpop.f32.mrb[0].mxu0
      %v1597 = vpop.f32.mrb[0].mxu0
      %1598 = vdwg.mxu0
      %v1599 = vadd.f32 %v1452, %v1546
      %v1600 = vadd.f32 %v1453, %v1549
      %v1601 = vadd.f32 %v1454, %v1554
      %v1602 = vadd.f32 %v1455, %v1557
      %v1603 = vadd.f32 %v1456, %v1562
      %v1604 = vadd.f32 %v1457, %v1565
      %v1605 = vadd.f32 %v1458, %v1570
      %v1606 = vadd.f32 %v1459, %v1573
      %v1607 = vadd.f32 %v1460, %v1578
      %v1608 = vadd.f32 %v1461, %v1581
      %v1609 = vadd.f32 %v1462, %v1586
      %v1610 = vadd.f32 %v1463, %v1589
      %v1611 = vadd.f32 %v1464, %v1594
      %v1612 = vld [vmem:[%s426 + $0x20] sm:$0xff]
      %v1613 = vld [vmem:[%s426 + $0x28] sm:$0xff]
      %v1614 = vld [vmem:[%s426 + $0x30] sm:$0xff]
      %v1615 = vld [vmem:[%s426 + $0x38] sm:$0xff]
      %v1616 = vld [vmem:[%s426 + $0x40] sm:$0xff]
      %v1617 = vld [vmem:[%s426 + $0x48] sm:$0xff]
      %v1618 = vld [vmem:[%s426 + $0x50] sm:$0xff]
      %v1619 = vld [vmem:[%s426 + $0x58] sm:$0xff]
      %v1620 = vld [vmem:[%s426 + $0x60] sm:$0xff]
      %v1621 = vld [vmem:[%s426 + $0x68] sm:$0xff]
      %v1622 = vld [vmem:[%s426 + $0x70] sm:$0xff]
      %v1623 = vld [vmem:[%s426 + $0x78] sm:$0xff]
      %v1624 = vld [vmem:[%s426 + $0x80] sm:$0xf]
      %v1625 = vpack.c.bf16 %v1613, %v1612
      %v1626 = vpack.c.bf16 %v1615, %v1614
      %v1627 = vpack.c.bf16 %v1617, %v1616
      %v1628 = vpack.c.bf16 %v1619, %v1618
      %v1629 = vpack.c.bf16 %v1621, %v1620
      %v1630 = vpack.c.bf16 %v1623, %v1622
      %v1631 = vpack.c.bf16 %v1624, %v1624
      %s1632 = scalar_lea.vmem %s5, 16
      %v1633 = vld [vmem:[%s1632] sm:$0x3]
      %v1635 = vsel %vm504, %v1625, 0
      %v1638 = vsel %vm504, %v1626, 0
      %v1641 = vsel %vm504, %v1627, 0
      %v1644 = vsel %vm504, %v1628, 0
      %v1647 = vsel %vm504, %v1629, 0
      %v1650 = vsel %vm504, %v1630, 0
      %v1653 = vsel %vm504, %v1631, 0
      %v1656 = vsel %vm526, %v1633, 0
      %1658 = vmatprep.subr.bf16.mxu0 0
      %1659 = vmatpush1.bf16.msra.mxu0 %v1656
      %1660 = vmatprep.subr.bf16.mxu0 0
      %1661 = vmatpush1.bf16.msra.mxu0 0
      %1662 = vmatprep.subr.bf16.mxu0 0
      %1663 = vmatpush1.bf16.msra.mxu0 0
      %1664 = vmatprep.subr.bf16.mxu0 0
      %1665 = vmatpush1.bf16.msra.mxu0 0
      %1666 = vmatprep.subr.bf16.mxu0 0
      %1667 = vmatpush1.bf16.msra.mxu0 0
      %1668 = vmatprep.subr.bf16.mxu0 0
      %1669 = vmatpush1.bf16.msra.mxu0 0
      %1670 = vmatprep.subr.bf16.mxu0 0
      %1671 = vmatpush1.bf16.msra.mxu0 0
      %1672 = vmatprep.subr.bf16.mxu0 0
      %1673 = vmatpush1.bf16.msra.mxu0 0
      %1674 = vmatprep.subr.bf16.mxu0 0
      %1675 = vmatpush1.bf16.msra.mxu0 0
      %1676 = vmatprep.subr.bf16.mxu0 0
      %1677 = vmatpush1.bf16.msra.mxu0 0
      %1678 = vmatprep.subr.bf16.mxu0 0
      %1679 = vmatpush1.bf16.msra.mxu0 0
      %1680 = vmatprep.subr.bf16.mxu0 0
      %1681 = vmatpush1.bf16.msra.mxu0 0
      %1682 = vmatprep.subr.bf16.mxu0 0
      %1683 = vmatpush1.bf16.msra.mxu0 0
      %1684 = vmatprep.subr.bf16.mxu0 0
      %1685 = vmatpush1.bf16.msra.mxu0 0
      %1686 = vmatprep.subr.bf16.mxu0 0
      %1687 = vmatpush1.bf16.msra.mxu0 0
      %1688 = vmatprep.subr.bf16.mxu0 0
      %1689 = vmatpush1.bf16.msra.mxu0 0
      %1690 = vmatprep.mubr.bf16.mxu0 0
      %1691 = vmatmul.mubr.bf16.gmra.mrb[0].mxu0 %v1635
      %v1692 = vpop.f32.mrb[0].mxu0
      %v1693 = vadd.f32 0.0, %v1692
      %v1694 = vpop.f32.mrb[0].mxu0
      %v1695 = vpop.f32.mrb[0].mxu0
      %v1696 = vadd.f32 0.0, %v1695
      %v1697 = vpop.f32.mrb[0].mxu0
      %1698 = vmatprep.mubr.bf16.mxu0 0
      %1699 = vmatmul.mubr.bf16.gmra.mrb[0].mxu0 %v1638
      %v1700 = vpop.f32.mrb[0].mxu0
      %v1701 = vadd.f32 0.0, %v1700
      %v1702 = vpop.f32.mrb[0].mxu0
      %v1703 = vpop.f32.mrb[0].mxu0
      %v1704 = vadd.f32 0.0, %v1703
      %v1705 = vpop.f32.mrb[0].mxu0
      %1706 = vmatprep.mubr.bf16.mxu0 0
      %1707 = vmatmul.mubr.bf16.gmra.mrb[0].mxu0 %v1641
      %v1708 = vpop.f32.mrb[0].mxu0
      %v1709 = vadd.f32 0.0, %v1708
      %v1710 = vpop.f32.mrb[0].mxu0
      %v1711 = vpop.f32.mrb[0].mxu0
      %v1712 = vadd.f32 0.0, %v1711
      %v1713 = vpop.f32.mrb[0].mxu0
      %1714 = vmatprep.mubr.bf16.mxu0 0
      %1715 = vmatmul.mubr.bf16.gmra.mrb[0].mxu0 %v1644
      %v1716 = vpop.f32.mrb[0].mxu0
      %v1717 = vadd.f32 0.0, %v1716
      %v1718 = vpop.f32.mrb[0].mxu0
      %v1719 = vpop.f32.mrb[0].mxu0
      %v1720 = vadd.f32 0.0, %v1719
      %v1721 = vpop.f32.mrb[0].mxu0
      %1722 = vmatprep.mubr.bf16.mxu0 0
      %1723 = vmatmul.mubr.bf16.gmra.mrb[0].mxu0 %v1647
      %v1724 = vpop.f32.mrb[0].mxu0
      %v1725 = vadd.f32 0.0, %v1724
      %v1726 = vpop.f32.mrb[0].mxu0
      %v1727 = vpop.f32.mrb[0].mxu0
      %v1728 = vadd.f32 0.0, %v1727
      %v1729 = vpop.f32.mrb[0].mxu0
      %1730 = vmatprep.mubr.bf16.mxu0 0
      %1731 = vmatmul.mubr.bf16.gmra.mrb[0].mxu0 %v1650
      %v1732 = vpop.f32.mrb[0].mxu0
      %v1733 = vadd.f32 0.0, %v1732
      %v1734 = vpop.f32.mrb[0].mxu0
      %v1735 = vpop.f32.mrb[0].mxu0
      %v1736 = vadd.f32 0.0, %v1735
      %v1737 = vpop.f32.mrb[0].mxu0
      %1738 = vmatprep.mubr.bf16.mxu0 0
      %1739 = vmatmul.mubr.bf16.gmra.mrb[0].mxu0 %v1653
      %v1740 = vpop.f32.mrb[0].mxu0
      %v1741 = vadd.f32 0.0, %v1740
      %v1742 = vpop.f32.mrb[0].mxu0
      %v1743 = vpop.f32.mrb[0].mxu0
      %v1744 = vpop.f32.mrb[0].mxu0
      %1745 = vdwg.mxu0
      %v1746 = vadd.f32 %v1599, %v1693
      %v1747 = vadd.f32 %v1600, %v1696
      %v1748 = vadd.f32 %v1601, %v1701
      %v1749 = vadd.f32 %v1602, %v1704
      %v1750 = vadd.f32 %v1603, %v1709
      %v1751 = vadd.f32 %v1604, %v1712
      %v1752 = vadd.f32 %v1605, %v1717
      %v1753 = vadd.f32 %v1606, %v1720
      %v1754 = vadd.f32 %v1607, %v1725
      %v1755 = vadd.f32 %v1608, %v1728
      %v1756 = vadd.f32 %v1609, %v1733
      %v1757 = vadd.f32 %v1610, %v1736
      %v1758 = vadd.f32 %v1611, %v1741
      %v1759 = vld [vmem:[%s6] sm:$0x1]
      %v1761 = vlaneseq
      %v1762 = vshrl.u32 %v1761, 7
      %v1763 = vsub.s32 0, %v1762
      %v1764 = vrot.slane %v1759, %v1763
      %v1766 = vadd.f32 %v1746, %v1764
      %v1767 = vadd.f32 %v1747, %v1764
      %v1768 = vadd.f32 %v1748, %v1764
      %v1769 = vadd.f32 %v1749, %v1764
      %v1770 = vadd.f32 %v1750, %v1764
      %v1771 = vadd.f32 %v1751, %v1764
      %v1772 = vadd.f32 %v1752, %v1764
      %v1773 = vadd.f32 %v1753, %v1764
      %v1774 = vadd.f32 %v1754, %v1764
      %v1775 = vadd.f32 %v1755, %v1764
      %v1776 = vadd.f32 %v1756, %v1764
      %v1777 = vadd.f32 %v1757, %v1764
      %v1778 = vadd.f32 %v1758, %v1764
      %v1779 = vmax.f32 %v1766, 0.0
      %v1780 = vmax.f32 %v1767, 0.0
      %v1781 = vmax.f32 %v1768, 0.0
      %v1782 = vmax.f32 %v1769, 0.0
      %v1783 = vmax.f32 %v1770, 0.0
      %v1784 = vmax.f32 %v1771, 0.0
      %v1785 = vmax.f32 %v1772, 0.0
      %v1786 = vmax.f32 %v1773, 0.0
      %v1787 = vmax.f32 %v1774, 0.0
      %v1788 = vmax.f32 %v1775, 0.0
      %v1789 = vmax.f32 %v1776, 0.0
      %v1790 = vmax.f32 %v1777, 0.0
      %v1791 = vmax.f32 %v1778, 0.0
      %vm1792 = vcmask 64512
      %1793 = vst.msk [vmem:[#allocation2] sm:$0xff] %vm1792, 0.0
      %1794 = vst.msk [vmem:[#allocation2 + $0x8] sm:$0xff] %vm1792, 0.0
      %1795 = vst.msk [vmem:[#allocation2 + $0x10] sm:$0xff] %vm1792, 0.0
      %1796 = vst.msk [vmem:[#allocation2 + $0x18] sm:$0xff] %vm1792, 0.0
      %1797 = vst.msk [vmem:[#allocation2 + $0x20] sm:$0xff] %vm1792, 0.0
      %1798 = vst.msk [vmem:[#allocation2 + $0x28] sm:$0xff] %vm1792, 0.0
      %1799 = vst.msk [vmem:[#allocation2 + $0x30] sm:$0xff] %vm1792, 0.0
      %1800 = vst.msk [vmem:[#allocation2 + $0x38] sm:$0xff] %vm1792, 0.0
      %1801 = vst.msk [vmem:[#allocation2 + $0x40] sm:$0xff] %vm1792, 0.0
      %1802 = vst.msk [vmem:[#allocation2 + $0x48] sm:$0xff] %vm1792, 0.0
      %1803 = vst.msk [vmem:[#allocation2 + $0x50] sm:$0xff] %vm1792, 0.0
      %1804 = vst.msk [vmem:[#allocation2 + $0x58] sm:$0xff] %vm1792, 0.0
      %1805 = vst.msk [vmem:[#allocation2 + $0x60] sm:$0xff] %vm1792, 0.0
      %1806 = vst.msk [vmem:[#allocation2 + $0x68] sm:$0xff] %vm1792, 0.0
      %1807 = vst.msk [vmem:[#allocation2 + $0x70] sm:$0xff] %vm1792, 0.0
      %1808 = vst.msk [vmem:[#allocation2 + $0x78] sm:$0xff] %vm1792, 0.0
      %1809 = vst.msk [vmem:[#allocation2 + $0x80] sm:$0xff] %vm1792, 0.0
      %1810 = vst.msk [vmem:[#allocation2 + $0x88] sm:$0xff] %vm1792, 0.0
      %1811 = vst.msk [vmem:[#allocation2 + $0x90] sm:$0xff] %vm1792, 0.0
      %1812 = vst.msk [vmem:[#allocation2 + $0x98] sm:$0xff] %vm1792, 0.0
      %vm1813 = vcmask 60416
      %1814 = vst.msk [vmem:[#allocation2 + $0xa0] sm:$0xf] %vm1813, 0.0
      %1816 = vset.pattern.permute.xlu0 0
      %1817 = vperm.xlu0 %1816, %v448
      %v1818 = vpop.permute.xlu0 %1817
      %1821 = vset.pattern.permute.xlu0 0
      %1822 = vperm.xlu0 %1821, %v449
      %v1823 = vpop.permute.xlu0 %1822
      %1826 = vset.pattern.permute.xlu0 0
      %1827 = vperm.xlu0 %1826, %v450
      %v1828 = vpop.permute.xlu0 %1827
      %1831 = vset.pattern.permute.xlu0 0
      %1832 = vperm.xlu0 %1831, %v451
      %v1833 = vpop.permute.xlu0 %1832
      %1836 = vset.pattern.permute.xlu0 0
      %1837 = vperm.xlu0 %1836, %v452
      %v1838 = vpop.permute.xlu0 %1837
      %1841 = vset.pattern.permute.xlu0 0
      %1842 = vperm.xlu0 %1841, %v453
      %v1843 = vpop.permute.xlu0 %1842
      %1846 = vset.pattern.permute.xlu0 0
      %1847 = vperm.xlu0 %1846, %v454
      %v1848 = vpop.permute.xlu0 %1847
      %1851 = vset.pattern.permute.xlu0 0
      %1852 = vperm.xlu0 %1851, %v455
      %v1853 = vpop.permute.xlu0 %1852
      %1856 = vset.pattern.permute.xlu0 0
      %1857 = vperm.xlu0 %1856, %v456
      %v1858 = vpop.permute.xlu0 %1857
      %1861 = vset.pattern.permute.xlu0 0
      %1862 = vperm.xlu0 %1861, %v457
      %v1863 = vpop.permute.xlu0 %1862
      %1866 = vset.pattern.permute.xlu0 0
      %1867 = vperm.xlu0 %1866, %v458
      %v1868 = vpop.permute.xlu0 %1867
      %1871 = vset.pattern.permute.xlu0 0
      %1872 = vperm.xlu0 %1871, %v459
      %v1873 = vpop.permute.xlu0 %1872
      %1876 = vset.pattern.permute.xlu0 0
      %1877 = vperm.xlu0 %1876, %v460
      %v1878 = vpop.permute.xlu0 %1877
      %v1880 = vmul.f32 %v1779, %v1818
      %v1881 = vmul.f32 %v1780, %v1823
      %v1882 = vmul.f32 %v1781, %v1828
      %v1883 = vmul.f32 %v1782, %v1833
      %v1884 = vmul.f32 %v1783, %v1838
      %v1885 = vmul.f32 %v1784, %v1843
      %v1886 = vmul.f32 %v1785, %v1848
      %v1887 = vmul.f32 %v1786, %v1853
      %v1888 = vmul.f32 %v1787, %v1858
      %v1889 = vmul.f32 %v1788, %v1863
      %v1890 = vmul.f32 %v1789, %v1868
      %v1891 = vmul.f32 %v1790, %v1873
      %v1892 = vmul.f32 %v1791, %v1878
      %1893 = vst.msk [vmem:[#allocation2 + $0x20] sm:$0xff] %vm1792, %v1880
      %1894 = vst.msk [vmem:[#allocation2 + $0x28] sm:$0xff] %vm1792, %v1881
      %1895 = vst.msk [vmem:[#allocation2 + $0x30] sm:$0xff] %vm1792, %v1882
      %1896 = vst.msk [vmem:[#allocation2 + $0x38] sm:$0xff] %vm1792, %v1883
      %1897 = vst.msk [vmem:[#allocation2 + $0x40] sm:$0xff] %vm1792, %v1884
      %1898 = vst.msk [vmem:[#allocation2 + $0x48] sm:$0xff] %vm1792, %v1885
      %1899 = vst.msk [vmem:[#allocation2 + $0x50] sm:$0xff] %vm1792, %v1886
      %1900 = vst.msk [vmem:[#allocation2 + $0x58] sm:$0xff] %vm1792, %v1887
      %1901 = vst.msk [vmem:[#allocation2 + $0x60] sm:$0xff] %vm1792, %v1888
      %1902 = vst.msk [vmem:[#allocation2 + $0x68] sm:$0xff] %vm1792, %v1889
      %1903 = vst.msk [vmem:[#allocation2 + $0x70] sm:$0xff] %vm1792, %v1890
      %1904 = vst.msk [vmem:[#allocation2 + $0x78] sm:$0xff] %vm1792, %v1891
      %1905 = vst.msk [vmem:[#allocation2 + $0x80] sm:$0xf] %vm1813, %v1892
      %v1906 = vld [vmem:[#allocation2 + $0x15] sm:$0xff]
      %v1907 = vld [vmem:[#allocation2 + $0x1d] sm:$0xff]
      %v1908 = vld [vmem:[#allocation2 + $0x25] sm:$0xff]
      %v1909 = vld [vmem:[#allocation2 + $0x2d] sm:$0xff]
      %v1910 = vld [vmem:[#allocation2 + $0x35] sm:$0xff]
      %v1911 = vld [vmem:[#allocation2 + $0x3d] sm:$0xff]
      %v1912 = vld [vmem:[#allocation2 + $0x45] sm:$0xff]
      %v1913 = vld [vmem:[#allocation2 + $0x4d] sm:$0xff]
      %v1914 = vld [vmem:[#allocation2 + $0x55] sm:$0xff]
      %v1915 = vld [vmem:[#allocation2 + $0x5d] sm:$0xff]
      %v1916 = vld [vmem:[#allocation2 + $0x65] sm:$0xff]
      %v1917 = vld [vmem:[#allocation2 + $0x6d] sm:$0xff]
      %v1918 = vld [vmem:[#allocation2 + $0x75] sm:$0xf]
      %v1919 = vpack.c.bf16 %v1907, %v1906
      %v1920 = vpack.c.bf16 %v1909, %v1908
      %v1921 = vpack.c.bf16 %v1911, %v1910
      %v1922 = vpack.c.bf16 %v1913, %v1912
      %v1923 = vpack.c.bf16 %v1915, %v1914
      %v1924 = vpack.c.bf16 %v1917, %v1916
      %v1925 = vpack.c.bf16 %v1918, %v1918
      %v1926 = vld [vmem:[%s7] sm:$0xf]
      %v1927 = vld [vmem:[#allocation2 + $0x16] sm:$0xff]
      %v1928 = vld [vmem:[#allocation2 + $0x1e] sm:$0xff]
      %v1929 = vld [vmem:[#allocation2 + $0x26] sm:$0xff]
      %v1930 = vld [vmem:[#allocation2 + $0x2e] sm:$0xff]
      %v1931 = vld [vmem:[#allocation2 + $0x36] sm:$0xff]
      %v1932 = vld [vmem:[#allocation2 + $0x3e] sm:$0xff]
      %v1933 = vld [vmem:[#allocation2 + $0x46] sm:$0xff]
      %v1934 = vld [vmem:[#allocation2 + $0x4e] sm:$0xff]
      %v1935 = vld [vmem:[#allocation2 + $0x56] sm:$0xff]
      %v1936 = vld [vmem:[#allocation2 + $0x5e] sm:$0xff]
      %v1937 = vld [vmem:[#allocation2 + $0x66] sm:$0xff]
      %v1938 = vld [vmem:[#allocation2 + $0x6e] sm:$0xff]
      %v1939 = vld [vmem:[#allocation2 + $0x76] sm:$0xf]
      %v1940 = vpack.c.bf16 %v1928, %v1927
      %v1941 = vpack.c.bf16 %v1930, %v1929
      %v1942 = vpack.c.bf16 %v1932, %v1931
      %v1943 = vpack.c.bf16 %v1934, %v1933
      %v1944 = vpack.c.bf16 %v1936, %v1935
      %v1945 = vpack.c.bf16 %v1938, %v1937
      %v1946 = vpack.c.bf16 %v1939, %v1939
      %s1947 = scalar_lea.vmem %s7, 4
      %v1948 = vld [vmem:[%s1947] sm:$0xf]
      %v1950 = vsel %vm1792, %v1940, 0
      %v1953 = vsel %vm1792, %v1941, 0
      %v1956 = vsel %vm1792, %v1942, 0
      %v1959 = vsel %vm1792, %v1943, 0
      %v1962 = vsel %vm1792, %v1944, 0
      %v1965 = vsel %vm1792, %v1945, 0
      %v1968 = vsel %vm1792, %v1946, 0
      %vm1970 = vcmask 1043456
      %v1972 = vsel %vm1970, %v1948, 0
      %1974 = vmatprep.subr.bf16.mxu0 0
      %1975 = vmatpush1.bf16.msra.mxu0 %v1972
      %1976 = vmatprep.subr.bf16.mxu0 0
      %1977 = vmatpush1.bf16.msra.mxu0 0
      %1978 = vmatprep.subr.bf16.mxu0 0
      %1979 = vmatpush1.bf16.msra.mxu0 0
      %1980 = vmatprep.subr.bf16.mxu0 0
      %1981 = vmatpush1.bf16.msra.mxu0 0
      %1982 = vmatprep.subr.bf16.mxu0 0
      %1983 = vmatpush1.bf16.msra.mxu0 0
      %1984 = vmatprep.subr.bf16.mxu0 0
      %1985 = vmatpush1.bf16.msra.mxu0 0
      %1986 = vmatprep.subr.bf16.mxu0 0
      %1987 = vmatpush1.bf16.msra.mxu0 0
      %1988 = vmatprep.subr.bf16.mxu0 0
      %1989 = vmatpush1.bf16.msra.mxu0 0
      %1990 = vmatprep.subr.bf16.mxu0 0
      %1991 = vmatpush1.bf16.msra.mxu0 0
      %1992 = vmatprep.subr.bf16.mxu0 0
      %1993 = vmatpush1.bf16.msra.mxu0 0
      %1994 = vmatprep.subr.bf16.mxu0 0
      %1995 = vmatpush1.bf16.msra.mxu0 0
      %1996 = vmatprep.subr.bf16.mxu0 0
      %1997 = vmatpush1.bf16.msra.mxu0 0
      %1998 = vmatprep.subr.bf16.mxu0 0
      %1999 = vmatpush1.bf16.msra.mxu0 0
      %2000 = vmatprep.subr.bf16.mxu0 0
      %2001 = vmatpush1.bf16.msra.mxu0 0
      %2002 = vmatprep.subr.bf16.mxu0 0
      %2003 = vmatpush1.bf16.msra.mxu0 0
      %2004 = vmatprep.subr.bf16.mxu0 0
      %2005 = vmatpush1.bf16.msra.mxu0 0
      %2006 = vmatprep.mubr.bf16.mxu0 0
      %2007 = vmatmul.mubr.bf16.gmra.mrb[0].mxu0 %v1950
      %v2008 = vpop.f32.mrb[0].mxu0
      %v2009 = vadd.f32 0.0, %v2008
      %v2010 = vpop.f32.mrb[0].mxu0
      %v2011 = vpop.f32.mrb[0].mxu0
      %v2012 = vadd.f32 0.0, %v2011
      %v2013 = vpop.f32.mrb[0].mxu0
      %2014 = vmatprep.mubr.bf16.mxu0 0
      %2015 = vmatmul.mubr.bf16.gmra.mrb[0].mxu0 %v1953
      %v2016 = vpop.f32.mrb[0].mxu0
      %v2017 = vadd.f32 0.0, %v2016
      %v2018 = vpop.f32.mrb[0].mxu0
      %v2019 = vpop.f32.mrb[0].mxu0
      %v2020 = vadd.f32 0.0, %v2019
      %v2021 = vpop.f32.mrb[0].mxu0
      %2022 = vmatprep.mubr.bf16.mxu0 0
      %2023 = vmatmul.mubr.bf16.gmra.mrb[0].mxu0 %v1956
      %v2024 = vpop.f32.mrb[0].mxu0
      %v2025 = vadd.f32 0.0, %v2024
      %v2026 = vpop.f32.mrb[0].mxu0
      %v2027 = vpop.f32.mrb[0].mxu0
      %v2028 = vadd.f32 0.0, %v2027
      %v2029 = vpop.f32.mrb[0].mxu0
      %2030 = vmatprep.mubr.bf16.mxu0 0
      %2031 = vmatmul.mubr.bf16.gmra.mrb[0].mxu0 %v1959
      %v2032 = vpop.f32.mrb[0].mxu0
      %v2033 = vadd.f32 0.0, %v2032
      %v2034 = vpop.f32.mrb[0].mxu0
      %v2035 = vpop.f32.mrb[0].mxu0
      %v2036 = vadd.f32 0.0, %v2035
      %v2037 = vpop.f32.mrb[0].mxu0
      %2038 = vmatprep.mubr.bf16.mxu0 0
      %2039 = vmatmul.mubr.bf16.gmra.mrb[0].mxu0 %v1962
      %v2040 = vpop.f32.mrb[0].mxu0
      %v2041 = vadd.f32 0.0, %v2040
      %v2042 = vpop.f32.mrb[0].mxu0
      %v2043 = vpop.f32.mrb[0].mxu0
      %v2044 = vadd.f32 0.0, %v2043
      %v2045 = vpop.f32.mrb[0].mxu0
      %2046 = vmatprep.mubr.bf16.mxu0 0
      %2047 = vmatmul.mubr.bf16.gmra.mrb[0].mxu0 %v1965
      %v2048 = vpop.f32.mrb[0].mxu0
      %v2049 = vadd.f32 0.0, %v2048
      %v2050 = vpop.f32.mrb[0].mxu0
      %v2051 = vpop.f32.mrb[0].mxu0
      %v2052 = vadd.f32 0.0, %v2051
      %v2053 = vpop.f32.mrb[0].mxu0
      %2054 = vmatprep.mubr.bf16.mxu0 0
      %2055 = vmatmul.mubr.bf16.gmra.mrb[0].mxu0 %v1968
      %v2056 = vpop.f32.mrb[0].mxu0
      %v2057 = vadd.f32 0.0, %v2056
      %v2058 = vpop.f32.mrb[0].mxu0
      %v2059 = vpop.f32.mrb[0].mxu0
      %v2060 = vpop.f32.mrb[0].mxu0
      %2061 = vdwg.mxu0
      %v2063 = vsel %vm1792, %v1919, 0
      %v2066 = vsel %vm1792, %v1920, 0
      %v2069 = vsel %vm1792, %v1921, 0
      %v2072 = vsel %vm1792, %v1922, 0
      %v2075 = vsel %vm1792, %v1923, 0
      %v2078 = vsel %vm1792, %v1924, 0
      %v2081 = vsel %vm1792, %v1925, 0
      %v2084 = vsel %vm1970, %v1926, 0
      %2086 = vmatprep.subr.bf16.mxu0 0
      %2087 = vmatpush1.bf16.msra.mxu0 %v2084
      %2088 = vmatprep.subr.bf16.mxu0 0
      %2089 = vmatpush1.bf16.msra.mxu0 0
      %2090 = vmatprep.subr.bf16.mxu0 0
      %2091 = vmatpush1.bf16.msra.mxu0 0
      %2092 = vmatprep.subr.bf16.mxu0 0
      %2093 = vmatpush1.bf16.msra.mxu0 0
      %2094 = vmatprep.subr.bf16.mxu0 0
      %2095 = vmatpush1.bf16.msra.mxu0 0
      %2096 = vmatprep.subr.bf16.mxu0 0
      %2097 = vmatpush1.bf16.msra.mxu0 0
      %2098 = vmatprep.subr.bf16.mxu0 0
      %2099 = vmatpush1.bf16.msra.mxu0 0
      %2100 = vmatprep.subr.bf16.mxu0 0
      %2101 = vmatpush1.bf16.msra.mxu0 0
      %2102 = vmatprep.subr.bf16.mxu0 0
      %2103 = vmatpush1.bf16.msra.mxu0 0
      %2104 = vmatprep.subr.bf16.mxu0 0
      %2105 = vmatpush1.bf16.msra.mxu0 0
      %2106 = vmatprep.subr.bf16.mxu0 0
      %2107 = vmatpush1.bf16.msra.mxu0 0
      %2108 = vmatprep.subr.bf16.mxu0 0
      %2109 = vmatpush1.bf16.msra.mxu0 0
      %2110 = vmatprep.subr.bf16.mxu0 0
      %2111 = vmatpush1.bf16.msra.mxu0 0
      %2112 = vmatprep.subr.bf16.mxu0 0
      %2113 = vmatpush1.bf16.msra.mxu0 0
      %2114 = vmatprep.subr.bf16.mxu0 0
      %2115 = vmatpush1.bf16.msra.mxu0 0
      %2116 = vmatprep.subr.bf16.mxu0 0
      %2117 = vmatpush1.bf16.msra.mxu0 0
      %2118 = vmatprep.mubr.bf16.mxu0 0
      %2119 = vmatmul.mubr.bf16.gmra.mrb[0].mxu0 %v2063
      %v2120 = vpop.f32.mrb[0].mxu0
      %v2121 = vadd.f32 %v2009, %v2120
      %v2122 = vpop.f32.mrb[0].mxu0
      %v2123 = vpop.f32.mrb[0].mxu0
      %v2124 = vadd.f32 %v2012, %v2123
      %v2125 = vpop.f32.mrb[0].mxu0
      %2126 = vmatprep.mubr.bf16.mxu0 0
      %2127 = vmatmul.mubr.bf16.gmra.mrb[0].mxu0 %v2066
      %v2128 = vpop.f32.mrb[0].mxu0
      %v2129 = vadd.f32 %v2017, %v2128
      %v2130 = vpop.f32.mrb[0].mxu0
      %v2131 = vpop.f32.mrb[0].mxu0
      %v2132 = vadd.f32 %v2020, %v2131
      %v2133 = vpop.f32.mrb[0].mxu0
      %2134 = vmatprep.mubr.bf16.mxu0 0
      %2135 = vmatmul.mubr.bf16.gmra.mrb[0].mxu0 %v2069
      %v2136 = vpop.f32.mrb[0].mxu0
      %v2137 = vadd.f32 %v2025, %v2136
      %v2138 = vpop.f32.mrb[0].mxu0
      %v2139 = vpop.f32.mrb[0].mxu0
      %v2140 = vadd.f32 %v2028, %v2139
      %v2141 = vpop.f32.mrb[0].mxu0
      %2142 = vmatprep.mubr.bf16.mxu0 0
      %2143 = vmatmul.mubr.bf16.gmra.mrb[0].mxu0 %v2072
      %v2144 = vpop.f32.mrb[0].mxu0
      %v2145 = vadd.f32 %v2033, %v2144
      %v2146 = vpop.f32.mrb[0].mxu0
      %v2147 = vpop.f32.mrb[0].mxu0
      %v2148 = vadd.f32 %v2036, %v2147
      %v2149 = vpop.f32.mrb[0].mxu0
      %2150 = vmatprep.mubr.bf16.mxu0 0
      %2151 = vmatmul.mubr.bf16.gmra.mrb[0].mxu0 %v2075
      %v2152 = vpop.f32.mrb[0].mxu0
      %v2153 = vadd.f32 %v2041, %v2152
      %v2154 = vpop.f32.mrb[0].mxu0
      %v2155 = vpop.f32.mrb[0].mxu0
      %v2156 = vadd.f32 %v2044, %v2155
      %v2157 = vpop.f32.mrb[0].mxu0
      %2158 = vmatprep.mubr.bf16.mxu0 0
      %2159 = vmatmul.mubr.bf16.gmra.mrb[0].mxu0 %v2078
      %v2160 = vpop.f32.mrb[0].mxu0
      %v2161 = vadd.f32 %v2049, %v2160
      %v2162 = vpop.f32.mrb[0].mxu0
      %v2163 = vpop.f32.mrb[0].mxu0
      %v2164 = vadd.f32 %v2052, %v2163
      %v2165 = vpop.f32.mrb[0].mxu0
      %2166 = vmatprep.mubr.bf16.mxu0 0
      %2167 = vmatmul.mubr.bf16.gmra.mrb[0].mxu0 %v2081
      %v2168 = vpop.f32.mrb[0].mxu0
      %v2169 = vadd.f32 %v2057, %v2168
      %v2170 = vpop.f32.mrb[0].mxu0
      %v2171 = vpop.f32.mrb[0].mxu0
      %v2172 = vpop.f32.mrb[0].mxu0
      %2173 = vdwg.mxu0
      %v2174 = vld [vmem:[#allocation2 + $0x17] sm:$0xff]
      %v2175 = vld [vmem:[#allocation2 + $0x1f] sm:$0xff]
      %v2176 = vld [vmem:[#allocation2 + $0x27] sm:$0xff]
      %v2177 = vld [vmem:[#allocation2 + $0x2f] sm:$0xff]
      %v2178 = vld [vmem:[#allocation2 + $0x37] sm:$0xff]
      %v2179 = vld [vmem:[#allocation2 + $0x3f] sm:$0xff]
      %v2180 = vld [vmem:[#allocation2 + $0x47] sm:$0xff]
      %v2181 = vld [vmem:[#allocation2 + $0x4f] sm:$0xff]
      %v2182 = vld [vmem:[#allocation2 + $0x57] sm:$0xff]
      %v2183 = vld [vmem:[#allocation2 + $0x5f] sm:$0xff]
      %v2184 = vld [vmem:[#allocation2 + $0x67] sm:$0xff]
      %v2185 = vld [vmem:[#allocation2 + $0x6f] sm:$0xff]
      %v2186 = vld [vmem:[#allocation2 + $0x77] sm:$0xf]
      %v2187 = vpack.c.bf16 %v2175, %v2174
      %v2188 = vpack.c.bf16 %v2177, %v2176
      %v2189 = vpack.c.bf16 %v2179, %v2178
      %v2190 = vpack.c.bf16 %v2181, %v2180
      %v2191 = vpack.c.bf16 %v2183, %v2182
      %v2192 = vpack.c.bf16 %v2185, %v2184
      %v2193 = vpack.c.bf16 %v2186, %v2186
      %s2194 = scalar_lea.vmem %s7, 8
      %v2195 = vld [vmem:[%s2194] sm:$0xf]
      %v2197 = vsel %vm1792, %v2187, 0
      %v2200 = vsel %vm1792, %v2188, 0
      %v2203 = vsel %vm1792, %v2189, 0
      %v2206 = vsel %vm1792, %v2190, 0
      %v2209 = vsel %vm1792, %v2191, 0
      %v2212 = vsel %vm1792, %v2192, 0
      %v2215 = vsel %vm1792, %v2193, 0
      %v2218 = vsel %vm1970, %v2195, 0
      %2220 = vmatprep.subr.bf16.mxu0 0
      %2221 = vmatpush1.bf16.msra.mxu0 %v2218
      %2222 = vmatprep.subr.bf16.mxu0 0
      %2223 = vmatpush1.bf16.msra.mxu0 0
      %2224 = vmatprep.subr.bf16.mxu0 0
      %2225 = vmatpush1.bf16.msra.mxu0 0
      %2226 = vmatprep.subr.bf16.mxu0 0
      %2227 = vmatpush1.bf16.msra.mxu0 0
      %2228 = vmatprep.subr.bf16.mxu0 0
      %2229 = vmatpush1.bf16.msra.mxu0 0
      %2230 = vmatprep.subr.bf16.mxu0 0
      %2231 = vmatpush1.bf16.msra.mxu0 0
      %2232 = vmatprep.subr.bf16.mxu0 0
      %2233 = vmatpush1.bf16.msra.mxu0 0
      %2234 = vmatprep.subr.bf16.mxu0 0
      %2235 = vmatpush1.bf16.msra.mxu0 0
      %2236 = vmatprep.subr.bf16.mxu0 0
      %2237 = vmatpush1.bf16.msra.mxu0 0
      %2238 = vmatprep.subr.bf16.mxu0 0
      %2239 = vmatpush1.bf16.msra.mxu0 0
      %2240 = vmatprep.subr.bf16.mxu0 0
      %2241 = vmatpush1.bf16.msra.mxu0 0
      %2242 = vmatprep.subr.bf16.mxu0 0
      %2243 = vmatpush1.bf16.msra.mxu0 0
      %2244 = vmatprep.subr.bf16.mxu0 0
      %2245 = vmatpush1.bf16.msra.mxu0 0
      %2246 = vmatprep.subr.bf16.mxu0 0
      %2247 = vmatpush1.bf16.msra.mxu0 0
      %2248 = vmatprep.subr.bf16.mxu0 0
      %2249 = vmatpush1.bf16.msra.mxu0 0
      %2250 = vmatprep.subr.bf16.mxu0 0
      %2251 = vmatpush1.bf16.msra.mxu0 0
      %2252 = vmatprep.mubr.bf16.mxu0 0
      %2253 = vmatmul.mubr.bf16.gmra.mrb[0].mxu0 %v2197
      %v2254 = vpop.f32.mrb[0].mxu0
      %v2255 = vadd.f32 0.0, %v2254
      %v2256 = vpop.f32.mrb[0].mxu0
      %v2257 = vpop.f32.mrb[0].mxu0
      %v2258 = vadd.f32 0.0, %v2257
      %v2259 = vpop.f32.mrb[0].mxu0
      %2260 = vmatprep.mubr.bf16.mxu0 0
      %2261 = vmatmul.mubr.bf16.gmra.mrb[0].mxu0 %v2200
      %v2262 = vpop.f32.mrb[0].mxu0
      %v2263 = vadd.f32 0.0, %v2262
      %v2264 = vpop.f32.mrb[0].mxu0
      %v2265 = vpop.f32.mrb[0].mxu0
      %v2266 = vadd.f32 0.0, %v2265
      %v2267 = vpop.f32.mrb[0].mxu0
      %2268 = vmatprep.mubr.bf16.mxu0 0
      %2269 = vmatmul.mubr.bf16.gmra.mrb[0].mxu0 %v2203
      %v2270 = vpop.f32.mrb[0].mxu0
      %v2271 = vadd.f32 0.0, %v2270
      %v2272 = vpop.f32.mrb[0].mxu0
      %v2273 = vpop.f32.mrb[0].mxu0
      %v2274 = vadd.f32 0.0, %v2273
      %v2275 = vpop.f32.mrb[0].mxu0
      %2276 = vmatprep.mubr.bf16.mxu0 0
      %2277 = vmatmul.mubr.bf16.gmra.mrb[0].mxu0 %v2206
      %v2278 = vpop.f32.mrb[0].mxu0
      %v2279 = vadd.f32 0.0, %v2278
      %v2280 = vpop.f32.mrb[0].mxu0
      %v2281 = vpop.f32.mrb[0].mxu0
      %v2282 = vadd.f32 0.0, %v2281
      %v2283 = vpop.f32.mrb[0].mxu0
      %2284 = vmatprep.mubr.bf16.mxu0 0
      %2285 = vmatmul.mubr.bf16.gmra.mrb[0].mxu0 %v2209
      %v2286 = vpop.f32.mrb[0].mxu0
      %v2287 = vadd.f32 0.0, %v2286
      %v2288 = vpop.f32.mrb[0].mxu0
      %v2289 = vpop.f32.mrb[0].mxu0
      %v2290 = vadd.f32 0.0, %v2289
      %v2291 = vpop.f32.mrb[0].mxu0
      %2292 = vmatprep.mubr.bf16.mxu0 0
      %2293 = vmatmul.mubr.bf16.gmra.mrb[0].mxu0 %v2212
      %v2294 = vpop.f32.mrb[0].mxu0
      %v2295 = vadd.f32 0.0, %v2294
      %v2296 = vpop.f32.mrb[0].mxu0
      %v2297 = vpop.f32.mrb[0].mxu0
      %v2298 = vadd.f32 0.0, %v2297
      %v2299 = vpop.f32.mrb[0].mxu0
      %2300 = vmatprep.mubr.bf16.mxu0 0
      %2301 = vmatmul.mubr.bf16.gmra.mrb[0].mxu0 %v2215
      %v2302 = vpop.f32.mrb[0].mxu0
      %v2303 = vadd.f32 0.0, %v2302
      %v2304 = vpop.f32.mrb[0].mxu0
      %v2305 = vpop.f32.mrb[0].mxu0
      %v2306 = vpop.f32.mrb[0].mxu0
      %2307 = vdwg.mxu0
      %v2308 = vadd.f32 %v2121, %v2255
      %v2309 = vadd.f32 %v2124, %v2258
      %v2310 = vadd.f32 %v2129, %v2263
      %v2311 = vadd.f32 %v2132, %v2266
      %v2312 = vadd.f32 %v2137, %v2271
      %v2313 = vadd.f32 %v2140, %v2274
      %v2314 = vadd.f32 %v2145, %v2279
      %v2315 = vadd.f32 %v2148, %v2282
      %v2316 = vadd.f32 %v2153, %v2287
      %v2317 = vadd.f32 %v2156, %v2290
      %v2318 = vadd.f32 %v2161, %v2295
      %v2319 = vadd.f32 %v2164, %v2298
      %v2320 = vadd.f32 %v2169, %v2303
      %v2321 = vld [vmem:[#allocation2 + $0x1f] sm:$0xff]
      %v2322 = vld [vmem:[#allocation2 + $0x27] sm:$0xff]
      %v2323 = vld [vmem:[#allocation2 + $0x2f] sm:$0xff]
      %v2324 = vld [vmem:[#allocation2 + $0x37] sm:$0xff]
      %v2325 = vld [vmem:[#allocation2 + $0x3f] sm:$0xff]
      %v2326 = vld [vmem:[#allocation2 + $0x47] sm:$0xff]
      %v2327 = vld [vmem:[#allocation2 + $0x4f] sm:$0xff]
      %v2328 = vld [vmem:[#allocation2 + $0x57] sm:$0xff]
      %v2329 = vld [vmem:[#allocation2 + $0x5f] sm:$0xff]
      %v2330 = vld [vmem:[#allocation2 + $0x67] sm:$0xff]
      %v2331 = vld [vmem:[#allocation2 + $0x6f] sm:$0xff]
      %v2332 = vld [vmem:[#allocation2 + $0x77] sm:$0xff]
      %v2333 = vld [vmem:[#allocation2 + $0x7f] sm:$0xf]
      %v2334 = vpack.c.bf16 %v2322, %v2321
      %v2335 = vpack.c.bf16 %v2324, %v2323
      %v2336 = vpack.c.bf16 %v2326, %v2325
      %v2337 = vpack.c.bf16 %v2328, %v2327
      %v2338 = vpack.c.bf16 %v2330, %v2329
      %v2339 = vpack.c.bf16 %v2332, %v2331
      %v2340 = vpack.c.bf16 %v2333, %v2333
      %s2341 = scalar_lea.vmem %s7, 12
      %v2342 = vld [vmem:[%s2341] sm:$0xf]
      %v2344 = vsel %vm1792, %v2334, 0
      %v2347 = vsel %vm1792, %v2335, 0
      %v2350 = vsel %vm1792, %v2336, 0
      %v2353 = vsel %vm1792, %v2337, 0
      %v2356 = vsel %vm1792, %v2338, 0
      %v2359 = vsel %vm1792, %v2339, 0
      %v2362 = vsel %vm1792, %v2340, 0
      %v2365 = vsel %vm1970, %v2342, 0
      %2367 = vmatprep.subr.bf16.mxu0 0
      %2368 = vmatpush1.bf16.msra.mxu0 %v2365
      %2369 = vmatprep.subr.bf16.mxu0 0
      %2370 = vmatpush1.bf16.msra.mxu0 0
      %2371 = vmatprep.subr.bf16.mxu0 0
      %2372 = vmatpush1.bf16.msra.mxu0 0
      %2373 = vmatprep.subr.bf16.mxu0 0
      %2374 = vmatpush1.bf16.msra.mxu0 0
      %2375 = vmatprep.subr.bf16.mxu0 0
      %2376 = vmatpush1.bf16.msra.mxu0 0
      %2377 = vmatprep.subr.bf16.mxu0 0
      %2378 = vmatpush1.bf16.msra.mxu0 0
      %2379 = vmatprep.subr.bf16.mxu0 0
      %2380 = vmatpush1.bf16.msra.mxu0 0
      %2381 = vmatprep.subr.bf16.mxu0 0
      %2382 = vmatpush1.bf16.msra.mxu0 0
      %2383 = vmatprep.subr.bf16.mxu0 0
      %2384 = vmatpush1.bf16.msra.mxu0 0
      %2385 = vmatprep.subr.bf16.mxu0 0
      %2386 = vmatpush1.bf16.msra.mxu0 0
      %2387 = vmatprep.subr.bf16.mxu0 0
      %2388 = vmatpush1.bf16.msra.mxu0 0
      %2389 = vmatprep.subr.bf16.mxu0 0
      %2390 = vmatpush1.bf16.msra.mxu0 0
      %2391 = vmatprep.subr.bf16.mxu0 0
      %2392 = vmatpush1.bf16.msra.mxu0 0
      %2393 = vmatprep.subr.bf16.mxu0 0
      %2394 = vmatpush1.bf16.msra.mxu0 0
      %2395 = vmatprep.subr.bf16.mxu0 0
      %2396 = vmatpush1.bf16.msra.mxu0 0
      %2397 = vmatprep.subr.bf16.mxu0 0
      %2398 = vmatpush1.bf16.msra.mxu0 0
      %2399 = vmatprep.mubr.bf16.mxu0 0
      %2400 = vmatmul.mubr.bf16.gmra.mrb[0].mxu0 %v2344
      %v2401 = vpop.f32.mrb[0].mxu0
      %v2402 = vadd.f32 0.0, %v2401
      %v2403 = vpop.f32.mrb[0].mxu0
      %v2404 = vpop.f32.mrb[0].mxu0
      %v2405 = vadd.f32 0.0, %v2404
      %v2406 = vpop.f32.mrb[0].mxu0
      %2407 = vmatprep.mubr.bf16.mxu0 0
      %2408 = vmatmul.mubr.bf16.gmra.mrb[0].mxu0 %v2347
      %v2409 = vpop.f32.mrb[0].mxu0
      %v2410 = vadd.f32 0.0, %v2409
      %v2411 = vpop.f32.mrb[0].mxu0
      %v2412 = vpop.f32.mrb[0].mxu0
      %v2413 = vadd.f32 0.0, %v2412
      %v2414 = vpop.f32.mrb[0].mxu0
      %2415 = vmatprep.mubr.bf16.mxu0 0
      %2416 = vmatmul.mubr.bf16.gmra.mrb[0].mxu0 %v2350
      %v2417 = vpop.f32.mrb[0].mxu0
      %v2418 = vadd.f32 0.0, %v2417
      %v2419 = vpop.f32.mrb[0].mxu0
      %v2420 = vpop.f32.mrb[0].mxu0
      %v2421 = vadd.f32 0.0, %v2420
      %v2422 = vpop.f32.mrb[0].mxu0
      %2423 = vmatprep.mubr.bf16.mxu0 0
      %2424 = vmatmul.mubr.bf16.gmra.mrb[0].mxu0 %v2353
      %v2425 = vpop.f32.mrb[0].mxu0
      %v2426 = vadd.f32 0.0, %v2425
      %v2427 = vpop.f32.mrb[0].mxu0
      %v2428 = vpop.f32.mrb[0].mxu0
      %v2429 = vadd.f32 0.0, %v2428
      %v2430 = vpop.f32.mrb[0].mxu0
      %2431 = vmatprep.mubr.bf16.mxu0 0
      %2432 = vmatmul.mubr.bf16.gmra.mrb[0].mxu0 %v2356
      %v2433 = vpop.f32.mrb[0].mxu0
      %v2434 = vadd.f32 0.0, %v2433
      %v2435 = vpop.f32.mrb[0].mxu0
      %v2436 = vpop.f32.mrb[0].mxu0
      %v2437 = vadd.f32 0.0, %v2436
      %v2438 = vpop.f32.mrb[0].mxu0
      %2439 = vmatprep.mubr.bf16.mxu0 0
      %2440 = vmatmul.mubr.bf16.gmra.mrb[0].mxu0 %v2359
      %v2441 = vpop.f32.mrb[0].mxu0
      %v2442 = vadd.f32 0.0, %v2441
      %v2443 = vpop.f32.mrb[0].mxu0
      %v2444 = vpop.f32.mrb[0].mxu0
      %v2445 = vadd.f32 0.0, %v2444
      %v2446 = vpop.f32.mrb[0].mxu0
      %2447 = vmatprep.mubr.bf16.mxu0 0
      %2448 = vmatmul.mubr.bf16.gmra.mrb[0].mxu0 %v2362
      %v2449 = vpop.f32.mrb[0].mxu0
      %v2450 = vadd.f32 0.0, %v2449
      %v2451 = vpop.f32.mrb[0].mxu0
      %v2452 = vpop.f32.mrb[0].mxu0
      %v2453 = vpop.f32.mrb[0].mxu0
      %2454 = vdwg.mxu0
      %v2455 = vadd.f32 %v2308, %v2402
      %v2456 = vadd.f32 %v2309, %v2405
      %v2457 = vadd.f32 %v2310, %v2410
      %v2458 = vadd.f32 %v2311, %v2413
      %v2459 = vadd.f32 %v2312, %v2418
      %v2460 = vadd.f32 %v2313, %v2421
      %v2461 = vadd.f32 %v2314, %v2426
      %v2462 = vadd.f32 %v2315, %v2429
      %v2463 = vadd.f32 %v2316, %v2434
      %v2464 = vadd.f32 %v2317, %v2437
      %v2465 = vadd.f32 %v2318, %v2442
      %v2466 = vadd.f32 %v2319, %v2445
      %v2467 = vadd.f32 %v2320, %v2450
      %v2468 = vld [vmem:[#allocation2 + $0x20] sm:$0xff]
      %v2469 = vld [vmem:[#allocation2 + $0x28] sm:$0xff]
      %v2470 = vld [vmem:[#allocation2 + $0x30] sm:$0xff]
      %v2471 = vld [vmem:[#allocation2 + $0x38] sm:$0xff]
      %v2472 = vld [vmem:[#allocation2 + $0x40] sm:$0xff]
      %v2473 = vld [vmem:[#allocation2 + $0x48] sm:$0xff]
      %v2474 = vld [vmem:[#allocation2 + $0x50] sm:$0xff]
      %v2475 = vld [vmem:[#allocation2 + $0x58] sm:$0xff]
      %v2476 = vld [vmem:[#allocation2 + $0x60] sm:$0xff]
      %v2477 = vld [vmem:[#allocation2 + $0x68] sm:$0xff]
      %v2478 = vld [vmem:[#allocation2 + $0x70] sm:$0xff]
      %v2479 = vld [vmem:[#allocation2 + $0x78] sm:$0xff]
      %v2480 = vld [vmem:[#allocation2 + $0x80] sm:$0xf]
      %v2481 = vpack.c.bf16 %v2469, %v2468
      %v2482 = vpack.c.bf16 %v2471, %v2470
      %v2483 = vpack.c.bf16 %v2473, %v2472
      %v2484 = vpack.c.bf16 %v2475, %v2474
      %v2485 = vpack.c.bf16 %v2477, %v2476
      %v2486 = vpack.c.bf16 %v2479, %v2478
      %v2487 = vpack.c.bf16 %v2480, %v2480
      %s2488 = scalar_lea.vmem %s7, 16
      %v2489 = vld [vmem:[%s2488] sm:$0xf]
      %v2491 = vsel %vm1792, %v2481, 0
      %v2494 = vsel %vm1792, %v2482, 0
      %v2497 = vsel %vm1792, %v2483, 0
      %v2500 = vsel %vm1792, %v2484, 0
      %v2503 = vsel %vm1792, %v2485, 0
      %v2506 = vsel %vm1792, %v2486, 0
      %v2509 = vsel %vm1792, %v2487, 0
      %v2512 = vsel %vm1970, %v2489, 0
      %2514 = vmatprep.subr.bf16.mxu0 0
      %2515 = vmatpush1.bf16.msra.mxu0 %v2512
      %2516 = vmatprep.subr.bf16.mxu0 0
      %2517 = vmatpush1.bf16.msra.mxu0 0
      %2518 = vmatprep.subr.bf16.mxu0 0
      %2519 = vmatpush1.bf16.msra.mxu0 0
      %2520 = vmatprep.subr.bf16.mxu0 0
      %2521 = vmatpush1.bf16.msra.mxu0 0
      %2522 = vmatprep.subr.bf16.mxu0 0
      %2523 = vmatpush1.bf16.msra.mxu0 0
      %2524 = vmatprep.subr.bf16.mxu0 0
      %2525 = vmatpush1.bf16.msra.mxu0 0
      %2526 = vmatprep.subr.bf16.mxu0 0
      %2527 = vmatpush1.bf16.msra.mxu0 0
      %2528 = vmatprep.subr.bf16.mxu0 0
      %2529 = vmatpush1.bf16.msra.mxu0 0
      %2530 = vmatprep.subr.bf16.mxu0 0
      %2531 = vmatpush1.bf16.msra.mxu0 0
      %2532 = vmatprep.subr.bf16.mxu0 0
      %2533 = vmatpush1.bf16.msra.mxu0 0
      %2534 = vmatprep.subr.bf16.mxu0 0
      %2535 = vmatpush1.bf16.msra.mxu0 0
      %2536 = vmatprep.subr.bf16.mxu0 0
      %2537 = vmatpush1.bf16.msra.mxu0 0
      %2538 = vmatprep.subr.bf16.mxu0 0
      %2539 = vmatpush1.bf16.msra.mxu0 0
      %2540 = vmatprep.subr.bf16.mxu0 0
      %2541 = vmatpush1.bf16.msra.mxu0 0
      %2542 = vmatprep.subr.bf16.mxu0 0
      %2543 = vmatpush1.bf16.msra.mxu0 0
      %2544 = vmatprep.subr.bf16.mxu0 0
      %2545 = vmatpush1.bf16.msra.mxu0 0
      %2546 = vmatprep.mubr.bf16.mxu0 0
      %2547 = vmatmul.mubr.bf16.gmra.mrb[0].mxu0 %v2491
      %v2548 = vpop.f32.mrb[0].mxu0
      %v2549 = vadd.f32 0.0, %v2548
      %v2550 = vpop.f32.mrb[0].mxu0
      %v2551 = vpop.f32.mrb[0].mxu0
      %v2552 = vadd.f32 0.0, %v2551
      %v2553 = vpop.f32.mrb[0].mxu0
      %2554 = vmatprep.mubr.bf16.mxu0 0
      %2555 = vmatmul.mubr.bf16.gmra.mrb[0].mxu0 %v2494
      %v2556 = vpop.f32.mrb[0].mxu0
      %v2557 = vadd.f32 0.0, %v2556
      %v2558 = vpop.f32.mrb[0].mxu0
      %v2559 = vpop.f32.mrb[0].mxu0
      %v2560 = vadd.f32 0.0, %v2559
      %v2561 = vpop.f32.mrb[0].mxu0
      %2562 = vmatprep.mubr.bf16.mxu0 0
      %2563 = vmatmul.mubr.bf16.gmra.mrb[0].mxu0 %v2497
      %v2564 = vpop.f32.mrb[0].mxu0
      %v2565 = vadd.f32 0.0, %v2564
      %v2566 = vpop.f32.mrb[0].mxu0
      %v2567 = vpop.f32.mrb[0].mxu0
      %v2568 = vadd.f32 0.0, %v2567
      %v2569 = vpop.f32.mrb[0].mxu0
      %2570 = vmatprep.mubr.bf16.mxu0 0
      %2571 = vmatmul.mubr.bf16.gmra.mrb[0].mxu0 %v2500
      %v2572 = vpop.f32.mrb[0].mxu0
      %v2573 = vadd.f32 0.0, %v2572
      %v2574 = vpop.f32.mrb[0].mxu0
      %v2575 = vpop.f32.mrb[0].mxu0
      %v2576 = vadd.f32 0.0, %v2575
      %v2577 = vpop.f32.mrb[0].mxu0
      %2578 = vmatprep.mubr.bf16.mxu0 0
      %2579 = vmatmul.mubr.bf16.gmra.mrb[0].mxu0 %v2503
      %v2580 = vpop.f32.mrb[0].mxu0
      %v2581 = vadd.f32 0.0, %v2580
      %v2582 = vpop.f32.mrb[0].mxu0
      %v2583 = vpop.f32.mrb[0].mxu0
      %v2584 = vadd.f32 0.0, %v2583
      %v2585 = vpop.f32.mrb[0].mxu0
      %2586 = vmatprep.mubr.bf16.mxu0 0
      %2587 = vmatmul.mubr.bf16.gmra.mrb[0].mxu0 %v2506
      %v2588 = vpop.f32.mrb[0].mxu0
      %v2589 = vadd.f32 0.0, %v2588
      %v2590 = vpop.f32.mrb[0].mxu0
      %v2591 = vpop.f32.mrb[0].mxu0
      %v2592 = vadd.f32 0.0, %v2591
      %v2593 = vpop.f32.mrb[0].mxu0
      %2594 = vmatprep.mubr.bf16.mxu0 0
      %2595 = vmatmul.mubr.bf16.gmra.mrb[0].mxu0 %v2509
      %v2596 = vpop.f32.mrb[0].mxu0
      %v2597 = vadd.f32 0.0, %v2596
      %v2598 = vpop.f32.mrb[0].mxu0
      %v2599 = vpop.f32.mrb[0].mxu0
      %v2600 = vpop.f32.mrb[0].mxu0
      %2601 = vdwg.mxu0
      %v2602 = vadd.f32 %v2455, %v2549
      %v2603 = vadd.f32 %v2456, %v2552
      %v2604 = vadd.f32 %v2457, %v2557
      %v2605 = vadd.f32 %v2458, %v2560
      %v2606 = vadd.f32 %v2459, %v2565
      %v2607 = vadd.f32 %v2460, %v2568
      %v2608 = vadd.f32 %v2461, %v2573
      %v2609 = vadd.f32 %v2462, %v2576
      %v2610 = vadd.f32 %v2463, %v2581
      %v2611 = vadd.f32 %v2464, %v2584
      %v2612 = vadd.f32 %v2465, %v2589
      %v2613 = vadd.f32 %v2466, %v2592
      %v2614 = vadd.f32 %v2467, %v2597
      %v2615 = vld [vmem:[#allocation2 + $0x21] sm:$0xff]
      %v2616 = vld [vmem:[#allocation2 + $0x29] sm:$0xff]
      %v2617 = vld [vmem:[#allocation2 + $0x31] sm:$0xff]
      %v2618 = vld [vmem:[#allocation2 + $0x39] sm:$0xff]
      %v2619 = vld [vmem:[#allocation2 + $0x41] sm:$0xff]
      %v2620 = vld [vmem:[#allocation2 + $0x49] sm:$0xff]
      %v2621 = vld [vmem:[#allocation2 + $0x51] sm:$0xff]
      %v2622 = vld [vmem:[#allocation2 + $0x59] sm:$0xff]
      %v2623 = vld [vmem:[#allocation2 + $0x61] sm:$0xff]
      %v2624 = vld [vmem:[#allocation2 + $0x69] sm:$0xff]
      %v2625 = vld [vmem:[#allocation2 + $0x71] sm:$0xff]
      %v2626 = vld [vmem:[#allocation2 + $0x79] sm:$0xff]
      %v2627 = vld [vmem:[#allocation2 + $0x81] sm:$0xf]
      %v2628 = vpack.c.bf16 %v2616, %v2615
      %v2629 = vpack.c.bf16 %v2618, %v2617
      %v2630 = vpack.c.bf16 %v2620, %v2619
      %v2631 = vpack.c.bf16 %v2622, %v2621
      %v2632 = vpack.c.bf16 %v2624, %v2623
      %v2633 = vpack.c.bf16 %v2626, %v2625
      %v2634 = vpack.c.bf16 %v2627, %v2627
      %s2635 = scalar_lea.vmem %s7, 20
      %v2636 = vld [vmem:[%s2635] sm:$0xf]
      %v2638 = vsel %vm1792, %v2628, 0
      %v2641 = vsel %vm1792, %v2629, 0
      %v2644 = vsel %vm1792, %v2630, 0
      %v2647 = vsel %vm1792, %v2631, 0
      %v2650 = vsel %vm1792, %v2632, 0
      %v2653 = vsel %vm1792, %v2633, 0
      %v2656 = vsel %vm1792, %v2634, 0
      %v2659 = vsel %vm1970, %v2636, 0
      %2661 = vmatprep.subr.bf16.mxu0 0
      %2662 = vmatpush1.bf16.msra.mxu0 %v2659
      %2663 = vmatprep.subr.bf16.mxu0 0
      %2664 = vmatpush1.bf16.msra.mxu0 0
      %2665 = vmatprep.subr.bf16.mxu0 0
      %2666 = vmatpush1.bf16.msra.mxu0 0
      %2667 = vmatprep.subr.bf16.mxu0 0
      %2668 = vmatpush1.bf16.msra.mxu0 0
      %2669 = vmatprep.subr.bf16.mxu0 0
      %2670 = vmatpush1.bf16.msra.mxu0 0
      %2671 = vmatprep.subr.bf16.mxu0 0
      %2672 = vmatpush1.bf16.msra.mxu0 0
      %2673 = vmatprep.subr.bf16.mxu0 0
      %2674 = vmatpush1.bf16.msra.mxu0 0
      %2675 = vmatprep.subr.bf16.mxu0 0
      %2676 = vmatpush1.bf16.msra.mxu0 0
      %2677 = vmatprep.subr.bf16.mxu0 0
      %2678 = vmatpush1.bf16.msra.mxu0 0
      %2679 = vmatprep.subr.bf16.mxu0 0
      %2680 = vmatpush1.bf16.msra.mxu0 0
      %2681 = vmatprep.subr.bf16.mxu0 0
      %2682 = vmatpush1.bf16.msra.mxu0 0
      %2683 = vmatprep.subr.bf16.mxu0 0
      %2684 = vmatpush1.bf16.msra.mxu0 0
      %2685 = vmatprep.subr.bf16.mxu0 0
      %2686 = vmatpush1.bf16.msra.mxu0 0
      %2687 = vmatprep.subr.bf16.mxu0 0
      %2688 = vmatpush1.bf16.msra.mxu0 0
      %2689 = vmatprep.subr.bf16.mxu0 0
      %2690 = vmatpush1.bf16.msra.mxu0 0
      %2691 = vmatprep.subr.bf16.mxu0 0
      %2692 = vmatpush1.bf16.msra.mxu0 0
      %2693 = vmatprep.mubr.bf16.mxu0 0
      %2694 = vmatmul.mubr.bf16.gmra.mrb[0].mxu0 %v2638
      %v2695 = vpop.f32.mrb[0].mxu0
      %v2696 = vadd.f32 0.0, %v2695
      %v2697 = vpop.f32.mrb[0].mxu0
      %v2698 = vpop.f32.mrb[0].mxu0
      %v2699 = vadd.f32 0.0, %v2698
      %v2700 = vpop.f32.mrb[0].mxu0
      %2701 = vmatprep.mubr.bf16.mxu0 0
      %2702 = vmatmul.mubr.bf16.gmra.mrb[0].mxu0 %v2641
      %v2703 = vpop.f32.mrb[0].mxu0
      %v2704 = vadd.f32 0.0, %v2703
      %v2705 = vpop.f32.mrb[0].mxu0
      %v2706 = vpop.f32.mrb[0].mxu0
      %v2707 = vadd.f32 0.0, %v2706
      %v2708 = vpop.f32.mrb[0].mxu0
      %2709 = vmatprep.mubr.bf16.mxu0 0
      %2710 = vmatmul.mubr.bf16.gmra.mrb[0].mxu0 %v2644
      %v2711 = vpop.f32.mrb[0].mxu0
      %v2712 = vadd.f32 0.0, %v2711
      %v2713 = vpop.f32.mrb[0].mxu0
      %v2714 = vpop.f32.mrb[0].mxu0
      %v2715 = vadd.f32 0.0, %v2714
      %v2716 = vpop.f32.mrb[0].mxu0
      %2717 = vmatprep.mubr.bf16.mxu0 0
      %2718 = vmatmul.mubr.bf16.gmra.mrb[0].mxu0 %v2647
      %v2719 = vpop.f32.mrb[0].mxu0
      %v2720 = vadd.f32 0.0, %v2719
      %v2721 = vpop.f32.mrb[0].mxu0
      %v2722 = vpop.f32.mrb[0].mxu0
      %v2723 = vadd.f32 0.0, %v2722
      %v2724 = vpop.f32.mrb[0].mxu0
      %2725 = vmatprep.mubr.bf16.mxu0 0
      %2726 = vmatmul.mubr.bf16.gmra.mrb[0].mxu0 %v2650
      %v2727 = vpop.f32.mrb[0].mxu0
      %v2728 = vadd.f32 0.0, %v2727
      %v2729 = vpop.f32.mrb[0].mxu0
      %v2730 = vpop.f32.mrb[0].mxu0
      %v2731 = vadd.f32 0.0, %v2730
      %v2732 = vpop.f32.mrb[0].mxu0
      %2733 = vmatprep.mubr.bf16.mxu0 0
      %2734 = vmatmul.mubr.bf16.gmra.mrb[0].mxu0 %v2653
      %v2735 = vpop.f32.mrb[0].mxu0
      %v2736 = vadd.f32 0.0, %v2735
      %v2737 = vpop.f32.mrb[0].mxu0
      %v2738 = vpop.f32.mrb[0].mxu0
      %v2739 = vadd.f32 0.0, %v2738
      %v2740 = vpop.f32.mrb[0].mxu0
      %2741 = vmatprep.mubr.bf16.mxu0 0
      %2742 = vmatmul.mubr.bf16.gmra.mrb[0].mxu0 %v2656
      %v2743 = vpop.f32.mrb[0].mxu0
      %v2744 = vadd.f32 0.0, %v2743
      %v2745 = vpop.f32.mrb[0].mxu0
      %v2746 = vpop.f32.mrb[0].mxu0
      %v2747 = vpop.f32.mrb[0].mxu0
      %2748 = vdwg.mxu0
      %v2749 = vadd.f32 %v2602, %v2696
      %v2750 = vadd.f32 %v2603, %v2699
      %v2751 = vadd.f32 %v2604, %v2704
      %v2752 = vadd.f32 %v2605, %v2707
      %v2753 = vadd.f32 %v2606, %v2712
      %v2754 = vadd.f32 %v2607, %v2715
      %v2755 = vadd.f32 %v2608, %v2720
      %v2756 = vadd.f32 %v2609, %v2723
      %v2757 = vadd.f32 %v2610, %v2728
      %v2758 = vadd.f32 %v2611, %v2731
      %v2759 = vadd.f32 %v2612, %v2736
      %v2760 = vadd.f32 %v2613, %v2739
      %v2761 = vadd.f32 %v2614, %v2744
      %v2762 = vld [vmem:[#allocation2 + $0x29] sm:$0xff]
      %v2763 = vld [vmem:[#allocation2 + $0x31] sm:$0xff]
      %v2764 = vld [vmem:[#allocation2 + $0x39] sm:$0xff]
      %v2765 = vld [vmem:[#allocation2 + $0x41] sm:$0xff]
      %v2766 = vld [vmem:[#allocation2 + $0x49] sm:$0xff]
      %v2767 = vld [vmem:[#allocation2 + $0x51] sm:$0xff]
      %v2768 = vld [vmem:[#allocation2 + $0x59] sm:$0xff]
      %v2769 = vld [vmem:[#allocation2 + $0x61] sm:$0xff]
      %v2770 = vld [vmem:[#allocation2 + $0x69] sm:$0xff]
      %v2771 = vld [vmem:[#allocation2 + $0x71] sm:$0xff]
      %v2772 = vld [vmem:[#allocation2 + $0x79] sm:$0xff]
      %v2773 = vld [vmem:[#allocation2 + $0x81] sm:$0xff]
      %v2774 = vld [vmem:[#allocation2 + $0x89] sm:$0xf]
      %v2775 = vpack.c.bf16 %v2763, %v2762
      %v2776 = vpack.c.bf16 %v2765, %v2764
      %v2777 = vpack.c.bf16 %v2767, %v2766
      %v2778 = vpack.c.bf16 %v2769, %v2768
      %v2779 = vpack.c.bf16 %v2771, %v2770
      %v2780 = vpack.c.bf16 %v2773, %v2772
      %v2781 = vpack.c.bf16 %v2774, %v2774
      %s2782 = scalar_lea.vmem %s7, 24
      %v2783 = vld [vmem:[%s2782] sm:$0xf]
      %v2785 = vsel %vm1792, %v2775, 0
      %v2788 = vsel %vm1792, %v2776, 0
      %v2791 = vsel %vm1792, %v2777, 0
      %v2794 = vsel %vm1792, %v2778, 0
      %v2797 = vsel %vm1792, %v2779, 0
      %v2800 = vsel %vm1792, %v2780, 0
      %v2803 = vsel %vm1792, %v2781, 0
      %v2806 = vsel %vm1970, %v2783, 0
      %2808 = vmatprep.subr.bf16.mxu0 0
      %2809 = vmatpush1.bf16.msra.mxu0 %v2806
      %2810 = vmatprep.subr.bf16.mxu0 0
      %2811 = vmatpush1.bf16.msra.mxu0 0
      %2812 = vmatprep.subr.bf16.mxu0 0
      %2813 = vmatpush1.bf16.msra.mxu0 0
      %2814 = vmatprep.subr.bf16.mxu0 0
      %2815 = vmatpush1.bf16.msra.mxu0 0
      %2816 = vmatprep.subr.bf16.mxu0 0
      %2817 = vmatpush1.bf16.msra.mxu0 0
      %2818 = vmatprep.subr.bf16.mxu0 0
      %2819 = vmatpush1.bf16.msra.mxu0 0
      %2820 = vmatprep.subr.bf16.mxu0 0
      %2821 = vmatpush1.bf16.msra.mxu0 0
      %2822 = vmatprep.subr.bf16.mxu0 0
      %2823 = vmatpush1.bf16.msra.mxu0 0
      %2824 = vmatprep.subr.bf16.mxu0 0
      %2825 = vmatpush1.bf16.msra.mxu0 0
      %2826 = vmatprep.subr.bf16.mxu0 0
      %2827 = vmatpush1.bf16.msra.mxu0 0
      %2828 = vmatprep.subr.bf16.mxu0 0
      %2829 = vmatpush1.bf16.msra.mxu0 0
      %2830 = vmatprep.subr.bf16.mxu0 0
      %2831 = vmatpush1.bf16.msra.mxu0 0
      %2832 = vmatprep.subr.bf16.mxu0 0
      %2833 = vmatpush1.bf16.msra.mxu0 0
      %2834 = vmatprep.subr.bf16.mxu0 0
      %2835 = vmatpush1.bf16.msra.mxu0 0
      %2836 = vmatprep.subr.bf16.mxu0 0
      %2837 = vmatpush1.bf16.msra.mxu0 0
      %2838 = vmatprep.subr.bf16.mxu0 0
      %2839 = vmatpush1.bf16.msra.mxu0 0
      %2840 = vmatprep.mubr.bf16.mxu0 0
      %2841 = vmatmul.mubr.bf16.gmra.mrb[0].mxu0 %v2785
      %v2842 = vpop.f32.mrb[0].mxu0
      %v2843 = vadd.f32 0.0, %v2842
      %v2844 = vpop.f32.mrb[0].mxu0
      %v2845 = vpop.f32.mrb[0].mxu0
      %v2846 = vadd.f32 0.0, %v2845
      %v2847 = vpop.f32.mrb[0].mxu0
      %2848 = vmatprep.mubr.bf16.mxu0 0
      %2849 = vmatmul.mubr.bf16.gmra.mrb[0].mxu0 %v2788
      %v2850 = vpop.f32.mrb[0].mxu0
      %v2851 = vadd.f32 0.0, %v2850
      %v2852 = vpop.f32.mrb[0].mxu0
      %v2853 = vpop.f32.mrb[0].mxu0
      %v2854 = vadd.f32 0.0, %v2853
      %v2855 = vpop.f32.mrb[0].mxu0
      %2856 = vmatprep.mubr.bf16.mxu0 0
      %2857 = vmatmul.mubr.bf16.gmra.mrb[0].mxu0 %v2791
      %v2858 = vpop.f32.mrb[0].mxu0
      %v2859 = vadd.f32 0.0, %v2858
      %v2860 = vpop.f32.mrb[0].mxu0
      %v2861 = vpop.f32.mrb[0].mxu0
      %v2862 = vadd.f32 0.0, %v2861
      %v2863 = vpop.f32.mrb[0].mxu0
      %2864 = vmatprep.mubr.bf16.mxu0 0
      %2865 = vmatmul.mubr.bf16.gmra.mrb[0].mxu0 %v2794
      %v2866 = vpop.f32.mrb[0].mxu0
      %v2867 = vadd.f32 0.0, %v2866
      %v2868 = vpop.f32.mrb[0].mxu0
      %v2869 = vpop.f32.mrb[0].mxu0
      %v2870 = vadd.f32 0.0, %v2869
      %v2871 = vpop.f32.mrb[0].mxu0
      %2872 = vmatprep.mubr.bf16.mxu0 0
      %2873 = vmatmul.mubr.bf16.gmra.mrb[0].mxu0 %v2797
      %v2874 = vpop.f32.mrb[0].mxu0
      %v2875 = vadd.f32 0.0, %v2874
      %v2876 = vpop.f32.mrb[0].mxu0
      %v2877 = vpop.f32.mrb[0].mxu0
      %v2878 = vadd.f32 0.0, %v2877
      %v2879 = vpop.f32.mrb[0].mxu0
      %2880 = vmatprep.mubr.bf16.mxu0 0
      %2881 = vmatmul.mubr.bf16.gmra.mrb[0].mxu0 %v2800
      %v2882 = vpop.f32.mrb[0].mxu0
      %v2883 = vadd.f32 0.0, %v2882
      %v2884 = vpop.f32.mrb[0].mxu0
      %v2885 = vpop.f32.mrb[0].mxu0
      %v2886 = vadd.f32 0.0, %v2885
      %v2887 = vpop.f32.mrb[0].mxu0
      %2888 = vmatprep.mubr.bf16.mxu0 0
      %2889 = vmatmul.mubr.bf16.gmra.mrb[0].mxu0 %v2803
      %v2890 = vpop.f32.mrb[0].mxu0
      %v2891 = vadd.f32 0.0, %v2890
      %v2892 = vpop.f32.mrb[0].mxu0
      %v2893 = vpop.f32.mrb[0].mxu0
      %v2894 = vpop.f32.mrb[0].mxu0
      %2895 = vdwg.mxu0
      %v2896 = vadd.f32 %v2749, %v2843
      %v2897 = vadd.f32 %v2750, %v2846
      %v2898 = vadd.f32 %v2751, %v2851
      %v2899 = vadd.f32 %v2752, %v2854
      %v2900 = vadd.f32 %v2753, %v2859
      %v2901 = vadd.f32 %v2754, %v2862
      %v2902 = vadd.f32 %v2755, %v2867
      %v2903 = vadd.f32 %v2756, %v2870
      %v2904 = vadd.f32 %v2757, %v2875
      %v2905 = vadd.f32 %v2758, %v2878
      %v2906 = vadd.f32 %v2759, %v2883
      %v2907 = vadd.f32 %v2760, %v2886
      %v2908 = vadd.f32 %v2761, %v2891
      %v2909 = vld [vmem:[#allocation2 + $0x2a] sm:$0xff]
      %v2910 = vld [vmem:[#allocation2 + $0x32] sm:$0xff]
      %v2911 = vld [vmem:[#allocation2 + $0x3a] sm:$0xff]
      %v2912 = vld [vmem:[#allocation2 + $0x42] sm:$0xff]
      %v2913 = vld [vmem:[#allocation2 + $0x4a] sm:$0xff]
      %v2914 = vld [vmem:[#allocation2 + $0x52] sm:$0xff]
      %v2915 = vld [vmem:[#allocation2 + $0x5a] sm:$0xff]
      %v2916 = vld [vmem:[#allocation2 + $0x62] sm:$0xff]
      %v2917 = vld [vmem:[#allocation2 + $0x6a] sm:$0xff]
      %v2918 = vld [vmem:[#allocation2 + $0x72] sm:$0xff]
      %v2919 = vld [vmem:[#allocation2 + $0x7a] sm:$0xff]
      %v2920 = vld [vmem:[#allocation2 + $0x82] sm:$0xff]
      %v2921 = vld [vmem:[#allocation2 + $0x8a] sm:$0xf]
      %v2922 = vpack.c.bf16 %v2910, %v2909
      %v2923 = vpack.c.bf16 %v2912, %v2911
      %v2924 = vpack.c.bf16 %v2914, %v2913
      %v2925 = vpack.c.bf16 %v2916, %v2915
      %v2926 = vpack.c.bf16 %v2918, %v2917
      %v2927 = vpack.c.bf16 %v2920, %v2919
      %v2928 = vpack.c.bf16 %v2921, %v2921
      %s2929 = scalar_lea.vmem %s7, 28
      %v2930 = vld [vmem:[%s2929] sm:$0xf]
      %v2932 = vsel %vm1792, %v2922, 0
      %v2935 = vsel %vm1792, %v2923, 0
      %v2938 = vsel %vm1792, %v2924, 0
      %v2941 = vsel %vm1792, %v2925, 0
      %v2944 = vsel %vm1792, %v2926, 0
      %v2947 = vsel %vm1792, %v2927, 0
      %v2950 = vsel %vm1792, %v2928, 0
      %v2953 = vsel %vm1970, %v2930, 0
      %2955 = vmatprep.subr.bf16.mxu0 0
      %2956 = vmatpush1.bf16.msra.mxu0 %v2953
      %2957 = vmatprep.subr.bf16.mxu0 0
      %2958 = vmatpush1.bf16.msra.mxu0 0
      %2959 = vmatprep.subr.bf16.mxu0 0
      %2960 = vmatpush1.bf16.msra.mxu0 0
      %2961 = vmatprep.subr.bf16.mxu0 0
      %2962 = vmatpush1.bf16.msra.mxu0 0
      %2963 = vmatprep.subr.bf16.mxu0 0
      %2964 = vmatpush1.bf16.msra.mxu0 0
      %2965 = vmatprep.subr.bf16.mxu0 0
      %2966 = vmatpush1.bf16.msra.mxu0 0
      %2967 = vmatprep.subr.bf16.mxu0 0
      %2968 = vmatpush1.bf16.msra.mxu0 0
      %2969 = vmatprep.subr.bf16.mxu0 0
      %2970 = vmatpush1.bf16.msra.mxu0 0
      %2971 = vmatprep.subr.bf16.mxu0 0
      %2972 = vmatpush1.bf16.msra.mxu0 0
      %2973 = vmatprep.subr.bf16.mxu0 0
      %2974 = vmatpush1.bf16.msra.mxu0 0
      %2975 = vmatprep.subr.bf16.mxu0 0
      %2976 = vmatpush1.bf16.msra.mxu0 0
      %2977 = vmatprep.subr.bf16.mxu0 0
      %2978 = vmatpush1.bf16.msra.mxu0 0
      %2979 = vmatprep.subr.bf16.mxu0 0
      %2980 = vmatpush1.bf16.msra.mxu0 0
      %2981 = vmatprep.subr.bf16.mxu0 0
      %2982 = vmatpush1.bf16.msra.mxu0 0
      %2983 = vmatprep.subr.bf16.mxu0 0
      %2984 = vmatpush1.bf16.msra.mxu0 0
      %2985 = vmatprep.subr.bf16.mxu0 0
      %2986 = vmatpush1.bf16.msra.mxu0 0
      %2987 = vmatprep.mubr.bf16.mxu0 0
      %2988 = vmatmul.mubr.bf16.gmra.mrb[0].mxu0 %v2932
      %v2989 = vpop.f32.mrb[0].mxu0
      %v2990 = vadd.f32 0.0, %v2989
      %v2991 = vpop.f32.mrb[0].mxu0
      %v2992 = vpop.f32.mrb[0].mxu0
      %v2993 = vadd.f32 0.0, %v2992
      %v2994 = vpop.f32.mrb[0].mxu0
      %2995 = vmatprep.mubr.bf16.mxu0 0
      %2996 = vmatmul.mubr.bf16.gmra.mrb[0].mxu0 %v2935
      %v2997 = vpop.f32.mrb[0].mxu0
      %v2998 = vadd.f32 0.0, %v2997
      %v2999 = vpop.f32.mrb[0].mxu0
      %v3000 = vpop.f32.mrb[0].mxu0
      %v3001 = vadd.f32 0.0, %v3000
      %v3002 = vpop.f32.mrb[0].mxu0
      %3003 = vmatprep.mubr.bf16.mxu0 0
      %3004 = vmatmul.mubr.bf16.gmra.mrb[0].mxu0 %v2938
      %v3005 = vpop.f32.mrb[0].mxu0
      %v3006 = vadd.f32 0.0, %v3005
      %v3007 = vpop.f32.mrb[0].mxu0
      %v3008 = vpop.f32.mrb[0].mxu0
      %v3009 = vadd.f32 0.0, %v3008
      %v3010 = vpop.f32.mrb[0].mxu0
      %3011 = vmatprep.mubr.bf16.mxu0 0
      %3012 = vmatmul.mubr.bf16.gmra.mrb[0].mxu0 %v2941
      %v3013 = vpop.f32.mrb[0].mxu0
      %v3014 = vadd.f32 0.0, %v3013
      %v3015 = vpop.f32.mrb[0].mxu0
      %v3016 = vpop.f32.mrb[0].mxu0
      %v3017 = vadd.f32 0.0, %v3016
      %v3018 = vpop.f32.mrb[0].mxu0
      %3019 = vmatprep.mubr.bf16.mxu0 0
      %3020 = vmatmul.mubr.bf16.gmra.mrb[0].mxu0 %v2944
      %v3021 = vpop.f32.mrb[0].mxu0
      %v3022 = vadd.f32 0.0, %v3021
      %v3023 = vpop.f32.mrb[0].mxu0
      %v3024 = vpop.f32.mrb[0].mxu0
      %v3025 = vadd.f32 0.0, %v3024
      %v3026 = vpop.f32.mrb[0].mxu0
      %3027 = vmatprep.mubr.bf16.mxu0 0
      %3028 = vmatmul.mubr.bf16.gmra.mrb[0].mxu0 %v2947
      %v3029 = vpop.f32.mrb[0].mxu0
      %v3030 = vadd.f32 0.0, %v3029
      %v3031 = vpop.f32.mrb[0].mxu0
      %v3032 = vpop.f32.mrb[0].mxu0
      %v3033 = vadd.f32 0.0, %v3032
      %v3034 = vpop.f32.mrb[0].mxu0
      %3035 = vmatprep.mubr.bf16.mxu0 0
      %3036 = vmatmul.mubr.bf16.gmra.mrb[0].mxu0 %v2950
      %v3037 = vpop.f32.mrb[0].mxu0
      %v3038 = vadd.f32 0.0, %v3037
      %v3039 = vpop.f32.mrb[0].mxu0
      %v3040 = vpop.f32.mrb[0].mxu0
      %v3041 = vpop.f32.mrb[0].mxu0
      %3042 = vdwg.mxu0
      %v3043 = vadd.f32 %v2896, %v2990
      %v3044 = vadd.f32 %v2897, %v2993
      %v3045 = vadd.f32 %v2898, %v2998
      %v3046 = vadd.f32 %v2899, %v3001
      %v3047 = vadd.f32 %v2900, %v3006
      %v3048 = vadd.f32 %v2901, %v3009
      %v3049 = vadd.f32 %v2902, %v3014
      %v3050 = vadd.f32 %v2903, %v3017
      %v3051 = vadd.f32 %v2904, %v3022
      %v3052 = vadd.f32 %v2905, %v3025
      %v3053 = vadd.f32 %v2906, %v3030
      %v3054 = vadd.f32 %v2907, %v3033
      %v3055 = vadd.f32 %v2908, %v3038
      %v3056 = vld [vmem:[#allocation2 + $0x2b] sm:$0xff]
      %v3057 = vld [vmem:[#allocation2 + $0x33] sm:$0xff]
      %v3058 = vld [vmem:[#allocation2 + $0x3b] sm:$0xff]
      %v3059 = vld [vmem:[#allocation2 + $0x43] sm:$0xff]
      %v3060 = vld [vmem:[#allocation2 + $0x4b] sm:$0xff]
      %v3061 = vld [vmem:[#allocation2 + $0x53] sm:$0xff]
      %v3062 = vld [vmem:[#allocation2 + $0x5b] sm:$0xff]
      %v3063 = vld [vmem:[#allocation2 + $0x63] sm:$0xff]
      %v3064 = vld [vmem:[#allocation2 + $0x6b] sm:$0xff]
      %v3065 = vld [vmem:[#allocation2 + $0x73] sm:$0xff]
      %v3066 = vld [vmem:[#allocation2 + $0x7b] sm:$0xff]
      %v3067 = vld [vmem:[#allocation2 + $0x83] sm:$0xff]
      %v3068 = vld [vmem:[#allocation2 + $0x8b] sm:$0xf]
      %v3069 = vpack.c.bf16 %v3057, %v3056
      %v3070 = vpack.c.bf16 %v3059, %v3058
      %v3071 = vpack.c.bf16 %v3061, %v3060
      %v3072 = vpack.c.bf16 %v3063, %v3062
      %v3073 = vpack.c.bf16 %v3065, %v3064
      %v3074 = vpack.c.bf16 %v3067, %v3066
      %v3075 = vpack.c.bf16 %v3068, %v3068
      %s3076 = scalar_lea.vmem %s7, 32
      %v3077 = vld [vmem:[%s3076] sm:$0xf]
      %v3079 = vsel %vm1792, %v3069, 0
      %v3082 = vsel %vm1792, %v3070, 0
      %v3085 = vsel %vm1792, %v3071, 0
      %v3088 = vsel %vm1792, %v3072, 0
      %v3091 = vsel %vm1792, %v3073, 0
      %v3094 = vsel %vm1792, %v3074, 0
      %v3097 = vsel %vm1792, %v3075, 0
      %v3100 = vsel %vm1970, %v3077, 0
      %3102 = vmatprep.subr.bf16.mxu0 0
      %3103 = vmatpush1.bf16.msra.mxu0 %v3100
      %3104 = vmatprep.subr.bf16.mxu0 0
      %3105 = vmatpush1.bf16.msra.mxu0 0
      %3106 = vmatprep.subr.bf16.mxu0 0
      %3107 = vmatpush1.bf16.msra.mxu0 0
      %3108 = vmatprep.subr.bf16.mxu0 0
      %3109 = vmatpush1.bf16.msra.mxu0 0
      %3110 = vmatprep.subr.bf16.mxu0 0
      %3111 = vmatpush1.bf16.msra.mxu0 0
      %3112 = vmatprep.subr.bf16.mxu0 0
      %3113 = vmatpush1.bf16.msra.mxu0 0
      %3114 = vmatprep.subr.bf16.mxu0 0
      %3115 = vmatpush1.bf16.msra.mxu0 0
      %3116 = vmatprep.subr.bf16.mxu0 0
      %3117 = vmatpush1.bf16.msra.mxu0 0
      %3118 = vmatprep.subr.bf16.mxu0 0
      %3119 = vmatpush1.bf16.msra.mxu0 0
      %3120 = vmatprep.subr.bf16.mxu0 0
      %3121 = vmatpush1.bf16.msra.mxu0 0
      %3122 = vmatprep.subr.bf16.mxu0 0
      %3123 = vmatpush1.bf16.msra.mxu0 0
      %3124 = vmatprep.subr.bf16.mxu0 0
      %3125 = vmatpush1.bf16.msra.mxu0 0
      %3126 = vmatprep.subr.bf16.mxu0 0
      %3127 = vmatpush1.bf16.msra.mxu0 0
      %3128 = vmatprep.subr.bf16.mxu0 0
      %3129 = vmatpush1.bf16.msra.mxu0 0
      %3130 = vmatprep.subr.bf16.mxu0 0
      %3131 = vmatpush1.bf16.msra.mxu0 0
      %3132 = vmatprep.subr.bf16.mxu0 0
      %3133 = vmatpush1.bf16.msra.mxu0 0
      %3134 = vmatprep.mubr.bf16.mxu0 0
      %3135 = vmatmul.mubr.bf16.gmra.mrb[0].mxu0 %v3079
      %v3136 = vpop.f32.mrb[0].mxu0
      %v3137 = vadd.f32 0.0, %v3136
      %v3138 = vpop.f32.mrb[0].mxu0
      %v3139 = vpop.f32.mrb[0].mxu0
      %v3140 = vadd.f32 0.0, %v3139
      %v3141 = vpop.f32.mrb[0].mxu0
      %3142 = vmatprep.mubr.bf16.mxu0 0
      %3143 = vmatmul.mubr.bf16.gmra.mrb[0].mxu0 %v3082
      %v3144 = vpop.f32.mrb[0].mxu0
      %v3145 = vadd.f32 0.0, %v3144
      %v3146 = vpop.f32.mrb[0].mxu0
      %v3147 = vpop.f32.mrb[0].mxu0
      %v3148 = vadd.f32 0.0, %v3147
      %v3149 = vpop.f32.mrb[0].mxu0
      %3150 = vmatprep.mubr.bf16.mxu0 0
      %3151 = vmatmul.mubr.bf16.gmra.mrb[0].mxu0 %v3085
      %v3152 = vpop.f32.mrb[0].mxu0
      %v3153 = vadd.f32 0.0, %v3152
      %v3154 = vpop.f32.mrb[0].mxu0
      %v3155 = vpop.f32.mrb[0].mxu0
      %v3156 = vadd.f32 0.0, %v3155
      %v3157 = vpop.f32.mrb[0].mxu0
      %3158 = vmatprep.mubr.bf16.mxu0 0
      %3159 = vmatmul.mubr.bf16.gmra.mrb[0].mxu0 %v3088
      %v3160 = vpop.f32.mrb[0].mxu0
      %v3161 = vadd.f32 0.0, %v3160
      %v3162 = vpop.f32.mrb[0].mxu0
      %v3163 = vpop.f32.mrb[0].mxu0
      %v3164 = vadd.f32 0.0, %v3163
      %v3165 = vpop.f32.mrb[0].mxu0
      %3166 = vmatprep.mubr.bf16.mxu0 0
      %3167 = vmatmul.mubr.bf16.gmra.mrb[0].mxu0 %v3091
      %v3168 = vpop.f32.mrb[0].mxu0
      %v3169 = vadd.f32 0.0, %v3168
      %v3170 = vpop.f32.mrb[0].mxu0
      %v3171 = vpop.f32.mrb[0].mxu0
      %v3172 = vadd.f32 0.0, %v3171
      %v3173 = vpop.f32.mrb[0].mxu0
      %3174 = vmatprep.mubr.bf16.mxu0 0
      %3175 = vmatmul.mubr.bf16.gmra.mrb[0].mxu0 %v3094
      %v3176 = vpop.f32.mrb[0].mxu0
      %v3177 = vadd.f32 0.0, %v3176
      %v3178 = vpop.f32.mrb[0].mxu0
      %v3179 = vpop.f32.mrb[0].mxu0
      %v3180 = vadd.f32 0.0, %v3179
      %v3181 = vpop.f32.mrb[0].mxu0
      %3182 = vmatprep.mubr.bf16.mxu0 0
      %3183 = vmatmul.mubr.bf16.gmra.mrb[0].mxu0 %v3097
      %v3184 = vpop.f32.mrb[0].mxu0
      %v3185 = vadd.f32 0.0, %v3184
      %v3186 = vpop.f32.mrb[0].mxu0
      %v3187 = vpop.f32.mrb[0].mxu0
      %v3188 = vpop.f32.mrb[0].mxu0
      %3189 = vdwg.mxu0
      %v3190 = vadd.f32 %v3043, %v3137
      %v3191 = vadd.f32 %v3044, %v3140
      %v3192 = vadd.f32 %v3045, %v3145
      %v3193 = vadd.f32 %v3046, %v3148
      %v3194 = vadd.f32 %v3047, %v3153
      %v3195 = vadd.f32 %v3048, %v3156
      %v3196 = vadd.f32 %v3049, %v3161
      %v3197 = vadd.f32 %v3050, %v3164
      %v3198 = vadd.f32 %v3051, %v3169
      %v3199 = vadd.f32 %v3052, %v3172
      %v3200 = vadd.f32 %v3053, %v3177
      %v3201 = vadd.f32 %v3054, %v3180
      %v3202 = vadd.f32 %v3055, %v3185
      %v3203 = vld [vmem:[%s8] sm:$0x1]
      %v3205 = vlaneseq
      %v3206 = vshrl.u32 %v3205, 7
      %v3207 = vsub.s32 0, %v3206
      %v3208 = vrot.slane %v3203, %v3207
      %v3210 = vadd.f32 %v3190, %v3208
      %v3211 = vadd.f32 %v3191, %v3208
      %v3212 = vadd.f32 %v3192, %v3208
      %v3213 = vadd.f32 %v3193, %v3208
      %v3214 = vadd.f32 %v3194, %v3208
      %v3215 = vadd.f32 %v3195, %v3208
      %v3216 = vadd.f32 %v3196, %v3208
      %v3217 = vadd.f32 %v3197, %v3208
      %v3218 = vadd.f32 %v3198, %v3208
      %v3219 = vadd.f32 %v3199, %v3208
      %v3220 = vadd.f32 %v3200, %v3208
      %v3221 = vadd.f32 %v3201, %v3208
      %v3222 = vadd.f32 %v3202, %v3208
      %v3223 = vmax.f32 %v3210, 0.0
      %v3224 = vmax.f32 %v3211, 0.0
      %v3225 = vmax.f32 %v3212, 0.0
      %v3226 = vmax.f32 %v3213, 0.0
      %v3227 = vmax.f32 %v3214, 0.0
      %v3228 = vmax.f32 %v3215, 0.0
      %v3229 = vmax.f32 %v3216, 0.0
      %v3230 = vmax.f32 %v3217, 0.0
      %v3231 = vmax.f32 %v3218, 0.0
      %v3232 = vmax.f32 %v3219, 0.0
      %v3233 = vmax.f32 %v3220, 0.0
      %v3234 = vmax.f32 %v3221, 0.0
      %v3235 = vmax.f32 %v3222, 0.0
      %v3236 = vld [vmem:[%s441 + $0x15] sm:$0xff]
      %v3237 = vld [vmem:[%s441 + $0x1d] sm:$0xff]
      %v3238 = vld [vmem:[%s441 + $0x25] sm:$0xff]
      %v3239 = vld [vmem:[%s441 + $0x2d] sm:$0xff]
      %v3240 = vld [vmem:[%s441 + $0x35] sm:$0xff]
      %v3241 = vld [vmem:[%s441 + $0x3d] sm:$0xff]
      %v3242 = vld [vmem:[%s441 + $0x45] sm:$0xff]
      %v3243 = vld [vmem:[%s441 + $0x4d] sm:$0xff]
      %v3244 = vld [vmem:[%s441 + $0x55] sm:$0xff]
      %v3245 = vld [vmem:[%s441 + $0x5d] sm:$0xff]
      %v3246 = vld [vmem:[%s441 + $0x65] sm:$0xff]
      %v3247 = vld [vmem:[%s441 + $0x6d] sm:$0xff]
      %v3248 = vld [vmem:[%s441 + $0x75] sm:$0xf]
      %v3249 = vpack.c.bf16 %v3237, %v3236
      %v3250 = vpack.c.bf16 %v3239, %v3238
      %v3251 = vpack.c.bf16 %v3241, %v3240
      %v3252 = vpack.c.bf16 %v3243, %v3242
      %v3253 = vpack.c.bf16 %v3245, %v3244
      %v3254 = vpack.c.bf16 %v3247, %v3246
      %v3255 = vpack.c.bf16 %v3248, %v3248
      %v3256 = vld [vmem:[%s9] sm:$0x3]
      %v3257 = vld [vmem:[%s10] sm:$0x1]
      %v3259 = vlaneseq
      %v3260 = vshrl.u32 %v3259, 7
      %v3261 = vsub.s32 0, %v3260
      %v3262 = vrot.slane %v3257, %v3261
      %v3265 = vsel %vm504, %v3249, 0
      %v3268 = vsel %vm504, %v3250, 0
      %v3271 = vsel %vm504, %v3251, 0
      %v3274 = vsel %vm504, %v3252, 0
      %v3277 = vsel %vm504, %v3253, 0
      %v3280 = vsel %vm504, %v3254, 0
      %v3283 = vsel %vm504, %v3255, 0
      %v3286 = vsel %vm526, %v3256, 0
      %3288 = vmatprep.subr.bf16.mxu0 0
      %3289 = vmatpush1.bf16.msra.mxu0 %v3286
      %3290 = vmatprep.subr.bf16.mxu0 0
      %3291 = vmatpush1.bf16.msra.mxu0 0
      %3292 = vmatprep.subr.bf16.mxu0 0
      %3293 = vmatpush1.bf16.msra.mxu0 0
      %3294 = vmatprep.subr.bf16.mxu0 0
      %3295 = vmatpush1.bf16.msra.mxu0 0
      %3296 = vmatprep.subr.bf16.mxu0 0
      %3297 = vmatpush1.bf16.msra.mxu0 0
      %3298 = vmatprep.subr.bf16.mxu0 0
      %3299 = vmatpush1.bf16.msra.mxu0 0
      %3300 = vmatprep.subr.bf16.mxu0 0
      %3301 = vmatpush1.bf16.msra.mxu0 0
      %3302 = vmatprep.subr.bf16.mxu0 0
      %3303 = vmatpush1.bf16.msra.mxu0 0
      %3304 = vmatprep.subr.bf16.mxu0 0
      %3305 = vmatpush1.bf16.msra.mxu0 0
      %3306 = vmatprep.subr.bf16.mxu0 0
      %3307 = vmatpush1.bf16.msra.mxu0 0
      %3308 = vmatprep.subr.bf16.mxu0 0
      %3309 = vmatpush1.bf16.msra.mxu0 0
      %3310 = vmatprep.subr.bf16.mxu0 0
      %3311 = vmatpush1.bf16.msra.mxu0 0
      %3312 = vmatprep.subr.bf16.mxu0 0
      %3313 = vmatpush1.bf16.msra.mxu0 0
      %3314 = vmatprep.subr.bf16.mxu0 0
      %3315 = vmatpush1.bf16.msra.mxu0 0
      %3316 = vmatprep.subr.bf16.mxu0 0
      %3317 = vmatpush1.bf16.msra.mxu0 0
      %3318 = vmatprep.subr.bf16.mxu0 0
      %3319 = vmatpush1.bf16.msra.mxu0 0
      %3320 = vmatprep.mubr.bf16.mxu0 0
      %3321 = vmatmul.mubr.bf16.gmra.mrb[0].mxu0 %v3265
      %v3322 = vpop.f32.mrb[0].mxu0
      %v3323 = vadd.f32 %v3262, %v3322
      %v3324 = vpop.f32.mrb[0].mxu0
      %v3325 = vpop.f32.mrb[0].mxu0
      %v3326 = vadd.f32 %v3262, %v3325
      %v3327 = vpop.f32.mrb[0].mxu0
      %3328 = vmatprep.mubr.bf16.mxu0 0
      %3329 = vmatmul.mubr.bf16.gmra.mrb[0].mxu0 %v3268
      %v3330 = vpop.f32.mrb[0].mxu0
      %v3331 = vadd.f32 %v3262, %v3330
      %v3332 = vpop.f32.mrb[0].mxu0
      %v3333 = vpop.f32.mrb[0].mxu0
      %v3334 = vadd.f32 %v3262, %v3333
      %v3335 = vpop.f32.mrb[0].mxu0
      %3336 = vmatprep.mubr.bf16.mxu0 0
      %3337 = vmatmul.mubr.bf16.gmra.mrb[0].mxu0 %v3271
      %v3338 = vpop.f32.mrb[0].mxu0
      %v3339 = vadd.f32 %v3262, %v3338
      %v3340 = vpop.f32.mrb[0].mxu0
      %v3341 = vpop.f32.mrb[0].mxu0
      %v3342 = vadd.f32 %v3262, %v3341
      %v3343 = vpop.f32.mrb[0].mxu0
      %3344 = vmatprep.mubr.bf16.mxu0 0
      %3345 = vmatmul.mubr.bf16.gmra.mrb[0].mxu0 %v3274
      %v3346 = vpop.f32.mrb[0].mxu0
      %v3347 = vadd.f32 %v3262, %v3346
      %v3348 = vpop.f32.mrb[0].mxu0
      %v3349 = vpop.f32.mrb[0].mxu0
      %v3350 = vadd.f32 %v3262, %v3349
      %v3351 = vpop.f32.mrb[0].mxu0
      %3352 = vmatprep.mubr.bf16.mxu0 0
      %3353 = vmatmul.mubr.bf16.gmra.mrb[0].mxu0 %v3277
      %v3354 = vpop.f32.mrb[0].mxu0
      %v3355 = vadd.f32 %v3262, %v3354
      %v3356 = vpop.f32.mrb[0].mxu0
      %v3357 = vpop.f32.mrb[0].mxu0
      %v3358 = vadd.f32 %v3262, %v3357
      %v3359 = vpop.f32.mrb[0].mxu0
      %3360 = vmatprep.mubr.bf16.mxu0 0
      %3361 = vmatmul.mubr.bf16.gmra.mrb[0].mxu0 %v3280
      %v3362 = vpop.f32.mrb[0].mxu0
      %v3363 = vadd.f32 %v3262, %v3362
      %v3364 = vpop.f32.mrb[0].mxu0
      %v3365 = vpop.f32.mrb[0].mxu0
      %v3366 = vadd.f32 %v3262, %v3365
      %v3367 = vpop.f32.mrb[0].mxu0
      %3368 = vmatprep.mubr.bf16.mxu0 0
      %3369 = vmatmul.mubr.bf16.gmra.mrb[0].mxu0 %v3283
      %v3370 = vpop.f32.mrb[0].mxu0
      %v3371 = vadd.f32 %v3262, %v3370
      %v3372 = vpop.f32.mrb[0].mxu0
      %v3373 = vpop.f32.mrb[0].mxu0
      %v3374 = vpop.f32.mrb[0].mxu0
      %3375 = vdwg.mxu0
      %v3376 = vadd.f32 %v3223, %v3323
      %v3377 = vadd.f32 %v3224, %v3326
      %v3378 = vadd.f32 %v3225, %v3331
      %v3379 = vadd.f32 %v3226, %v3334
      %v3380 = vadd.f32 %v3227, %v3339
      %v3381 = vadd.f32 %v3228, %v3342
      %v3382 = vadd.f32 %v3229, %v3347
      %v3383 = vadd.f32 %v3230, %v3350
      %v3384 = vadd.f32 %v3231, %v3355
      %v3385 = vadd.f32 %v3232, %v3358
      %v3386 = vadd.f32 %v3233, %v3363
      %v3387 = vadd.f32 %v3234, %v3366
      %v3388 = vadd.f32 %v3235, %v3371
      %v3389 = vmul.f32 %v3376, %v1818
      %v3390 = vmul.f32 %v3377, %v1823
      %v3391 = vmul.f32 %v3378, %v1828
      %v3392 = vmul.f32 %v3379, %v1833
      %v3393 = vmul.f32 %v3380, %v1838
      %v3394 = vmul.f32 %v3381, %v1843
      %v3395 = vmul.f32 %v3382, %v1848
      %v3396 = vmul.f32 %v3383, %v1853
      %v3397 = vmul.f32 %v3384, %v1858
      %v3398 = vmul.f32 %v3385, %v1863
      %v3399 = vmul.f32 %v3386, %v1868
      %v3400 = vmul.f32 %v3387, %v1873
      %v3401 = vmul.f32 %v3388, %v1878
      %3402 = vst.msk [vmem:[%s446] sm:$0xff] %vm1792, %v3389
      %3403 = vst.msk [vmem:[%s446 + $0x8] sm:$0xff] %vm1792, %v3390
      %3404 = vst.msk [vmem:[%s446 + $0x10] sm:$0xff] %vm1792, %v3391
      %3405 = vst.msk [vmem:[%s446 + $0x18] sm:$0xff] %vm1792, %v3392
      %3406 = vst.msk [vmem:[%s446 + $0x20] sm:$0xff] %vm1792, %v3393
      %3407 = vst.msk [vmem:[%s446 + $0x28] sm:$0xff] %vm1792, %v3394
      %3408 = vst.msk [vmem:[%s446 + $0x30] sm:$0xff] %vm1792, %v3395
      %3409 = vst.msk [vmem:[%s446 + $0x38] sm:$0xff] %vm1792, %v3396
      %3410 = vst.msk [vmem:[%s446 + $0x40] sm:$0xff] %vm1792, %v3397
      %3411 = vst.msk [vmem:[%s446 + $0x48] sm:$0xff] %vm1792, %v3398
      %3412 = vst.msk [vmem:[%s446 + $0x50] sm:$0xff] %vm1792, %v3399
      %3413 = vst.msk [vmem:[%s446 + $0x58] sm:$0xff] %vm1792, %v3400
      %3414 = vst.msk [vmem:[%s446 + $0x60] sm:$0xf] %vm1813, %v3401
      %p3415 = scmp.lt.s32.totalorder %s22, 1
      %s3416 = scalar_select %p3415, %s22, 1
      %s3417 = smul.addr %s3416, 13
      %s3418 = smul.addr %s3417, 8
      %s3419 = scalar_lea.vmem %s11, %s3418
      // Predicated region
      $region65: #{residual_block_forward.2} parent=63 // pred_check
        %p3420 = pneg %p291
      $region66: #{residual_block_forward.2} parent=63 // pred_check_branch
        %3422 = sbr.rel (%p3420) target = $region68
      $region67: #{residual_block_forward.2} parent=63 // pred_region
        _
      $region68: #{residual_block_forward.2} parent=63 // pred_fallthru
        _
    $region64: #{residual_block_forward.2} parent=5 // pred_fallthru
      _
    %p3423 = scmp.le.s32.totalorder 2, %s17
    // Predicated region
    $region69: #{residual_block_forward.2} parent=5 // pred_check
      %p3424 = pneg %p3423
    $region70: #{residual_block_forward.2} parent=5 // pred_check_branch
      %3426 = sbr.rel (%p3424) target = $region72
    $region71: #{residual_block_forward.2} parent=5 // pred_region
      %s3427 = ssub.s32 %s17, 2
      // Predicated region
      $region73: #{residual_block_forward.2} parent=71 // pred_check
        %p3428 = pneg %p297
      $region74: #{residual_block_forward.2} parent=71 // pred_check_branch
        %3430 = sbr.rel (%p3428) target = $region76
      $region75: #{residual_block_forward.2} parent=71 // pred_region
        %p3431 = scmp.lt.s32.totalorder %s23, 1
        %s3432 = scalar_select %p3431, %s23, 1
        %s3433 = smul.addr %s3432, 13
        %s3434 = smul.addr %s3433, 8
        %s3435 = scalar_lea.vmem %s11, %s3434
      $region76: #{residual_block_forward.2} parent=71 // pred_fallthru
        _
    $region72: #{residual_block_forward.2} parent=5 // pred_fallthru
      _
  $region6: #{residual_block_forward.2} parent=0 // loop_footer
    %s21 = sadd.s32 1, %s17
  $region7: #{residual_block_forward.2} parent=0 // loop_footer_branch
    %16 = sbr.rel target = $region3
  $region8: #{residual_block_forward.2} parent=0 // loop_exit
    _

// kernel: residual_block_forward.3
$region0: #{residual_block_forward.3}
  #allocation0 [shape = 'u32[]', space=smem, size = 0x4, offset = 0x4, fixed_abs, tag = 'smem constant byte address 0x4 - core index']
  #allocation1 [shape = 'u32[144,128]{1,0:T(1,128)}', space=vmem, size = 0x12000, scoped, tag = 'internal scratch']
  #allocation2 [shape = 'f32[164,8]{1,0:T(8,128)}', space=vmem, size = 0x15000, scoped, tag = 'scratch operand']
  %s0 = inlined_call_operand.vmem [shape: f32[2,164,8], index: 0, kind: input, shape index: {}]
  %s1 = inlined_call_operand.vmem [shape: f32[100,1], index: 1, kind: input, shape index: {}]
  %s2 = inlined_call_operand.vmem [shape: bf16[9,8,8], index: 2, kind: input, shape index: {}]
  %s3 = inlined_call_operand.vmem [shape: f32[1,8], index: 3, kind: input, shape index: {}]
  %s4 = inlined_call_operand.vmem [shape: bf16[9,8,8], index: 4, kind: input, shape index: {}]
  %s5 = inlined_call_operand.vmem [shape: f32[1,8], index: 5, kind: input, shape index: {}]
  %s6 = inlined_call_operand.vmem [shape: f32[2,100,8], index: 6, kind: output, shape index: {}]
  %s7 = sld [smem:[#allocation0]]
  $region57: #{residual_block_forward.3} parent=0
    _
  %s9 = ssub.s32 1, %s7
  %s10 = scalar_select 0, %s9, %s7
  loop: start=0, step=1, limit=4
  $region2: #{residual_block_forward.3} parent=0 // loop_pre_header
    _
  $region3: #{residual_block_forward.3} parent=0 // loop_header
    %s12 = sphi 0, %s16
    %p13 = scmp.ge.s32.totalorder %s12, 4
    %s22 = sphi 0, %s24
    %s25 = sphi 0, %s22
    %s26 = sphi 0, %s25
    %s42 = sphi 0, %s26
    %s46 = sphi 0, %s46
    %s48 = sphi 0, %s46
    %s49 = sphi 0, %s48
    %s63 = sphi 0, %s49
    %s67 = sphi 0, %s67
    %s69 = sphi 0, %s67
    %s70 = sphi 0, %s69
    %s84 = sphi 0, %s70
    %s88 = sphi 0, %s88
    %s90 = sphi 0, %s88
    %s91 = sphi 0, %s90
    %s105 = sphi 0, %s91
    %s109 = sphi 0, %s109
    %s111 = sphi 0, %s109
    %s112 = sphi 0, %s111
    %s126 = sphi 0, %s112
    %s130 = sphi 0, %s130
    %s132 = sphi 0, %s130
    %s133 = sphi 0, %s132
    %s147 = sphi 0, %s133
    %s153 = sphi 0, %s155
    %s156 = sphi 0, %s153
    %s157 = sphi 0, %s156
    %s173 = sphi 0, %s157
  $region4: #{residual_block_forward.3} parent=0 // loop_header_branch
    %15 = sbr.rel (%p13) target = $region8
  $region5: #{residual_block_forward.3} parent=0 // loop_body
    %s17 = ssub.s32 %s12, 1
    %s18 = ssub.s32 %s12, 2
    %s19 = sadd.s32 %s12, 1
    %s20 = ssub.s32 %s12, %s19
    %p21 = scmp.eq.s32.totalorder %s20, 0
    %s23 = sadd.s32 %s22, 1
    %s24 = scalar_select %p21, %s22, %s23
    %p27 = pneg %p21
    %p28 = scmp.eq.s32.totalorder %s12, 1
    %p29 = por %p27, %p28
    %p30 = scmp.ne.s32.totalorder %s22, %s25
    %p31 = scmp.eq.s32.totalorder %s12, 0
    %p32 = por %p30, %p31
    %p33 = scmp.ne.s32.totalorder %s22, %s25
    %p34 = scmp.eq.s32.totalorder %s17, 1
    %p35 = por %p33, %p34
    %p36 = scmp.ne.s32.totalorder %s25, %s26
    %p37 = scmp.eq.s32.totalorder %s17, 0
    %p38 = por %p36, %p37
    %p39 = scmp.ne.s32.totalorder %s25, %s26
    %p40 = scmp.eq.s32.totalorder %s18, 1
    %p41 = por %p39, %p40
    %p43 = scmp.ne.s32.totalorder %s26, %s42
    %p44 = scmp.eq.s32.totalorder %s18, 0
    %p45 = por %p43, %p44
    %s47 = sadd.s32 %s46, 1
    %p50 = scmp.eq.s32.totalorder %s12, 1
    %p51 = scmp.ne.s32.totalorder %s46, %s48
    %p52 = scmp.eq.s32.totalorder %s12, 0
    %p53 = por %p51, %p52
    %p54 = scmp.ne.s32.totalorder %s46, %s48
    %p55 = scmp.eq.s32.totalorder %s17, 1
    %p56 = por %p54, %p55
    %p57 = scmp.ne.s32.totalorder %s48, %s49
    %p58 = scmp.eq.s32.totalorder %s17, 0
    %p59 = por %p57, %p58
    %p60 = scmp.ne.s32.totalorder %s48, %s49
    %p61 = scmp.eq.s32.totalorder %s18, 1
    %p62 = por %p60, %p61
    %p64 = scmp.ne.s32.totalorder %s49, %s63
    %p65 = scmp.eq.s32.totalorder %s18, 0
    %p66 = por %p64, %p65
    %s68 = sadd.s32 %s67, 1
    %p71 = scmp.eq.s32.totalorder %s12, 1
    %p72 = scmp.ne.s32.totalorder %s67, %s69
    %p73 = scmp.eq.s32.totalorder %s12, 0
    %p74 = por %p72, %p73
    %p75 = scmp.ne.s32.totalorder %s67, %s69
    %p76 = scmp.eq.s32.totalorder %s17, 1
    %p77 = por %p75, %p76
    %p78 = scmp.ne.s32.totalorder %s69, %s70
    %p79 = scmp.eq.s32.totalorder %s17, 0
    %p80 = por %p78, %p79
    %p81 = scmp.ne.s32.totalorder %s69, %s70
    %p82 = scmp.eq.s32.totalorder %s18, 1
    %p83 = por %p81, %p82
    %p85 = scmp.ne.s32.totalorder %s70, %s84
    %p86 = scmp.eq.s32.totalorder %s18, 0
    %p87 = por %p85, %p86
    %s89 = sadd.s32 %s88, 1
    %p92 = scmp.eq.s32.totalorder %s12, 1
    %p93 = scmp.ne.s32.totalorder %s88, %s90
    %p94 = scmp.eq.s32.totalorder %s12, 0
    %p95 = por %p93, %p94
    %p96 = scmp.ne.s32.totalorder %s88, %s90
    %p97 = scmp.eq.s32.totalorder %s17, 1
    %p98 = por %p96, %p97
    %p99 = scmp.ne.s32.totalorder %s90, %s91
    %p100 = scmp.eq.s32.totalorder %s17, 0
    %p101 = por %p99, %p100
    %p102 = scmp.ne.s32.totalorder %s90, %s91
    %p103 = scmp.eq.s32.totalorder %s18, 1
    %p104 = por %p102, %p103
    %p106 = scmp.ne.s32.totalorder %s91, %s105
    %p107 = scmp.eq.s32.totalorder %s18, 0
    %p108 = por %p106, %p107
    %s110 = sadd.s32 %s109, 1
    %p113 = scmp.eq.s32.totalorder %s12, 1
    %p114 = scmp.ne.s32.totalorder %s109, %s111
    %p115 = scmp.eq.s32.totalorder %s12, 0
    %p116 = por %p114, %p115
    %p117 = scmp.ne.s32.totalorder %s109, %s111
    %p118 = scmp.eq.s32.totalorder %s17, 1
    %p119 = por %p117, %p118
    %p120 = scmp.ne.s32.totalorder %s111, %s112
    %p121 = scmp.eq.s32.totalorder %s17, 0
    %p122 = por %p120, %p121
    %p123 = scmp.ne.s32.totalorder %s111, %s112
    %p124 = scmp.eq.s32.totalorder %s18, 1
    %p125 = por %p123, %p124
    %p127 = scmp.ne.s32.totalorder %s112, %s126
    %p128 = scmp.eq.s32.totalorder %s18, 0
    %p129 = por %p127, %p128
    %s131 = sadd.s32 %s130, 1
    %p134 = scmp.eq.s32.totalorder %s12, 1
    %p135 = scmp.ne.s32.totalorder %s130, %s132
    %p136 = scmp.eq.s32.totalorder %s12, 0
    %p137 = por %p135, %p136
    %p138 = scmp.ne.s32.totalorder %s130, %s132
    %p139 = scmp.eq.s32.totalorder %s17, 1
    %p140 = por %p138, %p139
    %p141 = scmp.ne.s32.totalorder %s132, %s133
    %p142 = scmp.eq.s32.totalorder %s17, 0
    %p143 = por %p141, %p142
    %p144 = scmp.ne.s32.totalorder %s132, %s133
    %p145 = scmp.eq.s32.totalorder %s18, 1
    %p146 = por %p144, %p145
    %p148 = scmp.ne.s32.totalorder %s133, %s147
    %p149 = scmp.eq.s32.totalorder %s18, 0
    %p150 = por %p148, %p149
    %s151 = ssub.s32 %s12, %s19
    %p152 = scmp.eq.s32.totalorder %s151, 0
    %s154 = sadd.s32 %s153, 1
    %s155 = scalar_select %p152, %s153, %s154
    %p158 = pneg %p152
    %p159 = scmp.eq.s32.totalorder %s12, 1
    %p160 = por %p158, %p159
    %p161 = scmp.ne.s32.totalorder %s153, %s156
    %p162 = scmp.eq.s32.totalorder %s12, 0
    %p163 = por %p161, %p162
    %p164 = scmp.ne.s32.totalorder %s153, %s156
    %p165 = scmp.eq.s32.totalorder %s17, 1
    %p166 = por %p164, %p165
    %p167 = scmp.ne.s32.totalorder %s156, %s157
    %p168 = scmp.eq.s32.totalorder %s17, 0
    %p169 = por %p167, %p168
    %p170 = scmp.ne.s32.totalorder %s156, %s157
    %p171 = scmp.eq.s32.totalorder %s18, 1
    %p172 = por %p170, %p171
    %p174 = scmp.ne.s32.totalorder %s157, %s173
    %p175 = scmp.eq.s32.totalorder %s18, 0
    %p176 = por %p174, %p175
    %p177 = scmp.le.s32.totalorder 1, %s12
    %p178 = scmp.lt.s32.totalorder %s12, 3
    %p179 = pnand %p177, %p178
    %p180 = pneg %p179
    // Predicated region
    $region9: #{residual_block_forward.3} parent=5 // pred_check
      _
    $region10: #{residual_block_forward.3} parent=5 // pred_check_branch
      %182 = sbr.rel (%p179) target = $region12
    $region11: #{residual_block_forward.3} parent=5 // pred_region
      %s183 = ssub.s32 %s12, 1
      // Predicated region
      $region13: #{residual_block_forward.3} parent=11 // pred_check
        %p184 = pneg %p59
      $region14: #{residual_block_forward.3} parent=11 // pred_check_branch
        %186 = sbr.rel (%p184) target = $region16
      $region15: #{residual_block_forward.3} parent=11 // pred_region
        _
      $region16: #{residual_block_forward.3} parent=11 // pred_fallthru
        _
      // Predicated region
      $region17: #{residual_block_forward.3} parent=11 // pred_check
        %p187 = pneg %p80
      $region18: #{residual_block_forward.3} parent=11 // pred_check_branch
        %189 = sbr.rel (%p187) target = $region20
      $region19: #{residual_block_forward.3} parent=11 // pred_region
        _
      $region20: #{residual_block_forward.3} parent=11 // pred_fallthru
        _
      // Predicated region
      $region21: #{residual_block_forward.3} parent=11 // pred_check
        %p190 = pneg %p101
      $region22: #{residual_block_forward.3} parent=11 // pred_check_branch
        %192 = sbr.rel (%p190) target = $region24
      $region23: #{residual_block_forward.3} parent=11 // pred_region
        _
      $region24: #{residual_block_forward.3} parent=11 // pred_fallthru
        _
      // Predicated region
      $region25: #{residual_block_forward.3} parent=11 // pred_check
        %p193 = pneg %p122
      $region26: #{residual_block_forward.3} parent=11 // pred_check_branch
        %195 = sbr.rel (%p193) target = $region28
      $region27: #{residual_block_forward.3} parent=11 // pred_region
        _
      $region28: #{residual_block_forward.3} parent=11 // pred_fallthru
        _
      // Predicated region
      $region29: #{residual_block_forward.3} parent=11 // pred_check
        %p196 = pneg %p143
      $region30: #{residual_block_forward.3} parent=11 // pred_check_branch
        %198 = sbr.rel (%p196) target = $region32
      $region31: #{residual_block_forward.3} parent=11 // pred_region
        _
      $region32: #{residual_block_forward.3} parent=11 // pred_fallthru
        _
    $region12: #{residual_block_forward.3} parent=5 // pred_fallthru
      _
    %p199 = scmp.lt.s32.totalorder %s12, 2
    // Predicated region
    $region33: #{residual_block_forward.3} parent=5 // pred_check
      %p200 = pneg %p199
    $region34: #{residual_block_forward.3} parent=5 // pred_check_branch
      %202 = sbr.rel (%p200) target = $region36
    $region35: #{residual_block_forward.3} parent=5 // pred_region
      // Predicated region
      $region37: #{residual_block_forward.3} parent=35 // pred_check
        %p203 = pneg %p32
      $region38: #{residual_block_forward.3} parent=35 // pred_check_branch
        %205 = sbr.rel (%p203) target = $region40
      $region39: #{residual_block_forward.3} parent=35 // pred_region
        %p206 = scmp.lt.s32.totalorder %s12, 1
        %s207 = scalar_select %p206, %s12, 1
        %s208 = smul.addr %s207, 21
        %s209 = smul.addr %s208, 8
        %s210 = scalar_lea.vmem %s0, %s209
      $region40: #{residual_block_forward.3} parent=35 // pred_fallthru
        _
    $region36: #{residual_block_forward.3} parent=5 // pred_fallthru
      _
    %p211 = scmp.le.s32.totalorder 1, %s12
    %p212 = scmp.lt.s32.totalorder %s12, 3
    %p213 = pnand %p211, %p212
    %p214 = pneg %p213
    // Predicated region
    $region41: #{residual_block_forward.3} parent=5 // pred_check
      _
    $region42: #{residual_block_forward.3} parent=5 // pred_check_branch
      %216 = sbr.rel (%p213) target = $region44
    $region43: #{residual_block_forward.3} parent=5 // pred_region
      %s217 = ssub.s32 %s12, 1
      %p218 = scmp.lt.s32.totalorder %s17, 1
      %s219 = scalar_select %p218, %s17, 1
      %s220 = smul.addr %s219, 21
      %s221 = smul.addr %s220, 8
      %s222 = scalar_lea.vmem %s0, %s221
      %p223 = pneg %p38
      %p224 = pneg %p35
      %p225 = pneg %p59
      %p226 = pneg %p56
      %p227 = pneg %p80
      %p228 = pneg %p77
      %p229 = pneg %p101
      %p230 = pneg %p98
      %p231 = pneg %p122
      %p232 = pneg %p119
      %p233 = pneg %p143
      %p234 = pneg %p140
      %p235 = pneg %p169
      %p236 = pneg %p166
      %p237 = scmp.lt.s32.totalorder %s17, 1
      %s238 = scalar_select %p237, %s17, 1
      %s239 = smul.addr %s238, 13
      %s240 = smul.addr %s239, 8
      %s241 = scalar_lea.vmem %s6, %s240
      %p242 = scmp.lt.s32.totalorder %s17, 1
      %s243 = scalar_select %p242, %s17, 1
      %s244 = smul.addr %s243, 21
      %s245 = smul.addr %s244, 8
      %s246 = scalar_lea.vmem %s0, %s245
      %p247 = scmp.lt.s32.totalorder %s17, 1
      %s248 = scalar_select %p247, %s17, 1
      %s249 = smul.addr %s248, 13
      %s250 = smul.addr %s249, 8
      %s251 = scalar_lea.vmem %s6, %s250
      %v253 = vld [vmem:[%s1] sm:$0xff]
      %v254 = vld [vmem:[%s1 + $0x8] sm:$0xff]
      %v255 = vld [vmem:[%s1 + $0x10] sm:$0xff]
      %v256 = vld [vmem:[%s1 + $0x18] sm:$0xff]
      %v257 = vld [vmem:[%s1 + $0x20] sm:$0xff]
      %v258 = vld [vmem:[%s1 + $0x28] sm:$0xff]
      %v259 = vld [vmem:[%s1 + $0x30] sm:$0xff]
      %v260 = vld [vmem:[%s1 + $0x38] sm:$0xff]
      %v261 = vld [vmem:[%s1 + $0x40] sm:$0xff]
      %v262 = vld [vmem:[%s1 + $0x48] sm:$0xff]
      %v263 = vld [vmem:[%s1 + $0x50] sm:$0xff]
      %v264 = vld [vmem:[%s1 + $0x58] sm:$0xff]
      %v265 = vld [vmem:[%s1 + $0x60] sm:$0xf]
      %v266 = vld [vmem:[%s246 + $0x15] sm:$0xff]
      %v267 = vld [vmem:[%s246 + $0x1d] sm:$0xff]
      %v268 = vld [vmem:[%s246 + $0x25] sm:$0xff]
      %v269 = vld [vmem:[%s246 + $0x2d] sm:$0xff]
      %v270 = vld [vmem:[%s246 + $0x35] sm:$0xff]
      %v271 = vld [vmem:[%s246 + $0x3d] sm:$0xff]
      %v272 = vld [vmem:[%s246 + $0x45] sm:$0xff]
      %v273 = vld [vmem:[%s246 + $0x4d] sm:$0xff]
      %v274 = vld [vmem:[%s246 + $0x55] sm:$0xff]
      %v275 = vld [vmem:[%s246 + $0x5d] sm:$0xff]
      %v276 = vld [vmem:[%s246 + $0x65] sm:$0xff]
      %v277 = vld [vmem:[%s246 + $0x6d] sm:$0xff]
      %v278 = vld [vmem:[%s246 + $0x75] sm:$0xf]
      %v279 = vpack.c.bf16 %v267, %v266
      %v280 = vpack.c.bf16 %v269, %v268
      %v281 = vpack.c.bf16 %v271, %v270
      %v282 = vpack.c.bf16 %v273, %v272
      %v283 = vpack.c.bf16 %v275, %v274
      %v284 = vpack.c.bf16 %v277, %v276
      %v285 = vpack.c.bf16 %v278, %v278
      %v286 = vld [vmem:[%s2] sm:$0xf]
      %v287 = vld [vmem:[%s246 + $0x16] sm:$0xff]
      %v288 = vld [vmem:[%s246 + $0x1e] sm:$0xff]
      %v289 = vld [vmem:[%s246 + $0x26] sm:$0xff]
      %v290 = vld [vmem:[%s246 + $0x2e] sm:$0xff]
      %v291 = vld [vmem:[%s246 + $0x36] sm:$0xff]
      %v292 = vld [vmem:[%s246 + $0x3e] sm:$0xff]
      %v293 = vld [vmem:[%s246 + $0x46] sm:$0xff]
      %v294 = vld [vmem:[%s246 + $0x4e] sm:$0xff]
      %v295 = vld [vmem:[%s246 + $0x56] sm:$0xff]
      %v296 = vld [vmem:[%s246 + $0x5e] sm:$0xff]
      %v297 = vld [vmem:[%s246 + $0x66] sm:$0xff]
      %v298 = vld [vmem:[%s246 + $0x6e] sm:$0xff]
      %v299 = vld [vmem:[%s246 + $0x76] sm:$0xf]
      %v300 = vpack.c.bf16 %v288, %v287
      %v301 = vpack.c.bf16 %v290, %v289
      %v302 = vpack.c.bf16 %v292, %v291
      %v303 = vpack.c.bf16 %v294, %v293
      %v304 = vpack.c.bf16 %v296, %v295
      %v305 = vpack.c.bf16 %v298, %v297
      %v306 = vpack.c.bf16 %v299, %v299
      %s307 = scalar_lea.vmem %s2, 4
      %v308 = vld [vmem:[%s307] sm:$0xf]
      %vm309 = vcmask 64512
      %v311 = vsel %vm309, %v300, 0
      %v314 = vsel %vm309, %v301, 0
      %v317 = vsel %vm309, %v302, 0
      %v320 = vsel %vm309, %v303, 0
      %v323 = vsel %vm309, %v304, 0
      %v326 = vsel %vm309, %v305, 0
      %v329 = vsel %vm309, %v306, 0
      %vm331 = vcmask 1043456
      %v333 = vsel %vm331, %v308, 0
      %335 = vmatprep.subr.bf16.mxu0 0
      %336 = vmatpush1.bf16.msra.mxu0 %v333
      %337 = vmatprep.subr.bf16.mxu0 0
      %338 = vmatpush1.bf16.msra.mxu0 0
      %339 = vmatprep.subr.bf16.mxu0 0
      %340 = vmatpush1.bf16.msra.mxu0 0
      %341 = vmatprep.subr.bf16.mxu0 0
      %342 = vmatpush1.bf16.msra.mxu0 0
      %343 = vmatprep.subr.bf16.mxu0 0
      %344 = vmatpush1.bf16.msra.mxu0 0
      %345 = vmatprep.subr.bf16.mxu0 0
      %346 = vmatpush1.bf16.msra.mxu0 0
      %347 = vmatprep.subr.bf16.mxu0 0
      %348 = vmatpush1.bf16.msra.mxu0 0
      %349 = vmatprep.subr.bf16.mxu0 0
      %350 = vmatpush1.bf16.msra.mxu0 0
      %351 = vmatprep.subr.bf16.mxu0 0
      %352 = vmatpush1.bf16.msra.mxu0 0
      %353 = vmatprep.subr.bf16.mxu0 0
      %354 = vmatpush1.bf16.msra.mxu0 0
      %355 = vmatprep.subr.bf16.mxu0 0
      %356 = vmatpush1.bf16.msra.mxu0 0
      %357 = vmatprep.subr.bf16.mxu0 0
      %358 = vmatpush1.bf16.msra.mxu0 0
      %359 = vmatprep.subr.bf16.mxu0 0
      %360 = vmatpush1.bf16.msra.mxu0 0
      %361 = vmatprep.subr.bf16.mxu0 0
      %362 = vmatpush1.bf16.msra.mxu0 0
      %363 = vmatprep.subr.bf16.mxu0 0
      %364 = vmatpush1.bf16.msra.mxu0 0
      %365 = vmatprep.subr.bf16.mxu0 0
      %366 = vmatpush1.bf16.msra.mxu0 0
      %367 = vmatprep.mubr.bf16.mxu0 0
      %368 = vmatmul.mubr.bf16.gmra.mrb[0].mxu0 %v311
      %v369 = vpop.f32.mrb[0].mxu0
      %v370 = vadd.f32 0.0, %v369
      %v371 = vpop.f32.mrb[0].mxu0
      %v372 = vpop.f32.mrb[0].mxu0
      %v373 = vadd.f32 0.0, %v372
      %v374 = vpop.f32.mrb[0].mxu0
      %375 = vmatprep.mubr.bf16.mxu0 0
      %376 = vmatmul.mubr.bf16.gmra.mrb[0].mxu0 %v314
      %v377 = vpop.f32.mrb[0].mxu0
      %v378 = vadd.f32 0.0, %v377
      %v379 = vpop.f32.mrb[0].mxu0
      %v380 = vpop.f32.mrb[0].mxu0
      %v381 = vadd.f32 0.0, %v380
      %v382 = vpop.f32.mrb[0].mxu0
      %383 = vmatprep.mubr.bf16.mxu0 0
      %384 = vmatmul.mubr.bf16.gmra.mrb[0].mxu0 %v317
      %v385 = vpop.f32.mrb[0].mxu0
      %v386 = vadd.f32 0.0, %v385
      %v387 = vpop.f32.mrb[0].mxu0
      %v388 = vpop.f32.mrb[0].mxu0
      %v389 = vadd.f32 0.0, %v388
      %v390 = vpop.f32.mrb[0].mxu0
      %391 = vmatprep.mubr.bf16.mxu0 0
      %392 = vmatmul.mubr.bf16.gmra.mrb[0].mxu0 %v320
      %v393 = vpop.f32.mrb[0].mxu0
      %v394 = vadd.f32 0.0, %v393
      %v395 = vpop.f32.mrb[0].mxu0
      %v396 = vpop.f32.mrb[0].mxu0
      %v397 = vadd.f32 0.0, %v396
      %v398 = vpop.f32.mrb[0].mxu0
      %399 = vmatprep.mubr.bf16.mxu0 0
      %400 = vmatmul.mubr.bf16.gmra.mrb[0].mxu0 %v323
      %v401 = vpop.f32.mrb[0].mxu0
      %v402 = vadd.f32 0.0, %v401
      %v403 = vpop.f32.mrb[0].mxu0
      %v404 = vpop.f32.mrb[0].mxu0
      %v405 = vadd.f32 0.0, %v404
      %v406 = vpop.f32.mrb[0].mxu0
      %407 = vmatprep.mubr.bf16.mxu0 0
      %408 = vmatmul.mubr.bf16.gmra.mrb[0].mxu0 %v326
      %v409 = vpop.f32.mrb[0].mxu0
      %v410 = vadd.f32 0.0, %v409
      %v411 = vpop.f32.mrb[0].mxu0
      %v412 = vpop.f32.mrb[0].mxu0
      %v413 = vadd.f32 0.0, %v412
      %v414 = vpop.f32.mrb[0].mxu0
      %415 = vmatprep.mubr.bf16.mxu0 0
      %416 = vmatmul.mubr.bf16.gmra.mrb[0].mxu0 %v329
      %v417 = vpop.f32.mrb[0].mxu0
      %v418 = vadd.f32 0.0, %v417
      %v419 = vpop.f32.mrb[0].mxu0
      %v420 = vpop.f32.mrb[0].mxu0
      %v421 = vpop.f32.mrb[0].mxu0
      %422 = vdwg.mxu0
      %v424 = vsel %vm309, %v279, 0
      %v427 = vsel %vm309, %v280, 0
      %v430 = vsel %vm309, %v281, 0
      %v433 = vsel %vm309, %v282, 0
      %v436 = vsel %vm309, %v283, 0
      %v439 = vsel %vm309, %v284, 0
      %v442 = vsel %vm309, %v285, 0
      %v445 = vsel %vm331, %v286, 0
      %447 = vmatprep.subr.bf16.mxu0 0
      %448 = vmatpush1.bf16.msra.mxu0 %v445
      %449 = vmatprep.subr.bf16.mxu0 0
      %450 = vmatpush1.bf16.msra.mxu0 0
      %451 = vmatprep.subr.bf16.mxu0 0
      %452 = vmatpush1.bf16.msra.mxu0 0
      %453 = vmatprep.subr.bf16.mxu0 0
      %454 = vmatpush1.bf16.msra.mxu0 0
      %455 = vmatprep.subr.bf16.mxu0 0
      %456 = vmatpush1.bf16.msra.mxu0 0
      %457 = vmatprep.subr.bf16.mxu0 0
      %458 = vmatpush1.bf16.msra.mxu0 0
      %459 = vmatprep.subr.bf16.mxu0 0
      %460 = vmatpush1.bf16.msra.mxu0 0
      %461 = vmatprep.subr.bf16.mxu0 0
      %462 = vmatpush1.bf16.msra.mxu0 0
      %463 = vmatprep.subr.bf16.mxu0 0
      %464 = vmatpush1.bf16.msra.mxu0 0
      %465 = vmatprep.subr.bf16.mxu0 0
      %466 = vmatpush1.bf16.msra.mxu0 0
      %467 = vmatprep.subr.bf16.mxu0 0
      %468 = vmatpush1.bf16.msra.mxu0 0
      %469 = vmatprep.subr.bf16.mxu0 0
      %470 = vmatpush1.bf16.msra.mxu0 0
      %471 = vmatprep.subr.bf16.mxu0 0
      %472 = vmatpush1.bf16.msra.mxu0 0
      %473 = vmatprep.subr.bf16.mxu0 0
      %474 = vmatpush1.bf16.msra.mxu0 0
      %475 = vmatprep.subr.bf16.mxu0 0
      %476 = vmatpush1.bf16.msra.mxu0 0
      %477 = vmatprep.subr.bf16.mxu0 0
      %478 = vmatpush1.bf16.msra.mxu0 0
      %479 = vmatprep.mubr.bf16.mxu0 0
      %480 = vmatmul.mubr.bf16.gmra.mrb[0].mxu0 %v424
      %v481 = vpop.f32.mrb[0].mxu0
      %v482 = vadd.f32 %v370, %v481
      %v483 = vpop.f32.mrb[0].mxu0
      %v484 = vpop.f32.mrb[0].mxu0
      %v485 = vadd.f32 %v373, %v484
      %v486 = vpop.f32.mrb[0].mxu0
      %487 = vmatprep.mubr.bf16.mxu0 0
      %488 = vmatmul.mubr.bf16.gmra.mrb[0].mxu0 %v427
      %v489 = vpop.f32.mrb[0].mxu0
      %v490 = vadd.f32 %v378, %v489
      %v491 = vpop.f32.mrb[0].mxu0
      %v492 = vpop.f32.mrb[0].mxu0
      %v493 = vadd.f32 %v381, %v492
      %v494 = vpop.f32.mrb[0].mxu0
      %495 = vmatprep.mubr.bf16.mxu0 0
      %496 = vmatmul.mubr.bf16.gmra.mrb[0].mxu0 %v430
      %v497 = vpop.f32.mrb[0].mxu0
      %v498 = vadd.f32 %v386, %v497
      %v499 = vpop.f32.mrb[0].mxu0
      %v500 = vpop.f32.mrb[0].mxu0
      %v501 = vadd.f32 %v389, %v500
      %v502 = vpop.f32.mrb[0].mxu0
      %503 = vmatprep.mubr.bf16.mxu0 0
      %504 = vmatmul.mubr.bf16.gmra.mrb[0].mxu0 %v433
      %v505 = vpop.f32.mrb[0].mxu0
      %v506 = vadd.f32 %v394, %v505
      %v507 = vpop.f32.mrb[0].mxu0
      %v508 = vpop.f32.mrb[0].mxu0
      %v509 = vadd.f32 %v397, %v508
      %v510 = vpop.f32.mrb[0].mxu0
      %511 = vmatprep.mubr.bf16.mxu0 0
      %512 = vmatmul.mubr.bf16.gmra.mrb[0].mxu0 %v436
      %v513 = vpop.f32.mrb[0].mxu0
      %v514 = vadd.f32 %v402, %v513
      %v515 = vpop.f32.mrb[0].mxu0
      %v516 = vpop.f32.mrb[0].mxu0
      %v517 = vadd.f32 %v405, %v516
      %v518 = vpop.f32.mrb[0].mxu0
      %519 = vmatprep.mubr.bf16.mxu0 0
      %520 = vmatmul.mubr.bf16.gmra.mrb[0].mxu0 %v439
      %v521 = vpop.f32.mrb[0].mxu0
      %v522 = vadd.f32 %v410, %v521
      %v523 = vpop.f32.mrb[0].mxu0
      %v524 = vpop.f32.mrb[0].mxu0
      %v525 = vadd.f32 %v413, %v524
      %v526 = vpop.f32.mrb[0].mxu0
      %527 = vmatprep.mubr.bf16.mxu0 0
      %528 = vmatmul.mubr.bf16.gmra.mrb[0].mxu0 %v442
      %v529 = vpop.f32.mrb[0].mxu0
      %v530 = vadd.f32 %v418, %v529
      %v531 = vpop.f32.mrb[0].mxu0
      %v532 = vpop.f32.mrb[0].mxu0
      %v533 = vpop.f32.mrb[0].mxu0
      %534 = vdwg.mxu0
      %v535 = vld [vmem:[%s246 + $0x17] sm:$0xff]
      %v536 = vld [vmem:[%s246 + $0x1f] sm:$0xff]
      %v537 = vld [vmem:[%s246 + $0x27] sm:$0xff]
      %v538 = vld [vmem:[%s246 + $0x2f] sm:$0xff]
      %v539 = vld [vmem:[%s246 + $0x37] sm:$0xff]
      %v540 = vld [vmem:[%s246 + $0x3f] sm:$0xff]
      %v541 = vld [vmem:[%s246 + $0x47] sm:$0xff]
      %v542 = vld [vmem:[%s246 + $0x4f] sm:$0xff]
      %v543 = vld [vmem:[%s246 + $0x57] sm:$0xff]
      %v544 = vld [vmem:[%s246 + $0x5f] sm:$0xff]
      %v545 = vld [vmem:[%s246 + $0x67] sm:$0xff]
      %v546 = vld [vmem:[%s246 + $0x6f] sm:$0xff]
      %v547 = vld [vmem:[%s246 + $0x77] sm:$0xf]
      %v548 = vpack.c.bf16 %v536, %v535
      %v549 = vpack.c.bf16 %v538, %v537
      %v550 = vpack.c.bf16 %v540, %v539
      %v551 = vpack.c.bf16 %v542, %v541
      %v552 = vpack.c.bf16 %v544, %v543
      %v553 = vpack.c.bf16 %v546, %v545
      %v554 = vpack.c.bf16 %v547, %v547
      %s555 = scalar_lea.vmem %s2, 8
      %v556 = vld [vmem:[%s555] sm:$0xf]
      %v558 = vsel %vm309, %v548, 0
      %v561 = vsel %vm309, %v549, 0
      %v564 = vsel %vm309, %v550, 0
      %v567 = vsel %vm309, %v551, 0
      %v570 = vsel %vm309, %v552, 0
      %v573 = vsel %vm309, %v553, 0
      %v576 = vsel %vm309, %v554, 0
      %v579 = vsel %vm331, %v556, 0
      %581 = vmatprep.subr.bf16.mxu0 0
      %582 = vmatpush1.bf16.msra.mxu0 %v579
      %583 = vmatprep.subr.bf16.mxu0 0
      %584 = vmatpush1.bf16.msra.mxu0 0
      %585 = vmatprep.subr.bf16.mxu0 0
      %586 = vmatpush1.bf16.msra.mxu0 0
      %587 = vmatprep.subr.bf16.mxu0 0
      %588 = vmatpush1.bf16.msra.mxu0 0
      %589 = vmatprep.subr.bf16.mxu0 0
      %590 = vmatpush1.bf16.msra.mxu0 0
      %591 = vmatprep.subr.bf16.mxu0 0
      %592 = vmatpush1.bf16.msra.mxu0 0
      %593 = vmatprep.subr.bf16.mxu0 0
      %594 = vmatpush1.bf16.msra.mxu0 0
      %595 = vmatprep.subr.bf16.mxu0 0
      %596 = vmatpush1.bf16.msra.mxu0 0
      %597 = vmatprep.subr.bf16.mxu0 0
      %598 = vmatpush1.bf16.msra.mxu0 0
      %599 = vmatprep.subr.bf16.mxu0 0
      %600 = vmatpush1.bf16.msra.mxu0 0
      %601 = vmatprep.subr.bf16.mxu0 0
      %602 = vmatpush1.bf16.msra.mxu0 0
      %603 = vmatprep.subr.bf16.mxu0 0
      %604 = vmatpush1.bf16.msra.mxu0 0
      %605 = vmatprep.subr.bf16.mxu0 0
      %606 = vmatpush1.bf16.msra.mxu0 0
      %607 = vmatprep.subr.bf16.mxu0 0
      %608 = vmatpush1.bf16.msra.mxu0 0
      %609 = vmatprep.subr.bf16.mxu0 0
      %610 = vmatpush1.bf16.msra.mxu0 0
      %611 = vmatprep.subr.bf16.mxu0 0
      %612 = vmatpush1.bf16.msra.mxu0 0
      %613 = vmatprep.mubr.bf16.mxu0 0
      %614 = vmatmul.mubr.bf16.gmra.mrb[0].mxu0 %v558
      %v615 = vpop.f32.mrb[0].mxu0
      %v616 = vadd.f32 0.0, %v615
      %v617 = vpop.f32.mrb[0].mxu0
      %v618 = vpop.f32.mrb[0].mxu0
      %v619 = vadd.f32 0.0, %v618
      %v620 = vpop.f32.mrb[0].mxu0
      %621 = vmatprep.mubr.bf16.mxu0 0
      %622 = vmatmul.mubr.bf16.gmra.mrb[0].mxu0 %v561
      %v623 = vpop.f32.mrb[0].mxu0
      %v624 = vadd.f32 0.0, %v623
      %v625 = vpop.f32.mrb[0].mxu0
      %v626 = vpop.f32.mrb[0].mxu0
      %v627 = vadd.f32 0.0, %v626
      %v628 = vpop.f32.mrb[0].mxu0
      %629 = vmatprep.mubr.bf16.mxu0 0
      %630 = vmatmul.mubr.bf16.gmra.mrb[0].mxu0 %v564
      %v631 = vpop.f32.mrb[0].mxu0
      %v632 = vadd.f32 0.0, %v631
      %v633 = vpop.f32.mrb[0].mxu0
      %v634 = vpop.f32.mrb[0].mxu0
      %v635 = vadd.f32 0.0, %v634
      %v636 = vpop.f32.mrb[0].mxu0
      %637 = vmatprep.mubr.bf16.mxu0 0
      %638 = vmatmul.mubr.bf16.gmra.mrb[0].mxu0 %v567
      %v639 = vpop.f32.mrb[0].mxu0
      %v640 = vadd.f32 0.0, %v639
      %v641 = vpop.f32.mrb[0].mxu0
      %v642 = vpop.f32.mrb[0].mxu0
      %v643 = vadd.f32 0.0, %v642
      %v644 = vpop.f32.mrb[0].mxu0
      %645 = vmatprep.mubr.bf16.mxu0 0
      %646 = vmatmul.mubr.bf16.gmra.mrb[0].mxu0 %v570
      %v647 = vpop.f32.mrb[0].mxu0
      %v648 = vadd.f32 0.0, %v647
      %v649 = vpop.f32.mrb[0].mxu0
      %v650 = vpop.f32.mrb[0].mxu0
      %v651 = vadd.f32 0.0, %v650
      %v652 = vpop.f32.mrb[0].mxu0
      %653 = vmatprep.mubr.bf16.mxu0 0
      %654 = vmatmul.mubr.bf16.gmra.mrb[0].mxu0 %v573
      %v655 = vpop.f32.mrb[0].mxu0
      %v656 = vadd.f32 0.0, %v655
      %v657 = vpop.f32.mrb[0].mxu0
      %v658 = vpop.f32.mrb[0].mxu0
      %v659 = vadd.f32 0.0, %v658
      %v660 = vpop.f32.mrb[0].mxu0
      %661 = vmatprep.mubr.bf16.mxu0 0
      %662 = vmatmul.mubr.bf16.gmra.mrb[0].mxu0 %v576
      %v663 = vpop.f32.mrb[0].mxu0
      %v664 = vadd.f32 0.0, %v663
      %v665 = vpop.f32.mrb[0].mxu0
      %v666 = vpop.f32.mrb[0].mxu0
      %v667 = vpop.f32.mrb[0].mxu0
      %668 = vdwg.mxu0
      %v669 = vadd.f32 %v482, %v616
      %v670 = vadd.f32 %v485, %v619
      %v671 = vadd.f32 %v490, %v624
      %v672 = vadd.f32 %v493, %v627
      %v673 = vadd.f32 %v498, %v632
      %v674 = vadd.f32 %v501, %v635
      %v675 = vadd.f32 %v506, %v640
      %v676 = vadd.f32 %v509, %v643
      %v677 = vadd.f32 %v514, %v648
      %v678 = vadd.f32 %v517, %v651
      %v679 = vadd.f32 %v522, %v656
      %v680 = vadd.f32 %v525, %v659
      %v681 = vadd.f32 %v530, %v664
      %v682 = vld [vmem:[%s246 + $0x1f] sm:$0xff]
      %v683 = vld [vmem:[%s246 + $0x27] sm:$0xff]
      %v684 = vld [vmem:[%s246 + $0x2f] sm:$0xff]
      %v685 = vld [vmem:[%s246 + $0x37] sm:$0xff]
      %v686 = vld [vmem:[%s246 + $0x3f] sm:$0xff]
      %v687 = vld [vmem:[%s246 + $0x47] sm:$0xff]
      %v688 = vld [vmem:[%s246 + $0x4f] sm:$0xff]
      %v689 = vld [vmem:[%s246 + $0x57] sm:$0xff]
      %v690 = vld [vmem:[%s246 + $0x5f] sm:$0xff]
      %v691 = vld [vmem:[%s246 + $0x67] sm:$0xff]
      %v692 = vld [vmem:[%s246 + $0x6f] sm:$0xff]
      %v693 = vld [vmem:[%s246 + $0x77] sm:$0xff]
      %v694 = vld [vmem:[%s246 + $0x7f] sm:$0xf]
      %v695 = vpack.c.bf16 %v683, %v682
      %v696 = vpack.c.bf16 %v685, %v684
      %v697 = vpack.c.bf16 %v687, %v686
      %v698 = vpack.c.bf16 %v689, %v688
      %v699 = vpack.c.bf16 %v691, %v690
      %v700 = vpack.c.bf16 %v693, %v692
      %v701 = vpack.c.bf16 %v694, %v694
      %s702 = scalar_lea.vmem %s2, 12
      %v703 = vld [vmem:[%s702] sm:$0xf]
      %v705 = vsel %vm309, %v695, 0
      %v708 = vsel %vm309, %v696, 0
      %v711 = vsel %vm309, %v697, 0
      %v714 = vsel %vm309, %v698, 0
      %v717 = vsel %vm309, %v699, 0
      %v720 = vsel %vm309, %v700, 0
      %v723 = vsel %vm309, %v701, 0
      %v726 = vsel %vm331, %v703, 0
      %728 = vmatprep.subr.bf16.mxu0 0
      %729 = vmatpush1.bf16.msra.mxu0 %v726
      %730 = vmatprep.subr.bf16.mxu0 0
      %731 = vmatpush1.bf16.msra.mxu0 0
      %732 = vmatprep.subr.bf16.mxu0 0
      %733 = vmatpush1.bf16.msra.mxu0 0
      %734 = vmatprep.subr.bf16.mxu0 0
      %735 = vmatpush1.bf16.msra.mxu0 0
      %736 = vmatprep.subr.bf16.mxu0 0
      %737 = vmatpush1.bf16.msra.mxu0 0
      %738 = vmatprep.subr.bf16.mxu0 0
      %739 = vmatpush1.bf16.msra.mxu0 0
      %740 = vmatprep.subr.bf16.mxu0 0
      %741 = vmatpush1.bf16.msra.mxu0 0
      %742 = vmatprep.subr.bf16.mxu0 0
      %743 = vmatpush1.bf16.msra.mxu0 0
      %744 = vmatprep.subr.bf16.mxu0 0
      %745 = vmatpush1.bf16.msra.mxu0 0
      %746 = vmatprep.subr.bf16.mxu0 0
      %747 = vmatpush1.bf16.msra.mxu0 0
      %748 = vmatprep.subr.bf16.mxu0 0
      %749 = vmatpush1.bf16.msra.mxu0 0
      %750 = vmatprep.subr.bf16.mxu0 0
      %751 = vmatpush1.bf16.msra.mxu0 0
      %752 = vmatprep.subr.bf16.mxu0 0
      %753 = vmatpush1.bf16.msra.mxu0 0
      %754 = vmatprep.subr.bf16.mxu0 0
      %755 = vmatpush1.bf16.msra.mxu0 0
      %756 = vmatprep.subr.bf16.mxu0 0
      %757 = vmatpush1.bf16.msra.mxu0 0
      %758 = vmatprep.subr.bf16.mxu0 0
      %759 = vmatpush1.bf16.msra.mxu0 0
      %760 = vmatprep.mubr.bf16.mxu0 0
      %761 = vmatmul.mubr.bf16.gmra.mrb[0].mxu0 %v705
      %v762 = vpop.f32.mrb[0].mxu0
      %v763 = vadd.f32 0.0, %v762
      %v764 = vpop.f32.mrb[0].mxu0
      %v765 = vpop.f32.mrb[0].mxu0
      %v766 = vadd.f32 0.0, %v765
      %v767 = vpop.f32.mrb[0].mxu0
      %768 = vmatprep.mubr.bf16.mxu0 0
      %769 = vmatmul.mubr.bf16.gmra.mrb[0].mxu0 %v708
      %v770 = vpop.f32.mrb[0].mxu0
      %v771 = vadd.f32 0.0, %v770
      %v772 = vpop.f32.mrb[0].mxu0
      %v773 = vpop.f32.mrb[0].mxu0
      %v774 = vadd.f32 0.0, %v773
      %v775 = vpop.f32.mrb[0].mxu0
      %776 = vmatprep.mubr.bf16.mxu0 0
      %777 = vmatmul.mubr.bf16.gmra.mrb[0].mxu0 %v711
      %v778 = vpop.f32.mrb[0].mxu0
      %v779 = vadd.f32 0.0, %v778
      %v780 = vpop.f32.mrb[0].mxu0
      %v781 = vpop.f32.mrb[0].mxu0
      %v782 = vadd.f32 0.0, %v781
      %v783 = vpop.f32.mrb[0].mxu0
      %784 = vmatprep.mubr.bf16.mxu0 0
      %785 = vmatmul.mubr.bf16.gmra.mrb[0].mxu0 %v714
      %v786 = vpop.f32.mrb[0].mxu0
      %v787 = vadd.f32 0.0, %v786
      %v788 = vpop.f32.mrb[0].mxu0
      %v789 = vpop.f32.mrb[0].mxu0
      %v790 = vadd.f32 0.0, %v789
      %v791 = vpop.f32.mrb[0].mxu0
      %792 = vmatprep.mubr.bf16.mxu0 0
      %793 = vmatmul.mubr.bf16.gmra.mrb[0].mxu0 %v717
      %v794 = vpop.f32.mrb[0].mxu0
      %v795 = vadd.f32 0.0, %v794
      %v796 = vpop.f32.mrb[0].mxu0
      %v797 = vpop.f32.mrb[0].mxu0
      %v798 = vadd.f32 0.0, %v797
      %v799 = vpop.f32.mrb[0].mxu0
      %800 = vmatprep.mubr.bf16.mxu0 0
      %801 = vmatmul.mubr.bf16.gmra.mrb[0].mxu0 %v720
      %v802 = vpop.f32.mrb[0].mxu0
      %v803 = vadd.f32 0.0, %v802
      %v804 = vpop.f32.mrb[0].mxu0
      %v805 = vpop.f32.mrb[0].mxu0
      %v806 = vadd.f32 0.0, %v805
      %v807 = vpop.f32.mrb[0].mxu0
      %808 = vmatprep.mubr.bf16.mxu0 0
      %809 = vmatmul.mubr.bf16.gmra.mrb[0].mxu0 %v723
      %v810 = vpop.f32.mrb[0].mxu0
      %v811 = vadd.f32 0.0, %v810
      %v812 = vpop.f32.mrb[0].mxu0
      %v813 = vpop.f32.mrb[0].mxu0
      %v814 = vpop.f32.mrb[0].mxu0
      %815 = vdwg.mxu0
      %v816 = vadd.f32 %v669, %v763
      %v817 = vadd.f32 %v670, %v766
      %v818 = vadd.f32 %v671, %v771
      %v819 = vadd.f32 %v672, %v774
      %v820 = vadd.f32 %v673, %v779
      %v821 = vadd.f32 %v674, %v782
      %v822 = vadd.f32 %v675, %v787
      %v823 = vadd.f32 %v676, %v790
      %v824 = vadd.f32 %v677, %v795
      %v825 = vadd.f32 %v678, %v798
      %v826 = vadd.f32 %v679, %v803
      %v827 = vadd.f32 %v680, %v806
      %v828 = vadd.f32 %v681, %v811
      %v829 = vld [vmem:[%s246 + $0x20] sm:$0xff]
      %v830 = vld [vmem:[%s246 + $0x28] sm:$0xff]
      %v831 = vld [vmem:[%s246 + $0x30] sm:$0xff]
      %v832 = vld [vmem:[%s246 + $0x38] sm:$0xff]
      %v833 = vld [vmem:[%s246 + $0x40] sm:$0xff]
      %v834 = vld [vmem:[%s246 + $0x48] sm:$0xff]
      %v835 = vld [vmem:[%s246 + $0x50] sm:$0xff]
      %v836 = vld [vmem:[%s246 + $0x58] sm:$0xff]
      %v837 = vld [vmem:[%s246 + $0x60] sm:$0xff]
      %v838 = vld [vmem:[%s246 + $0x68] sm:$0xff]
      %v839 = vld [vmem:[%s246 + $0x70] sm:$0xff]
      %v840 = vld [vmem:[%s246 + $0x78] sm:$0xff]
      %v841 = vld [vmem:[%s246 + $0x80] sm:$0xf]
      %v842 = vpack.c.bf16 %v830, %v829
      %v843 = vpack.c.bf16 %v832, %v831
      %v844 = vpack.c.bf16 %v834, %v833
      %v845 = vpack.c.bf16 %v836, %v835
      %v846 = vpack.c.bf16 %v838, %v837
      %v847 = vpack.c.bf16 %v840, %v839
      %v848 = vpack.c.bf16 %v841, %v841
      %s849 = scalar_lea.vmem %s2, 16
      %v850 = vld [vmem:[%s849] sm:$0xf]
      %v852 = vsel %vm309, %v842, 0
      %v855 = vsel %vm309, %v843, 0
      %v858 = vsel %vm309, %v844, 0
      %v861 = vsel %vm309, %v845, 0
      %v864 = vsel %vm309, %v846, 0
      %v867 = vsel %vm309, %v847, 0
      %v870 = vsel %vm309, %v848, 0
      %v873 = vsel %vm331, %v850, 0
      %875 = vmatprep.subr.bf16.mxu0 0
      %876 = vmatpush1.bf16.msra.mxu0 %v873
      %877 = vmatprep.subr.bf16.mxu0 0
      %878 = vmatpush1.bf16.msra.mxu0 0
      %879 = vmatprep.subr.bf16.mxu0 0
      %880 = vmatpush1.bf16.msra.mxu0 0
      %881 = vmatprep.subr.bf16.mxu0 0
      %882 = vmatpush1.bf16.msra.mxu0 0
      %883 = vmatprep.subr.bf16.mxu0 0
      %884 = vmatpush1.bf16.msra.mxu0 0
      %885 = vmatprep.subr.bf16.mxu0 0
      %886 = vmatpush1.bf16.msra.mxu0 0
      %887 = vmatprep.subr.bf16.mxu0 0
      %888 = vmatpush1.bf16.msra.mxu0 0
      %889 = vmatprep.subr.bf16.mxu0 0
      %890 = vmatpush1.bf16.msra.mxu0 0
      %891 = vmatprep.subr.bf16.mxu0 0
      %892 = vmatpush1.bf16.msra.mxu0 0
      %893 = vmatprep.subr.bf16.mxu0 0
      %894 = vmatpush1.bf16.msra.mxu0 0
      %895 = vmatprep.subr.bf16.mxu0 0
      %896 = vmatpush1.bf16.msra.mxu0 0
      %897 = vmatprep.subr.bf16.mxu0 0
      %898 = vmatpush1.bf16.msra.mxu0 0
      %899 = vmatprep.subr.bf16.mxu0 0
      %900 = vmatpush1.bf16.msra.mxu0 0
      %901 = vmatprep.subr.bf16.mxu0 0
      %902 = vmatpush1.bf16.msra.mxu0 0
      %903 = vmatprep.subr.bf16.mxu0 0
      %904 = vmatpush1.bf16.msra.mxu0 0
      %905 = vmatprep.subr.bf16.mxu0 0
      %906 = vmatpush1.bf16.msra.mxu0 0
      %907 = vmatprep.mubr.bf16.mxu0 0
      %908 = vmatmul.mubr.bf16.gmra.mrb[0].mxu0 %v852
      %v909 = vpop.f32.mrb[0].mxu0
      %v910 = vadd.f32 0.0, %v909
      %v911 = vpop.f32.mrb[0].mxu0
      %v912 = vpop.f32.mrb[0].mxu0
      %v913 = vadd.f32 0.0, %v912
      %v914 = vpop.f32.mrb[0].mxu0
      %915 = vmatprep.mubr.bf16.mxu0 0
      %916 = vmatmul.mubr.bf16.gmra.mrb[0].mxu0 %v855
      %v917 = vpop.f32.mrb[0].mxu0
      %v918 = vadd.f32 0.0, %v917
      %v919 = vpop.f32.mrb[0].mxu0
      %v920 = vpop.f32.mrb[0].mxu0
      %v921 = vadd.f32 0.0, %v920
      %v922 = vpop.f32.mrb[0].mxu0
      %923 = vmatprep.mubr.bf16.mxu0 0
      %924 = vmatmul.mubr.bf16.gmra.mrb[0].mxu0 %v858
      %v925 = vpop.f32.mrb[0].mxu0
      %v926 = vadd.f32 0.0, %v925
      %v927 = vpop.f32.mrb[0].mxu0
      %v928 = vpop.f32.mrb[0].mxu0
      %v929 = vadd.f32 0.0, %v928
      %v930 = vpop.f32.mrb[0].mxu0
      %931 = vmatprep.mubr.bf16.mxu0 0
      %932 = vmatmul.mubr.bf16.gmra.mrb[0].mxu0 %v861
      %v933 = vpop.f32.mrb[0].mxu0
      %v934 = vadd.f32 0.0, %v933
      %v935 = vpop.f32.mrb[0].mxu0
      %v936 = vpop.f32.mrb[0].mxu0
      %v937 = vadd.f32 0.0, %v936
      %v938 = vpop.f32.mrb[0].mxu0
      %939 = vmatprep.mubr.bf16.mxu0 0
      %940 = vmatmul.mubr.bf16.gmra.mrb[0].mxu0 %v864
      %v941 = vpop.f32.mrb[0].mxu0
      %v942 = vadd.f32 0.0, %v941
      %v943 = vpop.f32.mrb[0].mxu0
      %v944 = vpop.f32.mrb[0].mxu0
      %v945 = vadd.f32 0.0, %v944
      %v946 = vpop.f32.mrb[0].mxu0
      %947 = vmatprep.mubr.bf16.mxu0 0
      %948 = vmatmul.mubr.bf16.gmra.mrb[0].mxu0 %v867
      %v949 = vpop.f32.mrb[0].mxu0
      %v950 = vadd.f32 0.0, %v949
      %v951 = vpop.f32.mrb[0].mxu0
      %v952 = vpop.f32.mrb[0].mxu0
      %v953 = vadd.f32 0.0, %v952
      %v954 = vpop.f32.mrb[0].mxu0
      %955 = vmatprep.mubr.bf16.mxu0 0
      %956 = vmatmul.mubr.bf16.gmra.mrb[0].mxu0 %v870
      %v957 = vpop.f32.mrb[0].mxu0
      %v958 = vadd.f32 0.0, %v957
      %v959 = vpop.f32.mrb[0].mxu0
      %v960 = vpop.f32.mrb[0].mxu0
      %v961 = vpop.f32.mrb[0].mxu0
      %962 = vdwg.mxu0
      %v963 = vadd.f32 %v816, %v910
      %v964 = vadd.f32 %v817, %v913
      %v965 = vadd.f32 %v818, %v918
      %v966 = vadd.f32 %v819, %v921
      %v967 = vadd.f32 %v820, %v926
      %v968 = vadd.f32 %v821, %v929
      %v969 = vadd.f32 %v822, %v934
      %v970 = vadd.f32 %v823, %v937
      %v971 = vadd.f32 %v824, %v942
      %v972 = vadd.f32 %v825, %v945
      %v973 = vadd.f32 %v826, %v950
      %v974 = vadd.f32 %v827, %v953
      %v975 = vadd.f32 %v828, %v958
      %v976 = vld [vmem:[%s246 + $0x21] sm:$0xff]
      %v977 = vld [vmem:[%s246 + $0x29] sm:$0xff]
      %v978 = vld [vmem:[%s246 + $0x31] sm:$0xff]
      %v979 = vld [vmem:[%s246 + $0x39] sm:$0xff]
      %v980 = vld [vmem:[%s246 + $0x41] sm:$0xff]
      %v981 = vld [vmem:[%s246 + $0x49] sm:$0xff]
      %v982 = vld [vmem:[%s246 + $0x51] sm:$0xff]
      %v983 = vld [vmem:[%s246 + $0x59] sm:$0xff]
      %v984 = vld [vmem:[%s246 + $0x61] sm:$0xff]
      %v985 = vld [vmem:[%s246 + $0x69] sm:$0xff]
      %v986 = vld [vmem:[%s246 + $0x71] sm:$0xff]
      %v987 = vld [vmem:[%s246 + $0x79] sm:$0xff]
      %v988 = vld [vmem:[%s246 + $0x81] sm:$0xf]
      %v989 = vpack.c.bf16 %v977, %v976
      %v990 = vpack.c.bf16 %v979, %v978
      %v991 = vpack.c.bf16 %v981, %v980
      %v992 = vpack.c.bf16 %v983, %v982
      %v993 = vpack.c.bf16 %v985, %v984
      %v994 = vpack.c.bf16 %v987, %v986
      %v995 = vpack.c.bf16 %v988, %v988
      %s996 = scalar_lea.vmem %s2, 20
      %v997 = vld [vmem:[%s996] sm:$0xf]
      %v999 = vsel %vm309, %v989, 0
      %v1002 = vsel %vm309, %v990, 0
      %v1005 = vsel %vm309, %v991, 0
      %v1008 = vsel %vm309, %v992, 0
      %v1011 = vsel %vm309, %v993, 0
      %v1014 = vsel %vm309, %v994, 0
      %v1017 = vsel %vm309, %v995, 0
      %v1020 = vsel %vm331, %v997, 0
      %1022 = vmatprep.subr.bf16.mxu0 0
      %1023 = vmatpush1.bf16.msra.mxu0 %v1020
      %1024 = vmatprep.subr.bf16.mxu0 0
      %1025 = vmatpush1.bf16.msra.mxu0 0
      %1026 = vmatprep.subr.bf16.mxu0 0
      %1027 = vmatpush1.bf16.msra.mxu0 0
      %1028 = vmatprep.subr.bf16.mxu0 0
      %1029 = vmatpush1.bf16.msra.mxu0 0
      %1030 = vmatprep.subr.bf16.mxu0 0
      %1031 = vmatpush1.bf16.msra.mxu0 0
      %1032 = vmatprep.subr.bf16.mxu0 0
      %1033 = vmatpush1.bf16.msra.mxu0 0
      %1034 = vmatprep.subr.bf16.mxu0 0
      %1035 = vmatpush1.bf16.msra.mxu0 0
      %1036 = vmatprep.subr.bf16.mxu0 0
      %1037 = vmatpush1.bf16.msra.mxu0 0
      %1038 = vmatprep.subr.bf16.mxu0 0
      %1039 = vmatpush1.bf16.msra.mxu0 0
      %1040 = vmatprep.subr.bf16.mxu0 0
      %1041 = vmatpush1.bf16.msra.mxu0 0
      %1042 = vmatprep.subr.bf16.mxu0 0
      %1043 = vmatpush1.bf16.msra.mxu0 0
      %1044 = vmatprep.subr.bf16.mxu0 0
      %1045 = vmatpush1.bf16.msra.mxu0 0
      %1046 = vmatprep.subr.bf16.mxu0 0
      %1047 = vmatpush1.bf16.msra.mxu0 0
      %1048 = vmatprep.subr.bf16.mxu0 0
      %1049 = vmatpush1.bf16.msra.mxu0 0
      %1050 = vmatprep.subr.bf16.mxu0 0
      %1051 = vmatpush1.bf16.msra.mxu0 0
      %1052 = vmatprep.subr.bf16.mxu0 0
      %1053 = vmatpush1.bf16.msra.mxu0 0
      %1054 = vmatprep.mubr.bf16.mxu0 0
      %1055 = vmatmul.mubr.bf16.gmra.mrb[0].mxu0 %v999
      %v1056 = vpop.f32.mrb[0].mxu0
      %v1057 = vadd.f32 0.0, %v1056
      %v1058 = vpop.f32.mrb[0].mxu0
      %v1059 = vpop.f32.mrb[0].mxu0
      %v1060 = vadd.f32 0.0, %v1059
      %v1061 = vpop.f32.mrb[0].mxu0
      %1062 = vmatprep.mubr.bf16.mxu0 0
      %1063 = vmatmul.mubr.bf16.gmra.mrb[0].mxu0 %v1002
      %v1064 = vpop.f32.mrb[0].mxu0
      %v1065 = vadd.f32 0.0, %v1064
      %v1066 = vpop.f32.mrb[0].mxu0
      %v1067 = vpop.f32.mrb[0].mxu0
      %v1068 = vadd.f32 0.0, %v1067
      %v1069 = vpop.f32.mrb[0].mxu0
      %1070 = vmatprep.mubr.bf16.mxu0 0
      %1071 = vmatmul.mubr.bf16.gmra.mrb[0].mxu0 %v1005
      %v1072 = vpop.f32.mrb[0].mxu0
      %v1073 = vadd.f32 0.0, %v1072
      %v1074 = vpop.f32.mrb[0].mxu0
      %v1075 = vpop.f32.mrb[0].mxu0
      %v1076 = vadd.f32 0.0, %v1075
      %v1077 = vpop.f32.mrb[0].mxu0
      %1078 = vmatprep.mubr.bf16.mxu0 0
      %1079 = vmatmul.mubr.bf16.gmra.mrb[0].mxu0 %v1008
      %v1080 = vpop.f32.mrb[0].mxu0
      %v1081 = vadd.f32 0.0, %v1080
      %v1082 = vpop.f32.mrb[0].mxu0
      %v1083 = vpop.f32.mrb[0].mxu0
      %v1084 = vadd.f32 0.0, %v1083
      %v1085 = vpop.f32.mrb[0].mxu0
      %1086 = vmatprep.mubr.bf16.mxu0 0
      %1087 = vmatmul.mubr.bf16.gmra.mrb[0].mxu0 %v1011
      %v1088 = vpop.f32.mrb[0].mxu0
      %v1089 = vadd.f32 0.0, %v1088
      %v1090 = vpop.f32.mrb[0].mxu0
      %v1091 = vpop.f32.mrb[0].mxu0
      %v1092 = vadd.f32 0.0, %v1091
      %v1093 = vpop.f32.mrb[0].mxu0
      %1094 = vmatprep.mubr.bf16.mxu0 0
      %1095 = vmatmul.mubr.bf16.gmra.mrb[0].mxu0 %v1014
      %v1096 = vpop.f32.mrb[0].mxu0
      %v1097 = vadd.f32 0.0, %v1096
      %v1098 = vpop.f32.mrb[0].mxu0
      %v1099 = vpop.f32.mrb[0].mxu0
      %v1100 = vadd.f32 0.0, %v1099
      %v1101 = vpop.f32.mrb[0].mxu0
      %1102 = vmatprep.mubr.bf16.mxu0 0
      %1103 = vmatmul.mubr.bf16.gmra.mrb[0].mxu0 %v1017
      %v1104 = vpop.f32.mrb[0].mxu0
      %v1105 = vadd.f32 0.0, %v1104
      %v1106 = vpop.f32.mrb[0].mxu0
      %v1107 = vpop.f32.mrb[0].mxu0
      %v1108 = vpop.f32.mrb[0].mxu0
      %1109 = vdwg.mxu0
      %v1110 = vadd.f32 %v963, %v1057
      %v1111 = vadd.f32 %v964, %v1060
      %v1112 = vadd.f32 %v965, %v1065
      %v1113 = vadd.f32 %v966, %v1068
      %v1114 = vadd.f32 %v967, %v1073
      %v1115 = vadd.f32 %v968, %v1076
      %v1116 = vadd.f32 %v969, %v1081
      %v1117 = vadd.f32 %v970, %v1084
      %v1118 = vadd.f32 %v971, %v1089
      %v1119 = vadd.f32 %v972, %v1092
      %v1120 = vadd.f32 %v973, %v1097
      %v1121 = vadd.f32 %v974, %v1100
      %v1122 = vadd.f32 %v975, %v1105
      %v1123 = vld [vmem:[%s246 + $0x29] sm:$0xff]
      %v1124 = vld [vmem:[%s246 + $0x31] sm:$0xff]
      %v1125 = vld [vmem:[%s246 + $0x39] sm:$0xff]
      %v1126 = vld [vmem:[%s246 + $0x41] sm:$0xff]
      %v1127 = vld [vmem:[%s246 + $0x49] sm:$0xff]
      %v1128 = vld [vmem:[%s246 + $0x51] sm:$0xff]
      %v1129 = vld [vmem:[%s246 + $0x59] sm:$0xff]
      %v1130 = vld [vmem:[%s246 + $0x61] sm:$0xff]
      %v1131 = vld [vmem:[%s246 + $0x69] sm:$0xff]
      %v1132 = vld [vmem:[%s246 + $0x71] sm:$0xff]
      %v1133 = vld [vmem:[%s246 + $0x79] sm:$0xff]
      %v1134 = vld [vmem:[%s246 + $0x81] sm:$0xff]
      %v1135 = vld [vmem:[%s246 + $0x89] sm:$0xf]
      %v1136 = vpack.c.bf16 %v1124, %v1123
      %v1137 = vpack.c.bf16 %v1126, %v1125
      %v1138 = vpack.c.bf16 %v1128, %v1127
      %v1139 = vpack.c.bf16 %v1130, %v1129
      %v1140 = vpack.c.bf16 %v1132, %v1131
      %v1141 = vpack.c.bf16 %v1134, %v1133
      %v1142 = vpack.c.bf16 %v1135, %v1135
      %s1143 = scalar_lea.vmem %s2, 24
      %v1144 = vld [vmem:[%s1143] sm:$0xf]
      %v1146 = vsel %vm309, %v1136, 0
      %v1149 = vsel %vm309, %v1137, 0
      %v1152 = vsel %vm309, %v1138, 0
      %v1155 = vsel %vm309, %v1139, 0
      %v1158 = vsel %vm309, %v1140, 0
      %v1161 = vsel %vm309, %v1141, 0
      %v1164 = vsel %vm309, %v1142, 0
      %v1167 = vsel %vm331, %v1144, 0
      %1169 = vmatprep.subr.bf16.mxu0 0
      %1170 = vmatpush1.bf16.msra.mxu0 %v1167
      %1171 = vmatprep.subr.bf16.mxu0 0
      %1172 = vmatpush1.bf16.msra.mxu0 0
      %1173 = vmatprep.subr.bf16.mxu0 0
      %1174 = vmatpush1.bf16.msra.mxu0 0
      %1175 = vmatprep.subr.bf16.mxu0 0
      %1176 = vmatpush1.bf16.msra.mxu0 0
      %1177 = vmatprep.subr.bf16.mxu0 0
      %1178 = vmatpush1.bf16.msra.mxu0 0
      %1179 = vmatprep.subr.bf16.mxu0 0
      %1180 = vmatpush1.bf16.msra.mxu0 0
      %1181 = vmatprep.subr.bf16.mxu0 0
      %1182 = vmatpush1.bf16.msra.mxu0 0
      %1183 = vmatprep.subr.bf16.mxu0 0
      %1184 = vmatpush1.bf16.msra.mxu0 0
      %1185 = vmatprep.subr.bf16.mxu0 0
      %1186 = vmatpush1.bf16.msra.mxu0 0
      %1187 = vmatprep.subr.bf16.mxu0 0
      %1188 = vmatpush1.bf16.msra.mxu0 0
      %1189 = vmatprep.subr.bf16.mxu0 0
      %1190 = vmatpush1.bf16.msra.mxu0 0
      %1191 = vmatprep.subr.bf16.mxu0 0
      %1192 = vmatpush1.bf16.msra.mxu0 0
      %1193 = vmatprep.subr.bf16.mxu0 0
      %1194 = vmatpush1.bf16.msra.mxu0 0
      %1195 = vmatprep.subr.bf16.mxu0 0
      %1196 = vmatpush1.bf16.msra.mxu0 0
      %1197 = vmatprep.subr.bf16.mxu0 0
      %1198 = vmatpush1.bf16.msra.mxu0 0
      %1199 = vmatprep.subr.bf16.mxu0 0
      %1200 = vmatpush1.bf16.msra.mxu0 0
      %1201 = vmatprep.mubr.bf16.mxu0 0
      %1202 = vmatmul.mubr.bf16.gmra.mrb[0].mxu0 %v1146
      %v1203 = vpop.f32.mrb[0].mxu0
      %v1204 = vadd.f32 0.0, %v1203
      %v1205 = vpop.f32.mrb[0].mxu0
      %v1206 = vpop.f32.mrb[0].mxu0
      %v1207 = vadd.f32 0.0, %v1206
      %v1208 = vpop.f32.mrb[0].mxu0
      %1209 = vmatprep.mubr.bf16.mxu0 0
      %1210 = vmatmul.mubr.bf16.gmra.mrb[0].mxu0 %v1149
      %v1211 = vpop.f32.mrb[0].mxu0
      %v1212 = vadd.f32 0.0, %v1211
      %v1213 = vpop.f32.mrb[0].mxu0
      %v1214 = vpop.f32.mrb[0].mxu0
      %v1215 = vadd.f32 0.0, %v1214
      %v1216 = vpop.f32.mrb[0].mxu0
      %1217 = vmatprep.mubr.bf16.mxu0 0
      %1218 = vmatmul.mubr.bf16.gmra.mrb[0].mxu0 %v1152
      %v1219 = vpop.f32.mrb[0].mxu0
      %v1220 = vadd.f32 0.0, %v1219
      %v1221 = vpop.f32.mrb[0].mxu0
      %v1222 = vpop.f32.mrb[0].mxu0
      %v1223 = vadd.f32 0.0, %v1222
      %v1224 = vpop.f32.mrb[0].mxu0
      %1225 = vmatprep.mubr.bf16.mxu0 0
      %1226 = vmatmul.mubr.bf16.gmra.mrb[0].mxu0 %v1155
      %v1227 = vpop.f32.mrb[0].mxu0
      %v1228 = vadd.f32 0.0, %v1227
      %v1229 = vpop.f32.mrb[0].mxu0
      %v1230 = vpop.f32.mrb[0].mxu0
      %v1231 = vadd.f32 0.0, %v1230
      %v1232 = vpop.f32.mrb[0].mxu0
      %1233 = vmatprep.mubr.bf16.mxu0 0
      %1234 = vmatmul.mubr.bf16.gmra.mrb[0].mxu0 %v1158
      %v1235 = vpop.f32.mrb[0].mxu0
      %v1236 = vadd.f32 0.0, %v1235
      %v1237 = vpop.f32.mrb[0].mxu0
      %v1238 = vpop.f32.mrb[0].mxu0
      %v1239 = vadd.f32 0.0, %v1238
      %v1240 = vpop.f32.mrb[0].mxu0
      %1241 = vmatprep.mubr.bf16.mxu0 0
      %1242 = vmatmul.mubr.bf16.gmra.mrb[0].mxu0 %v1161
      %v1243 = vpop.f32.mrb[0].mxu0
      %v1244 = vadd.f32 0.0, %v1243
      %v1245 = vpop.f32.mrb[0].mxu0
      %v1246 = vpop.f32.mrb[0].mxu0
      %v1247 = vadd.f32 0.0, %v1246
      %v1248 = vpop.f32.mrb[0].mxu0
      %1249 = vmatprep.mubr.bf16.mxu0 0
      %1250 = vmatmul.mubr.bf16.gmra.mrb[0].mxu0 %v1164
      %v1251 = vpop.f32.mrb[0].mxu0
      %v1252 = vadd.f32 0.0, %v1251
      %v1253 = vpop.f32.mrb[0].mxu0
      %v1254 = vpop.f32.mrb[0].mxu0
      %v1255 = vpop.f32.mrb[0].mxu0
      %1256 = vdwg.mxu0
      %v1257 = vadd.f32 %v1110, %v1204
      %v1258 = vadd.f32 %v1111, %v1207
      %v1259 = vadd.f32 %v1112, %v1212
      %v1260 = vadd.f32 %v1113, %v1215
      %v1261 = vadd.f32 %v1114, %v1220
      %v1262 = vadd.f32 %v1115, %v1223
      %v1263 = vadd.f32 %v1116, %v1228
      %v1264 = vadd.f32 %v1117, %v1231
      %v1265 = vadd.f32 %v1118, %v1236
      %v1266 = vadd.f32 %v1119, %v1239
      %v1267 = vadd.f32 %v1120, %v1244
      %v1268 = vadd.f32 %v1121, %v1247
      %v1269 = vadd.f32 %v1122, %v1252
      %v1270 = vld [vmem:[%s246 + $0x2a] sm:$0xff]
      %v1271 = vld [vmem:[%s246 + $0x32] sm:$0xff]
      %v1272 = vld [vmem:[%s246 + $0x3a] sm:$0xff]
      %v1273 = vld [vmem:[%s246 + $0x42] sm:$0xff]
      %v1274 = vld [vmem:[%s246 + $0x4a] sm:$0xff]
      %v1275 = vld [vmem:[%s246 + $0x52] sm:$0xff]
      %v1276 = vld [vmem:[%s246 + $0x5a] sm:$0xff]
      %v1277 = vld [vmem:[%s246 + $0x62] sm:$0xff]
      %v1278 = vld [vmem:[%s246 + $0x6a] sm:$0xff]
      %v1279 = vld [vmem:[%s246 + $0x72] sm:$0xff]
      %v1280 = vld [vmem:[%s246 + $0x7a] sm:$0xff]
      %v1281 = vld [vmem:[%s246 + $0x82] sm:$0xff]
      %v1282 = vld [vmem:[%s246 + $0x8a] sm:$0xf]
      %v1283 = vpack.c.bf16 %v1271, %v1270
      %v1284 = vpack.c.bf16 %v1273, %v1272
      %v1285 = vpack.c.bf16 %v1275, %v1274
      %v1286 = vpack.c.bf16 %v1277, %v1276
      %v1287 = vpack.c.bf16 %v1279, %v1278
      %v1288 = vpack.c.bf16 %v1281, %v1280
      %v1289 = vpack.c.bf16 %v1282, %v1282
      %s1290 = scalar_lea.vmem %s2, 28
      %v1291 = vld [vmem:[%s1290] sm:$0xf]
      %v1293 = vsel %vm309, %v1283, 0
      %v1296 = vsel %vm309, %v1284, 0
      %v1299 = vsel %vm309, %v1285, 0
      %v1302 = vsel %vm309, %v1286, 0
      %v1305 = vsel %vm309, %v1287, 0
      %v1308 = vsel %vm309, %v1288, 0
      %v1311 = vsel %vm309, %v1289, 0
      %v1314 = vsel %vm331, %v1291, 0
      %1316 = vmatprep.subr.bf16.mxu0 0
      %1317 = vmatpush1.bf16.msra.mxu0 %v1314
      %1318 = vmatprep.subr.bf16.mxu0 0
      %1319 = vmatpush1.bf16.msra.mxu0 0
      %1320 = vmatprep.subr.bf16.mxu0 0
      %1321 = vmatpush1.bf16.msra.mxu0 0
      %1322 = vmatprep.subr.bf16.mxu0 0
      %1323 = vmatpush1.bf16.msra.mxu0 0
      %1324 = vmatprep.subr.bf16.mxu0 0
      %1325 = vmatpush1.bf16.msra.mxu0 0
      %1326 = vmatprep.subr.bf16.mxu0 0
      %1327 = vmatpush1.bf16.msra.mxu0 0
      %1328 = vmatprep.subr.bf16.mxu0 0
      %1329 = vmatpush1.bf16.msra.mxu0 0
      %1330 = vmatprep.subr.bf16.mxu0 0
      %1331 = vmatpush1.bf16.msra.mxu0 0
      %1332 = vmatprep.subr.bf16.mxu0 0
      %1333 = vmatpush1.bf16.msra.mxu0 0
      %1334 = vmatprep.subr.bf16.mxu0 0
      %1335 = vmatpush1.bf16.msra.mxu0 0
      %1336 = vmatprep.subr.bf16.mxu0 0
      %1337 = vmatpush1.bf16.msra.mxu0 0
      %1338 = vmatprep.subr.bf16.mxu0 0
      %1339 = vmatpush1.bf16.msra.mxu0 0
      %1340 = vmatprep.subr.bf16.mxu0 0
      %1341 = vmatpush1.bf16.msra.mxu0 0
      %1342 = vmatprep.subr.bf16.mxu0 0
      %1343 = vmatpush1.bf16.msra.mxu0 0
      %1344 = vmatprep.subr.bf16.mxu0 0
      %1345 = vmatpush1.bf16.msra.mxu0 0
      %1346 = vmatprep.subr.bf16.mxu0 0
      %1347 = vmatpush1.bf16.msra.mxu0 0
      %1348 = vmatprep.mubr.bf16.mxu0 0
      %1349 = vmatmul.mubr.bf16.gmra.mrb[0].mxu0 %v1293
      %v1350 = vpop.f32.mrb[0].mxu0
      %v1351 = vadd.f32 0.0, %v1350
      %v1352 = vpop.f32.mrb[0].mxu0
      %v1353 = vpop.f32.mrb[0].mxu0
      %v1354 = vadd.f32 0.0, %v1353
      %v1355 = vpop.f32.mrb[0].mxu0
      %1356 = vmatprep.mubr.bf16.mxu0 0
      %1357 = vmatmul.mubr.bf16.gmra.mrb[0].mxu0 %v1296
      %v1358 = vpop.f32.mrb[0].mxu0
      %v1359 = vadd.f32 0.0, %v1358
      %v1360 = vpop.f32.mrb[0].mxu0
      %v1361 = vpop.f32.mrb[0].mxu0
      %v1362 = vadd.f32 0.0, %v1361
      %v1363 = vpop.f32.mrb[0].mxu0
      %1364 = vmatprep.mubr.bf16.mxu0 0
      %1365 = vmatmul.mubr.bf16.gmra.mrb[0].mxu0 %v1299
      %v1366 = vpop.f32.mrb[0].mxu0
      %v1367 = vadd.f32 0.0, %v1366
      %v1368 = vpop.f32.mrb[0].mxu0
      %v1369 = vpop.f32.mrb[0].mxu0
      %v1370 = vadd.f32 0.0, %v1369
      %v1371 = vpop.f32.mrb[0].mxu0
      %1372 = vmatprep.mubr.bf16.mxu0 0
      %1373 = vmatmul.mubr.bf16.gmra.mrb[0].mxu0 %v1302
      %v1374 = vpop.f32.mrb[0].mxu0
      %v1375 = vadd.f32 0.0, %v1374
      %v1376 = vpop.f32.mrb[0].mxu0
      %v1377 = vpop.f32.mrb[0].mxu0
      %v1378 = vadd.f32 0.0, %v1377
      %v1379 = vpop.f32.mrb[0].mxu0
      %1380 = vmatprep.mubr.bf16.mxu0 0
      %1381 = vmatmul.mubr.bf16.gmra.mrb[0].mxu0 %v1305
      %v1382 = vpop.f32.mrb[0].mxu0
      %v1383 = vadd.f32 0.0, %v1382
      %v1384 = vpop.f32.mrb[0].mxu0
      %v1385 = vpop.f32.mrb[0].mxu0
      %v1386 = vadd.f32 0.0, %v1385
      %v1387 = vpop.f32.mrb[0].mxu0
      %1388 = vmatprep.mubr.bf16.mxu0 0
      %1389 = vmatmul.mubr.bf16.gmra.mrb[0].mxu0 %v1308
      %v1390 = vpop.f32.mrb[0].mxu0
      %v1391 = vadd.f32 0.0, %v1390
      %v1392 = vpop.f32.mrb[0].mxu0
      %v1393 = vpop.f32.mrb[0].mxu0
      %v1394 = vadd.f32 0.0, %v1393
      %v1395 = vpop.f32.mrb[0].mxu0
      %1396 = vmatprep.mubr.bf16.mxu0 0
      %1397 = vmatmul.mubr.bf16.gmra.mrb[0].mxu0 %v1311
      %v1398 = vpop.f32.mrb[0].mxu0
      %v1399 = vadd.f32 0.0, %v1398
      %v1400 = vpop.f32.mrb[0].mxu0
      %v1401 = vpop.f32.mrb[0].mxu0
      %v1402 = vpop.f32.mrb[0].mxu0
      %1403 = vdwg.mxu0
      %v1404 = vadd.f32 %v1257, %v1351
      %v1405 = vadd.f32 %v1258, %v1354
      %v1406 = vadd.f32 %v1259, %v1359
      %v1407 = vadd.f32 %v1260, %v1362
      %v1408 = vadd.f32 %v1261, %v1367
      %v1409 = vadd.f32 %v1262, %v1370
      %v1410 = vadd.f32 %v1263, %v1375
      %v1411 = vadd.f32 %v1264, %v1378
      %v1412 = vadd.f32 %v1265, %v1383
      %v1413 = vadd.f32 %v1266, %v1386
      %v1414 = vadd.f32 %v1267, %v1391
      %v1415 = vadd.f32 %v1268, %v1394
      %v1416 = vadd.f32 %v1269, %v1399
      %v1417 = vld [vmem:[%s246 + $0x2b] sm:$0xff]
      %v1418 = vld [vmem:[%s246 + $0x33] sm:$0xff]
      %v1419 = vld [vmem:[%s246 + $0x3b] sm:$0xff]
      %v1420 = vld [vmem:[%s246 + $0x43] sm:$0xff]
      %v1421 = vld [vmem:[%s246 + $0x4b] sm:$0xff]
      %v1422 = vld [vmem:[%s246 + $0x53] sm:$0xff]
      %v1423 = vld [vmem:[%s246 + $0x5b] sm:$0xff]
      %v1424 = vld [vmem:[%s246 + $0x63] sm:$0xff]
      %v1425 = vld [vmem:[%s246 + $0x6b] sm:$0xff]
      %v1426 = vld [vmem:[%s246 + $0x73] sm:$0xff]
      %v1427 = vld [vmem:[%s246 + $0x7b] sm:$0xff]
      %v1428 = vld [vmem:[%s246 + $0x83] sm:$0xff]
      %v1429 = vld [vmem:[%s246 + $0x8b] sm:$0xf]
      %v1430 = vpack.c.bf16 %v1418, %v1417
      %v1431 = vpack.c.bf16 %v1420, %v1419
      %v1432 = vpack.c.bf16 %v1422, %v1421
      %v1433 = vpack.c.bf16 %v1424, %v1423
      %v1434 = vpack.c.bf16 %v1426, %v1425
      %v1435 = vpack.c.bf16 %v1428, %v1427
      %v1436 = vpack.c.bf16 %v1429, %v1429
      %s1437 = scalar_lea.vmem %s2, 32
      %v1438 = vld [vmem:[%s1437] sm:$0xf]
      %v1440 = vsel %vm309, %v1430, 0
      %v1443 = vsel %vm309, %v1431, 0
      %v1446 = vsel %vm309, %v1432, 0
      %v1449 = vsel %vm309, %v1433, 0
      %v1452 = vsel %vm309, %v1434, 0
      %v1455 = vsel %vm309, %v1435, 0
      %v1458 = vsel %vm309, %v1436, 0
      %v1461 = vsel %vm331, %v1438, 0
      %1463 = vmatprep.subr.bf16.mxu0 0
      %1464 = vmatpush1.bf16.msra.mxu0 %v1461
      %1465 = vmatprep.subr.bf16.mxu0 0
      %1466 = vmatpush1.bf16.msra.mxu0 0
      %1467 = vmatprep.subr.bf16.mxu0 0
      %1468 = vmatpush1.bf16.msra.mxu0 0
      %1469 = vmatprep.subr.bf16.mxu0 0
      %1470 = vmatpush1.bf16.msra.mxu0 0
      %1471 = vmatprep.subr.bf16.mxu0 0
      %1472 = vmatpush1.bf16.msra.mxu0 0
      %1473 = vmatprep.subr.bf16.mxu0 0
      %1474 = vmatpush1.bf16.msra.mxu0 0
      %1475 = vmatprep.subr.bf16.mxu0 0
      %1476 = vmatpush1.bf16.msra.mxu0 0
      %1477 = vmatprep.subr.bf16.mxu0 0
      %1478 = vmatpush1.bf16.msra.mxu0 0
      %1479 = vmatprep.subr.bf16.mxu0 0
      %1480 = vmatpush1.bf16.msra.mxu0 0
      %1481 = vmatprep.subr.bf16.mxu0 0
      %1482 = vmatpush1.bf16.msra.mxu0 0
      %1483 = vmatprep.subr.bf16.mxu0 0
      %1484 = vmatpush1.bf16.msra.mxu0 0
      %1485 = vmatprep.subr.bf16.mxu0 0
      %1486 = vmatpush1.bf16.msra.mxu0 0
      %1487 = vmatprep.subr.bf16.mxu0 0
      %1488 = vmatpush1.bf16.msra.mxu0 0
      %1489 = vmatprep.subr.bf16.mxu0 0
      %1490 = vmatpush1.bf16.msra.mxu0 0
      %1491 = vmatprep.subr.bf16.mxu0 0
      %1492 = vmatpush1.bf16.msra.mxu0 0
      %1493 = vmatprep.subr.bf16.mxu0 0
      %1494 = vmatpush1.bf16.msra.mxu0 0
      %1495 = vmatprep.mubr.bf16.mxu0 0
      %1496 = vmatmul.mubr.bf16.gmra.mrb[0].mxu0 %v1440
      %v1497 = vpop.f32.mrb[0].mxu0
      %v1498 = vadd.f32 0.0, %v1497
      %v1499 = vpop.f32.mrb[0].mxu0
      %v1500 = vpop.f32.mrb[0].mxu0
      %v1501 = vadd.f32 0.0, %v1500
      %v1502 = vpop.f32.mrb[0].mxu0
      %1503 = vmatprep.mubr.bf16.mxu0 0
      %1504 = vmatmul.mubr.bf16.gmra.mrb[0].mxu0 %v1443
      %v1505 = vpop.f32.mrb[0].mxu0
      %v1506 = vadd.f32 0.0, %v1505
      %v1507 = vpop.f32.mrb[0].mxu0
      %v1508 = vpop.f32.mrb[0].mxu0
      %v1509 = vadd.f32 0.0, %v1508
      %v1510 = vpop.f32.mrb[0].mxu0
      %1511 = vmatprep.mubr.bf16.mxu0 0
      %1512 = vmatmul.mubr.bf16.gmra.mrb[0].mxu0 %v1446
      %v1513 = vpop.f32.mrb[0].mxu0
      %v1514 = vadd.f32 0.0, %v1513
      %v1515 = vpop.f32.mrb[0].mxu0
      %v1516 = vpop.f32.mrb[0].mxu0
      %v1517 = vadd.f32 0.0, %v1516
      %v1518 = vpop.f32.mrb[0].mxu0
      %1519 = vmatprep.mubr.bf16.mxu0 0
      %1520 = vmatmul.mubr.bf16.gmra.mrb[0].mxu0 %v1449
      %v1521 = vpop.f32.mrb[0].mxu0
      %v1522 = vadd.f32 0.0, %v1521
      %v1523 = vpop.f32.mrb[0].mxu0
      %v1524 = vpop.f32.mrb[0].mxu0
      %v1525 = vadd.f32 0.0, %v1524
      %v1526 = vpop.f32.mrb[0].mxu0
      %1527 = vmatprep.mubr.bf16.mxu0 0
      %1528 = vmatmul.mubr.bf16.gmra.mrb[0].mxu0 %v1452
      %v1529 = vpop.f32.mrb[0].mxu0
      %v1530 = vadd.f32 0.0, %v1529
      %v1531 = vpop.f32.mrb[0].mxu0
      %v1532 = vpop.f32.mrb[0].mxu0
      %v1533 = vadd.f32 0.0, %v1532
      %v1534 = vpop.f32.mrb[0].mxu0
      %1535 = vmatprep.mubr.bf16.mxu0 0
      %1536 = vmatmul.mubr.bf16.gmra.mrb[0].mxu0 %v1455
      %v1537 = vpop.f32.mrb[0].mxu0
      %v1538 = vadd.f32 0.0, %v1537
      %v1539 = vpop.f32.mrb[0].mxu0
      %v1540 = vpop.f32.mrb[0].mxu0
      %v1541 = vadd.f32 0.0, %v1540
      %v1542 = vpop.f32.mrb[0].mxu0
      %1543 = vmatprep.mubr.bf16.mxu0 0
      %1544 = vmatmul.mubr.bf16.gmra.mrb[0].mxu0 %v1458
      %v1545 = vpop.f32.mrb[0].mxu0
      %v1546 = vadd.f32 0.0, %v1545
      %v1547 = vpop.f32.mrb[0].mxu0
      %v1548 = vpop.f32.mrb[0].mxu0
      %v1549 = vpop.f32.mrb[0].mxu0
      %1550 = vdwg.mxu0
      %v1551 = vadd.f32 %v1404, %v1498
      %v1552 = vadd.f32 %v1405, %v1501
      %v1553 = vadd.f32 %v1406, %v1506
      %v1554 = vadd.f32 %v1407, %v1509
      %v1555 = vadd.f32 %v1408, %v1514
      %v1556 = vadd.f32 %v1409, %v1517
      %v1557 = vadd.f32 %v1410, %v1522
      %v1558 = vadd.f32 %v1411, %v1525
      %v1559 = vadd.f32 %v1412, %v1530
      %v1560 = vadd.f32 %v1413, %v1533
      %v1561 = vadd.f32 %v1414, %v1538
      %v1562 = vadd.f32 %v1415, %v1541
      %v1563 = vadd.f32 %v1416, %v1546
      %v1564 = vld [vmem:[%s3] sm:$0x1]
      %v1566 = vlaneseq
      %v1567 = vshrl.u32 %v1566, 7
      %v1568 = vsub.s32 0, %v1567
      %v1569 = vrot.slane %v1564, %v1568
      %v1571 = vadd.f32 %v1551, %v1569
      %v1572 = vadd.f32 %v1552, %v1569
      %v1573 = vadd.f32 %v1553, %v1569
      %v1574 = vadd.f32 %v1554, %v1569
      %v1575 = vadd.f32 %v1555, %v1569
      %v1576 = vadd.f32 %v1556, %v1569
      %v1577 = vadd.f32 %v1557, %v1569
      %v1578 = vadd.f32 %v1558, %v1569
      %v1579 = vadd.f32 %v1559, %v1569
      %v1580 = vadd.f32 %v1560, %v1569
      %v1581 = vadd.f32 %v1561, %v1569
      %v1582 = vadd.f32 %v1562, %v1569
      %v1583 = vadd.f32 %v1563, %v1569
      %v1584 = vmax.f32 %v1571, 0.0
      %v1585 = vmax.f32 %v1572, 0.0
      %v1586 = vmax.f32 %v1573, 0.0
      %v1587 = vmax.f32 %v1574, 0.0
      %v1588 = vmax.f32 %v1575, 0.0
      %v1589 = vmax.f32 %v1576, 0.0
      %v1590 = vmax.f32 %v1577, 0.0
      %v1591 = vmax.f32 %v1578, 0.0
      %v1592 = vmax.f32 %v1579, 0.0
      %v1593 = vmax.f32 %v1580, 0.0
      %v1594 = vmax.f32 %v1581, 0.0
      %v1595 = vmax.f32 %v1582, 0.0
      %v1596 = vmax.f32 %v1583, 0.0
      %1597 = vst.msk [vmem:[#allocation2] sm:$0xff] %vm309, 0.0
      %1598 = vst.msk [vmem:[#allocation2 + $0x8] sm:$0xff] %vm309, 0.0
      %1599 = vst.msk [vmem:[#allocation2 + $0x10] sm:$0xff] %vm309, 0.0
      %1600 = vst.msk [vmem:[#allocation2 + $0x18] sm:$0xff] %vm309, 0.0
      %1601 = vst.msk [vmem:[#allocation2 + $0x20] sm:$0xff] %vm309, 0.0
      %1602 = vst.msk [vmem:[#allocation2 + $0x28] sm:$0xff] %vm309, 0.0
      %1603 = vst.msk [vmem:[#allocation2 + $0x30] sm:$0xff] %vm309, 0.0
      %1604 = vst.msk [vmem:[#allocation2 + $0x38] sm:$0xff] %vm309, 0.0
      %1605 = vst.msk [vmem:[#allocation2 + $0x40] sm:$0xff] %vm309, 0.0
      %1606 = vst.msk [vmem:[#allocation2 + $0x48] sm:$0xff] %vm309, 0.0
      %1607 = vst.msk [vmem:[#allocation2 + $0x50] sm:$0xff] %vm309, 0.0
      %1608 = vst.msk [vmem:[#allocation2 + $0x58] sm:$0xff] %vm309, 0.0
      %1609 = vst.msk [vmem:[#allocation2 + $0x60] sm:$0xff] %vm309, 0.0
      %1610 = vst.msk [vmem:[#allocation2 + $0x68] sm:$0xff] %vm309, 0.0
      %1611 = vst.msk [vmem:[#allocation2 + $0x70] sm:$0xff] %vm309, 0.0
      %1612 = vst.msk [vmem:[#allocation2 + $0x78] sm:$0xff] %vm309, 0.0
      %1613 = vst.msk [vmem:[#allocation2 + $0x80] sm:$0xff] %vm309, 0.0
      %1614 = vst.msk [vmem:[#allocation2 + $0x88] sm:$0xff] %vm309, 0.0
      %1615 = vst.msk [vmem:[#allocation2 + $0x90] sm:$0xff] %vm309, 0.0
      %1616 = vst.msk [vmem:[#allocation2 + $0x98] sm:$0xff] %vm309, 0.0
      %vm1617 = vcmask 60416
      %1618 = vst.msk [vmem:[#allocation2 + $0xa0] sm:$0xf] %vm1617, 0.0
      %1620 = vset.pattern.permute.xlu0 0
      %1621 = vperm.xlu0 %1620, %v253
      %v1622 = vpop.permute.xlu0 %1621
      %1625 = vset.pattern.permute.xlu0 0
      %1626 = vperm.xlu0 %1625, %v254
      %v1627 = vpop.permute.xlu0 %1626
      %1630 = vset.pattern.permute.xlu0 0
      %1631 = vperm.xlu0 %1630, %v255
      %v1632 = vpop.permute.xlu0 %1631
      %1635 = vset.pattern.permute.xlu0 0
      %1636 = vperm.xlu0 %1635, %v256
      %v1637 = vpop.permute.xlu0 %1636
      %1640 = vset.pattern.permute.xlu0 0
      %1641 = vperm.xlu0 %1640, %v257
      %v1642 = vpop.permute.xlu0 %1641
      %1645 = vset.pattern.permute.xlu0 0
      %1646 = vperm.xlu0 %1645, %v258
      %v1647 = vpop.permute.xlu0 %1646
      %1650 = vset.pattern.permute.xlu0 0
      %1651 = vperm.xlu0 %1650, %v259
      %v1652 = vpop.permute.xlu0 %1651
      %1655 = vset.pattern.permute.xlu0 0
      %1656 = vperm.xlu0 %1655, %v260
      %v1657 = vpop.permute.xlu0 %1656
      %1660 = vset.pattern.permute.xlu0 0
      %1661 = vperm.xlu0 %1660, %v261
      %v1662 = vpop.permute.xlu0 %1661
      %1665 = vset.pattern.permute.xlu0 0
      %1666 = vperm.xlu0 %1665, %v262
      %v1667 = vpop.permute.xlu0 %1666
      %1670 = vset.pattern.permute.xlu0 0
      %1671 = vperm.xlu0 %1670, %v263
      %v1672 = vpop.permute.xlu0 %1671
      %1675 = vset.pattern.permute.xlu0 0
      %1676 = vperm.xlu0 %1675, %v264
      %v1677 = vpop.permute.xlu0 %1676
      %1680 = vset.pattern.permute.xlu0 0
      %1681 = vperm.xlu0 %1680, %v265
      %v1682 = vpop.permute.xlu0 %1681
      %v1684 = vmul.f32 %v1584, %v1622
      %v1685 = vmul.f32 %v1585, %v1627
      %v1686 = vmul.f32 %v1586, %v1632
      %v1687 = vmul.f32 %v1587, %v1637
      %v1688 = vmul.f32 %v1588, %v1642
      %v1689 = vmul.f32 %v1589, %v1647
      %v1690 = vmul.f32 %v1590, %v1652
      %v1691 = vmul.f32 %v1591, %v1657
      %v1692 = vmul.f32 %v1592, %v1662
      %v1693 = vmul.f32 %v1593, %v1667
      %v1694 = vmul.f32 %v1594, %v1672
      %v1695 = vmul.f32 %v1595, %v1677
      %v1696 = vmul.f32 %v1596, %v1682
      %1697 = vst.msk [vmem:[#allocation2 + $0x20] sm:$0xff] %vm309, %v1684
      %1698 = vst.msk [vmem:[#allocation2 + $0x28] sm:$0xff] %vm309, %v1685
      %1699 = vst.msk [vmem:[#allocation2 + $0x30] sm:$0xff] %vm309, %v1686
      %1700 = vst.msk [vmem:[#allocation2 + $0x38] sm:$0xff] %vm309, %v1687
      %1701 = vst.msk [vmem:[#allocation2 + $0x40] sm:$0xff] %vm309, %v1688
      %1702 = vst.msk [vmem:[#allocation2 + $0x48] sm:$0xff] %vm309, %v1689
      %1703 = vst.msk [vmem:[#allocation2 + $0x50] sm:$0xff] %vm309, %v1690
      %1704 = vst.msk [vmem:[#allocation2 + $0x58] sm:$0xff] %vm309, %v1691
      %1705 = vst.msk [vmem:[#allocation2 + $0x60] sm:$0xff] %vm309, %v1692
      %1706 = vst.msk [vmem:[#allocation2 + $0x68] sm:$0xff] %vm309, %v1693
      %1707 = vst.msk [vmem:[#allocation2 + $0x70] sm:$0xff] %vm309, %v1694
      %1708 = vst.msk [vmem:[#allocation2 + $0x78] sm:$0xff] %vm309, %v1695
      %1709 = vst.msk [vmem:[#allocation2 + $0x80] sm:$0xf] %vm1617, %v1696
      %v1710 = vld [vmem:[#allocation2 + $0x15] sm:$0xff]
      %v1711 = vld [vmem:[#allocation2 + $0x1d] sm:$0xff]
      %v1712 = vld [vmem:[#allocation2 + $0x25] sm:$0xff]
      %v1713 = vld [vmem:[#allocation2 + $0x2d] sm:$0xff]
      %v1714 = vld [vmem:[#allocation2 + $0x35] sm:$0xff]
      %v1715 = vld [vmem:[#allocation2 + $0x3d] sm:$0xff]
      %v1716 = vld [vmem:[#allocation2 + $0x45] sm:$0xff]
      %v1717 = vld [vmem:[#allocation2 + $0x4d] sm:$0xff]
      %v1718 = vld [vmem:[#allocation2 + $0x55] sm:$0xff]
      %v1719 = vld [vmem:[#allocation2 + $0x5d] sm:$0xff]
      %v1720 = vld [vmem:[#allocation2 + $0x65] sm:$0xff]
      %v1721 = vld [vmem:[#allocation2 + $0x6d] sm:$0xff]
      %v1722 = vld [vmem:[#allocation2 + $0x75] sm:$0xf]
      %v1723 = vpack.c.bf16 %v1711, %v1710
      %v1724 = vpack.c.bf16 %v1713, %v1712
      %v1725 = vpack.c.bf16 %v1715, %v1714
      %v1726 = vpack.c.bf16 %v1717, %v1716
      %v1727 = vpack.c.bf16 %v1719, %v1718
      %v1728 = vpack.c.bf16 %v1721, %v1720
      %v1729 = vpack.c.bf16 %v1722, %v1722
      %v1730 = vld [vmem:[%s4] sm:$0xf]
      %v1731 = vld [vmem:[#allocation2 + $0x16] sm:$0xff]
      %v1732 = vld [vmem:[#allocation2 + $0x1e] sm:$0xff]
      %v1733 = vld [vmem:[#allocation2 + $0x26] sm:$0xff]
      %v1734 = vld [vmem:[#allocation2 + $0x2e] sm:$0xff]
      %v1735 = vld [vmem:[#allocation2 + $0x36] sm:$0xff]
      %v1736 = vld [vmem:[#allocation2 + $0x3e] sm:$0xff]
      %v1737 = vld [vmem:[#allocation2 + $0x46] sm:$0xff]
      %v1738 = vld [vmem:[#allocation2 + $0x4e] sm:$0xff]
      %v1739 = vld [vmem:[#allocation2 + $0x56] sm:$0xff]
      %v1740 = vld [vmem:[#allocation2 + $0x5e] sm:$0xff]
      %v1741 = vld [vmem:[#allocation2 + $0x66] sm:$0xff]
      %v1742 = vld [vmem:[#allocation2 + $0x6e] sm:$0xff]
      %v1743 = vld [vmem:[#allocation2 + $0x76] sm:$0xf]
      %v1744 = vpack.c.bf16 %v1732, %v1731
      %v1745 = vpack.c.bf16 %v1734, %v1733
      %v1746 = vpack.c.bf16 %v1736, %v1735
      %v1747 = vpack.c.bf16 %v1738, %v1737
      %v1748 = vpack.c.bf16 %v1740, %v1739
      %v1749 = vpack.c.bf16 %v1742, %v1741
      %v1750 = vpack.c.bf16 %v1743, %v1743
      %s1751 = scalar_lea.vmem %s4, 4
      %v1752 = vld [vmem:[%s1751] sm:$0xf]
      %v1754 = vsel %vm309, %v1744, 0
      %v1757 = vsel %vm309, %v1745, 0
      %v1760 = vsel %vm309, %v1746, 0
      %v1763 = vsel %vm309, %v1747, 0
      %v1766 = vsel %vm309, %v1748, 0
      %v1769 = vsel %vm309, %v1749, 0
      %v1772 = vsel %vm309, %v1750, 0
      %v1775 = vsel %vm331, %v1752, 0
      %1777 = vmatprep.subr.bf16.mxu0 0
      %1778 = vmatpush1.bf16.msra.mxu0 %v1775
      %1779 = vmatprep.subr.bf16.mxu0 0
      %1780 = vmatpush1.bf16.msra.mxu0 0
      %1781 = vmatprep.subr.bf16.mxu0 0
      %1782 = vmatpush1.bf16.msra.mxu0 0
      %1783 = vmatprep.subr.bf16.mxu0 0
      %1784 = vmatpush1.bf16.msra.mxu0 0
      %1785 = vmatprep.subr.bf16.mxu0 0
      %1786 = vmatpush1.bf16.msra.mxu0 0
      %1787 = vmatprep.subr.bf16.mxu0 0
      %1788 = vmatpush1.bf16.msra.mxu0 0
      %1789 = vmatprep.subr.bf16.mxu0 0
      %1790 = vmatpush1.bf16.msra.mxu0 0
      %1791 = vmatprep.subr.bf16.mxu0 0
      %1792 = vmatpush1.bf16.msra.mxu0 0
      %1793 = vmatprep.subr.bf16.mxu0 0
      %1794 = vmatpush1.bf16.msra.mxu0 0
      %1795 = vmatprep.subr.bf16.mxu0 0
      %1796 = vmatpush1.bf16.msra.mxu0 0
      %1797 = vmatprep.subr.bf16.mxu0 0
      %1798 = vmatpush1.bf16.msra.mxu0 0
      %1799 = vmatprep.subr.bf16.mxu0 0
      %1800 = vmatpush1.bf16.msra.mxu0 0
      %1801 = vmatprep.subr.bf16.mxu0 0
      %1802 = vmatpush1.bf16.msra.mxu0 0
      %1803 = vmatprep.subr.bf16.mxu0 0
      %1804 = vmatpush1.bf16.msra.mxu0 0
      %1805 = vmatprep.subr.bf16.mxu0 0
      %1806 = vmatpush1.bf16.msra.mxu0 0
      %1807 = vmatprep.subr.bf16.mxu0 0
      %1808 = vmatpush1.bf16.msra.mxu0 0
      %1809 = vmatprep.mubr.bf16.mxu0 0
      %1810 = vmatmul.mubr.bf16.gmra.mrb[0].mxu0 %v1754
      %v1811 = vpop.f32.mrb[0].mxu0
      %v1812 = vadd.f32 0.0, %v1811
      %v1813 = vpop.f32.mrb[0].mxu0
      %v1814 = vpop.f32.mrb[0].mxu0
      %v1815 = vadd.f32 0.0, %v1814
      %v1816 = vpop.f32.mrb[0].mxu0
      %1817 = vmatprep.mubr.bf16.mxu0 0
      %1818 = vmatmul.mubr.bf16.gmra.mrb[0].mxu0 %v1757
      %v1819 = vpop.f32.mrb[0].mxu0
      %v1820 = vadd.f32 0.0, %v1819
      %v1821 = vpop.f32.mrb[0].mxu0
      %v1822 = vpop.f32.mrb[0].mxu0
      %v1823 = vadd.f32 0.0, %v1822
      %v1824 = vpop.f32.mrb[0].mxu0
      %1825 = vmatprep.mubr.bf16.mxu0 0
      %1826 = vmatmul.mubr.bf16.gmra.mrb[0].mxu0 %v1760
      %v1827 = vpop.f32.mrb[0].mxu0
      %v1828 = vadd.f32 0.0, %v1827
      %v1829 = vpop.f32.mrb[0].mxu0
      %v1830 = vpop.f32.mrb[0].mxu0
      %v1831 = vadd.f32 0.0, %v1830
      %v1832 = vpop.f32.mrb[0].mxu0
      %1833 = vmatprep.mubr.bf16.mxu0 0
      %1834 = vmatmul.mubr.bf16.gmra.mrb[0].mxu0 %v1763
      %v1835 = vpop.f32.mrb[0].mxu0
      %v1836 = vadd.f32 0.0, %v1835
      %v1837 = vpop.f32.mrb[0].mxu0
      %v1838 = vpop.f32.mrb[0].mxu0
      %v1839 = vadd.f32 0.0, %v1838
      %v1840 = vpop.f32.mrb[0].mxu0
      %1841 = vmatprep.mubr.bf16.mxu0 0
      %1842 = vmatmul.mubr.bf16.gmra.mrb[0].mxu0 %v1766
      %v1843 = vpop.f32.mrb[0].mxu0
      %v1844 = vadd.f32 0.0, %v1843
      %v1845 = vpop.f32.mrb[0].mxu0
      %v1846 = vpop.f32.mrb[0].mxu0
      %v1847 = vadd.f32 0.0, %v1846
      %v1848 = vpop.f32.mrb[0].mxu0
      %1849 = vmatprep.mubr.bf16.mxu0 0
      %1850 = vmatmul.mubr.bf16.gmra.mrb[0].mxu0 %v1769
      %v1851 = vpop.f32.mrb[0].mxu0
      %v1852 = vadd.f32 0.0, %v1851
      %v1853 = vpop.f32.mrb[0].mxu0
      %v1854 = vpop.f32.mrb[0].mxu0
      %v1855 = vadd.f32 0.0, %v1854
      %v1856 = vpop.f32.mrb[0].mxu0
      %1857 = vmatprep.mubr.bf16.mxu0 0
      %1858 = vmatmul.mubr.bf16.gmra.mrb[0].mxu0 %v1772
      %v1859 = vpop.f32.mrb[0].mxu0
      %v1860 = vadd.f32 0.0, %v1859
      %v1861 = vpop.f32.mrb[0].mxu0
      %v1862 = vpop.f32.mrb[0].mxu0
      %v1863 = vpop.f32.mrb[0].mxu0
      %1864 = vdwg.mxu0
      %v1866 = vsel %vm309, %v1723, 0
      %v1869 = vsel %vm309, %v1724, 0
      %v1872 = vsel %vm309, %v1725, 0
      %v1875 = vsel %vm309, %v1726, 0
      %v1878 = vsel %vm309, %v1727, 0
      %v1881 = vsel %vm309, %v1728, 0
      %v1884 = vsel %vm309, %v1729, 0
      %v1887 = vsel %vm331, %v1730, 0
      %1889 = vmatprep.subr.bf16.mxu0 0
      %1890 = vmatpush1.bf16.msra.mxu0 %v1887
      %1891 = vmatprep.subr.bf16.mxu0 0
      %1892 = vmatpush1.bf16.msra.mxu0 0
      %1893 = vmatprep.subr.bf16.mxu0 0
      %1894 = vmatpush1.bf16.msra.mxu0 0
      %1895 = vmatprep.subr.bf16.mxu0 0
      %1896 = vmatpush1.bf16.msra.mxu0 0
      %1897 = vmatprep.subr.bf16.mxu0 0
      %1898 = vmatpush1.bf16.msra.mxu0 0
      %1899 = vmatprep.subr.bf16.mxu0 0
      %1900 = vmatpush1.bf16.msra.mxu0 0
      %1901 = vmatprep.subr.bf16.mxu0 0
      %1902 = vmatpush1.bf16.msra.mxu0 0
      %1903 = vmatprep.subr.bf16.mxu0 0
      %1904 = vmatpush1.bf16.msra.mxu0 0
      %1905 = vmatprep.subr.bf16.mxu0 0
      %1906 = vmatpush1.bf16.msra.mxu0 0
      %1907 = vmatprep.subr.bf16.mxu0 0
      %1908 = vmatpush1.bf16.msra.mxu0 0
      %1909 = vmatprep.subr.bf16.mxu0 0
      %1910 = vmatpush1.bf16.msra.mxu0 0
      %1911 = vmatprep.subr.bf16.mxu0 0
      %1912 = vmatpush1.bf16.msra.mxu0 0
      %1913 = vmatprep.subr.bf16.mxu0 0
      %1914 = vmatpush1.bf16.msra.mxu0 0
      %1915 = vmatprep.subr.bf16.mxu0 0
      %1916 = vmatpush1.bf16.msra.mxu0 0
      %1917 = vmatprep.subr.bf16.mxu0 0
      %1918 = vmatpush1.bf16.msra.mxu0 0
      %1919 = vmatprep.subr.bf16.mxu0 0
      %1920 = vmatpush1.bf16.msra.mxu0 0
      %1921 = vmatprep.mubr.bf16.mxu0 0
      %1922 = vmatmul.mubr.bf16.gmra.mrb[0].mxu0 %v1866
      %v1923 = vpop.f32.mrb[0].mxu0
      %v1924 = vadd.f32 %v1812, %v1923
      %v1925 = vpop.f32.mrb[0].mxu0
      %v1926 = vpop.f32.mrb[0].mxu0
      %v1927 = vadd.f32 %v1815, %v1926
      %v1928 = vpop.f32.mrb[0].mxu0
      %1929 = vmatprep.mubr.bf16.mxu0 0
      %1930 = vmatmul.mubr.bf16.gmra.mrb[0].mxu0 %v1869
      %v1931 = vpop.f32.mrb[0].mxu0
      %v1932 = vadd.f32 %v1820, %v1931
      %v1933 = vpop.f32.mrb[0].mxu0
      %v1934 = vpop.f32.mrb[0].mxu0
      %v1935 = vadd.f32 %v1823, %v1934
      %v1936 = vpop.f32.mrb[0].mxu0
      %1937 = vmatprep.mubr.bf16.mxu0 0
      %1938 = vmatmul.mubr.bf16.gmra.mrb[0].mxu0 %v1872
      %v1939 = vpop.f32.mrb[0].mxu0
      %v1940 = vadd.f32 %v1828, %v1939
      %v1941 = vpop.f32.mrb[0].mxu0
      %v1942 = vpop.f32.mrb[0].mxu0
      %v1943 = vadd.f32 %v1831, %v1942
      %v1944 = vpop.f32.mrb[0].mxu0
      %1945 = vmatprep.mubr.bf16.mxu0 0
      %1946 = vmatmul.mubr.bf16.gmra.mrb[0].mxu0 %v1875
      %v1947 = vpop.f32.mrb[0].mxu0
      %v1948 = vadd.f32 %v1836, %v1947
      %v1949 = vpop.f32.mrb[0].mxu0
      %v1950 = vpop.f32.mrb[0].mxu0
      %v1951 = vadd.f32 %v1839, %v1950
      %v1952 = vpop.f32.mrb[0].mxu0
      %1953 = vmatprep.mubr.bf16.mxu0 0
      %1954 = vmatmul.mubr.bf16.gmra.mrb[0].mxu0 %v1878
      %v1955 = vpop.f32.mrb[0].mxu0
      %v1956 = vadd.f32 %v1844, %v1955
      %v1957 = vpop.f32.mrb[0].mxu0
      %v1958 = vpop.f32.mrb[0].mxu0
      %v1959 = vadd.f32 %v1847, %v1958
      %v1960 = vpop.f32.mrb[0].mxu0
      %1961 = vmatprep.mubr.bf16.mxu0 0
      %1962 = vmatmul.mubr.bf16.gmra.mrb[0].mxu0 %v1881
      %v1963 = vpop.f32.mrb[0].mxu0
      %v1964 = vadd.f32 %v1852, %v1963
      %v1965 = vpop.f32.mrb[0].mxu0
      %v1966 = vpop.f32.mrb[0].mxu0
      %v1967 = vadd.f32 %v1855, %v1966
      %v1968 = vpop.f32.mrb[0].mxu0
      %1969 = vmatprep.mubr.bf16.mxu0 0
      %1970 = vmatmul.mubr.bf16.gmra.mrb[0].mxu0 %v1884
      %v1971 = vpop.f32.mrb[0].mxu0
      %v1972 = vadd.f32 %v1860, %v1971
      %v1973 = vpop.f32.mrb[0].mxu0
      %v1974 = vpop.f32.mrb[0].mxu0
      %v1975 = vpop.f32.mrb[0].mxu0
      %1976 = vdwg.mxu0
      %v1977 = vld [vmem:[#allocation2 + $0x17] sm:$0xff]
      %v1978 = vld [vmem:[#allocation2 + $0x1f] sm:$0xff]
      %v1979 = vld [vmem:[#allocation2 + $0x27] sm:$0xff]
      %v1980 = vld [vmem:[#allocation2 + $0x2f] sm:$0xff]
      %v1981 = vld [vmem:[#allocation2 + $0x37] sm:$0xff]
      %v1982 = vld [vmem:[#allocation2 + $0x3f] sm:$0xff]
      %v1983 = vld [vmem:[#allocation2 + $0x47] sm:$0xff]
      %v1984 = vld [vmem:[#allocation2 + $0x4f] sm:$0xff]
      %v1985 = vld [vmem:[#allocation2 + $0x57] sm:$0xff]
      %v1986 = vld [vmem:[#allocation2 + $0x5f] sm:$0xff]
      %v1987 = vld [vmem:[#allocation2 + $0x67] sm:$0xff]
      %v1988 = vld [vmem:[#allocation2 + $0x6f] sm:$0xff]
      %v1989 = vld [vmem:[#allocation2 + $0x77] sm:$0xf]
      %v1990 = vpack.c.bf16 %v1978, %v1977
      %v1991 = vpack.c.bf16 %v1980, %v1979
      %v1992 = vpack.c.bf16 %v1982, %v1981
      %v1993 = vpack.c.bf16 %v1984, %v1983
      %v1994 = vpack.c.bf16 %v1986, %v1985
      %v1995 = vpack.c.bf16 %v1988, %v1987
      %v1996 = vpack.c.bf16 %v1989, %v1989
      %s1997 = scalar_lea.vmem %s4, 8
      %v1998 = vld [vmem:[%s1997] sm:$0xf]
      %v2000 = vsel %vm309, %v1990, 0
      %v2003 = vsel %vm309, %v1991, 0
      %v2006 = vsel %vm309, %v1992, 0
      %v2009 = vsel %vm309, %v1993, 0
      %v2012 = vsel %vm309, %v1994, 0
      %v2015 = vsel %vm309, %v1995, 0
      %v2018 = vsel %vm309, %v1996, 0
      %v2021 = vsel %vm331, %v1998, 0
      %2023 = vmatprep.subr.bf16.mxu0 0
      %2024 = vmatpush1.bf16.msra.mxu0 %v2021
      %2025 = vmatprep.subr.bf16.mxu0 0
      %2026 = vmatpush1.bf16.msra.mxu0 0
      %2027 = vmatprep.subr.bf16.mxu0 0
      %2028 = vmatpush1.bf16.msra.mxu0 0
      %2029 = vmatprep.subr.bf16.mxu0 0
      %2030 = vmatpush1.bf16.msra.mxu0 0
      %2031 = vmatprep.subr.bf16.mxu0 0
      %2032 = vmatpush1.bf16.msra.mxu0 0
      %2033 = vmatprep.subr.bf16.mxu0 0
      %2034 = vmatpush1.bf16.msra.mxu0 0
      %2035 = vmatprep.subr.bf16.mxu0 0
      %2036 = vmatpush1.bf16.msra.mxu0 0
      %2037 = vmatprep.subr.bf16.mxu0 0
      %2038 = vmatpush1.bf16.msra.mxu0 0
      %2039 = vmatprep.subr.bf16.mxu0 0
      %2040 = vmatpush1.bf16.msra.mxu0 0
      %2041 = vmatprep.subr.bf16.mxu0 0
      %2042 = vmatpush1.bf16.msra.mxu0 0
      %2043 = vmatprep.subr.bf16.mxu0 0
      %2044 = vmatpush1.bf16.msra.mxu0 0
      %2045 = vmatprep.subr.bf16.mxu0 0
      %2046 = vmatpush1.bf16.msra.mxu0 0
      %2047 = vmatprep.subr.bf16.mxu0 0
      %2048 = vmatpush1.bf16.msra.mxu0 0
      %2049 = vmatprep.subr.bf16.mxu0 0
      %2050 = vmatpush1.bf16.msra.mxu0 0
      %2051 = vmatprep.subr.bf16.mxu0 0
      %2052 = vmatpush1.bf16.msra.mxu0 0
      %2053 = vmatprep.subr.bf16.mxu0 0
      %2054 = vmatpush1.bf16.msra.mxu0 0
      %2055 = vmatprep.mubr.bf16.mxu0 0
      %2056 = vmatmul.mubr.bf16.gmra.mrb[0].mxu0 %v2000
      %v2057 = vpop.f32.mrb[0].mxu0
      %v2058 = vadd.f32 0.0, %v2057
      %v2059 = vpop.f32.mrb[0].mxu0
      %v2060 = vpop.f32.mrb[0].mxu0
      %v2061 = vadd.f32 0.0, %v2060
      %v2062 = vpop.f32.mrb[0].mxu0
      %2063 = vmatprep.mubr.bf16.mxu0 0
      %2064 = vmatmul.mubr.bf16.gmra.mrb[0].mxu0 %v2003
      %v2065 = vpop.f32.mrb[0].mxu0
      %v2066 = vadd.f32 0.0, %v2065
      %v2067 = vpop.f32.mrb[0].mxu0
      %v2068 = vpop.f32.mrb[0].mxu0
      %v2069 = vadd.f32 0.0, %v2068
      %v2070 = vpop.f32.mrb[0].mxu0
      %2071 = vmatprep.mubr.bf16.mxu0 0
      %2072 = vmatmul.mubr.bf16.gmra.mrb[0].mxu0 %v2006
      %v2073 = vpop.f32.mrb[0].mxu0
      %v2074 = vadd.f32 0.0, %v2073
      %v2075 = vpop.f32.mrb[0].mxu0
      %v2076 = vpop.f32.mrb[0].mxu0
      %v2077 = vadd.f32 0.0, %v2076
      %v2078 = vpop.f32.mrb[0].mxu0
      %2079 = vmatprep.mubr.bf16.mxu0 0
      %2080 = vmatmul.mubr.bf16.gmra.mrb[0].mxu0 %v2009
      %v2081 = vpop.f32.mrb[0].mxu0
      %v2082 = vadd.f32 0.0, %v2081
      %v2083 = vpop.f32.mrb[0].mxu0
      %v2084 = vpop.f32.mrb[0].mxu0
      %v2085 = vadd.f32 0.0, %v2084
      %v2086 = vpop.f32.mrb[0].mxu0
      %2087 = vmatprep.mubr.bf16.mxu0 0
      %2088 = vmatmul.mubr.bf16.gmra.mrb[0].mxu0 %v2012
      %v2089 = vpop.f32.mrb[0].mxu0
      %v2090 = vadd.f32 0.0, %v2089
      %v2091 = vpop.f32.mrb[0].mxu0
      %v2092 = vpop.f32.mrb[0].mxu0
      %v2093 = vadd.f32 0.0, %v2092
      %v2094 = vpop.f32.mrb[0].mxu0
      %2095 = vmatprep.mubr.bf16.mxu0 0
      %2096 = vmatmul.mubr.bf16.gmra.mrb[0].mxu0 %v2015
      %v2097 = vpop.f32.mrb[0].mxu0
      %v2098 = vadd.f32 0.0, %v2097
      %v2099 = vpop.f32.mrb[0].mxu0
      %v2100 = vpop.f32.mrb[0].mxu0
      %v2101 = vadd.f32 0.0, %v2100
      %v2102 = vpop.f32.mrb[0].mxu0
      %2103 = vmatprep.mubr.bf16.mxu0 0
      %2104 = vmatmul.mubr.bf16.gmra.mrb[0].mxu0 %v2018
      %v2105 = vpop.f32.mrb[0].mxu0
      %v2106 = vadd.f32 0.0, %v2105
      %v2107 = vpop.f32.mrb[0].mxu0
      %v2108 = vpop.f32.mrb[0].mxu0
      %v2109 = vpop.f32.mrb[0].mxu0
      %2110 = vdwg.mxu0
      %v2111 = vadd.f32 %v1924, %v2058
      %v2112 = vadd.f32 %v1927, %v2061
      %v2113 = vadd.f32 %v1932, %v2066
      %v2114 = vadd.f32 %v1935, %v2069
      %v2115 = vadd.f32 %v1940, %v2074
      %v2116 = vadd.f32 %v1943, %v2077
      %v2117 = vadd.f32 %v1948, %v2082
      %v2118 = vadd.f32 %v1951, %v2085
      %v2119 = vadd.f32 %v1956, %v2090
      %v2120 = vadd.f32 %v1959, %v2093
      %v2121 = vadd.f32 %v1964, %v2098
      %v2122 = vadd.f32 %v1967, %v2101
      %v2123 = vadd.f32 %v1972, %v2106
      %v2124 = vld [vmem:[#allocation2 + $0x1f] sm:$0xff]
      %v2125 = vld [vmem:[#allocation2 + $0x27] sm:$0xff]
      %v2126 = vld [vmem:[#allocation2 + $0x2f] sm:$0xff]
      %v2127 = vld [vmem:[#allocation2 + $0x37] sm:$0xff]
      %v2128 = vld [vmem:[#allocation2 + $0x3f] sm:$0xff]
      %v2129 = vld [vmem:[#allocation2 + $0x47] sm:$0xff]
      %v2130 = vld [vmem:[#allocation2 + $0x4f] sm:$0xff]
      %v2131 = vld [vmem:[#allocation2 + $0x57] sm:$0xff]
      %v2132 = vld [vmem:[#allocation2 + $0x5f] sm:$0xff]
      %v2133 = vld [vmem:[#allocation2 + $0x67] sm:$0xff]
      %v2134 = vld [vmem:[#allocation2 + $0x6f] sm:$0xff]
      %v2135 = vld [vmem:[#allocation2 + $0x77] sm:$0xff]
      %v2136 = vld [vmem:[#allocation2 + $0x7f] sm:$0xf]
      %v2137 = vpack.c.bf16 %v2125, %v2124
      %v2138 = vpack.c.bf16 %v2127, %v2126
      %v2139 = vpack.c.bf16 %v2129, %v2128
      %v2140 = vpack.c.bf16 %v2131, %v2130
      %v2141 = vpack.c.bf16 %v2133, %v2132
      %v2142 = vpack.c.bf16 %v2135, %v2134
      %v2143 = vpack.c.bf16 %v2136, %v2136
      %s2144 = scalar_lea.vmem %s4, 12
      %v2145 = vld [vmem:[%s2144] sm:$0xf]
      %v2147 = vsel %vm309, %v2137, 0
      %v2150 = vsel %vm309, %v2138, 0
      %v2153 = vsel %vm309, %v2139, 0
      %v2156 = vsel %vm309, %v2140, 0
      %v2159 = vsel %vm309, %v2141, 0
      %v2162 = vsel %vm309, %v2142, 0
      %v2165 = vsel %vm309, %v2143, 0
      %v2168 = vsel %vm331, %v2145, 0
      %2170 = vmatprep.subr.bf16.mxu0 0
      %2171 = vmatpush1.bf16.msra.mxu0 %v2168
      %2172 = vmatprep.subr.bf16.mxu0 0
      %2173 = vmatpush1.bf16.msra.mxu0 0
      %2174 = vmatprep.subr.bf16.mxu0 0
      %2175 = vmatpush1.bf16.msra.mxu0 0
      %2176 = vmatprep.subr.bf16.mxu0 0
      %2177 = vmatpush1.bf16.msra.mxu0 0
      %2178 = vmatprep.subr.bf16.mxu0 0
      %2179 = vmatpush1.bf16.msra.mxu0 0
      %2180 = vmatprep.subr.bf16.mxu0 0
      %2181 = vmatpush1.bf16.msra.mxu0 0
      %2182 = vmatprep.subr.bf16.mxu0 0
      %2183 = vmatpush1.bf16.msra.mxu0 0
      %2184 = vmatprep.subr.bf16.mxu0 0
      %2185 = vmatpush1.bf16.msra.mxu0 0
      %2186 = vmatprep.subr.bf16.mxu0 0
      %2187 = vmatpush1.bf16.msra.mxu0 0
      %2188 = vmatprep.subr.bf16.mxu0 0
      %2189 = vmatpush1.bf16.msra.mxu0 0
      %2190 = vmatprep.subr.bf16.mxu0 0
      %2191 = vmatpush1.bf16.msra.mxu0 0
      %2192 = vmatprep.subr.bf16.mxu0 0
      %2193 = vmatpush1.bf16.msra.mxu0 0
      %2194 = vmatprep.subr.bf16.mxu0 0
      %2195 = vmatpush1.bf16.msra.mxu0 0
      %2196 = vmatprep.subr.bf16.mxu0 0
      %2197 = vmatpush1.bf16.msra.mxu0 0
      %2198 = vmatprep.subr.bf16.mxu0 0
      %2199 = vmatpush1.bf16.msra.mxu0 0
      %2200 = vmatprep.subr.bf16.mxu0 0
      %2201 = vmatpush1.bf16.msra.mxu0 0
      %2202 = vmatprep.mubr.bf16.mxu0 0
      %2203 = vmatmul.mubr.bf16.gmra.mrb[0].mxu0 %v2147
      %v2204 = vpop.f32.mrb[0].mxu0
      %v2205 = vadd.f32 0.0, %v2204
      %v2206 = vpop.f32.mrb[0].mxu0
      %v2207 = vpop.f32.mrb[0].mxu0
      %v2208 = vadd.f32 0.0, %v2207
      %v2209 = vpop.f32.mrb[0].mxu0
      %2210 = vmatprep.mubr.bf16.mxu0 0
      %2211 = vmatmul.mubr.bf16.gmra.mrb[0].mxu0 %v2150
      %v2212 = vpop.f32.mrb[0].mxu0
      %v2213 = vadd.f32 0.0, %v2212
      %v2214 = vpop.f32.mrb[0].mxu0
      %v2215 = vpop.f32.mrb[0].mxu0
      %v2216 = vadd.f32 0.0, %v2215
      %v2217 = vpop.f32.mrb[0].mxu0
      %2218 = vmatprep.mubr.bf16.mxu0 0
      %2219 = vmatmul.mubr.bf16.gmra.mrb[0].mxu0 %v2153
      %v2220 = vpop.f32.mrb[0].mxu0
      %v2221 = vadd.f32 0.0, %v2220
      %v2222 = vpop.f32.mrb[0].mxu0
      %v2223 = vpop.f32.mrb[0].mxu0
      %v2224 = vadd.f32 0.0, %v2223
      %v2225 = vpop.f32.mrb[0].mxu0
      %2226 = vmatprep.mubr.bf16.mxu0 0
      %2227 = vmatmul.mubr.bf16.gmra.mrb[0].mxu0 %v2156
      %v2228 = vpop.f32.mrb[0].mxu0
      %v2229 = vadd.f32 0.0, %v2228
      %v2230 = vpop.f32.mrb[0].mxu0
      %v2231 = vpop.f32.mrb[0].mxu0
      %v2232 = vadd.f32 0.0, %v2231
      %v2233 = vpop.f32.mrb[0].mxu0
      %2234 = vmatprep.mubr.bf16.mxu0 0
      %2235 = vmatmul.mubr.bf16.gmra.mrb[0].mxu0 %v2159
      %v2236 = vpop.f32.mrb[0].mxu0
      %v2237 = vadd.f32 0.0, %v2236
      %v2238 = vpop.f32.mrb[0].mxu0
      %v2239 = vpop.f32.mrb[0].mxu0
      %v2240 = vadd.f32 0.0, %v2239
      %v2241 = vpop.f32.mrb[0].mxu0
      %2242 = vmatprep.mubr.bf16.mxu0 0
      %2243 = vmatmul.mubr.bf16.gmra.mrb[0].mxu0 %v2162
      %v2244 = vpop.f32.mrb[0].mxu0
      %v2245 = vadd.f32 0.0, %v2244
      %v2246 = vpop.f32.mrb[0].mxu0
      %v2247 = vpop.f32.mrb[0].mxu0
      %v2248 = vadd.f32 0.0, %v2247
      %v2249 = vpop.f32.mrb[0].mxu0
      %2250 = vmatprep.mubr.bf16.mxu0 0
      %2251 = vmatmul.mubr.bf16.gmra.mrb[0].mxu0 %v2165
      %v2252 = vpop.f32.mrb[0].mxu0
      %v2253 = vadd.f32 0.0, %v2252
      %v2254 = vpop.f32.mrb[0].mxu0
      %v2255 = vpop.f32.mrb[0].mxu0
      %v2256 = vpop.f32.mrb[0].mxu0
      %2257 = vdwg.mxu0
      %v2258 = vadd.f32 %v2111, %v2205
      %v2259 = vadd.f32 %v2112, %v2208
      %v2260 = vadd.f32 %v2113, %v2213
      %v2261 = vadd.f32 %v2114, %v2216
      %v2262 = vadd.f32 %v2115, %v2221
      %v2263 = vadd.f32 %v2116, %v2224
      %v2264 = vadd.f32 %v2117, %v2229
      %v2265 = vadd.f32 %v2118, %v2232
      %v2266 = vadd.f32 %v2119, %v2237
      %v2267 = vadd.f32 %v2120, %v2240
      %v2268 = vadd.f32 %v2121, %v2245
      %v2269 = vadd.f32 %v2122, %v2248
      %v2270 = vadd.f32 %v2123, %v2253
      %v2271 = vld [vmem:[#allocation2 + $0x20] sm:$0xff]
      %v2272 = vld [vmem:[#allocation2 + $0x28] sm:$0xff]
      %v2273 = vld [vmem:[#allocation2 + $0x30] sm:$0xff]
      %v2274 = vld [vmem:[#allocation2 + $0x38] sm:$0xff]
      %v2275 = vld [vmem:[#allocation2 + $0x40] sm:$0xff]
      %v2276 = vld [vmem:[#allocation2 + $0x48] sm:$0xff]
      %v2277 = vld [vmem:[#allocation2 + $0x50] sm:$0xff]
      %v2278 = vld [vmem:[#allocation2 + $0x58] sm:$0xff]
      %v2279 = vld [vmem:[#allocation2 + $0x60] sm:$0xff]
      %v2280 = vld [vmem:[#allocation2 + $0x68] sm:$0xff]
      %v2281 = vld [vmem:[#allocation2 + $0x70] sm:$0xff]
      %v2282 = vld [vmem:[#allocation2 + $0x78] sm:$0xff]
      %v2283 = vld [vmem:[#allocation2 + $0x80] sm:$0xf]
      %v2284 = vpack.c.bf16 %v2272, %v2271
      %v2285 = vpack.c.bf16 %v2274, %v2273
      %v2286 = vpack.c.bf16 %v2276, %v2275
      %v2287 = vpack.c.bf16 %v2278, %v2277
      %v2288 = vpack.c.bf16 %v2280, %v2279
      %v2289 = vpack.c.bf16 %v2282, %v2281
      %v2290 = vpack.c.bf16 %v2283, %v2283
      %s2291 = scalar_lea.vmem %s4, 16
      %v2292 = vld [vmem:[%s2291] sm:$0xf]
      %v2294 = vsel %vm309, %v2284, 0
      %v2297 = vsel %vm309, %v2285, 0
      %v2300 = vsel %vm309, %v2286, 0
      %v2303 = vsel %vm309, %v2287, 0
      %v2306 = vsel %vm309, %v2288, 0
      %v2309 = vsel %vm309, %v2289, 0
      %v2312 = vsel %vm309, %v2290, 0
      %v2315 = vsel %vm331, %v2292, 0
      %2317 = vmatprep.subr.bf16.mxu0 0
      %2318 = vmatpush1.bf16.msra.mxu0 %v2315
      %2319 = vmatprep.subr.bf16.mxu0 0
      %2320 = vmatpush1.bf16.msra.mxu0 0
      %2321 = vmatprep.subr.bf16.mxu0 0
      %2322 = vmatpush1.bf16.msra.mxu0 0
      %2323 = vmatprep.subr.bf16.mxu0 0
      %2324 = vmatpush1.bf16.msra.mxu0 0
      %2325 = vmatprep.subr.bf16.mxu0 0
      %2326 = vmatpush1.bf16.msra.mxu0 0
      %2327 = vmatprep.subr.bf16.mxu0 0
      %2328 = vmatpush1.bf16.msra.mxu0 0
      %2329 = vmatprep.subr.bf16.mxu0 0
      %2330 = vmatpush1.bf16.msra.mxu0 0
      %2331 = vmatprep.subr.bf16.mxu0 0
      %2332 = vmatpush1.bf16.msra.mxu0 0
      %2333 = vmatprep.subr.bf16.mxu0 0
      %2334 = vmatpush1.bf16.msra.mxu0 0
      %2335 = vmatprep.subr.bf16.mxu0 0
      %2336 = vmatpush1.bf16.msra.mxu0 0
      %2337 = vmatprep.subr.bf16.mxu0 0
      %2338 = vmatpush1.bf16.msra.mxu0 0
      %2339 = vmatprep.subr.bf16.mxu0 0
      %2340 = vmatpush1.bf16.msra.mxu0 0
      %2341 = vmatprep.subr.bf16.mxu0 0
      %2342 = vmatpush1.bf16.msra.mxu0 0
      %2343 = vmatprep.subr.bf16.mxu0 0
      %2344 = vmatpush1.bf16.msra.mxu0 0
      %2345 = vmatprep.subr.bf16.mxu0 0
      %2346 = vmatpush1.bf16.msra.mxu0 0
      %2347 = vmatprep.subr.bf16.mxu0 0
      %2348 = vmatpush1.bf16.msra.mxu0 0
      %2349 = vmatprep.mubr.bf16.mxu0 0
      %2350 = vmatmul.mubr.bf16.gmra.mrb[0].mxu0 %v2294
      %v2351 = vpop.f32.mrb[0].mxu0
      %v2352 = vadd.f32 0.0, %v2351
      %v2353 = vpop.f32.mrb[0].mxu0
      %v2354 = vpop.f32.mrb[0].mxu0
      %v2355 = vadd.f32 0.0, %v2354
      %v2356 = vpop.f32.mrb[0].mxu0
      %2357 = vmatprep.mubr.bf16.mxu0 0
      %2358 = vmatmul.mubr.bf16.gmra.mrb[0].mxu0 %v2297
      %v2359 = vpop.f32.mrb[0].mxu0
      %v2360 = vadd.f32 0.0, %v2359
      %v2361 = vpop.f32.mrb[0].mxu0
      %v2362 = vpop.f32.mrb[0].mxu0
      %v2363 = vadd.f32 0.0, %v2362
      %v2364 = vpop.f32.mrb[0].mxu0
      %2365 = vmatprep.mubr.bf16.mxu0 0
      %2366 = vmatmul.mubr.bf16.gmra.mrb[0].mxu0 %v2300
      %v2367 = vpop.f32.mrb[0].mxu0
      %v2368 = vadd.f32 0.0, %v2367
      %v2369 = vpop.f32.mrb[0].mxu0
      %v2370 = vpop.f32.mrb[0].mxu0
      %v2371 = vadd.f32 0.0, %v2370
      %v2372 = vpop.f32.mrb[0].mxu0
      %2373 = vmatprep.mubr.bf16.mxu0 0
      %2374 = vmatmul.mubr.bf16.gmra.mrb[0].mxu0 %v2303
      %v2375 = vpop.f32.mrb[0].mxu0
      %v2376 = vadd.f32 0.0, %v2375
      %v2377 = vpop.f32.mrb[0].mxu0
      %v2378 = vpop.f32.mrb[0].mxu0
      %v2379 = vadd.f32 0.0, %v2378
      %v2380 = vpop.f32.mrb[0].mxu0
      %2381 = vmatprep.mubr.bf16.mxu0 0
      %2382 = vmatmul.mubr.bf16.gmra.mrb[0].mxu0 %v2306
      %v2383 = vpop.f32.mrb[0].mxu0
      %v2384 = vadd.f32 0.0, %v2383
      %v2385 = vpop.f32.mrb[0].mxu0
      %v2386 = vpop.f32.mrb[0].mxu0
      %v2387 = vadd.f32 0.0, %v2386
      %v2388 = vpop.f32.mrb[0].mxu0
      %2389 = vmatprep.mubr.bf16.mxu0 0
      %2390 = vmatmul.mubr.bf16.gmra.mrb[0].mxu0 %v2309
      %v2391 = vpop.f32.mrb[0].mxu0
      %v2392 = vadd.f32 0.0, %v2391
      %v2393 = vpop.f32.mrb[0].mxu0
      %v2394 = vpop.f32.mrb[0].mxu0
      %v2395 = vadd.f32 0.0, %v2394
      %v2396 = vpop.f32.mrb[0].mxu0
      %2397 = vmatprep.mubr.bf16.mxu0 0
      %2398 = vmatmul.mubr.bf16.gmra.mrb[0].mxu0 %v2312
      %v2399 = vpop.f32.mrb[0].mxu0
      %v2400 = vadd.f32 0.0, %v2399
      %v2401 = vpop.f32.mrb[0].mxu0
      %v2402 = vpop.f32.mrb[0].mxu0
      %v2403 = vpop.f32.mrb[0].mxu0
      %2404 = vdwg.mxu0
      %v2405 = vadd.f32 %v2258, %v2352
      %v2406 = vadd.f32 %v2259, %v2355
      %v2407 = vadd.f32 %v2260, %v2360
      %v2408 = vadd.f32 %v2261, %v2363
      %v2409 = vadd.f32 %v2262, %v2368
      %v2410 = vadd.f32 %v2263, %v2371
      %v2411 = vadd.f32 %v2264, %v2376
      %v2412 = vadd.f32 %v2265, %v2379
      %v2413 = vadd.f32 %v2266, %v2384
      %v2414 = vadd.f32 %v2267, %v2387
      %v2415 = vadd.f32 %v2268, %v2392
      %v2416 = vadd.f32 %v2269, %v2395
      %v2417 = vadd.f32 %v2270, %v2400
      %v2418 = vld [vmem:[#allocation2 + $0x21] sm:$0xff]
      %v2419 = vld [vmem:[#allocation2 + $0x29] sm:$0xff]
      %v2420 = vld [vmem:[#allocation2 + $0x31] sm:$0xff]
      %v2421 = vld [vmem:[#allocation2 + $0x39] sm:$0xff]
      %v2422 = vld [vmem:[#allocation2 + $0x41] sm:$0xff]
      %v2423 = vld [vmem:[#allocation2 + $0x49] sm:$0xff]
      %v2424 = vld [vmem:[#allocation2 + $0x51] sm:$0xff]
      %v2425 = vld [vmem:[#allocation2 + $0x59] sm:$0xff]
      %v2426 = vld [vmem:[#allocation2 + $0x61] sm:$0xff]
      %v2427 = vld [vmem:[#allocation2 + $0x69] sm:$0xff]
      %v2428 = vld [vmem:[#allocation2 + $0x71] sm:$0xff]
      %v2429 = vld [vmem:[#allocation2 + $0x79] sm:$0xff]
      %v2430 = vld [vmem:[#allocation2 + $0x81] sm:$0xf]
      %v2431 = vpack.c.bf16 %v2419, %v2418
      %v2432 = vpack.c.bf16 %v2421, %v2420
      %v2433 = vpack.c.bf16 %v2423, %v2422
      %v2434 = vpack.c.bf16 %v2425, %v2424
      %v2435 = vpack.c.bf16 %v2427, %v2426
      %v2436 = vpack.c.bf16 %v2429, %v2428
      %v2437 = vpack.c.bf16 %v2430, %v2430
      %s2438 = scalar_lea.vmem %s4, 20
      %v2439 = vld [vmem:[%s2438] sm:$0xf]
      %v2441 = vsel %vm309, %v2431, 0
      %v2444 = vsel %vm309, %v2432, 0
      %v2447 = vsel %vm309, %v2433, 0
      %v2450 = vsel %vm309, %v2434, 0
      %v2453 = vsel %vm309, %v2435, 0
      %v2456 = vsel %vm309, %v2436, 0
      %v2459 = vsel %vm309, %v2437, 0
      %v2462 = vsel %vm331, %v2439, 0
      %2464 = vmatprep.subr.bf16.mxu0 0
      %2465 = vmatpush1.bf16.msra.mxu0 %v2462
      %2466 = vmatprep.subr.bf16.mxu0 0
      %2467 = vmatpush1.bf16.msra.mxu0 0
      %2468 = vmatprep.subr.bf16.mxu0 0
      %2469 = vmatpush1.bf16.msra.mxu0 0
      %2470 = vmatprep.subr.bf16.mxu0 0
      %2471 = vmatpush1.bf16.msra.mxu0 0
      %2472 = vmatprep.subr.bf16.mxu0 0
      %2473 = vmatpush1.bf16.msra.mxu0 0
      %2474 = vmatprep.subr.bf16.mxu0 0
      %2475 = vmatpush1.bf16.msra.mxu0 0
      %2476 = vmatprep.subr.bf16.mxu0 0
      %2477 = vmatpush1.bf16.msra.mxu0 0
      %2478 = vmatprep.subr.bf16.mxu0 0
      %2479 = vmatpush1.bf16.msra.mxu0 0
      %2480 = vmatprep.subr.bf16.mxu0 0
      %2481 = vmatpush1.bf16.msra.mxu0 0
      %2482 = vmatprep.subr.bf16.mxu0 0
      %2483 = vmatpush1.bf16.msra.mxu0 0
      %2484 = vmatprep.subr.bf16.mxu0 0
      %2485 = vmatpush1.bf16.msra.mxu0 0
      %2486 = vmatprep.subr.bf16.mxu0 0
      %2487 = vmatpush1.bf16.msra.mxu0 0
      %2488 = vmatprep.subr.bf16.mxu0 0
      %2489 = vmatpush1.bf16.msra.mxu0 0
      %2490 = vmatprep.subr.bf16.mxu0 0
      %2491 = vmatpush1.bf16.msra.mxu0 0
      %2492 = vmatprep.subr.bf16.mxu0 0
      %2493 = vmatpush1.bf16.msra.mxu0 0
      %2494 = vmatprep.subr.bf16.mxu0 0
      %2495 = vmatpush1.bf16.msra.mxu0 0
      %2496 = vmatprep.mubr.bf16.mxu0 0
      %2497 = vmatmul.mubr.bf16.gmra.mrb[0].mxu0 %v2441
      %v2498 = vpop.f32.mrb[0].mxu0
      %v2499 = vadd.f32 0.0, %v2498
      %v2500 = vpop.f32.mrb[0].mxu0
      %v2501 = vpop.f32.mrb[0].mxu0
      %v2502 = vadd.f32 0.0, %v2501
      %v2503 = vpop.f32.mrb[0].mxu0
      %2504 = vmatprep.mubr.bf16.mxu0 0
      %2505 = vmatmul.mubr.bf16.gmra.mrb[0].mxu0 %v2444
      %v2506 = vpop.f32.mrb[0].mxu0
      %v2507 = vadd.f32 0.0, %v2506
      %v2508 = vpop.f32.mrb[0].mxu0
      %v2509 = vpop.f32.mrb[0].mxu0
      %v2510 = vadd.f32 0.0, %v2509
      %v2511 = vpop.f32.mrb[0].mxu0
      %2512 = vmatprep.mubr.bf16.mxu0 0
      %2513 = vmatmul.mubr.bf16.gmra.mrb[0].mxu0 %v2447
      %v2514 = vpop.f32.mrb[0].mxu0
      %v2515 = vadd.f32 0.0, %v2514
      %v2516 = vpop.f32.mrb[0].mxu0
      %v2517 = vpop.f32.mrb[0].mxu0
      %v2518 = vadd.f32 0.0, %v2517
      %v2519 = vpop.f32.mrb[0].mxu0
      %2520 = vmatprep.mubr.bf16.mxu0 0
      %2521 = vmatmul.mubr.bf16.gmra.mrb[0].mxu0 %v2450
      %v2522 = vpop.f32.mrb[0].mxu0
      %v2523 = vadd.f32 0.0, %v2522
      %v2524 = vpop.f32.mrb[0].mxu0
      %v2525 = vpop.f32.mrb[0].mxu0
      %v2526 = vadd.f32 0.0, %v2525
      %v2527 = vpop.f32.mrb[0].mxu0
      %2528 = vmatprep.mubr.bf16.mxu0 0
      %2529 = vmatmul.mubr.bf16.gmra.mrb[0].mxu0 %v2453
      %v2530 = vpop.f32.mrb[0].mxu0
      %v2531 = vadd.f32 0.0, %v2530
      %v2532 = vpop.f32.mrb[0].mxu0
      %v2533 = vpop.f32.mrb[0].mxu0
      %v2534 = vadd.f32 0.0, %v2533
      %v2535 = vpop.f32.mrb[0].mxu0
      %2536 = vmatprep.mubr.bf16.mxu0 0
      %2537 = vmatmul.mubr.bf16.gmra.mrb[0].mxu0 %v2456
      %v2538 = vpop.f32.mrb[0].mxu0
      %v2539 = vadd.f32 0.0, %v2538
      %v2540 = vpop.f32.mrb[0].mxu0
      %v2541 = vpop.f32.mrb[0].mxu0
      %v2542 = vadd.f32 0.0, %v2541
      %v2543 = vpop.f32.mrb[0].mxu0
      %2544 = vmatprep.mubr.bf16.mxu0 0
      %2545 = vmatmul.mubr.bf16.gmra.mrb[0].mxu0 %v2459
      %v2546 = vpop.f32.mrb[0].mxu0
      %v2547 = vadd.f32 0.0, %v2546
      %v2548 = vpop.f32.mrb[0].mxu0
      %v2549 = vpop.f32.mrb[0].mxu0
      %v2550 = vpop.f32.mrb[0].mxu0
      %2551 = vdwg.mxu0
      %v2552 = vadd.f32 %v2405, %v2499
      %v2553 = vadd.f32 %v2406, %v2502
      %v2554 = vadd.f32 %v2407, %v2507
      %v2555 = vadd.f32 %v2408, %v2510
      %v2556 = vadd.f32 %v2409, %v2515
      %v2557 = vadd.f32 %v2410, %v2518
      %v2558 = vadd.f32 %v2411, %v2523
      %v2559 = vadd.f32 %v2412, %v2526
      %v2560 = vadd.f32 %v2413, %v2531
      %v2561 = vadd.f32 %v2414, %v2534
      %v2562 = vadd.f32 %v2415, %v2539
      %v2563 = vadd.f32 %v2416, %v2542
      %v2564 = vadd.f32 %v2417, %v2547
      %v2565 = vld [vmem:[#allocation2 + $0x29] sm:$0xff]
      %v2566 = vld [vmem:[#allocation2 + $0x31] sm:$0xff]
      %v2567 = vld [vmem:[#allocation2 + $0x39] sm:$0xff]
      %v2568 = vld [vmem:[#allocation2 + $0x41] sm:$0xff]
      %v2569 = vld [vmem:[#allocation2 + $0x49] sm:$0xff]
      %v2570 = vld [vmem:[#allocation2 + $0x51] sm:$0xff]
      %v2571 = vld [vmem:[#allocation2 + $0x59] sm:$0xff]
      %v2572 = vld [vmem:[#allocation2 + $0x61] sm:$0xff]
      %v2573 = vld [vmem:[#allocation2 + $0x69] sm:$0xff]
      %v2574 = vld [vmem:[#allocation2 + $0x71] sm:$0xff]
      %v2575 = vld [vmem:[#allocation2 + $0x79] sm:$0xff]
      %v2576 = vld [vmem:[#allocation2 + $0x81] sm:$0xff]
      %v2577 = vld [vmem:[#allocation2 + $0x89] sm:$0xf]
      %v2578 = vpack.c.bf16 %v2566, %v2565
      %v2579 = vpack.c.bf16 %v2568, %v2567
      %v2580 = vpack.c.bf16 %v2570, %v2569
      %v2581 = vpack.c.bf16 %v2572, %v2571
      %v2582 = vpack.c.bf16 %v2574, %v2573
      %v2583 = vpack.c.bf16 %v2576, %v2575
      %v2584 = vpack.c.bf16 %v2577, %v2577
      %s2585 = scalar_lea.vmem %s4, 24
      %v2586 = vld [vmem:[%s2585] sm:$0xf]
      %v2588 = vsel %vm309, %v2578, 0
      %v2591 = vsel %vm309, %v2579, 0
      %v2594 = vsel %vm309, %v2580, 0
      %v2597 = vsel %vm309, %v2581, 0
      %v2600 = vsel %vm309, %v2582, 0
      %v2603 = vsel %vm309, %v2583, 0
      %v2606 = vsel %vm309, %v2584, 0
      %v2609 = vsel %vm331, %v2586, 0
      %2611 = vmatprep.subr.bf16.mxu0 0
      %2612 = vmatpush1.bf16.msra.mxu0 %v2609
      %2613 = vmatprep.subr.bf16.mxu0 0
      %2614 = vmatpush1.bf16.msra.mxu0 0
      %2615 = vmatprep.subr.bf16.mxu0 0
      %2616 = vmatpush1.bf16.msra.mxu0 0
      %2617 = vmatprep.subr.bf16.mxu0 0
      %2618 = vmatpush1.bf16.msra.mxu0 0
      %2619 = vmatprep.subr.bf16.mxu0 0
      %2620 = vmatpush1.bf16.msra.mxu0 0
      %2621 = vmatprep.subr.bf16.mxu0 0
      %2622 = vmatpush1.bf16.msra.mxu0 0
      %2623 = vmatprep.subr.bf16.mxu0 0
      %2624 = vmatpush1.bf16.msra.mxu0 0
      %2625 = vmatprep.subr.bf16.mxu0 0
      %2626 = vmatpush1.bf16.msra.mxu0 0
      %2627 = vmatprep.subr.bf16.mxu0 0
      %2628 = vmatpush1.bf16.msra.mxu0 0
      %2629 = vmatprep.subr.bf16.mxu0 0
      %2630 = vmatpush1.bf16.msra.mxu0 0
      %2631 = vmatprep.subr.bf16.mxu0 0
      %2632 = vmatpush1.bf16.msra.mxu0 0
      %2633 = vmatprep.subr.bf16.mxu0 0
      %2634 = vmatpush1.bf16.msra.mxu0 0
      %2635 = vmatprep.subr.bf16.mxu0 0
      %2636 = vmatpush1.bf16.msra.mxu0 0
      %2637 = vmatprep.subr.bf16.mxu0 0
      %2638 = vmatpush1.bf16.msra.mxu0 0
      %2639 = vmatprep.subr.bf16.mxu0 0
      %2640 = vmatpush1.bf16.msra.mxu0 0
      %2641 = vmatprep.subr.bf16.mxu0 0
      %2642 = vmatpush1.bf16.msra.mxu0 0
      %2643 = vmatprep.mubr.bf16.mxu0 0
      %2644 = vmatmul.mubr.bf16.gmra.mrb[0].mxu0 %v2588
      %v2645 = vpop.f32.mrb[0].mxu0
      %v2646 = vadd.f32 0.0, %v2645
      %v2647 = vpop.f32.mrb[0].mxu0
      %v2648 = vpop.f32.mrb[0].mxu0
      %v2649 = vadd.f32 0.0, %v2648
      %v2650 = vpop.f32.mrb[0].mxu0
      %2651 = vmatprep.mubr.bf16.mxu0 0
      %2652 = vmatmul.mubr.bf16.gmra.mrb[0].mxu0 %v2591
      %v2653 = vpop.f32.mrb[0].mxu0
      %v2654 = vadd.f32 0.0, %v2653
      %v2655 = vpop.f32.mrb[0].mxu0
      %v2656 = vpop.f32.mrb[0].mxu0
      %v2657 = vadd.f32 0.0, %v2656
      %v2658 = vpop.f32.mrb[0].mxu0
      %2659 = vmatprep.mubr.bf16.mxu0 0
      %2660 = vmatmul.mubr.bf16.gmra.mrb[0].mxu0 %v2594
      %v2661 = vpop.f32.mrb[0].mxu0
      %v2662 = vadd.f32 0.0, %v2661
      %v2663 = vpop.f32.mrb[0].mxu0
      %v2664 = vpop.f32.mrb[0].mxu0
      %v2665 = vadd.f32 0.0, %v2664
      %v2666 = vpop.f32.mrb[0].mxu0
      %2667 = vmatprep.mubr.bf16.mxu0 0
      %2668 = vmatmul.mubr.bf16.gmra.mrb[0].mxu0 %v2597
      %v2669 = vpop.f32.mrb[0].mxu0
      %v2670 = vadd.f32 0.0, %v2669
      %v2671 = vpop.f32.mrb[0].mxu0
      %v2672 = vpop.f32.mrb[0].mxu0
      %v2673 = vadd.f32 0.0, %v2672
      %v2674 = vpop.f32.mrb[0].mxu0
      %2675 = vmatprep.mubr.bf16.mxu0 0
      %2676 = vmatmul.mubr.bf16.gmra.mrb[0].mxu0 %v2600
      %v2677 = vpop.f32.mrb[0].mxu0
      %v2678 = vadd.f32 0.0, %v2677
      %v2679 = vpop.f32.mrb[0].mxu0
      %v2680 = vpop.f32.mrb[0].mxu0
      %v2681 = vadd.f32 0.0, %v2680
      %v2682 = vpop.f32.mrb[0].mxu0
      %2683 = vmatprep.mubr.bf16.mxu0 0
      %2684 = vmatmul.mubr.bf16.gmra.mrb[0].mxu0 %v2603
      %v2685 = vpop.f32.mrb[0].mxu0
      %v2686 = vadd.f32 0.0, %v2685
      %v2687 = vpop.f32.mrb[0].mxu0
      %v2688 = vpop.f32.mrb[0].mxu0
      %v2689 = vadd.f32 0.0, %v2688
      %v2690 = vpop.f32.mrb[0].mxu0
      %2691 = vmatprep.mubr.bf16.mxu0 0
      %2692 = vmatmul.mubr.bf16.gmra.mrb[0].mxu0 %v2606
      %v2693 = vpop.f32.mrb[0].mxu0
      %v2694 = vadd.f32 0.0, %v2693
      %v2695 = vpop.f32.mrb[0].mxu0
      %v2696 = vpop.f32.mrb[0].mxu0
      %v2697 = vpop.f32.mrb[0].mxu0
      %2698 = vdwg.mxu0
      %v2699 = vadd.f32 %v2552, %v2646
      %v2700 = vadd.f32 %v2553, %v2649
      %v2701 = vadd.f32 %v2554, %v2654
      %v2702 = vadd.f32 %v2555, %v2657
      %v2703 = vadd.f32 %v2556, %v2662
      %v2704 = vadd.f32 %v2557, %v2665
      %v2705 = vadd.f32 %v2558, %v2670
      %v2706 = vadd.f32 %v2559, %v2673
      %v2707 = vadd.f32 %v2560, %v2678
      %v2708 = vadd.f32 %v2561, %v2681
      %v2709 = vadd.f32 %v2562, %v2686
      %v2710 = vadd.f32 %v2563, %v2689
      %v2711 = vadd.f32 %v2564, %v2694
      %v2712 = vld [vmem:[#allocation2 + $0x2a] sm:$0xff]
      %v2713 = vld [vmem:[#allocation2 + $0x32] sm:$0xff]
      %v2714 = vld [vmem:[#allocation2 + $0x3a] sm:$0xff]
      %v2715 = vld [vmem:[#allocation2 + $0x42] sm:$0xff]
      %v2716 = vld [vmem:[#allocation2 + $0x4a] sm:$0xff]
      %v2717 = vld [vmem:[#allocation2 + $0x52] sm:$0xff]
      %v2718 = vld [vmem:[#allocation2 + $0x5a] sm:$0xff]
      %v2719 = vld [vmem:[#allocation2 + $0x62] sm:$0xff]
      %v2720 = vld [vmem:[#allocation2 + $0x6a] sm:$0xff]
      %v2721 = vld [vmem:[#allocation2 + $0x72] sm:$0xff]
      %v2722 = vld [vmem:[#allocation2 + $0x7a] sm:$0xff]
      %v2723 = vld [vmem:[#allocation2 + $0x82] sm:$0xff]
      %v2724 = vld [vmem:[#allocation2 + $0x8a] sm:$0xf]
      %v2725 = vpack.c.bf16 %v2713, %v2712
      %v2726 = vpack.c.bf16 %v2715, %v2714
      %v2727 = vpack.c.bf16 %v2717, %v2716
      %v2728 = vpack.c.bf16 %v2719, %v2718
      %v2729 = vpack.c.bf16 %v2721, %v2720
      %v2730 = vpack.c.bf16 %v2723, %v2722
      %v2731 = vpack.c.bf16 %v2724, %v2724
      %s2732 = scalar_lea.vmem %s4, 28
      %v2733 = vld [vmem:[%s2732] sm:$0xf]
      %v2735 = vsel %vm309, %v2725, 0
      %v2738 = vsel %vm309, %v2726, 0
      %v2741 = vsel %vm309, %v2727, 0
      %v2744 = vsel %vm309, %v2728, 0
      %v2747 = vsel %vm309, %v2729, 0
      %v2750 = vsel %vm309, %v2730, 0
      %v2753 = vsel %vm309, %v2731, 0
      %v2756 = vsel %vm331, %v2733, 0
      %2758 = vmatprep.subr.bf16.mxu0 0
      %2759 = vmatpush1.bf16.msra.mxu0 %v2756
      %2760 = vmatprep.subr.bf16.mxu0 0
      %2761 = vmatpush1.bf16.msra.mxu0 0
      %2762 = vmatprep.subr.bf16.mxu0 0
      %2763 = vmatpush1.bf16.msra.mxu0 0
      %2764 = vmatprep.subr.bf16.mxu0 0
      %2765 = vmatpush1.bf16.msra.mxu0 0
      %2766 = vmatprep.subr.bf16.mxu0 0
      %2767 = vmatpush1.bf16.msra.mxu0 0
      %2768 = vmatprep.subr.bf16.mxu0 0
      %2769 = vmatpush1.bf16.msra.mxu0 0
      %2770 = vmatprep.subr.bf16.mxu0 0
      %2771 = vmatpush1.bf16.msra.mxu0 0
      %2772 = vmatprep.subr.bf16.mxu0 0
      %2773 = vmatpush1.bf16.msra.mxu0 0
      %2774 = vmatprep.subr.bf16.mxu0 0
      %2775 = vmatpush1.bf16.msra.mxu0 0
      %2776 = vmatprep.subr.bf16.mxu0 0
      %2777 = vmatpush1.bf16.msra.mxu0 0
      %2778 = vmatprep.subr.bf16.mxu0 0
      %2779 = vmatpush1.bf16.msra.mxu0 0
      %2780 = vmatprep.subr.bf16.mxu0 0
      %2781 = vmatpush1.bf16.msra.mxu0 0
      %2782 = vmatprep.subr.bf16.mxu0 0
      %2783 = vmatpush1.bf16.msra.mxu0 0
      %2784 = vmatprep.subr.bf16.mxu0 0
      %2785 = vmatpush1.bf16.msra.mxu0 0
      %2786 = vmatprep.subr.bf16.mxu0 0
      %2787 = vmatpush1.bf16.msra.mxu0 0
      %2788 = vmatprep.subr.bf16.mxu0 0
      %2789 = vmatpush1.bf16.msra.mxu0 0
      %2790 = vmatprep.mubr.bf16.mxu0 0
      %2791 = vmatmul.mubr.bf16.gmra.mrb[0].mxu0 %v2735
      %v2792 = vpop.f32.mrb[0].mxu0
      %v2793 = vadd.f32 0.0, %v2792
      %v2794 = vpop.f32.mrb[0].mxu0
      %v2795 = vpop.f32.mrb[0].mxu0
      %v2796 = vadd.f32 0.0, %v2795
      %v2797 = vpop.f32.mrb[0].mxu0
      %2798 = vmatprep.mubr.bf16.mxu0 0
      %2799 = vmatmul.mubr.bf16.gmra.mrb[0].mxu0 %v2738
      %v2800 = vpop.f32.mrb[0].mxu0
      %v2801 = vadd.f32 0.0, %v2800
      %v2802 = vpop.f32.mrb[0].mxu0
      %v2803 = vpop.f32.mrb[0].mxu0
      %v2804 = vadd.f32 0.0, %v2803
      %v2805 = vpop.f32.mrb[0].mxu0
      %2806 = vmatprep.mubr.bf16.mxu0 0
      %2807 = vmatmul.mubr.bf16.gmra.mrb[0].mxu0 %v2741
      %v2808 = vpop.f32.mrb[0].mxu0
      %v2809 = vadd.f32 0.0, %v2808
      %v2810 = vpop.f32.mrb[0].mxu0
      %v2811 = vpop.f32.mrb[0].mxu0
      %v2812 = vadd.f32 0.0, %v2811
      %v2813 = vpop.f32.mrb[0].mxu0
      %2814 = vmatprep.mubr.bf16.mxu0 0
      %2815 = vmatmul.mubr.bf16.gmra.mrb[0].mxu0 %v2744
      %v2816 = vpop.f32.mrb[0].mxu0
      %v2817 = vadd.f32 0.0, %v2816
      %v2818 = vpop.f32.mrb[0].mxu0
      %v2819 = vpop.f32.mrb[0].mxu0
      %v2820 = vadd.f32 0.0, %v2819
      %v2821 = vpop.f32.mrb[0].mxu0
      %2822 = vmatprep.mubr.bf16.mxu0 0
      %2823 = vmatmul.mubr.bf16.gmra.mrb[0].mxu0 %v2747
      %v2824 = vpop.f32.mrb[0].mxu0
      %v2825 = vadd.f32 0.0, %v2824
      %v2826 = vpop.f32.mrb[0].mxu0
      %v2827 = vpop.f32.mrb[0].mxu0
      %v2828 = vadd.f32 0.0, %v2827
      %v2829 = vpop.f32.mrb[0].mxu0
      %2830 = vmatprep.mubr.bf16.mxu0 0
      %2831 = vmatmul.mubr.bf16.gmra.mrb[0].mxu0 %v2750
      %v2832 = vpop.f32.mrb[0].mxu0
      %v2833 = vadd.f32 0.0, %v2832
      %v2834 = vpop.f32.mrb[0].mxu0
      %v2835 = vpop.f32.mrb[0].mxu0
      %v2836 = vadd.f32 0.0, %v2835
      %v2837 = vpop.f32.mrb[0].mxu0
      %2838 = vmatprep.mubr.bf16.mxu0 0
      %2839 = vmatmul.mubr.bf16.gmra.mrb[0].mxu0 %v2753
      %v2840 = vpop.f32.mrb[0].mxu0
      %v2841 = vadd.f32 0.0, %v2840
      %v2842 = vpop.f32.mrb[0].mxu0
      %v2843 = vpop.f32.mrb[0].mxu0
      %v2844 = vpop.f32.mrb[0].mxu0
      %2845 = vdwg.mxu0
      %v2846 = vadd.f32 %v2699, %v2793
      %v2847 = vadd.f32 %v2700, %v2796
      %v2848 = vadd.f32 %v2701, %v2801
      %v2849 = vadd.f32 %v2702, %v2804
      %v2850 = vadd.f32 %v2703, %v2809
      %v2851 = vadd.f32 %v2704, %v2812
      %v2852 = vadd.f32 %v2705, %v2817
      %v2853 = vadd.f32 %v2706, %v2820
      %v2854 = vadd.f32 %v2707, %v2825
      %v2855 = vadd.f32 %v2708, %v2828
      %v2856 = vadd.f32 %v2709, %v2833
      %v2857 = vadd.f32 %v2710, %v2836
      %v2858 = vadd.f32 %v2711, %v2841
      %v2859 = vld [vmem:[#allocation2 + $0x2b] sm:$0xff]
      %v2860 = vld [vmem:[#allocation2 + $0x33] sm:$0xff]
      %v2861 = vld [vmem:[#allocation2 + $0x3b] sm:$0xff]
      %v2862 = vld [vmem:[#allocation2 + $0x43] sm:$0xff]
      %v2863 = vld [vmem:[#allocation2 + $0x4b] sm:$0xff]
      %v2864 = vld [vmem:[#allocation2 + $0x53] sm:$0xff]
      %v2865 = vld [vmem:[#allocation2 + $0x5b] sm:$0xff]
      %v2866 = vld [vmem:[#allocation2 + $0x63] sm:$0xff]
      %v2867 = vld [vmem:[#allocation2 + $0x6b] sm:$0xff]
      %v2868 = vld [vmem:[#allocation2 + $0x73] sm:$0xff]
      %v2869 = vld [vmem:[#allocation2 + $0x7b] sm:$0xff]
      %v2870 = vld [vmem:[#allocation2 + $0x83] sm:$0xff]
      %v2871 = vld [vmem:[#allocation2 + $0x8b] sm:$0xf]
      %v2872 = vpack.c.bf16 %v2860, %v2859
      %v2873 = vpack.c.bf16 %v2862, %v2861
      %v2874 = vpack.c.bf16 %v2864, %v2863
      %v2875 = vpack.c.bf16 %v2866, %v2865
      %v2876 = vpack.c.bf16 %v2868, %v2867
      %v2877 = vpack.c.bf16 %v2870, %v2869
      %v2878 = vpack.c.bf16 %v2871, %v2871
      %s2879 = scalar_lea.vmem %s4, 32
      %v2880 = vld [vmem:[%s2879] sm:$0xf]
      %v2882 = vsel %vm309, %v2872, 0
      %v2885 = vsel %vm309, %v2873, 0
      %v2888 = vsel %vm309, %v2874, 0
      %v2891 = vsel %vm309, %v2875, 0
      %v2894 = vsel %vm309, %v2876, 0
      %v2897 = vsel %vm309, %v2877, 0
      %v2900 = vsel %vm309, %v2878, 0
      %v2903 = vsel %vm331, %v2880, 0
      %2905 = vmatprep.subr.bf16.mxu0 0
      %2906 = vmatpush1.bf16.msra.mxu0 %v2903
      %2907 = vmatprep.subr.bf16.mxu0 0
      %2908 = vmatpush1.bf16.msra.mxu0 0
      %2909 = vmatprep.subr.bf16.mxu0 0
      %2910 = vmatpush1.bf16.msra.mxu0 0
      %2911 = vmatprep.subr.bf16.mxu0 0
      %2912 = vmatpush1.bf16.msra.mxu0 0
      %2913 = vmatprep.subr.bf16.mxu0 0
      %2914 = vmatpush1.bf16.msra.mxu0 0
      %2915 = vmatprep.subr.bf16.mxu0 0
      %2916 = vmatpush1.bf16.msra.mxu0 0
      %2917 = vmatprep.subr.bf16.mxu0 0
      %2918 = vmatpush1.bf16.msra.mxu0 0
      %2919 = vmatprep.subr.bf16.mxu0 0
      %2920 = vmatpush1.bf16.msra.mxu0 0
      %2921 = vmatprep.subr.bf16.mxu0 0
      %2922 = vmatpush1.bf16.msra.mxu0 0
      %2923 = vmatprep.subr.bf16.mxu0 0
      %2924 = vmatpush1.bf16.msra.mxu0 0
      %2925 = vmatprep.subr.bf16.mxu0 0
      %2926 = vmatpush1.bf16.msra.mxu0 0
      %2927 = vmatprep.subr.bf16.mxu0 0
      %2928 = vmatpush1.bf16.msra.mxu0 0
      %2929 = vmatprep.subr.bf16.mxu0 0
      %2930 = vmatpush1.bf16.msra.mxu0 0
      %2931 = vmatprep.subr.bf16.mxu0 0
      %2932 = vmatpush1.bf16.msra.mxu0 0
      %2933 = vmatprep.subr.bf16.mxu0 0
      %2934 = vmatpush1.bf16.msra.mxu0 0
      %2935 = vmatprep.subr.bf16.mxu0 0
      %2936 = vmatpush1.bf16.msra.mxu0 0
      %2937 = vmatprep.mubr.bf16.mxu0 0
      %2938 = vmatmul.mubr.bf16.gmra.mrb[0].mxu0 %v2882
      %v2939 = vpop.f32.mrb[0].mxu0
      %v2940 = vadd.f32 0.0, %v2939
      %v2941 = vpop.f32.mrb[0].mxu0
      %v2942 = vpop.f32.mrb[0].mxu0
      %v2943 = vadd.f32 0.0, %v2942
      %v2944 = vpop.f32.mrb[0].mxu0
      %2945 = vmatprep.mubr.bf16.mxu0 0
      %2946 = vmatmul.mubr.bf16.gmra.mrb[0].mxu0 %v2885
      %v2947 = vpop.f32.mrb[0].mxu0
      %v2948 = vadd.f32 0.0, %v2947
      %v2949 = vpop.f32.mrb[0].mxu0
      %v2950 = vpop.f32.mrb[0].mxu0
      %v2951 = vadd.f32 0.0, %v2950
      %v2952 = vpop.f32.mrb[0].mxu0
      %2953 = vmatprep.mubr.bf16.mxu0 0
      %2954 = vmatmul.mubr.bf16.gmra.mrb[0].mxu0 %v2888
      %v2955 = vpop.f32.mrb[0].mxu0
      %v2956 = vadd.f32 0.0, %v2955
      %v2957 = vpop.f32.mrb[0].mxu0
      %v2958 = vpop.f32.mrb[0].mxu0
      %v2959 = vadd.f32 0.0, %v2958
      %v2960 = vpop.f32.mrb[0].mxu0
      %2961 = vmatprep.mubr.bf16.mxu0 0
      %2962 = vmatmul.mubr.bf16.gmra.mrb[0].mxu0 %v2891
      %v2963 = vpop.f32.mrb[0].mxu0
      %v2964 = vadd.f32 0.0, %v2963
      %v2965 = vpop.f32.mrb[0].mxu0
      %v2966 = vpop.f32.mrb[0].mxu0
      %v2967 = vadd.f32 0.0, %v2966
      %v2968 = vpop.f32.mrb[0].mxu0
      %2969 = vmatprep.mubr.bf16.mxu0 0
      %2970 = vmatmul.mubr.bf16.gmra.mrb[0].mxu0 %v2894
      %v2971 = vpop.f32.mrb[0].mxu0
      %v2972 = vadd.f32 0.0, %v2971
      %v2973 = vpop.f32.mrb[0].mxu0
      %v2974 = vpop.f32.mrb[0].mxu0
      %v2975 = vadd.f32 0.0, %v2974
      %v2976 = vpop.f32.mrb[0].mxu0
      %2977 = vmatprep.mubr.bf16.mxu0 0
      %2978 = vmatmul.mubr.bf16.gmra.mrb[0].mxu0 %v2897
      %v2979 = vpop.f32.mrb[0].mxu0
      %v2980 = vadd.f32 0.0, %v2979
      %v2981 = vpop.f32.mrb[0].mxu0
      %v2982 = vpop.f32.mrb[0].mxu0
      %v2983 = vadd.f32 0.0, %v2982
      %v2984 = vpop.f32.mrb[0].mxu0
      %2985 = vmatprep.mubr.bf16.mxu0 0
      %2986 = vmatmul.mubr.bf16.gmra.mrb[0].mxu0 %v2900
      %v2987 = vpop.f32.mrb[0].mxu0
      %v2988 = vadd.f32 0.0, %v2987
      %v2989 = vpop.f32.mrb[0].mxu0
      %v2990 = vpop.f32.mrb[0].mxu0
      %v2991 = vpop.f32.mrb[0].mxu0
      %2992 = vdwg.mxu0
      %v2993 = vadd.f32 %v2846, %v2940
      %v2994 = vadd.f32 %v2847, %v2943
      %v2995 = vadd.f32 %v2848, %v2948
      %v2996 = vadd.f32 %v2849, %v2951
      %v2997 = vadd.f32 %v2850, %v2956
      %v2998 = vadd.f32 %v2851, %v2959
      %v2999 = vadd.f32 %v2852, %v2964
      %v3000 = vadd.f32 %v2853, %v2967
      %v3001 = vadd.f32 %v2854, %v2972
      %v3002 = vadd.f32 %v2855, %v2975
      %v3003 = vadd.f32 %v2856, %v2980
      %v3004 = vadd.f32 %v2857, %v2983
      %v3005 = vadd.f32 %v2858, %v2988
      %v3006 = vld [vmem:[%s5] sm:$0x1]
      %v3008 = vlaneseq
      %v3009 = vshrl.u32 %v3008, 7
      %v3010 = vsub.s32 0, %v3009
      %v3011 = vrot.slane %v3006, %v3010
      %v3013 = vadd.f32 %v2993, %v3011
      %v3014 = vadd.f32 %v2994, %v3011
      %v3015 = vadd.f32 %v2995, %v3011
      %v3016 = vadd.f32 %v2996, %v3011
      %v3017 = vadd.f32 %v2997, %v3011
      %v3018 = vadd.f32 %v2998, %v3011
      %v3019 = vadd.f32 %v2999, %v3011
      %v3020 = vadd.f32 %v3000, %v3011
      %v3021 = vadd.f32 %v3001, %v3011
      %v3022 = vadd.f32 %v3002, %v3011
      %v3023 = vadd.f32 %v3003, %v3011
      %v3024 = vadd.f32 %v3004, %v3011
      %v3025 = vadd.f32 %v3005, %v3011
      %v3026 = vmax.f32 %v3013, 0.0
      %v3027 = vmax.f32 %v3014, 0.0
      %v3028 = vmax.f32 %v3015, 0.0
      %v3029 = vmax.f32 %v3016, 0.0
      %v3030 = vmax.f32 %v3017, 0.0
      %v3031 = vmax.f32 %v3018, 0.0
      %v3032 = vmax.f32 %v3019, 0.0
      %v3033 = vmax.f32 %v3020, 0.0
      %v3034 = vmax.f32 %v3021, 0.0
      %v3035 = vmax.f32 %v3022, 0.0
      %v3036 = vmax.f32 %v3023, 0.0
      %v3037 = vmax.f32 %v3024, 0.0
      %v3038 = vmax.f32 %v3025, 0.0
      %v3039 = vld [vmem:[%s246 + $0x20] sm:$0xff]
      %v3040 = vld [vmem:[%s246 + $0x28] sm:$0xff]
      %v3041 = vld [vmem:[%s246 + $0x30] sm:$0xff]
      %v3042 = vld [vmem:[%s246 + $0x38] sm:$0xff]
      %v3043 = vld [vmem:[%s246 + $0x40] sm:$0xff]
      %v3044 = vld [vmem:[%s246 + $0x48] sm:$0xff]
      %v3045 = vld [vmem:[%s246 + $0x50] sm:$0xff]
      %v3046 = vld [vmem:[%s246 + $0x58] sm:$0xff]
      %v3047 = vld [vmem:[%s246 + $0x60] sm:$0xff]
      %v3048 = vld [vmem:[%s246 + $0x68] sm:$0xff]
      %v3049 = vld [vmem:[%s246 + $0x70] sm:$0xff]
      %v3050 = vld [vmem:[%s246 + $0x78] sm:$0xff]
      %v3051 = vld [vmem:[%s246 + $0x80] sm:$0xf]
      %v3052 = vadd.f32 %v3026, %v3039
      %v3053 = vadd.f32 %v3027, %v3040
      %v3054 = vadd.f32 %v3028, %v3041
      %v3055 = vadd.f32 %v3029, %v3042
      %v3056 = vadd.f32 %v3030, %v3043
      %v3057 = vadd.f32 %v3031, %v3044
      %v3058 = vadd.f32 %v3032, %v3045
      %v3059 = vadd.f32 %v3033, %v3046
      %v3060 = vadd.f32 %v3034, %v3047
      %v3061 = vadd.f32 %v3035, %v3048
      %v3062 = vadd.f32 %v3036, %v3049
      %v3063 = vadd.f32 %v3037, %v3050
      %v3064 = vadd.f32 %v3038, %v3051
      %v3065 = vmul.f32 %v3052, %v1622
      %v3066 = vmul.f32 %v3053, %v1627
      %v3067 = vmul.f32 %v3054, %v1632
      %v3068 = vmul.f32 %v3055, %v1637
      %v3069 = vmul.f32 %v3056, %v1642
      %v3070 = vmul.f32 %v3057, %v1647
      %v3071 = vmul.f32 %v3058, %v1652
      %v3072 = vmul.f32 %v3059, %v1657
      %v3073 = vmul.f32 %v3060, %v1662
      %v3074 = vmul.f32 %v3061, %v1667
      %v3075 = vmul.f32 %v3062, %v1672
      %v3076 = vmul.f32 %v3063, %v1677
      %v3077 = vmul.f32 %v3064, %v1682
      %3078 = vst.msk [vmem:[%s251] sm:$0xff] %vm309, %v3065
      %3079 = vst.msk [vmem:[%s251 + $0x8] sm:$0xff] %vm309, %v3066
      %3080 = vst.msk [vmem:[%s251 + $0x10] sm:$0xff] %vm309, %v3067
      %3081 = vst.msk [vmem:[%s251 + $0x18] sm:$0xff] %vm309, %v3068
      %3082 = vst.msk [vmem:[%s251 + $0x20] sm:$0xff] %vm309, %v3069
      %3083 = vst.msk [vmem:[%s251 + $0x28] sm:$0xff] %vm309, %v3070
      %3084 = vst.msk [vmem:[%s251 + $0x30] sm:$0xff] %vm309, %v3071
      %3085 = vst.msk [vmem:[%s251 + $0x38] sm:$0xff] %vm309, %v3072
      %3086 = vst.msk [vmem:[%s251 + $0x40] sm:$0xff] %vm309, %v3073
      %3087 = vst.msk [vmem:[%s251 + $0x48] sm:$0xff] %vm309, %v3074
      %3088 = vst.msk [vmem:[%s251 + $0x50] sm:$0xff] %vm309, %v3075
      %3089 = vst.msk [vmem:[%s251 + $0x58] sm:$0xff] %vm309, %v3076
      %3090 = vst.msk [vmem:[%s251 + $0x60] sm:$0xf] %vm1617, %v3077
      %p3091 = scmp.lt.s32.totalorder %s17, 1
      %s3092 = scalar_select %p3091, %s17, 1
      %s3093 = smul.addr %s3092, 13
      %s3094 = smul.addr %s3093, 8
      %s3095 = scalar_lea.vmem %s6, %s3094
      // Predicated region
      $region45: #{residual_block_forward.3} parent=43 // pred_check
        %p3096 = pneg %p166
      $region46: #{residual_block_forward.3} parent=43 // pred_check_branch
        %3098 = sbr.rel (%p3096) target = $region48
      $region47: #{residual_block_forward.3} parent=43 // pred_region
        _
      $region48: #{residual_block_forward.3} parent=43 // pred_fallthru
        _
    $region44: #{residual_block_forward.3} parent=5 // pred_fallthru
      _
    %p3099 = scmp.le.s32.totalorder 2, %s12
    // Predicated region
    $region49: #{residual_block_forward.3} parent=5 // pred_check
      %p3100 = pneg %p3099
    $region50: #{residual_block_forward.3} parent=5 // pred_check_branch
      %3102 = sbr.rel (%p3100) target = $region52
    $region51: #{residual_block_forward.3} parent=5 // pred_region
      %s3103 = ssub.s32 %s12, 2
      // Predicated region
      $region53: #{residual_block_forward.3} parent=51 // pred_check
        %p3104 = pneg %p172
      $region54: #{residual_block_forward.3} parent=51 // pred_check_branch
        %3106 = sbr.rel (%p3104) target = $region56
      $region55: #{residual_block_forward.3} parent=51 // pred_region
        %p3107 = scmp.lt.s32.totalorder %s18, 1
        %s3108 = scalar_select %p3107, %s18, 1
        %s3109 = smul.addr %s3108, 13
        %s3110 = smul.addr %s3109, 8
        %s3111 = scalar_lea.vmem %s6, %s3110
      $region56: #{residual_block_forward.3} parent=51 // pred_fallthru
        _
    $region52: #{residual_block_forward.3} parent=5 // pred_fallthru
      _
  $region6: #{residual_block_forward.3} parent=0 // loop_footer
    %s16 = sadd.s32 1, %s12
  $region7: #{residual_block_forward.3} parent=0 // loop_footer_branch
    %11 = sbr.rel target = $region3
  $region8: #{residual_block_forward.3} parent=0 // loop_exit
    _

</llo_original>
